<compile_context>
chip_gen: v5e
topology: v5e:2x2
jax: 0.10.0
libtpu: 0.0.40
codegen_flags: <defaults>
</compile_context>

<pallas_src>
import functools

import jax
import jax.numpy as jnp
import numpy as np
from jax.experimental import pallas as pl
from jax.experimental.pallas import tpu as pltpu


def _round_up(x, m):
    return (x + m - 1) // m * m


# ----------------------------- Pallas kernel -------------------------------

def _basic_block_kernel(x_ref, w1_ref, w2_ref, s1_ref, b1_ref, s2_ref, b2_ref,
                        mask_ref, o_ref, col_ref, y1_ref,
                        *, wp, halo, m_out, cp):
    """Fused BasicBlock body for one image.

    x_ref   : (1, lin, cp) f32   padded image, flattened rows, zero halo margins
    w1_ref  : (9*cp, cp)   bf16  conv1 weights, taps stacked on the K axis
    w2_ref  : (9*cp, cp)   bf16  conv2 weights
    s*/b*   : (1, cp)      f32   folded BatchNorm scale / shift
    mask_ref: (m_out, 1)   f32   1.0 at interior padded positions, 0.0 on ring
    o_ref   : (1, m_out, cp) f32 output at all padded positions (ring discarded)
    col_ref : (m_out, 9*cp) bf16 VMEM scratch: lane-packed im2col taps
    y1_ref  : (lin, cp)    f32   VMEM scratch: conv1 output with zero halo
    """
    # flat-row shift of each 3x3 tap in the padded (wp-wide) image
    shifts = [halo + (ky - 1) * wp + (kx - 1)
              for ky in range(3) for kx in range(3)]

    # ---- conv1: pack 9 shifted taps on the lane axis, one MXU matmul -------
    for k, s in enumerate(shifts):
        col_ref[:, k * cp:(k + 1) * cp] = (
            x_ref[0, s:s + m_out, :].astype(col_ref.dtype))
    acc1 = jnp.dot(col_ref[...], w1_ref[...],
                   preferred_element_type=jnp.float32)
    y1 = jnp.maximum(acc1 * s1_ref[...] + b1_ref[...], 0.0)     # BN1 + ReLU
    y1 = y1 * mask_ref[...]        # zero the padded ring -> conv2's zero pad

    # stash y1 (with zero halo margins) for conv2's shifted reads
    margin = jnp.zeros((halo, cp), y1_ref.dtype)
    y1_ref[0:halo, :] = margin
    y1_ref[halo + m_out:halo + m_out + halo, :] = margin
    y1_ref[halo:halo + m_out, :] = y1

    # ---- conv2 + BN2 + residual add + ReLU ---------------------------------
    for k, s in enumerate(shifts):
        col_ref[:, k * cp:(k + 1) * cp] = (
            y1_ref[s:s + m_out, :].astype(col_ref.dtype))
    acc2 = jnp.dot(col_ref[...], w2_ref[...],
                   preferred_element_type=jnp.float32)
    y2 = acc2 * s2_ref[...] + b2_ref[...]
    res = x_ref[0, halo:halo + m_out, :]     # identity residual (downsample=None)
    o_ref[0] = jnp.maximum(y2 + res, 0.0).astype(o_ref.dtype)


def _fused_basic_block(xf, w1, w2, s1, b1, s2, b2, mask,
                       *, wp, halo, m_out, cp):
    n, lin, _ = xf.shape
    kernel = functools.partial(_basic_block_kernel,
                               wp=wp, halo=halo, m_out=m_out, cp=cp)
    return pl.pallas_call(
        kernel,
        out_shape=jax.ShapeDtypeStruct((n, m_out, cp), jnp.float32),
        grid_spec=pltpu.PrefetchScalarGridSpec(
            num_scalar_prefetch=0,
            grid=(n,),                                    # one image per step
            in_specs=[
                pl.BlockSpec((1, lin, cp), lambda i: (i, 0, 0)),
                pl.BlockSpec((9 * cp, cp), lambda i: (0, 0)),
                pl.BlockSpec((9 * cp, cp), lambda i: (0, 0)),
                pl.BlockSpec((1, cp), lambda i: (0, 0)),
                pl.BlockSpec((1, cp), lambda i: (0, 0)),
                pl.BlockSpec((1, cp), lambda i: (0, 0)),
                pl.BlockSpec((1, cp), lambda i: (0, 0)),
                pl.BlockSpec((m_out, 1), lambda i: (0, 0)),
            ],
            out_specs=pl.BlockSpec((1, m_out, cp), lambda i: (i, 0, 0)),
            scratch_shapes=[
                pltpu.VMEM((m_out, 9 * cp), jnp.bfloat16),  # packed im2col taps
                pltpu.VMEM((lin, cp), jnp.float32),         # y1 (+ zero halo)
            ],
        ),
        compiler_params=pltpu.CompilerParams(
            dimension_semantics=("parallel",),
            vmem_limit_bytes=32 * 1024 * 1024,
        ),
    )(xf, w1, w2, s1, b1, s2, b2, mask)


# ------------------------------- JAX glue -----------------------------------

def basic_block_forward(x_nchw, params, stride=1):
    """Forward pass of BasicBlock (downsample=None => stride=1, Cin==planes)."""
    if stride != 1:
        raise NotImplementedError("downsample is None => stride must be 1")
    n, cin, h, w = x_nchw.shape
    p_out = params["w1"].shape[-1]
    assert cin == p_out, "identity residual requires inplanes == planes"

    cp = _round_up(max(cin, p_out, 128), 128)      # lane-dense channel padding
    hp, wp = h + 2, w + 2
    hwp = hp * wp
    m_out = _round_up(hwp, 16)                     # output rows (bf16-tile aligned)
    halo = _round_up(wp + 1, 8)                    # zero margin for tap shifts
    lin = m_out + 2 * halo

    # NCHW -> NHWC, spatial pad 1, channel pad to cp, flatten rows, add margins
    x = jnp.transpose(x_nchw, (0, 2, 3, 1)).astype(jnp.float32)
    xp = jnp.pad(x, ((0, 0), (1, 1), (1, 1), (0, cp - cin)))
    xf = xp.reshape(n, hwp, cp)
    xf = jnp.pad(xf, ((0, 0), (halo, lin - halo - hwp), (0, 0)))

    def pad_w(wt):                                 # (3,3,Ci,Co) -> (9*cp, cp) bf16
        ci, co = wt.shape[2], wt.shape[3]
        wt = jnp.pad(wt, ((0, 0), (0, 0), (0, cp - ci), (0, cp - co)))
        return wt.reshape(9 * cp, cp).astype(jnp.bfloat16)

    def pad_c(v):                                  # (Co,) -> (1, cp) f32
        return jnp.pad(v, (0, cp - v.shape[0])).reshape(1, cp).astype(jnp.float32)

    w1, w2 = pad_w(params["w1"]), pad_w(params["w2"])
    s1, b1 = pad_c(params["bn1_scale"]), pad_c(params["bn1_shift"])
    s2, b2 = pad_c(params["bn2_scale"]), pad_c(params["bn2_shift"])

    # static interior mask over flattened padded positions
    idx = np.arange(m_out)
    py, px = idx // wp, idx % wp
    interior = (idx < hwp) & (py >= 1) & (py <= h) & (px >= 1) & (px <= w)
    mask = jnp.asarray(interior.astype(np.float32).reshape(m_out, 1))

    out_flat = _fused_basic_block(xf, w1, w2, s1, b1, s2, b2, mask,
                                  wp=wp, halo=halo, m_out=m_out, cp=cp)

    out = out_flat[:, :hwp, :p_out].reshape(n, hp, wp, p_out)
    out = out[:, 1:1 + h, 1:1 + w, :]
    return jnp.transpose(out, (0, 3, 1, 2))        # NHWC -> NCHW


def init_params(key, inplanes, planes):
    """Deterministic synthetic parameters (weights in HWIO layout)."""
    ks = jax.random.split(key, 10)
    w1 = 0.1 * jax.random.normal(ks[0], (3, 3, inplanes, planes), jnp.float32)
    w2 = 0.1 * jax.random.normal(ks[1], (3, 3, planes, planes), jnp.float32)

    def folded_bn(kg, kb, km, kv):
        gamma = 1.0 + 0.1 * jax.random.normal(kg, (planes,), jnp.float32)
        beta = 0.1 * jax.random.normal(kb, (planes,), jnp.float32)
        mean = 0.05 * jax.random.normal(km, (planes,), jnp.float32)
        var = 1.0 + 0.1 * jnp.abs(jax.random.normal(kv, (planes,), jnp.float32))
        scale = gamma / jnp.sqrt(var + 1e-5)
        shift = beta - mean * scale
        return scale, shift

    s1, b1 = folded_bn(ks[2], ks[3], ks[4], ks[5])
    s2, b2 = folded_bn(ks[6], ks[7], ks[8], ks[9])
    return {"w1": w1, "w2": w2,
            "bn1_scale": s1, "bn1_shift": b1,
            "bn2_scale": s2, "bn2_shift": b2}


def reference_forward(x_nchw, params, stride=1):
    """Pure-JAX reference (lax conv) for correctness checking."""
    dn = ("NHWC", "HWIO", "NHWC")
    x = jnp.transpose(x_nchw, (0, 2, 3, 1))
    y = jax.lax.conv_general_dilated(x, params["w1"], (stride, stride),
                                     ((1, 1), (1, 1)), dimension_numbers=dn)
    y = jnp.maximum(y * params["bn1_scale"] + params["bn1_shift"], 0.0)
    y2 = jax.lax.conv_general_dilated(y, params["w2"], (1, 1),
                                      ((1, 1), (1, 1)), dimension_numbers=dn)
    y2 = y2 * params["bn2_scale"] + params["bn2_shift"]
    out = jnp.maximum(y2 + x, 0.0)
    return jnp.transpose(out, (0, 3, 1, 2))


if __name__ == "__main__":
    key = jax.random.PRNGKey(0)
    kx, kp = jax.random.split(key)

    N, C, H, W = 2, 4, 16, 16          # inplanes = planes = 4, stride = 1
    x = jax.random.normal(kx, (N, C, H, W), jnp.float32)
    params = init_params(kp, C, C)

    fwd = jax.jit(basic_block_forward, static_argnames=("stride",))
    out = fwd(x, params, stride=1)
    out = jax.block_until_ready(out)

    assert out.shape == (N, C, H, W)
    ref = reference_forward(x, params, stride=1)
    # bf16 matmul operands -> slightly looser tolerance than pure f32
    np.testing.assert_allclose(np.asarray(out), np.asarray(ref),
                               atol=2e-2, rtol=2e-2)
    print("KERNEL_OK")
</pallas_src>

<mosaic_0001>
module attributes {stable_mosaic.version = 11 : i64} {
  func.func @_basic_block_kernel(%arg0: i32, %arg1: memref<1x384x128xf32, #tpu.memory_space<vmem>>, %arg2: memref<1152x128xbf16, #tpu.memory_space<vmem>>, %arg3: memref<1152x128xbf16, #tpu.memory_space<vmem>>, %arg4: memref<1x128xf32, #tpu.memory_space<vmem>>, %arg5: memref<1x128xf32, #tpu.memory_space<vmem>>, %arg6: memref<1x128xf32, #tpu.memory_space<vmem>>, %arg7: memref<1x128xf32, #tpu.memory_space<vmem>>, %arg8: memref<336x1xf32, #tpu.memory_space<vmem>>, %arg9: memref<1x336x128xf32, #tpu.memory_space<vmem>>, %arg10: memref<336x1152xbf16, #tpu.memory_space<vmem>>, %arg11: memref<384x128xf32, #tpu.memory_space<vmem>>) attributes {dimension_semantics = [#tpu.dimension_semantics<parallel>], iteration_bounds = array<i64: 2>, scalar_prefetch = 0 : i64, scratch_operands = 2 : i64, tpu.core_type = #tpu.core_type<tc>, window_params = [{transform_indices = @transform_0, window_bounds = array<i64: 1, 384, 128>}, {pipeline_mode = #tpu.pipeline_mode<synchronous>, transform_indices = @transform_1, window_bounds = array<i64: 1152, 128>}, {pipeline_mode = #tpu.pipeline_mode<synchronous>, transform_indices = @transform_2, window_bounds = array<i64: 1152, 128>}, {pipeline_mode = #tpu.pipeline_mode<synchronous>, transform_indices = @transform_3, window_bounds = array<i64: 1, 128>}, {pipeline_mode = #tpu.pipeline_mode<synchronous>, transform_indices = @transform_4, window_bounds = array<i64: 1, 128>}, {pipeline_mode = #tpu.pipeline_mode<synchronous>, transform_indices = @transform_5, window_bounds = array<i64: 1, 128>}, {pipeline_mode = #tpu.pipeline_mode<synchronous>, transform_indices = @transform_6, window_bounds = array<i64: 1, 128>}, {pipeline_mode = #tpu.pipeline_mode<synchronous>, transform_indices = @transform_7, window_bounds = array<i64: 336, 1>}, {transform_indices = @transform_8, window_bounds = array<i64: 1, 336, 128>}]} {
    %c0 = arith.constant 0 : index
    %c5 = arith.constant 5 : index
    %c0_0 = arith.constant 0 : index
    %0 = vector.load %arg1[%c0, %c5, %c0_0] : memref<1x384x128xf32, #tpu.memory_space<vmem>>, vector<1x336x128xf32>
    %1 = vector.shape_cast %0 : vector<1x336x128xf32> to vector<336x128xf32>
    %2 = arith.truncf %1 : vector<336x128xf32> to vector<336x128xbf16>
    %c0_1 = arith.constant 0 : index
    %c0_2 = arith.constant 0 : index
    %3 = vector.load %arg10[%c0_1, %c0_2] : memref<336x1152xbf16, #tpu.memory_space<vmem>>, vector<336x128xbf16>
    tpu.vector_store %arg10[%c0_1, %c0_2], %2 {strides = array<i32>} : memref<336x1152xbf16, #tpu.memory_space<vmem>>, vector<336x128xbf16>,
    %c0_3 = arith.constant 0 : index
    %c6 = arith.constant 6 : index
    %c0_4 = arith.constant 0 : index
    %4 = vector.load %arg1[%c0_3, %c6, %c0_4] : memref<1x384x128xf32, #tpu.memory_space<vmem>>, vector<1x336x128xf32>
    %5 = vector.shape_cast %4 : vector<1x336x128xf32> to vector<336x128xf32>
    %6 = arith.truncf %5 : vector<336x128xf32> to vector<336x128xbf16>
    %c0_5 = arith.constant 0 : index
    %c128 = arith.constant 128 : index
    %7 = vector.load %arg10[%c0_5, %c128] : memref<336x1152xbf16, #tpu.memory_space<vmem>>, vector<336x128xbf16>
    tpu.vector_store %arg10[%c0_5, %c128], %6 {strides = array<i32>} : memref<336x1152xbf16, #tpu.memory_space<vmem>>, vector<336x128xbf16>,
    %c0_6 = arith.constant 0 : index
    %c7 = arith.constant 7 : index
    %c0_7 = arith.constant 0 : index
    %8 = vector.load %arg1[%c0_6, %c7, %c0_7] : memref<1x384x128xf32, #tpu.memory_space<vmem>>, vector<1x336x128xf32>
    %9 = vector.shape_cast %8 : vector<1x336x128xf32> to vector<336x128xf32>
    %10 = arith.truncf %9 : vector<336x128xf32> to vector<336x128xbf16>
    %c0_8 = arith.constant 0 : index
    %c256 = arith.constant 256 : index
    %11 = vector.load %arg10[%c0_8, %c256] : memref<336x1152xbf16, #tpu.memory_space<vmem>>, vector<336x128xbf16>
    tpu.vector_store %arg10[%c0_8, %c256], %10 {strides = array<i32>} : memref<336x1152xbf16, #tpu.memory_space<vmem>>, vector<336x128xbf16>,
    %c0_9 = arith.constant 0 : index
    %c23 = arith.constant 23 : index
    %c0_10 = arith.constant 0 : index
    %12 = vector.load %arg1[%c0_9, %c23, %c0_10] : memref<1x384x128xf32, #tpu.memory_space<vmem>>, vector<1x336x128xf32>
    %13 = vector.shape_cast %12 : vector<1x336x128xf32> to vector<336x128xf32>
    %14 = arith.truncf %13 : vector<336x128xf32> to vector<336x128xbf16>
    %c0_11 = arith.constant 0 : index
    %c384 = arith.constant 384 : index
    %15 = vector.load %arg10[%c0_11, %c384] : memref<336x1152xbf16, #tpu.memory_space<vmem>>, vector<336x128xbf16>
    tpu.vector_store %arg10[%c0_11, %c384], %14 {strides = array<i32>} : memref<336x1152xbf16, #tpu.memory_space<vmem>>, vector<336x128xbf16>,
    %c0_12 = arith.constant 0 : index
    %c24 = arith.constant 24 : index
    %c0_13 = arith.constant 0 : index
    %16 = vector.load %arg1[%c0_12, %c24, %c0_13] : memref<1x384x128xf32, #tpu.memory_space<vmem>>, vector<1x336x128xf32>
    %17 = vector.shape_cast %16 : vector<1x336x128xf32> to vector<336x128xf32>
    %18 = arith.truncf %17 : vector<336x128xf32> to vector<336x128xbf16>
    %c0_14 = arith.constant 0 : index
    %c512 = arith.constant 512 : index
    %19 = vector.load %arg10[%c0_14, %c512] : memref<336x1152xbf16, #tpu.memory_space<vmem>>, vector<336x128xbf16>
    tpu.vector_store %arg10[%c0_14, %c512], %18 {strides = array<i32>} : memref<336x1152xbf16, #tpu.memory_space<vmem>>, vector<336x128xbf16>,
    %c0_15 = arith.constant 0 : index
    %c25 = arith.constant 25 : index
    %c0_16 = arith.constant 0 : index
    %20 = vector.load %arg1[%c0_15, %c25, %c0_16] : memref<1x384x128xf32, #tpu.memory_space<vmem>>, vector<1x336x128xf32>
    %21 = vector.shape_cast %20 : vector<1x336x128xf32> to vector<336x128xf32>
    %22 = arith.truncf %21 : vector<336x128xf32> to vector<336x128xbf16>
    %c0_17 = arith.constant 0 : index
    %c640 = arith.constant 640 : index
    %23 = vector.load %arg10[%c0_17, %c640] : memref<336x1152xbf16, #tpu.memory_space<vmem>>, vector<336x128xbf16>
    tpu.vector_store %arg10[%c0_17, %c640], %22 {strides = array<i32>} : memref<336x1152xbf16, #tpu.memory_space<vmem>>, vector<336x128xbf16>,
    %c0_18 = arith.constant 0 : index
    %c41 = arith.constant 41 : index
    %c0_19 = arith.constant 0 : index
    %24 = vector.load %arg1[%c0_18, %c41, %c0_19] : memref<1x384x128xf32, #tpu.memory_space<vmem>>, vector<1x336x128xf32>
    %25 = vector.shape_cast %24 : vector<1x336x128xf32> to vector<336x128xf32>
    %26 = arith.truncf %25 : vector<336x128xf32> to vector<336x128xbf16>
    %c0_20 = arith.constant 0 : index
    %c768 = arith.constant 768 : index
    %27 = vector.load %arg10[%c0_20, %c768] : memref<336x1152xbf16, #tpu.memory_space<vmem>>, vector<336x128xbf16>
    tpu.vector_store %arg10[%c0_20, %c768], %26 {strides = array<i32>} : memref<336x1152xbf16, #tpu.memory_space<vmem>>, vector<336x128xbf16>,
    %c0_21 = arith.constant 0 : index
    %c42 = arith.constant 42 : index
    %c0_22 = arith.constant 0 : index
    %28 = vector.load %arg1[%c0_21, %c42, %c0_22] : memref<1x384x128xf32, #tpu.memory_space<vmem>>, vector<1x336x128xf32>
    %29 = vector.shape_cast %28 : vector<1x336x128xf32> to vector<336x128xf32>
    %30 = arith.truncf %29 : vector<336x128xf32> to vector<336x128xbf16>
    %c0_23 = arith.constant 0 : index
    %c896 = arith.constant 896 : index
    %31 = vector.load %arg10[%c0_23, %c896] : memref<336x1152xbf16, #tpu.memory_space<vmem>>, vector<336x128xbf16>
    tpu.vector_store %arg10[%c0_23, %c896], %30 {strides = array<i32>} : memref<336x1152xbf16, #tpu.memory_space<vmem>>, vector<336x128xbf16>,
    %c0_24 = arith.constant 0 : index
    %c43 = arith.constant 43 : index
    %c0_25 = arith.constant 0 : index
    %32 = vector.load %arg1[%c0_24, %c43, %c0_25] : memref<1x384x128xf32, #tpu.memory_space<vmem>>, vector<1x336x128xf32>
    %33 = vector.shape_cast %32 : vector<1x336x128xf32> to vector<336x128xf32>
    %34 = arith.truncf %33 : vector<336x128xf32> to vector<336x128xbf16>
    %c0_26 = arith.constant 0 : index
    %c1024 = arith.constant 1024 : index
    %35 = vector.load %arg10[%c0_26, %c1024] : memref<336x1152xbf16, #tpu.memory_space<vmem>>, vector<336x128xbf16>
    tpu.vector_store %arg10[%c0_26, %c1024], %34 {strides = array<i32>} : memref<336x1152xbf16, #tpu.memory_space<vmem>>, vector<336x128xbf16>,
    %c0_27 = arith.constant 0 : index
    %c0_28 = arith.constant 0 : index
    %36 = vector.load %arg10[%c0_27, %c0_28] : memref<336x1152xbf16, #tpu.memory_space<vmem>>, vector<336x1152xbf16>
    %c0_29 = arith.constant 0 : index
    %c0_30 = arith.constant 0 : index
    %37 = vector.load %arg2[%c0_29, %c0_30] : memref<1152x128xbf16, #tpu.memory_space<vmem>>, vector<1152x128xbf16>
    %cst = arith.constant dense<0.000000e+00> : vector<336x128xf32>
    %38 = tpu.matmul %36, %37, %cst {dimension_numbers = #tpu.dot_dimension_numbers<[1], [0], [0], [1], [0, 0, 1, 1], [], []>} : vector<336x1152xbf16>, vector<1152x128xbf16>, vector<336x128xf32> -> vector<336x128xf32>
    %c0_31 = arith.constant 0 : index
    %c0_32 = arith.constant 0 : index
    %39 = vector.load %arg4[%c0_31, %c0_32] : memref<1x128xf32, #tpu.memory_space<vmem>>, vector<1x128xf32>
    %40 = vector.broadcast %39 : vector<1x128xf32> to vector<336x128xf32>
    %41 = arith.mulf %38, %40 : vector<336x128xf32>
    %c0_33 = arith.constant 0 : index
    %c0_34 = arith.constant 0 : index
    %42 = vector.load %arg5[%c0_33, %c0_34] : memref<1x128xf32, #tpu.memory_space<vmem>>, vector<1x128xf32>
    %43 = vector.broadcast %42 : vector<1x128xf32> to vector<336x128xf32>
    %44 = arith.addf %41, %43 : vector<336x128xf32>
    %cst_35 = arith.constant 0.000000e+00 : f32
    %45 = vector.broadcast %cst_35 : f32 to vector<336x128xf32>
    %46 = arith.maximumf %44, %45 : vector<336x128xf32>
    %c0_36 = arith.constant 0 : index
    %c0_37 = arith.constant 0 : index
    %47 = vector.load %arg8[%c0_36, %c0_37] : memref<336x1xf32, #tpu.memory_space<vmem>>, vector<336x1xf32>
    %48 = vector.broadcast %47 : vector<336x1xf32> to vector<336x128xf32>
    %49 = arith.mulf %46, %48 : vector<336x128xf32>
    %cst_38 = arith.constant 0.000000e+00 : f32
    %50 = vector.broadcast %cst_38 : f32 to vector<24x128xf32>
    %c0_39 = arith.constant 0 : index
    %c0_40 = arith.constant 0 : index
    %51 = vector.load %arg11[%c0_39, %c0_40] : memref<384x128xf32, #tpu.memory_space<vmem>>, vector<24x128xf32>
    tpu.vector_store %arg11[%c0_39, %c0_40], %50 {strides = array<i32>} : memref<384x128xf32, #tpu.memory_space<vmem>>, vector<24x128xf32>,
    %c360 = arith.constant 360 : index
    %c0_41 = arith.constant 0 : index
    %52 = vector.load %arg11[%c360, %c0_41] : memref<384x128xf32, #tpu.memory_space<vmem>>, vector<24x128xf32>
    tpu.vector_store %arg11[%c360, %c0_41], %50 {strides = array<i32>} : memref<384x128xf32, #tpu.memory_space<vmem>>, vector<24x128xf32>,
    %c24_42 = arith.constant 24 : index
    %c0_43 = arith.constant 0 : index
    %53 = vector.load %arg11[%c24_42, %c0_43] : memref<384x128xf32, #tpu.memory_space<vmem>>, vector<336x128xf32>
    tpu.vector_store %arg11[%c24_42, %c0_43], %49 {strides = array<i32>} : memref<384x128xf32, #tpu.memory_space<vmem>>, vector<336x128xf32>,
    %c5_44 = arith.constant 5 : index
    %c0_45 = arith.constant 0 : index
    %54 = vector.load %arg11[%c5_44, %c0_45] : memref<384x128xf32, #tpu.memory_space<vmem>>, vector<336x128xf32>
    %55 = arith.truncf %54 : vector<336x128xf32> to vector<336x128xbf16>
    %c0_46 = arith.constant 0 : index
    %c0_47 = arith.constant 0 : index
    %56 = vector.load %arg10[%c0_46, %c0_47] : memref<336x1152xbf16, #tpu.memory_space<vmem>>, vector<336x128xbf16>
    tpu.vector_store %arg10[%c0_46, %c0_47], %55 {strides = array<i32>} : memref<336x1152xbf16, #tpu.memory_space<vmem>>, vector<336x128xbf16>,
    %c6_48 = arith.constant 6 : index
    %c0_49 = arith.constant 0 : index
    %57 = vector.load %arg11[%c6_48, %c0_49] : memref<384x128xf32, #tpu.memory_space<vmem>>, vector<336x128xf32>
    %58 = arith.truncf %57 : vector<336x128xf32> to vector<336x128xbf16>
    %c0_50 = arith.constant 0 : index
    %c128_51 = arith.constant 128 : index
    %59 = vector.load %arg10[%c0_50, %c128_51] : memref<336x1152xbf16, #tpu.memory_space<vmem>>, vector<336x128xbf16>
    tpu.vector_store %arg10[%c0_50, %c128_51], %58 {strides = array<i32>} : memref<336x1152xbf16, #tpu.memory_space<vmem>>, vector<336x128xbf16>,
    %c7_52 = arith.constant 7 : index
    %c0_53 = arith.constant 0 : index
    %60 = vector.load %arg11[%c7_52, %c0_53] : memref<384x128xf32, #tpu.memory_space<vmem>>, vector<336x128xf32>
    %61 = arith.truncf %60 : vector<336x128xf32> to vector<336x128xbf16>
    %c0_54 = arith.constant 0 : index
    %c256_55 = arith.constant 256 : index
    %62 = vector.load %arg10[%c0_54, %c256_55] : memref<336x1152xbf16, #tpu.memory_space<vmem>>, vector<336x128xbf16>
    tpu.vector_store %arg10[%c0_54, %c256_55], %61 {strides = array<i32>} : memref<336x1152xbf16, #tpu.memory_space<vmem>>, vector<336x128xbf16>,
    %c23_56 = arith.constant 23 : index
    %c0_57 = arith.constant 0 : index
    %63 = vector.load %arg11[%c23_56, %c0_57] : memref<384x128xf32, #tpu.memory_space<vmem>>, vector<336x128xf32>
    %64 = arith.truncf %63 : vector<336x128xf32> to vector<336x128xbf16>
    %c0_58 = arith.constant 0 : index
    %c384_59 = arith.constant 384 : index
    %65 = vector.load %arg10[%c0_58, %c384_59] : memref<336x1152xbf16, #tpu.memory_space<vmem>>, vector<336x128xbf16>
    tpu.vector_store %arg10[%c0_58, %c384_59], %64 {strides = array<i32>} : memref<336x1152xbf16, #tpu.memory_space<vmem>>, vector<336x128xbf16>,
    %c24_60 = arith.constant 24 : index
    %c0_61 = arith.constant 0 : index
    %66 = vector.load %arg11[%c24_60, %c0_61] : memref<384x128xf32, #tpu.memory_space<vmem>>, vector<336x128xf32>
    %67 = arith.truncf %66 : vector<336x128xf32> to vector<336x128xbf16>
    %c0_62 = arith.constant 0 : index
    %c512_63 = arith.constant 512 : index
    %68 = vector.load %arg10[%c0_62, %c512_63] : memref<336x1152xbf16, #tpu.memory_space<vmem>>, vector<336x128xbf16>
    tpu.vector_store %arg10[%c0_62, %c512_63], %67 {strides = array<i32>} : memref<336x1152xbf16, #tpu.memory_space<vmem>>, vector<336x128xbf16>,
    %c25_64 = arith.constant 25 : index
    %c0_65 = arith.constant 0 : index
    %69 = vector.load %arg11[%c25_64, %c0_65] : memref<384x128xf32, #tpu.memory_space<vmem>>, vector<336x128xf32>
    %70 = arith.truncf %69 : vector<336x128xf32> to vector<336x128xbf16>
    %c0_66 = arith.constant 0 : index
    %c640_67 = arith.constant 640 : index
    %71 = vector.load %arg10[%c0_66, %c640_67] : memref<336x1152xbf16, #tpu.memory_space<vmem>>, vector<336x128xbf16>
    tpu.vector_store %arg10[%c0_66, %c640_67], %70 {strides = array<i32>} : memref<336x1152xbf16, #tpu.memory_space<vmem>>, vector<336x128xbf16>,
    %c41_68 = arith.constant 41 : index
    %c0_69 = arith.constant 0 : index
    %72 = vector.load %arg11[%c41_68, %c0_69] : memref<384x128xf32, #tpu.memory_space<vmem>>, vector<336x128xf32>
    %73 = arith.truncf %72 : vector<336x128xf32> to vector<336x128xbf16>
    %c0_70 = arith.constant 0 : index
    %c768_71 = arith.constant 768 : index
    %74 = vector.load %arg10[%c0_70, %c768_71] : memref<336x1152xbf16, #tpu.memory_space<vmem>>, vector<336x128xbf16>
    tpu.vector_store %arg10[%c0_70, %c768_71], %73 {strides = array<i32>} : memref<336x1152xbf16, #tpu.memory_space<vmem>>, vector<336x128xbf16>,
    %c42_72 = arith.constant 42 : index
    %c0_73 = arith.constant 0 : index
    %75 = vector.load %arg11[%c42_72, %c0_73] : memref<384x128xf32, #tpu.memory_space<vmem>>, vector<336x128xf32>
    %76 = arith.truncf %75 : vector<336x128xf32> to vector<336x128xbf16>
    %c0_74 = arith.constant 0 : index
    %c896_75 = arith.constant 896 : index
    %77 = vector.load %arg10[%c0_74, %c896_75] : memref<336x1152xbf16, #tpu.memory_space<vmem>>, vector<336x128xbf16>
    tpu.vector_store %arg10[%c0_74, %c896_75], %76 {strides = array<i32>} : memref<336x1152xbf16, #tpu.memory_space<vmem>>, vector<336x128xbf16>,
    %c43_76 = arith.constant 43 : index
    %c0_77 = arith.constant 0 : index
    %78 = vector.load %arg11[%c43_76, %c0_77] : memref<384x128xf32, #tpu.memory_space<vmem>>, vector<336x128xf32>
    %79 = arith.truncf %78 : vector<336x128xf32> to vector<336x128xbf16>
    %c0_78 = arith.constant 0 : index
    %c1024_79 = arith.constant 1024 : index
    %80 = vector.load %arg10[%c0_78, %c1024_79] : memref<336x1152xbf16, #tpu.memory_space<vmem>>, vector<336x128xbf16>
    tpu.vector_store %arg10[%c0_78, %c1024_79], %79 {strides = array<i32>} : memref<336x1152xbf16, #tpu.memory_space<vmem>>, vector<336x128xbf16>,
    %c0_80 = arith.constant 0 : index
    %c0_81 = arith.constant 0 : index
    %81 = vector.load %arg10[%c0_80, %c0_81] : memref<336x1152xbf16, #tpu.memory_space<vmem>>, vector<336x1152xbf16>
    %c0_82 = arith.constant 0 : index
    %c0_83 = arith.constant 0 : index
    %82 = vector.load %arg3[%c0_82, %c0_83] : memref<1152x128xbf16, #tpu.memory_space<vmem>>, vector<1152x128xbf16>
    %cst_84 = arith.constant dense<0.000000e+00> : vector<336x128xf32>
    %83 = tpu.matmul %81, %82, %cst_84 {dimension_numbers = #tpu.dot_dimension_numbers<[1], [0], [0], [1], [0, 0, 1, 1], [], []>} : vector<336x1152xbf16>, vector<1152x128xbf16>, vector<336x128xf32> -> vector<336x128xf32>
    %c0_85 = arith.constant 0 : index
    %c0_86 = arith.constant 0 : index
    %84 = vector.load %arg6[%c0_85, %c0_86] : memref<1x128xf32, #tpu.memory_space<vmem>>, vector<1x128xf32>
    %85 = vector.broadcast %84 : vector<1x128xf32> to vector<336x128xf32>
    %86 = arith.mulf %83, %85 : vector<336x128xf32>
    %c0_87 = arith.constant 0 : index
    %c0_88 = arith.constant 0 : index
    %87 = vector.load %arg7[%c0_87, %c0_88] : memref<1x128xf32, #tpu.memory_space<vmem>>, vector<1x128xf32>
    %88 = vector.broadcast %87 : vector<1x128xf32> to vector<336x128xf32>
    %89 = arith.addf %86, %88 : vector<336x128xf32>
    %c0_89 = arith.constant 0 : index
    %c24_90 = arith.constant 24 : index
    %c0_91 = arith.constant 0 : index
    %90 = vector.load %arg1[%c0_89, %c24_90, %c0_91] : memref<1x384x128xf32, #tpu.memory_space<vmem>>, vector<1x336x128xf32>
    %91 = vector.shape_cast %90 : vector<1x336x128xf32> to vector<336x128xf32>
    %92 = arith.addf %89, %91 : vector<336x128xf32>
    %cst_92 = arith.constant 0.000000e+00 : f32
    %93 = vector.broadcast %cst_92 : f32 to vector<336x128xf32>
    %94 = arith.maximumf %92, %93 : vector<336x128xf32>
    %c0_93 = arith.constant 0 : index
    %c0_94 = arith.constant 0 : index
    %c0_95 = arith.constant 0 : index
    %95 = vector.load %arg9[%c0_93, %c0_94, %c0_95] : memref<1x336x128xf32, #tpu.memory_space<vmem>>, vector<1x336x128xf32>
    %96 = vector.shape_cast %95 : vector<1x336x128xf32> to vector<336x128xf32>
    %97 = vector.shape_cast %94 : vector<336x128xf32> to vector<1x336x128xf32>
    tpu.vector_store %arg9[%c0_93, %c0_94, %c0_95], %97 {strides = array<i32>} : memref<1x336x128xf32, #tpu.memory_space<vmem>>, vector<1x336x128xf32>,
    return
  }
  func.func @transform_0(%arg0: i32) -> (i32, i32, i32) {
    %c0_i32 = arith.constant 0 : i32
    %c0_i32_0 = arith.constant 0 : i32
    %c0_i32_1 = arith.constant 0 : i32
    return %arg0, %c0_i32, %c0_i32_0 : i32, i32, i32
  }
  func.func @transform_1(%arg0: i32) -> (i32, i32) {
    %c0_i32 = arith.constant 0 : i32
    %c0_i32_0 = arith.constant 0 : i32
    %c0_i32_1 = arith.constant 0 : i32
    return %c0_i32, %c0_i32_0 : i32, i32
  }
  func.func @transform_2(%arg0: i32) -> (i32, i32) {
    %c0_i32 = arith.constant 0 : i32
    %c0_i32_0 = arith.constant 0 : i32
    %c0_i32_1 = arith.constant 0 : i32
    return %c0_i32, %c0_i32_0 : i32, i32
  }
  func.func @transform_3(%arg0: i32) -> (i32, i32) {
    %c0_i32 = arith.constant 0 : i32
    %c0_i32_0 = arith.constant 0 : i32
    %c0_i32_1 = arith.constant 0 : i32
    return %c0_i32, %c0_i32_0 : i32, i32
  }
  func.func @transform_4(%arg0: i32) -> (i32, i32) {
    %c0_i32 = arith.constant 0 : i32
    %c0_i32_0 = arith.constant 0 : i32
    %c0_i32_1 = arith.constant 0 : i32
    return %c0_i32, %c0_i32_0 : i32, i32
  }
  func.func @transform_5(%arg0: i32) -> (i32, i32) {
    %c0_i32 = arith.constant 0 : i32
    %c0_i32_0 = arith.constant 0 : i32
    %c0_i32_1 = arith.constant 0 : i32
    return %c0_i32, %c0_i32_0 : i32, i32
  }
  func.func @transform_6(%arg0: i32) -> (i32, i32) {
    %c0_i32 = arith.constant 0 : i32
    %c0_i32_0 = arith.constant 0 : i32
    %c0_i32_1 = arith.constant 0 : i32
    return %c0_i32, %c0_i32_0 : i32, i32
  }
  func.func @transform_7(%arg0: i32) -> (i32, i32) {
    %c0_i32 = arith.constant 0 : i32
    %c0_i32_0 = arith.constant 0 : i32
    %c0_i32_1 = arith.constant 0 : i32
    return %c0_i32, %c0_i32_0 : i32, i32
  }
  func.func @transform_8(%arg0: i32) -> (i32, i32, i32) {
    %c0_i32 = arith.constant 0 : i32
    %c0_i32_0 = arith.constant 0 : i32
    %c0_i32_1 = arith.constant 0 : i32
    return %arg0, %c0_i32, %c0_i32_0 : i32, i32, i32
  }
}

</mosaic_0001>

<llo_original>
// kernel: basic_block_forward.1
$region0: #{basic_block_forward.1}
  #allocation0 [shape = 'u32[]', space=smem, size = 0x4, offset = 0x4, fixed_abs, tag = 'smem constant byte address 0x4 - core index']
  #allocation1 [shape = 'u32[72,128]{1,0:T(1,128)}', space=vmem, size = 0x9000, scoped, tag = 'internal scratch']
  #allocation2 [shape = 'bf16[336,1152]{1,0:T(8,128)(2,1)}', space=vmem, size = 0xbd000, scoped, tag = 'scratch operand']
  #allocation3 [shape = 'f32[384,128]{1,0:T(8,128)}', space=vmem, size = 0x30000, scoped, tag = 'scratch operand']
  %s0 = inlined_call_operand.vmem [shape: f32[2,384,128], index: 0, kind: input, shape index: {}]
  %s1 = inlined_call_operand.vmem [shape: bf16[1152,128], index: 1, kind: input, shape index: {}]
  %s2 = inlined_call_operand.vmem [shape: bf16[1152,128], index: 2, kind: input, shape index: {}]
  %s3 = inlined_call_operand.vmem [shape: f32[1,128], index: 3, kind: input, shape index: {}]
  %s4 = inlined_call_operand.vmem [shape: f32[1,128], index: 4, kind: input, shape index: {}]
  %s5 = inlined_call_operand.vmem [shape: f32[1,128], index: 5, kind: input, shape index: {}]
  %s6 = inlined_call_operand.vmem [shape: f32[1,128], index: 6, kind: input, shape index: {}]
  %s7 = inlined_call_operand.vmem [shape: f32[336,1], index: 7, kind: input, shape index: {}]
  %s8 = inlined_call_operand.vmem [shape: f32[2,336,128], index: 8, kind: output, shape index: {}]
  %s9 = sld [smem:[#allocation0]]
  $region65: #{basic_block_forward.1} parent=0
    _
  %s11 = ssub.s32 1, %s9
  %s12 = scalar_select 0, %s11, %s9
  loop: start=0, step=1, limit=4
  $region2: #{basic_block_forward.1} parent=0 // loop_pre_header
    _
  $region3: #{basic_block_forward.1} parent=0 // loop_header
    %s14 = sphi 0, %s18
    %p15 = scmp.ge.s32.totalorder %s14, 4
    %s24 = sphi 0, %s26
    %s27 = sphi 0, %s24
    %s28 = sphi 0, %s27
    %s44 = sphi 0, %s28
    %s48 = sphi 0, %s48
    %s50 = sphi 0, %s48
    %s51 = sphi 0, %s50
    %s65 = sphi 0, %s51
    %s69 = sphi 0, %s69
    %s71 = sphi 0, %s69
    %s72 = sphi 0, %s71
    %s86 = sphi 0, %s72
    %s90 = sphi 0, %s90
    %s92 = sphi 0, %s90
    %s93 = sphi 0, %s92
    %s107 = sphi 0, %s93
    %s111 = sphi 0, %s111
    %s113 = sphi 0, %s111
    %s114 = sphi 0, %s113
    %s128 = sphi 0, %s114
    %s132 = sphi 0, %s132
    %s134 = sphi 0, %s132
    %s135 = sphi 0, %s134
    %s149 = sphi 0, %s135
    %s153 = sphi 0, %s153
    %s155 = sphi 0, %s153
    %s156 = sphi 0, %s155
    %s170 = sphi 0, %s156
    %s174 = sphi 0, %s174
    %s176 = sphi 0, %s174
    %s177 = sphi 0, %s176
    %s191 = sphi 0, %s177
    %s197 = sphi 0, %s199
    %s200 = sphi 0, %s197
    %s201 = sphi 0, %s200
    %s217 = sphi 0, %s201
  $region4: #{basic_block_forward.1} parent=0 // loop_header_branch
    %17 = sbr.rel (%p15) target = $region8
  $region5: #{basic_block_forward.1} parent=0 // loop_body
    %s19 = ssub.s32 %s14, 1
    %s20 = ssub.s32 %s14, 2
    %s21 = sadd.s32 %s14, 1
    %s22 = ssub.s32 %s14, %s21
    %p23 = scmp.eq.s32.totalorder %s22, 0
    %s25 = sadd.s32 %s24, 1
    %s26 = scalar_select %p23, %s24, %s25
    %p29 = pneg %p23
    %p30 = scmp.eq.s32.totalorder %s14, 1
    %p31 = por %p29, %p30
    %p32 = scmp.ne.s32.totalorder %s24, %s27
    %p33 = scmp.eq.s32.totalorder %s14, 0
    %p34 = por %p32, %p33
    %p35 = scmp.ne.s32.totalorder %s24, %s27
    %p36 = scmp.eq.s32.totalorder %s19, 1
    %p37 = por %p35, %p36
    %p38 = scmp.ne.s32.totalorder %s27, %s28
    %p39 = scmp.eq.s32.totalorder %s19, 0
    %p40 = por %p38, %p39
    %p41 = scmp.ne.s32.totalorder %s27, %s28
    %p42 = scmp.eq.s32.totalorder %s20, 1
    %p43 = por %p41, %p42
    %p45 = scmp.ne.s32.totalorder %s28, %s44
    %p46 = scmp.eq.s32.totalorder %s20, 0
    %p47 = por %p45, %p46
    %s49 = sadd.s32 %s48, 1
    %p52 = scmp.eq.s32.totalorder %s14, 1
    %p53 = scmp.ne.s32.totalorder %s48, %s50
    %p54 = scmp.eq.s32.totalorder %s14, 0
    %p55 = por %p53, %p54
    %p56 = scmp.ne.s32.totalorder %s48, %s50
    %p57 = scmp.eq.s32.totalorder %s19, 1
    %p58 = por %p56, %p57
    %p59 = scmp.ne.s32.totalorder %s50, %s51
    %p60 = scmp.eq.s32.totalorder %s19, 0
    %p61 = por %p59, %p60
    %p62 = scmp.ne.s32.totalorder %s50, %s51
    %p63 = scmp.eq.s32.totalorder %s20, 1
    %p64 = por %p62, %p63
    %p66 = scmp.ne.s32.totalorder %s51, %s65
    %p67 = scmp.eq.s32.totalorder %s20, 0
    %p68 = por %p66, %p67
    %s70 = sadd.s32 %s69, 1
    %p73 = scmp.eq.s32.totalorder %s14, 1
    %p74 = scmp.ne.s32.totalorder %s69, %s71
    %p75 = scmp.eq.s32.totalorder %s14, 0
    %p76 = por %p74, %p75
    %p77 = scmp.ne.s32.totalorder %s69, %s71
    %p78 = scmp.eq.s32.totalorder %s19, 1
    %p79 = por %p77, %p78
    %p80 = scmp.ne.s32.totalorder %s71, %s72
    %p81 = scmp.eq.s32.totalorder %s19, 0
    %p82 = por %p80, %p81
    %p83 = scmp.ne.s32.totalorder %s71, %s72
    %p84 = scmp.eq.s32.totalorder %s20, 1
    %p85 = por %p83, %p84
    %p87 = scmp.ne.s32.totalorder %s72, %s86
    %p88 = scmp.eq.s32.totalorder %s20, 0
    %p89 = por %p87, %p88
    %s91 = sadd.s32 %s90, 1
    %p94 = scmp.eq.s32.totalorder %s14, 1
    %p95 = scmp.ne.s32.totalorder %s90, %s92
    %p96 = scmp.eq.s32.totalorder %s14, 0
    %p97 = por %p95, %p96
    %p98 = scmp.ne.s32.totalorder %s90, %s92
    %p99 = scmp.eq.s32.totalorder %s19, 1
    %p100 = por %p98, %p99
    %p101 = scmp.ne.s32.totalorder %s92, %s93
    %p102 = scmp.eq.s32.totalorder %s19, 0
    %p103 = por %p101, %p102
    %p104 = scmp.ne.s32.totalorder %s92, %s93
    %p105 = scmp.eq.s32.totalorder %s20, 1
    %p106 = por %p104, %p105
    %p108 = scmp.ne.s32.totalorder %s93, %s107
    %p109 = scmp.eq.s32.totalorder %s20, 0
    %p110 = por %p108, %p109
    %s112 = sadd.s32 %s111, 1
    %p115 = scmp.eq.s32.totalorder %s14, 1
    %p116 = scmp.ne.s32.totalorder %s111, %s113
    %p117 = scmp.eq.s32.totalorder %s14, 0
    %p118 = por %p116, %p117
    %p119 = scmp.ne.s32.totalorder %s111, %s113
    %p120 = scmp.eq.s32.totalorder %s19, 1
    %p121 = por %p119, %p120
    %p122 = scmp.ne.s32.totalorder %s113, %s114
    %p123 = scmp.eq.s32.totalorder %s19, 0
    %p124 = por %p122, %p123
    %p125 = scmp.ne.s32.totalorder %s113, %s114
    %p126 = scmp.eq.s32.totalorder %s20, 1
    %p127 = por %p125, %p126
    %p129 = scmp.ne.s32.totalorder %s114, %s128
    %p130 = scmp.eq.s32.totalorder %s20, 0
    %p131 = por %p129, %p130
    %s133 = sadd.s32 %s132, 1
    %p136 = scmp.eq.s32.totalorder %s14, 1
    %p137 = scmp.ne.s32.totalorder %s132, %s134
    %p138 = scmp.eq.s32.totalorder %s14, 0
    %p139 = por %p137, %p138
    %p140 = scmp.ne.s32.totalorder %s132, %s134
    %p141 = scmp.eq.s32.totalorder %s19, 1
    %p142 = por %p140, %p141
    %p143 = scmp.ne.s32.totalorder %s134, %s135
    %p144 = scmp.eq.s32.totalorder %s19, 0
    %p145 = por %p143, %p144
    %p146 = scmp.ne.s32.totalorder %s134, %s135
    %p147 = scmp.eq.s32.totalorder %s20, 1
    %p148 = por %p146, %p147
    %p150 = scmp.ne.s32.totalorder %s135, %s149
    %p151 = scmp.eq.s32.totalorder %s20, 0
    %p152 = por %p150, %p151
    %s154 = sadd.s32 %s153, 1
    %p157 = scmp.eq.s32.totalorder %s14, 1
    %p158 = scmp.ne.s32.totalorder %s153, %s155
    %p159 = scmp.eq.s32.totalorder %s14, 0
    %p160 = por %p158, %p159
    %p161 = scmp.ne.s32.totalorder %s153, %s155
    %p162 = scmp.eq.s32.totalorder %s19, 1
    %p163 = por %p161, %p162
    %p164 = scmp.ne.s32.totalorder %s155, %s156
    %p165 = scmp.eq.s32.totalorder %s19, 0
    %p166 = por %p164, %p165
    %p167 = scmp.ne.s32.totalorder %s155, %s156
    %p168 = scmp.eq.s32.totalorder %s20, 1
    %p169 = por %p167, %p168
    %p171 = scmp.ne.s32.totalorder %s156, %s170
    %p172 = scmp.eq.s32.totalorder %s20, 0
    %p173 = por %p171, %p172
    %s175 = sadd.s32 %s174, 1
    %p178 = scmp.eq.s32.totalorder %s14, 1
    %p179 = scmp.ne.s32.totalorder %s174, %s176
    %p180 = scmp.eq.s32.totalorder %s14, 0
    %p181 = por %p179, %p180
    %p182 = scmp.ne.s32.totalorder %s174, %s176
    %p183 = scmp.eq.s32.totalorder %s19, 1
    %p184 = por %p182, %p183
    %p185 = scmp.ne.s32.totalorder %s176, %s177
    %p186 = scmp.eq.s32.totalorder %s19, 0
    %p187 = por %p185, %p186
    %p188 = scmp.ne.s32.totalorder %s176, %s177
    %p189 = scmp.eq.s32.totalorder %s20, 1
    %p190 = por %p188, %p189
    %p192 = scmp.ne.s32.totalorder %s177, %s191
    %p193 = scmp.eq.s32.totalorder %s20, 0
    %p194 = por %p192, %p193
    %s195 = ssub.s32 %s14, %s21
    %p196 = scmp.eq.s32.totalorder %s195, 0
    %s198 = sadd.s32 %s197, 1
    %s199 = scalar_select %p196, %s197, %s198
    %p202 = pneg %p196
    %p203 = scmp.eq.s32.totalorder %s14, 1
    %p204 = por %p202, %p203
    %p205 = scmp.ne.s32.totalorder %s197, %s200
    %p206 = scmp.eq.s32.totalorder %s14, 0
    %p207 = por %p205, %p206
    %p208 = scmp.ne.s32.totalorder %s197, %s200
    %p209 = scmp.eq.s32.totalorder %s19, 1
    %p210 = por %p208, %p209
    %p211 = scmp.ne.s32.totalorder %s200, %s201
    %p212 = scmp.eq.s32.totalorder %s19, 0
    %p213 = por %p211, %p212
    %p214 = scmp.ne.s32.totalorder %s200, %s201
    %p215 = scmp.eq.s32.totalorder %s20, 1
    %p216 = por %p214, %p215
    %p218 = scmp.ne.s32.totalorder %s201, %s217
    %p219 = scmp.eq.s32.totalorder %s20, 0
    %p220 = por %p218, %p219
    %p221 = scmp.le.s32.totalorder 1, %s14
    %p222 = scmp.lt.s32.totalorder %s14, 3
    %p223 = pnand %p221, %p222
    %p224 = pneg %p223
    // Predicated region
    $region9: #{basic_block_forward.1} parent=5 // pred_check
      _
    $region10: #{basic_block_forward.1} parent=5 // pred_check_branch
      %226 = sbr.rel (%p223) target = $region12
    $region11: #{basic_block_forward.1} parent=5 // pred_region
      %s227 = ssub.s32 %s14, 1
      // Predicated region
      $region13: #{basic_block_forward.1} parent=11 // pred_check
        %p228 = pneg %p61
      $region14: #{basic_block_forward.1} parent=11 // pred_check_branch
        %230 = sbr.rel (%p228) target = $region16
      $region15: #{basic_block_forward.1} parent=11 // pred_region
        _
      $region16: #{basic_block_forward.1} parent=11 // pred_fallthru
        _
      // Predicated region
      $region17: #{basic_block_forward.1} parent=11 // pred_check
        %p231 = pneg %p82
      $region18: #{basic_block_forward.1} parent=11 // pred_check_branch
        %233 = sbr.rel (%p231) target = $region20
      $region19: #{basic_block_forward.1} parent=11 // pred_region
        _
      $region20: #{basic_block_forward.1} parent=11 // pred_fallthru
        _
      // Predicated region
      $region21: #{basic_block_forward.1} parent=11 // pred_check
        %p234 = pneg %p103
      $region22: #{basic_block_forward.1} parent=11 // pred_check_branch
        %236 = sbr.rel (%p234) target = $region24
      $region23: #{basic_block_forward.1} parent=11 // pred_region
        _
      $region24: #{basic_block_forward.1} parent=11 // pred_fallthru
        _
      // Predicated region
      $region25: #{basic_block_forward.1} parent=11 // pred_check
        %p237 = pneg %p124
      $region26: #{basic_block_forward.1} parent=11 // pred_check_branch
        %239 = sbr.rel (%p237) target = $region28
      $region27: #{basic_block_forward.1} parent=11 // pred_region
        _
      $region28: #{basic_block_forward.1} parent=11 // pred_fallthru
        _
      // Predicated region
      $region29: #{basic_block_forward.1} parent=11 // pred_check
        %p240 = pneg %p145
      $region30: #{basic_block_forward.1} parent=11 // pred_check_branch
        %242 = sbr.rel (%p240) target = $region32
      $region31: #{basic_block_forward.1} parent=11 // pred_region
        _
      $region32: #{basic_block_forward.1} parent=11 // pred_fallthru
        _
      // Predicated region
      $region33: #{basic_block_forward.1} parent=11 // pred_check
        %p243 = pneg %p166
      $region34: #{basic_block_forward.1} parent=11 // pred_check_branch
        %245 = sbr.rel (%p243) target = $region36
      $region35: #{basic_block_forward.1} parent=11 // pred_region
        _
      $region36: #{basic_block_forward.1} parent=11 // pred_fallthru
        _
      // Predicated region
      $region37: #{basic_block_forward.1} parent=11 // pred_check
        %p246 = pneg %p187
      $region38: #{basic_block_forward.1} parent=11 // pred_check_branch
        %248 = sbr.rel (%p246) target = $region40
      $region39: #{basic_block_forward.1} parent=11 // pred_region
        _
      $region40: #{basic_block_forward.1} parent=11 // pred_fallthru
        _
    $region12: #{basic_block_forward.1} parent=5 // pred_fallthru
      _
    %p249 = scmp.lt.s32.totalorder %s14, 2
    // Predicated region
    $region41: #{basic_block_forward.1} parent=5 // pred_check
      %p250 = pneg %p249
    $region42: #{basic_block_forward.1} parent=5 // pred_check_branch
      %252 = sbr.rel (%p250) target = $region44
    $region43: #{basic_block_forward.1} parent=5 // pred_region
      // Predicated region
      $region45: #{basic_block_forward.1} parent=43 // pred_check
        %p253 = pneg %p34
      $region46: #{basic_block_forward.1} parent=43 // pred_check_branch
        %255 = sbr.rel (%p253) target = $region48
      $region47: #{basic_block_forward.1} parent=43 // pred_region
        %p256 = scmp.lt.s32.totalorder %s14, 1
        %s257 = scalar_select %p256, %s14, 1
        %s258 = smul.addr %s257, 48
        %s259 = smul.addr %s258, 8
        %s260 = scalar_lea.vmem %s0, %s259
      $region48: #{basic_block_forward.1} parent=43 // pred_fallthru
        _
    $region44: #{basic_block_forward.1} parent=5 // pred_fallthru
      _
    %p261 = scmp.le.s32.totalorder 1, %s14
    %p262 = scmp.lt.s32.totalorder %s14, 3
    %p263 = pnand %p261, %p262
    %p264 = pneg %p263
    // Predicated region
    $region49: #{basic_block_forward.1} parent=5 // pred_check
      _
    $region50: #{basic_block_forward.1} parent=5 // pred_check_branch
      %266 = sbr.rel (%p263) target = $region52
    $region51: #{basic_block_forward.1} parent=5 // pred_region
      %s267 = ssub.s32 %s14, 1
      %p268 = scmp.lt.s32.totalorder %s19, 1
      %s269 = scalar_select %p268, %s19, 1
      %s270 = smul.addr %s269, 48
      %s271 = smul.addr %s270, 8
      %s272 = scalar_lea.vmem %s0, %s271
      %p273 = pneg %p40
      %p274 = pneg %p37
      %p275 = pneg %p61
      %p276 = pneg %p58
      %p277 = pneg %p82
      %p278 = pneg %p79
      %p279 = pneg %p103
      %p280 = pneg %p100
      %p281 = pneg %p124
      %p282 = pneg %p121
      %p283 = pneg %p145
      %p284 = pneg %p142
      %p285 = pneg %p166
      %p286 = pneg %p163
      %p287 = pneg %p187
      %p288 = pneg %p184
      %p289 = pneg %p213
      %p290 = pneg %p210
      %p291 = scmp.lt.s32.totalorder %s19, 1
      %s292 = scalar_select %p291, %s19, 1
      %s293 = smul.addr %s292, 42
      %s294 = smul.addr %s293, 8
      %s295 = scalar_lea.vmem %s8, %s294
      %p296 = scmp.lt.s32.totalorder %s19, 1
      %s297 = scalar_select %p296, %s19, 1
      %s298 = smul.addr %s297, 48
      %s299 = smul.addr %s298, 8
      %s300 = scalar_lea.vmem %s0, %s299
      %p301 = scmp.lt.s32.totalorder %s19, 1
      %s302 = scalar_select %p301, %s19, 1
      %s303 = smul.addr %s302, 42
      %s304 = smul.addr %s303, 8
      %s305 = scalar_lea.vmem %s8, %s304
      %v306 = vld [vmem:[%s300 + $0x5] sm:$0xff]
      %v307 = vld [vmem:[%s300 + $0xd] sm:$0xff]
      %v308 = vld [vmem:[%s300 + $0x15] sm:$0xff]
      %v309 = vld [vmem:[%s300 + $0x1d] sm:$0xff]
      %v310 = vld [vmem:[%s300 + $0x25] sm:$0xff]
      %v311 = vld [vmem:[%s300 + $0x2d] sm:$0xff]
      %v312 = vld [vmem:[%s300 + $0x35] sm:$0xff]
      %v313 = vld [vmem:[%s300 + $0x3d] sm:$0xff]
      %v314 = vld [vmem:[%s300 + $0x45] sm:$0xff]
      %v315 = vld [vmem:[%s300 + $0x4d] sm:$0xff]
      %v316 = vld [vmem:[%s300 + $0x55] sm:$0xff]
      %v317 = vld [vmem:[%s300 + $0x5d] sm:$0xff]
      %v318 = vld [vmem:[%s300 + $0x65] sm:$0xff]
      %v319 = vld [vmem:[%s300 + $0x6d] sm:$0xff]
      %v320 = vld [vmem:[%s300 + $0x75] sm:$0xff]
      %v321 = vld [vmem:[%s300 + $0x7d] sm:$0xff]
      %v322 = vld [vmem:[%s300 + $0x85] sm:$0xff]
      %v323 = vld [vmem:[%s300 + $0x8d] sm:$0xff]
      %v324 = vld [vmem:[%s300 + $0x95] sm:$0xff]
      %v325 = vld [vmem:[%s300 + $0x9d] sm:$0xff]
      %v326 = vld [vmem:[%s300 + $0xa5] sm:$0xff]
      %v327 = vld [vmem:[%s300 + $0xad] sm:$0xff]
      %v328 = vld [vmem:[%s300 + $0xb5] sm:$0xff]
      %v329 = vld [vmem:[%s300 + $0xbd] sm:$0xff]
      %v330 = vld [vmem:[%s300 + $0xc5] sm:$0xff]
      %v331 = vld [vmem:[%s300 + $0xcd] sm:$0xff]
      %v332 = vld [vmem:[%s300 + $0xd5] sm:$0xff]
      %v333 = vld [vmem:[%s300 + $0xdd] sm:$0xff]
      %v334 = vld [vmem:[%s300 + $0xe5] sm:$0xff]
      %v335 = vld [vmem:[%s300 + $0xed] sm:$0xff]
      %v336 = vld [vmem:[%s300 + $0xf5] sm:$0xff]
      %v337 = vld [vmem:[%s300 + $0xfd] sm:$0xff]
      %v338 = vld [vmem:[%s300 + $0x105] sm:$0xff]
      %v339 = vld [vmem:[%s300 + $0x10d] sm:$0xff]
      %v340 = vld [vmem:[%s300 + $0x115] sm:$0xff]
      %v341 = vld [vmem:[%s300 + $0x11d] sm:$0xff]
      %v342 = vld [vmem:[%s300 + $0x125] sm:$0xff]
      %v343 = vld [vmem:[%s300 + $0x12d] sm:$0xff]
      %v344 = vld [vmem:[%s300 + $0x135] sm:$0xff]
      %v345 = vld [vmem:[%s300 + $0x13d] sm:$0xff]
      %v346 = vld [vmem:[%s300 + $0x145] sm:$0xff]
      %v347 = vld [vmem:[%s300 + $0x14d] sm:$0xff]
      %v348 = vpack.c.bf16 %v306, %v306
      %v349 = vpack.c.bf16 %v307, %v307
      %v350 = vpack.c.bf16 %v308, %v308
      %v351 = vpack.c.bf16 %v309, %v309
      %v352 = vpack.c.bf16 %v310, %v310
      %v353 = vpack.c.bf16 %v311, %v311
      %v354 = vpack.c.bf16 %v312, %v312
      %v355 = vpack.c.bf16 %v313, %v313
      %v356 = vpack.c.bf16 %v314, %v314
      %v357 = vpack.c.bf16 %v315, %v315
      %v358 = vpack.c.bf16 %v316, %v316
      %v359 = vpack.c.bf16 %v317, %v317
      %v360 = vpack.c.bf16 %v318, %v318
      %v361 = vpack.c.bf16 %v319, %v319
      %v362 = vpack.c.bf16 %v320, %v320
      %v363 = vpack.c.bf16 %v321, %v321
      %v364 = vpack.c.bf16 %v322, %v322
      %v365 = vpack.c.bf16 %v323, %v323
      %v366 = vpack.c.bf16 %v324, %v324
      %v367 = vpack.c.bf16 %v325, %v325
      %v368 = vpack.c.bf16 %v326, %v326
      %v369 = vpack.c.bf16 %v327, %v327
      %v370 = vpack.c.bf16 %v328, %v328
      %v371 = vpack.c.bf16 %v329, %v329
      %v372 = vpack.c.bf16 %v330, %v330
      %v373 = vpack.c.bf16 %v331, %v331
      %v374 = vpack.c.bf16 %v332, %v332
      %v375 = vpack.c.bf16 %v333, %v333
      %v376 = vpack.c.bf16 %v334, %v334
      %v377 = vpack.c.bf16 %v335, %v335
      %v378 = vpack.c.bf16 %v336, %v336
      %v379 = vpack.c.bf16 %v337, %v337
      %v380 = vpack.c.bf16 %v338, %v338
      %v381 = vpack.c.bf16 %v339, %v339
      %v382 = vpack.c.bf16 %v340, %v340
      %v383 = vpack.c.bf16 %v341, %v341
      %v384 = vpack.c.bf16 %v342, %v342
      %v385 = vpack.c.bf16 %v343, %v343
      %v386 = vpack.c.bf16 %v344, %v344
      %v387 = vpack.c.bf16 %v345, %v345
      %v388 = vpack.c.bf16 %v346, %v346
      %v389 = vpack.c.bf16 %v347, %v347
      %390 = vst [vmem:[#allocation2] sm:$0xf] %v348
      %391 = vst [vmem:[#allocation2 + $0x24] sm:$0xf] %v349
      %392 = vst [vmem:[#allocation2 + $0x48] sm:$0xf] %v350
      %393 = vst [vmem:[#allocation2 + $0x6c] sm:$0xf] %v351
      %394 = vst [vmem:[#allocation2 + $0x90] sm:$0xf] %v352
      %395 = vst [vmem:[#allocation2 + $0xb4] sm:$0xf] %v353
      %396 = vst [vmem:[#allocation2 + $0xd8] sm:$0xf] %v354
      %397 = vst [vmem:[#allocation2 + $0xfc] sm:$0xf] %v355
      %398 = vst [vmem:[#allocation2 + $0x120] sm:$0xf] %v356
      %399 = vst [vmem:[#allocation2 + $0x144] sm:$0xf] %v357
      %400 = vst [vmem:[#allocation2 + $0x168] sm:$0xf] %v358
      %401 = vst [vmem:[#allocation2 + $0x18c] sm:$0xf] %v359
      %402 = vst [vmem:[#allocation2 + $0x1b0] sm:$0xf] %v360
      %403 = vst [vmem:[#allocation2 + $0x1d4] sm:$0xf] %v361
      %404 = vst [vmem:[#allocation2 + $0x1f8] sm:$0xf] %v362
      %405 = vst [vmem:[#allocation2 + $0x21c] sm:$0xf] %v363
      %406 = vst [vmem:[#allocation2 + $0x240] sm:$0xf] %v364
      %407 = vst [vmem:[#allocation2 + $0x264] sm:$0xf] %v365
      %408 = vst [vmem:[#allocation2 + $0x288] sm:$0xf] %v366
      %409 = vst [vmem:[#allocation2 + $0x2ac] sm:$0xf] %v367
      %410 = vst [vmem:[#allocation2 + $0x2d0] sm:$0xf] %v368
      %411 = vst [vmem:[#allocation2 + $0x2f4] sm:$0xf] %v369
      %412 = vst [vmem:[#allocation2 + $0x318] sm:$0xf] %v370
      %413 = vst [vmem:[#allocation2 + $0x33c] sm:$0xf] %v371
      %414 = vst [vmem:[#allocation2 + $0x360] sm:$0xf] %v372
      %415 = vst [vmem:[#allocation2 + $0x384] sm:$0xf] %v373
      %416 = vst [vmem:[#allocation2 + $0x3a8] sm:$0xf] %v374
      %417 = vst [vmem:[#allocation2 + $0x3cc] sm:$0xf] %v375
      %418 = vst [vmem:[#allocation2 + $0x3f0] sm:$0xf] %v376
      %419 = vst [vmem:[#allocation2 + $0x414] sm:$0xf] %v377
      %420 = vst [vmem:[#allocation2 + $0x438] sm:$0xf] %v378
      %421 = vst [vmem:[#allocation2 + $0x45c] sm:$0xf] %v379
      %422 = vst [vmem:[#allocation2 + $0x480] sm:$0xf] %v380
      %423 = vst [vmem:[#allocation2 + $0x4a4] sm:$0xf] %v381
      %424 = vst [vmem:[#allocation2 + $0x4c8] sm:$0xf] %v382
      %425 = vst [vmem:[#allocation2 + $0x4ec] sm:$0xf] %v383
      %426 = vst [vmem:[#allocation2 + $0x510] sm:$0xf] %v384
      %427 = vst [vmem:[#allocation2 + $0x534] sm:$0xf] %v385
      %428 = vst [vmem:[#allocation2 + $0x558] sm:$0xf] %v386
      %429 = vst [vmem:[#allocation2 + $0x57c] sm:$0xf] %v387
      %430 = vst [vmem:[#allocation2 + $0x5a0] sm:$0xf] %v388
      %431 = vst [vmem:[#allocation2 + $0x5c4] sm:$0xf] %v389
      %v432 = vld [vmem:[%s300 + $0x6] sm:$0xff]
      %v433 = vld [vmem:[%s300 + $0xe] sm:$0xff]
      %v434 = vld [vmem:[%s300 + $0x16] sm:$0xff]
      %v435 = vld [vmem:[%s300 + $0x1e] sm:$0xff]
      %v436 = vld [vmem:[%s300 + $0x26] sm:$0xff]
      %v437 = vld [vmem:[%s300 + $0x2e] sm:$0xff]
      %v438 = vld [vmem:[%s300 + $0x36] sm:$0xff]
      %v439 = vld [vmem:[%s300 + $0x3e] sm:$0xff]
      %v440 = vld [vmem:[%s300 + $0x46] sm:$0xff]
      %v441 = vld [vmem:[%s300 + $0x4e] sm:$0xff]
      %v442 = vld [vmem:[%s300 + $0x56] sm:$0xff]
      %v443 = vld [vmem:[%s300 + $0x5e] sm:$0xff]
      %v444 = vld [vmem:[%s300 + $0x66] sm:$0xff]
      %v445 = vld [vmem:[%s300 + $0x6e] sm:$0xff]
      %v446 = vld [vmem:[%s300 + $0x76] sm:$0xff]
      %v447 = vld [vmem:[%s300 + $0x7e] sm:$0xff]
      %v448 = vld [vmem:[%s300 + $0x86] sm:$0xff]
      %v449 = vld [vmem:[%s300 + $0x8e] sm:$0xff]
      %v450 = vld [vmem:[%s300 + $0x96] sm:$0xff]
      %v451 = vld [vmem:[%s300 + $0x9e] sm:$0xff]
      %v452 = vld [vmem:[%s300 + $0xa6] sm:$0xff]
      %v453 = vld [vmem:[%s300 + $0xae] sm:$0xff]
      %v454 = vld [vmem:[%s300 + $0xb6] sm:$0xff]
      %v455 = vld [vmem:[%s300 + $0xbe] sm:$0xff]
      %v456 = vld [vmem:[%s300 + $0xc6] sm:$0xff]
      %v457 = vld [vmem:[%s300 + $0xce] sm:$0xff]
      %v458 = vld [vmem:[%s300 + $0xd6] sm:$0xff]
      %v459 = vld [vmem:[%s300 + $0xde] sm:$0xff]
      %v460 = vld [vmem:[%s300 + $0xe6] sm:$0xff]
      %v461 = vld [vmem:[%s300 + $0xee] sm:$0xff]
      %v462 = vld [vmem:[%s300 + $0xf6] sm:$0xff]
      %v463 = vld [vmem:[%s300 + $0xfe] sm:$0xff]
      %v464 = vld [vmem:[%s300 + $0x106] sm:$0xff]
      %v465 = vld [vmem:[%s300 + $0x10e] sm:$0xff]
      %v466 = vld [vmem:[%s300 + $0x116] sm:$0xff]
      %v467 = vld [vmem:[%s300 + $0x11e] sm:$0xff]
      %v468 = vld [vmem:[%s300 + $0x126] sm:$0xff]
      %v469 = vld [vmem:[%s300 + $0x12e] sm:$0xff]
      %v470 = vld [vmem:[%s300 + $0x136] sm:$0xff]
      %v471 = vld [vmem:[%s300 + $0x13e] sm:$0xff]
      %v472 = vld [vmem:[%s300 + $0x146] sm:$0xff]
      %v473 = vld [vmem:[%s300 + $0x14e] sm:$0xff]
      %v474 = vpack.c.bf16 %v432, %v432
      %v475 = vpack.c.bf16 %v433, %v433
      %v476 = vpack.c.bf16 %v434, %v434
      %v477 = vpack.c.bf16 %v435, %v435
      %v478 = vpack.c.bf16 %v436, %v436
      %v479 = vpack.c.bf16 %v437, %v437
      %v480 = vpack.c.bf16 %v438, %v438
      %v481 = vpack.c.bf16 %v439, %v439
      %v482 = vpack.c.bf16 %v440, %v440
      %v483 = vpack.c.bf16 %v441, %v441
      %v484 = vpack.c.bf16 %v442, %v442
      %v485 = vpack.c.bf16 %v443, %v443
      %v486 = vpack.c.bf16 %v444, %v444
      %v487 = vpack.c.bf16 %v445, %v445
      %v488 = vpack.c.bf16 %v446, %v446
      %v489 = vpack.c.bf16 %v447, %v447
      %v490 = vpack.c.bf16 %v448, %v448
      %v491 = vpack.c.bf16 %v449, %v449
      %v492 = vpack.c.bf16 %v450, %v450
      %v493 = vpack.c.bf16 %v451, %v451
      %v494 = vpack.c.bf16 %v452, %v452
      %v495 = vpack.c.bf16 %v453, %v453
      %v496 = vpack.c.bf16 %v454, %v454
      %v497 = vpack.c.bf16 %v455, %v455
      %v498 = vpack.c.bf16 %v456, %v456
      %v499 = vpack.c.bf16 %v457, %v457
      %v500 = vpack.c.bf16 %v458, %v458
      %v501 = vpack.c.bf16 %v459, %v459
      %v502 = vpack.c.bf16 %v460, %v460
      %v503 = vpack.c.bf16 %v461, %v461
      %v504 = vpack.c.bf16 %v462, %v462
      %v505 = vpack.c.bf16 %v463, %v463
      %v506 = vpack.c.bf16 %v464, %v464
      %v507 = vpack.c.bf16 %v465, %v465
      %v508 = vpack.c.bf16 %v466, %v466
      %v509 = vpack.c.bf16 %v467, %v467
      %v510 = vpack.c.bf16 %v468, %v468
      %v511 = vpack.c.bf16 %v469, %v469
      %v512 = vpack.c.bf16 %v470, %v470
      %v513 = vpack.c.bf16 %v471, %v471
      %v514 = vpack.c.bf16 %v472, %v472
      %v515 = vpack.c.bf16 %v473, %v473
      %516 = vst [vmem:[#allocation2 + $0x4] sm:$0xf] %v474
      %517 = vst [vmem:[#allocation2 + $0x28] sm:$0xf] %v475
      %518 = vst [vmem:[#allocation2 + $0x4c] sm:$0xf] %v476
      %519 = vst [vmem:[#allocation2 + $0x70] sm:$0xf] %v477
      %520 = vst [vmem:[#allocation2 + $0x94] sm:$0xf] %v478
      %521 = vst [vmem:[#allocation2 + $0xb8] sm:$0xf] %v479
      %522 = vst [vmem:[#allocation2 + $0xdc] sm:$0xf] %v480
      %523 = vst [vmem:[#allocation2 + $0x100] sm:$0xf] %v481
      %524 = vst [vmem:[#allocation2 + $0x124] sm:$0xf] %v482
      %525 = vst [vmem:[#allocation2 + $0x148] sm:$0xf] %v483
      %526 = vst [vmem:[#allocation2 + $0x16c] sm:$0xf] %v484
      %527 = vst [vmem:[#allocation2 + $0x190] sm:$0xf] %v485
      %528 = vst [vmem:[#allocation2 + $0x1b4] sm:$0xf] %v486
      %529 = vst [vmem:[#allocation2 + $0x1d8] sm:$0xf] %v487
      %530 = vst [vmem:[#allocation2 + $0x1fc] sm:$0xf] %v488
      %531 = vst [vmem:[#allocation2 + $0x220] sm:$0xf] %v489
      %532 = vst [vmem:[#allocation2 + $0x244] sm:$0xf] %v490
      %533 = vst [vmem:[#allocation2 + $0x268] sm:$0xf] %v491
      %534 = vst [vmem:[#allocation2 + $0x28c] sm:$0xf] %v492
      %535 = vst [vmem:[#allocation2 + $0x2b0] sm:$0xf] %v493
      %536 = vst [vmem:[#allocation2 + $0x2d4] sm:$0xf] %v494
      %537 = vst [vmem:[#allocation2 + $0x2f8] sm:$0xf] %v495
      %538 = vst [vmem:[#allocation2 + $0x31c] sm:$0xf] %v496
      %539 = vst [vmem:[#allocation2 + $0x340] sm:$0xf] %v497
      %540 = vst [vmem:[#allocation2 + $0x364] sm:$0xf] %v498
      %541 = vst [vmem:[#allocation2 + $0x388] sm:$0xf] %v499
      %542 = vst [vmem:[#allocation2 + $0x3ac] sm:$0xf] %v500
      %543 = vst [vmem:[#allocation2 + $0x3d0] sm:$0xf] %v501
      %544 = vst [vmem:[#allocation2 + $0x3f4] sm:$0xf] %v502
      %545 = vst [vmem:[#allocation2 + $0x418] sm:$0xf] %v503
      %546 = vst [vmem:[#allocation2 + $0x43c] sm:$0xf] %v504
      %547 = vst [vmem:[#allocation2 + $0x460] sm:$0xf] %v505
      %548 = vst [vmem:[#allocation2 + $0x484] sm:$0xf] %v506
      %549 = vst [vmem:[#allocation2 + $0x4a8] sm:$0xf] %v507
      %550 = vst [vmem:[#allocation2 + $0x4cc] sm:$0xf] %v508
      %551 = vst [vmem:[#allocation2 + $0x4f0] sm:$0xf] %v509
      %552 = vst [vmem:[#allocation2 + $0x514] sm:$0xf] %v510
      %553 = vst [vmem:[#allocation2 + $0x538] sm:$0xf] %v511
      %554 = vst [vmem:[#allocation2 + $0x55c] sm:$0xf] %v512
      %555 = vst [vmem:[#allocation2 + $0x580] sm:$0xf] %v513
      %556 = vst [vmem:[#allocation2 + $0x5a4] sm:$0xf] %v514
      %557 = vst [vmem:[#allocation2 + $0x5c8] sm:$0xf] %v515
      %v558 = vld [vmem:[%s300 + $0x7] sm:$0xff]
      %v559 = vld [vmem:[%s300 + $0xf] sm:$0xff]
      %v560 = vld [vmem:[%s300 + $0x17] sm:$0xff]
      %v561 = vld [vmem:[%s300 + $0x1f] sm:$0xff]
      %v562 = vld [vmem:[%s300 + $0x27] sm:$0xff]
      %v563 = vld [vmem:[%s300 + $0x2f] sm:$0xff]
      %v564 = vld [vmem:[%s300 + $0x37] sm:$0xff]
      %v565 = vld [vmem:[%s300 + $0x3f] sm:$0xff]
      %v566 = vld [vmem:[%s300 + $0x47] sm:$0xff]
      %v567 = vld [vmem:[%s300 + $0x4f] sm:$0xff]
      %v568 = vld [vmem:[%s300 + $0x57] sm:$0xff]
      %v569 = vld [vmem:[%s300 + $0x5f] sm:$0xff]
      %v570 = vld [vmem:[%s300 + $0x67] sm:$0xff]
      %v571 = vld [vmem:[%s300 + $0x6f] sm:$0xff]
      %v572 = vld [vmem:[%s300 + $0x77] sm:$0xff]
      %v573 = vld [vmem:[%s300 + $0x7f] sm:$0xff]
      %v574 = vld [vmem:[%s300 + $0x87] sm:$0xff]
      %v575 = vld [vmem:[%s300 + $0x8f] sm:$0xff]
      %v576 = vld [vmem:[%s300 + $0x97] sm:$0xff]
      %v577 = vld [vmem:[%s300 + $0x9f] sm:$0xff]
      %v578 = vld [vmem:[%s300 + $0xa7] sm:$0xff]
      %v579 = vld [vmem:[%s300 + $0xaf] sm:$0xff]
      %v580 = vld [vmem:[%s300 + $0xb7] sm:$0xff]
      %v581 = vld [vmem:[%s300 + $0xbf] sm:$0xff]
      %v582 = vld [vmem:[%s300 + $0xc7] sm:$0xff]
      %v583 = vld [vmem:[%s300 + $0xcf] sm:$0xff]
      %v584 = vld [vmem:[%s300 + $0xd7] sm:$0xff]
      %v585 = vld [vmem:[%s300 + $0xdf] sm:$0xff]
      %v586 = vld [vmem:[%s300 + $0xe7] sm:$0xff]
      %v587 = vld [vmem:[%s300 + $0xef] sm:$0xff]
      %v588 = vld [vmem:[%s300 + $0xf7] sm:$0xff]
      %v589 = vld [vmem:[%s300 + $0xff] sm:$0xff]
      %v590 = vld [vmem:[%s300 + $0x107] sm:$0xff]
      %v591 = vld [vmem:[%s300 + $0x10f] sm:$0xff]
      %v592 = vld [vmem:[%s300 + $0x117] sm:$0xff]
      %v593 = vld [vmem:[%s300 + $0x11f] sm:$0xff]
      %v594 = vld [vmem:[%s300 + $0x127] sm:$0xff]
      %v595 = vld [vmem:[%s300 + $0x12f] sm:$0xff]
      %v596 = vld [vmem:[%s300 + $0x137] sm:$0xff]
      %v597 = vld [vmem:[%s300 + $0x13f] sm:$0xff]
      %v598 = vld [vmem:[%s300 + $0x147] sm:$0xff]
      %v599 = vld [vmem:[%s300 + $0x14f] sm:$0xff]
      %v600 = vpack.c.bf16 %v558, %v558
      %v601 = vpack.c.bf16 %v559, %v559
      %v602 = vpack.c.bf16 %v560, %v560
      %v603 = vpack.c.bf16 %v561, %v561
      %v604 = vpack.c.bf16 %v562, %v562
      %v605 = vpack.c.bf16 %v563, %v563
      %v606 = vpack.c.bf16 %v564, %v564
      %v607 = vpack.c.bf16 %v565, %v565
      %v608 = vpack.c.bf16 %v566, %v566
      %v609 = vpack.c.bf16 %v567, %v567
      %v610 = vpack.c.bf16 %v568, %v568
      %v611 = vpack.c.bf16 %v569, %v569
      %v612 = vpack.c.bf16 %v570, %v570
      %v613 = vpack.c.bf16 %v571, %v571
      %v614 = vpack.c.bf16 %v572, %v572
      %v615 = vpack.c.bf16 %v573, %v573
      %v616 = vpack.c.bf16 %v574, %v574
      %v617 = vpack.c.bf16 %v575, %v575
      %v618 = vpack.c.bf16 %v576, %v576
      %v619 = vpack.c.bf16 %v577, %v577
      %v620 = vpack.c.bf16 %v578, %v578
      %v621 = vpack.c.bf16 %v579, %v579
      %v622 = vpack.c.bf16 %v580, %v580
      %v623 = vpack.c.bf16 %v581, %v581
      %v624 = vpack.c.bf16 %v582, %v582
      %v625 = vpack.c.bf16 %v583, %v583
      %v626 = vpack.c.bf16 %v584, %v584
      %v627 = vpack.c.bf16 %v585, %v585
      %v628 = vpack.c.bf16 %v586, %v586
      %v629 = vpack.c.bf16 %v587, %v587
      %v630 = vpack.c.bf16 %v588, %v588
      %v631 = vpack.c.bf16 %v589, %v589
      %v632 = vpack.c.bf16 %v590, %v590
      %v633 = vpack.c.bf16 %v591, %v591
      %v634 = vpack.c.bf16 %v592, %v592
      %v635 = vpack.c.bf16 %v593, %v593
      %v636 = vpack.c.bf16 %v594, %v594
      %v637 = vpack.c.bf16 %v595, %v595
      %v638 = vpack.c.bf16 %v596, %v596
      %v639 = vpack.c.bf16 %v597, %v597
      %v640 = vpack.c.bf16 %v598, %v598
      %v641 = vpack.c.bf16 %v599, %v599
      %642 = vst [vmem:[#allocation2 + $0x8] sm:$0xf] %v600
      %643 = vst [vmem:[#allocation2 + $0x2c] sm:$0xf] %v601
      %644 = vst [vmem:[#allocation2 + $0x50] sm:$0xf] %v602
      %645 = vst [vmem:[#allocation2 + $0x74] sm:$0xf] %v603
      %646 = vst [vmem:[#allocation2 + $0x98] sm:$0xf] %v604
      %647 = vst [vmem:[#allocation2 + $0xbc] sm:$0xf] %v605
      %648 = vst [vmem:[#allocation2 + $0xe0] sm:$0xf] %v606
      %649 = vst [vmem:[#allocation2 + $0x104] sm:$0xf] %v607
      %650 = vst [vmem:[#allocation2 + $0x128] sm:$0xf] %v608
      %651 = vst [vmem:[#allocation2 + $0x14c] sm:$0xf] %v609
      %652 = vst [vmem:[#allocation2 + $0x170] sm:$0xf] %v610
      %653 = vst [vmem:[#allocation2 + $0x194] sm:$0xf] %v611
      %654 = vst [vmem:[#allocation2 + $0x1b8] sm:$0xf] %v612
      %655 = vst [vmem:[#allocation2 + $0x1dc] sm:$0xf] %v613
      %656 = vst [vmem:[#allocation2 + $0x200] sm:$0xf] %v614
      %657 = vst [vmem:[#allocation2 + $0x224] sm:$0xf] %v615
      %658 = vst [vmem:[#allocation2 + $0x248] sm:$0xf] %v616
      %659 = vst [vmem:[#allocation2 + $0x26c] sm:$0xf] %v617
      %660 = vst [vmem:[#allocation2 + $0x290] sm:$0xf] %v618
      %661 = vst [vmem:[#allocation2 + $0x2b4] sm:$0xf] %v619
      %662 = vst [vmem:[#allocation2 + $0x2d8] sm:$0xf] %v620
      %663 = vst [vmem:[#allocation2 + $0x2fc] sm:$0xf] %v621
      %664 = vst [vmem:[#allocation2 + $0x320] sm:$0xf] %v622
      %665 = vst [vmem:[#allocation2 + $0x344] sm:$0xf] %v623
      %666 = vst [vmem:[#allocation2 + $0x368] sm:$0xf] %v624
      %667 = vst [vmem:[#allocation2 + $0x38c] sm:$0xf] %v625
      %668 = vst [vmem:[#allocation2 + $0x3b0] sm:$0xf] %v626
      %669 = vst [vmem:[#allocation2 + $0x3d4] sm:$0xf] %v627
      %670 = vst [vmem:[#allocation2 + $0x3f8] sm:$0xf] %v628
      %671 = vst [vmem:[#allocation2 + $0x41c] sm:$0xf] %v629
      %672 = vst [vmem:[#allocation2 + $0x440] sm:$0xf] %v630
      %673 = vst [vmem:[#allocation2 + $0x464] sm:$0xf] %v631
      %674 = vst [vmem:[#allocation2 + $0x488] sm:$0xf] %v632
      %675 = vst [vmem:[#allocation2 + $0x4ac] sm:$0xf] %v633
      %676 = vst [vmem:[#allocation2 + $0x4d0] sm:$0xf] %v634
      %677 = vst [vmem:[#allocation2 + $0x4f4] sm:$0xf] %v635
      %678 = vst [vmem:[#allocation2 + $0x518] sm:$0xf] %v636
      %679 = vst [vmem:[#allocation2 + $0x53c] sm:$0xf] %v637
      %680 = vst [vmem:[#allocation2 + $0x560] sm:$0xf] %v638
      %681 = vst [vmem:[#allocation2 + $0x584] sm:$0xf] %v639
      %682 = vst [vmem:[#allocation2 + $0x5a8] sm:$0xf] %v640
      %683 = vst [vmem:[#allocation2 + $0x5cc] sm:$0xf] %v641
      %v684 = vld [vmem:[%s300 + $0x17] sm:$0xff]
      %v685 = vld [vmem:[%s300 + $0x1f] sm:$0xff]
      %v686 = vld [vmem:[%s300 + $0x27] sm:$0xff]
      %v687 = vld [vmem:[%s300 + $0x2f] sm:$0xff]
      %v688 = vld [vmem:[%s300 + $0x37] sm:$0xff]
      %v689 = vld [vmem:[%s300 + $0x3f] sm:$0xff]
      %v690 = vld [vmem:[%s300 + $0x47] sm:$0xff]
      %v691 = vld [vmem:[%s300 + $0x4f] sm:$0xff]
      %v692 = vld [vmem:[%s300 + $0x57] sm:$0xff]
      %v693 = vld [vmem:[%s300 + $0x5f] sm:$0xff]
      %v694 = vld [vmem:[%s300 + $0x67] sm:$0xff]
      %v695 = vld [vmem:[%s300 + $0x6f] sm:$0xff]
      %v696 = vld [vmem:[%s300 + $0x77] sm:$0xff]
      %v697 = vld [vmem:[%s300 + $0x7f] sm:$0xff]
      %v698 = vld [vmem:[%s300 + $0x87] sm:$0xff]
      %v699 = vld [vmem:[%s300 + $0x8f] sm:$0xff]
      %v700 = vld [vmem:[%s300 + $0x97] sm:$0xff]
      %v701 = vld [vmem:[%s300 + $0x9f] sm:$0xff]
      %v702 = vld [vmem:[%s300 + $0xa7] sm:$0xff]
      %v703 = vld [vmem:[%s300 + $0xaf] sm:$0xff]
      %v704 = vld [vmem:[%s300 + $0xb7] sm:$0xff]
      %v705 = vld [vmem:[%s300 + $0xbf] sm:$0xff]
      %v706 = vld [vmem:[%s300 + $0xc7] sm:$0xff]
      %v707 = vld [vmem:[%s300 + $0xcf] sm:$0xff]
      %v708 = vld [vmem:[%s300 + $0xd7] sm:$0xff]
      %v709 = vld [vmem:[%s300 + $0xdf] sm:$0xff]
      %v710 = vld [vmem:[%s300 + $0xe7] sm:$0xff]
      %v711 = vld [vmem:[%s300 + $0xef] sm:$0xff]
      %v712 = vld [vmem:[%s300 + $0xf7] sm:$0xff]
      %v713 = vld [vmem:[%s300 + $0xff] sm:$0xff]
      %v714 = vld [vmem:[%s300 + $0x107] sm:$0xff]
      %v715 = vld [vmem:[%s300 + $0x10f] sm:$0xff]
      %v716 = vld [vmem:[%s300 + $0x117] sm:$0xff]
      %v717 = vld [vmem:[%s300 + $0x11f] sm:$0xff]
      %v718 = vld [vmem:[%s300 + $0x127] sm:$0xff]
      %v719 = vld [vmem:[%s300 + $0x12f] sm:$0xff]
      %v720 = vld [vmem:[%s300 + $0x137] sm:$0xff]
      %v721 = vld [vmem:[%s300 + $0x13f] sm:$0xff]
      %v722 = vld [vmem:[%s300 + $0x147] sm:$0xff]
      %v723 = vld [vmem:[%s300 + $0x14f] sm:$0xff]
      %v724 = vld [vmem:[%s300 + $0x157] sm:$0xff]
      %v725 = vld [vmem:[%s300 + $0x15f] sm:$0xff]
      %v726 = vpack.c.bf16 %v684, %v684
      %v727 = vpack.c.bf16 %v685, %v685
      %v728 = vpack.c.bf16 %v686, %v686
      %v729 = vpack.c.bf16 %v687, %v687
      %v730 = vpack.c.bf16 %v688, %v688
      %v731 = vpack.c.bf16 %v689, %v689
      %v732 = vpack.c.bf16 %v690, %v690
      %v733 = vpack.c.bf16 %v691, %v691
      %v734 = vpack.c.bf16 %v692, %v692
      %v735 = vpack.c.bf16 %v693, %v693
      %v736 = vpack.c.bf16 %v694, %v694
      %v737 = vpack.c.bf16 %v695, %v695
      %v738 = vpack.c.bf16 %v696, %v696
      %v739 = vpack.c.bf16 %v697, %v697
      %v740 = vpack.c.bf16 %v698, %v698
      %v741 = vpack.c.bf16 %v699, %v699
      %v742 = vpack.c.bf16 %v700, %v700
      %v743 = vpack.c.bf16 %v701, %v701
      %v744 = vpack.c.bf16 %v702, %v702
      %v745 = vpack.c.bf16 %v703, %v703
      %v746 = vpack.c.bf16 %v704, %v704
      %v747 = vpack.c.bf16 %v705, %v705
      %v748 = vpack.c.bf16 %v706, %v706
      %v749 = vpack.c.bf16 %v707, %v707
      %v750 = vpack.c.bf16 %v708, %v708
      %v751 = vpack.c.bf16 %v709, %v709
      %v752 = vpack.c.bf16 %v710, %v710
      %v753 = vpack.c.bf16 %v711, %v711
      %v754 = vpack.c.bf16 %v712, %v712
      %v755 = vpack.c.bf16 %v713, %v713
      %v756 = vpack.c.bf16 %v714, %v714
      %v757 = vpack.c.bf16 %v715, %v715
      %v758 = vpack.c.bf16 %v716, %v716
      %v759 = vpack.c.bf16 %v717, %v717
      %v760 = vpack.c.bf16 %v718, %v718
      %v761 = vpack.c.bf16 %v719, %v719
      %v762 = vpack.c.bf16 %v720, %v720
      %v763 = vpack.c.bf16 %v721, %v721
      %v764 = vpack.c.bf16 %v722, %v722
      %v765 = vpack.c.bf16 %v723, %v723
      %v766 = vpack.c.bf16 %v724, %v724
      %v767 = vpack.c.bf16 %v725, %v725
      %768 = vst [vmem:[#allocation2 + $0xc] sm:$0xf] %v726
      %769 = vst [vmem:[#allocation2 + $0x30] sm:$0xf] %v727
      %770 = vst [vmem:[#allocation2 + $0x54] sm:$0xf] %v728
      %771 = vst [vmem:[#allocation2 + $0x78] sm:$0xf] %v729
      %772 = vst [vmem:[#allocation2 + $0x9c] sm:$0xf] %v730
      %773 = vst [vmem:[#allocation2 + $0xc0] sm:$0xf] %v731
      %774 = vst [vmem:[#allocation2 + $0xe4] sm:$0xf] %v732
      %775 = vst [vmem:[#allocation2 + $0x108] sm:$0xf] %v733
      %776 = vst [vmem:[#allocation2 + $0x12c] sm:$0xf] %v734
      %777 = vst [vmem:[#allocation2 + $0x150] sm:$0xf] %v735
      %778 = vst [vmem:[#allocation2 + $0x174] sm:$0xf] %v736
      %779 = vst [vmem:[#allocation2 + $0x198] sm:$0xf] %v737
      %780 = vst [vmem:[#allocation2 + $0x1bc] sm:$0xf] %v738
      %781 = vst [vmem:[#allocation2 + $0x1e0] sm:$0xf] %v739
      %782 = vst [vmem:[#allocation2 + $0x204] sm:$0xf] %v740
      %783 = vst [vmem:[#allocation2 + $0x228] sm:$0xf] %v741
      %784 = vst [vmem:[#allocation2 + $0x24c] sm:$0xf] %v742
      %785 = vst [vmem:[#allocation2 + $0x270] sm:$0xf] %v743
      %786 = vst [vmem:[#allocation2 + $0x294] sm:$0xf] %v744
      %787 = vst [vmem:[#allocation2 + $0x2b8] sm:$0xf] %v745
      %788 = vst [vmem:[#allocation2 + $0x2dc] sm:$0xf] %v746
      %789 = vst [vmem:[#allocation2 + $0x300] sm:$0xf] %v747
      %790 = vst [vmem:[#allocation2 + $0x324] sm:$0xf] %v748
      %791 = vst [vmem:[#allocation2 + $0x348] sm:$0xf] %v749
      %792 = vst [vmem:[#allocation2 + $0x36c] sm:$0xf] %v750
      %793 = vst [vmem:[#allocation2 + $0x390] sm:$0xf] %v751
      %794 = vst [vmem:[#allocation2 + $0x3b4] sm:$0xf] %v752
      %795 = vst [vmem:[#allocation2 + $0x3d8] sm:$0xf] %v753
      %796 = vst [vmem:[#allocation2 + $0x3fc] sm:$0xf] %v754
      %797 = vst [vmem:[#allocation2 + $0x420] sm:$0xf] %v755
      %798 = vst [vmem:[#allocation2 + $0x444] sm:$0xf] %v756
      %799 = vst [vmem:[#allocation2 + $0x468] sm:$0xf] %v757
      %800 = vst [vmem:[#allocation2 + $0x48c] sm:$0xf] %v758
      %801 = vst [vmem:[#allocation2 + $0x4b0] sm:$0xf] %v759
      %802 = vst [vmem:[#allocation2 + $0x4d4] sm:$0xf] %v760
      %803 = vst [vmem:[#allocation2 + $0x4f8] sm:$0xf] %v761
      %804 = vst [vmem:[#allocation2 + $0x51c] sm:$0xf] %v762
      %805 = vst [vmem:[#allocation2 + $0x540] sm:$0xf] %v763
      %806 = vst [vmem:[#allocation2 + $0x564] sm:$0xf] %v764
      %807 = vst [vmem:[#allocation2 + $0x588] sm:$0xf] %v765
      %808 = vst [vmem:[#allocation2 + $0x5ac] sm:$0xf] %v766
      %809 = vst [vmem:[#allocation2 + $0x5d0] sm:$0xf] %v767
      %v810 = vld [vmem:[%s300 + $0x18] sm:$0xff]
      %v811 = vld [vmem:[%s300 + $0x20] sm:$0xff]
      %v812 = vld [vmem:[%s300 + $0x28] sm:$0xff]
      %v813 = vld [vmem:[%s300 + $0x30] sm:$0xff]
      %v814 = vld [vmem:[%s300 + $0x38] sm:$0xff]
      %v815 = vld [vmem:[%s300 + $0x40] sm:$0xff]
      %v816 = vld [vmem:[%s300 + $0x48] sm:$0xff]
      %v817 = vld [vmem:[%s300 + $0x50] sm:$0xff]
      %v818 = vld [vmem:[%s300 + $0x58] sm:$0xff]
      %v819 = vld [vmem:[%s300 + $0x60] sm:$0xff]
      %v820 = vld [vmem:[%s300 + $0x68] sm:$0xff]
      %v821 = vld [vmem:[%s300 + $0x70] sm:$0xff]
      %v822 = vld [vmem:[%s300 + $0x78] sm:$0xff]
      %v823 = vld [vmem:[%s300 + $0x80] sm:$0xff]
      %v824 = vld [vmem:[%s300 + $0x88] sm:$0xff]
      %v825 = vld [vmem:[%s300 + $0x90] sm:$0xff]
      %v826 = vld [vmem:[%s300 + $0x98] sm:$0xff]
      %v827 = vld [vmem:[%s300 + $0xa0] sm:$0xff]
      %v828 = vld [vmem:[%s300 + $0xa8] sm:$0xff]
      %v829 = vld [vmem:[%s300 + $0xb0] sm:$0xff]
      %v830 = vld [vmem:[%s300 + $0xb8] sm:$0xff]
      %v831 = vld [vmem:[%s300 + $0xc0] sm:$0xff]
      %v832 = vld [vmem:[%s300 + $0xc8] sm:$0xff]
      %v833 = vld [vmem:[%s300 + $0xd0] sm:$0xff]
      %v834 = vld [vmem:[%s300 + $0xd8] sm:$0xff]
      %v835 = vld [vmem:[%s300 + $0xe0] sm:$0xff]
      %v836 = vld [vmem:[%s300 + $0xe8] sm:$0xff]
      %v837 = vld [vmem:[%s300 + $0xf0] sm:$0xff]
      %v838 = vld [vmem:[%s300 + $0xf8] sm:$0xff]
      %v839 = vld [vmem:[%s300 + $0x100] sm:$0xff]
      %v840 = vld [vmem:[%s300 + $0x108] sm:$0xff]
      %v841 = vld [vmem:[%s300 + $0x110] sm:$0xff]
      %v842 = vld [vmem:[%s300 + $0x118] sm:$0xff]
      %v843 = vld [vmem:[%s300 + $0x120] sm:$0xff]
      %v844 = vld [vmem:[%s300 + $0x128] sm:$0xff]
      %v845 = vld [vmem:[%s300 + $0x130] sm:$0xff]
      %v846 = vld [vmem:[%s300 + $0x138] sm:$0xff]
      %v847 = vld [vmem:[%s300 + $0x140] sm:$0xff]
      %v848 = vld [vmem:[%s300 + $0x148] sm:$0xff]
      %v849 = vld [vmem:[%s300 + $0x150] sm:$0xff]
      %v850 = vld [vmem:[%s300 + $0x158] sm:$0xff]
      %v851 = vld [vmem:[%s300 + $0x160] sm:$0xff]
      %v852 = vpack.c.bf16 %v810, %v810
      %v853 = vpack.c.bf16 %v811, %v811
      %v854 = vpack.c.bf16 %v812, %v812
      %v855 = vpack.c.bf16 %v813, %v813
      %v856 = vpack.c.bf16 %v814, %v814
      %v857 = vpack.c.bf16 %v815, %v815
      %v858 = vpack.c.bf16 %v816, %v816
      %v859 = vpack.c.bf16 %v817, %v817
      %v860 = vpack.c.bf16 %v818, %v818
      %v861 = vpack.c.bf16 %v819, %v819
      %v862 = vpack.c.bf16 %v820, %v820
      %v863 = vpack.c.bf16 %v821, %v821
      %v864 = vpack.c.bf16 %v822, %v822
      %v865 = vpack.c.bf16 %v823, %v823
      %v866 = vpack.c.bf16 %v824, %v824
      %v867 = vpack.c.bf16 %v825, %v825
      %v868 = vpack.c.bf16 %v826, %v826
      %v869 = vpack.c.bf16 %v827, %v827
      %v870 = vpack.c.bf16 %v828, %v828
      %v871 = vpack.c.bf16 %v829, %v829
      %v872 = vpack.c.bf16 %v830, %v830
      %v873 = vpack.c.bf16 %v831, %v831
      %v874 = vpack.c.bf16 %v832, %v832
      %v875 = vpack.c.bf16 %v833, %v833
      %v876 = vpack.c.bf16 %v834, %v834
      %v877 = vpack.c.bf16 %v835, %v835
      %v878 = vpack.c.bf16 %v836, %v836
      %v879 = vpack.c.bf16 %v837, %v837
      %v880 = vpack.c.bf16 %v838, %v838
      %v881 = vpack.c.bf16 %v839, %v839
      %v882 = vpack.c.bf16 %v840, %v840
      %v883 = vpack.c.bf16 %v841, %v841
      %v884 = vpack.c.bf16 %v842, %v842
      %v885 = vpack.c.bf16 %v843, %v843
      %v886 = vpack.c.bf16 %v844, %v844
      %v887 = vpack.c.bf16 %v845, %v845
      %v888 = vpack.c.bf16 %v846, %v846
      %v889 = vpack.c.bf16 %v847, %v847
      %v890 = vpack.c.bf16 %v848, %v848
      %v891 = vpack.c.bf16 %v849, %v849
      %v892 = vpack.c.bf16 %v850, %v850
      %v893 = vpack.c.bf16 %v851, %v851
      %894 = vst [vmem:[#allocation2 + $0x10] sm:$0xf] %v852
      %895 = vst [vmem:[#allocation2 + $0x34] sm:$0xf] %v853
      %896 = vst [vmem:[#allocation2 + $0x58] sm:$0xf] %v854
      %897 = vst [vmem:[#allocation2 + $0x7c] sm:$0xf] %v855
      %898 = vst [vmem:[#allocation2 + $0xa0] sm:$0xf] %v856
      %899 = vst [vmem:[#allocation2 + $0xc4] sm:$0xf] %v857
      %900 = vst [vmem:[#allocation2 + $0xe8] sm:$0xf] %v858
      %901 = vst [vmem:[#allocation2 + $0x10c] sm:$0xf] %v859
      %902 = vst [vmem:[#allocation2 + $0x130] sm:$0xf] %v860
      %903 = vst [vmem:[#allocation2 + $0x154] sm:$0xf] %v861
      %904 = vst [vmem:[#allocation2 + $0x178] sm:$0xf] %v862
      %905 = vst [vmem:[#allocation2 + $0x19c] sm:$0xf] %v863
      %906 = vst [vmem:[#allocation2 + $0x1c0] sm:$0xf] %v864
      %907 = vst [vmem:[#allocation2 + $0x1e4] sm:$0xf] %v865
      %908 = vst [vmem:[#allocation2 + $0x208] sm:$0xf] %v866
      %909 = vst [vmem:[#allocation2 + $0x22c] sm:$0xf] %v867
      %910 = vst [vmem:[#allocation2 + $0x250] sm:$0xf] %v868
      %911 = vst [vmem:[#allocation2 + $0x274] sm:$0xf] %v869
      %912 = vst [vmem:[#allocation2 + $0x298] sm:$0xf] %v870
      %913 = vst [vmem:[#allocation2 + $0x2bc] sm:$0xf] %v871
      %914 = vst [vmem:[#allocation2 + $0x2e0] sm:$0xf] %v872
      %915 = vst [vmem:[#allocation2 + $0x304] sm:$0xf] %v873
      %916 = vst [vmem:[#allocation2 + $0x328] sm:$0xf] %v874
      %917 = vst [vmem:[#allocation2 + $0x34c] sm:$0xf] %v875
      %918 = vst [vmem:[#allocation2 + $0x370] sm:$0xf] %v876
      %919 = vst [vmem:[#allocation2 + $0x394] sm:$0xf] %v877
      %920 = vst [vmem:[#allocation2 + $0x3b8] sm:$0xf] %v878
      %921 = vst [vmem:[#allocation2 + $0x3dc] sm:$0xf] %v879
      %922 = vst [vmem:[#allocation2 + $0x400] sm:$0xf] %v880
      %923 = vst [vmem:[#allocation2 + $0x424] sm:$0xf] %v881
      %924 = vst [vmem:[#allocation2 + $0x448] sm:$0xf] %v882
      %925 = vst [vmem:[#allocation2 + $0x46c] sm:$0xf] %v883
      %926 = vst [vmem:[#allocation2 + $0x490] sm:$0xf] %v884
      %927 = vst [vmem:[#allocation2 + $0x4b4] sm:$0xf] %v885
      %928 = vst [vmem:[#allocation2 + $0x4d8] sm:$0xf] %v886
      %929 = vst [vmem:[#allocation2 + $0x4fc] sm:$0xf] %v887
      %930 = vst [vmem:[#allocation2 + $0x520] sm:$0xf] %v888
      %931 = vst [vmem:[#allocation2 + $0x544] sm:$0xf] %v889
      %932 = vst [vmem:[#allocation2 + $0x568] sm:$0xf] %v890
      %933 = vst [vmem:[#allocation2 + $0x58c] sm:$0xf] %v891
      %934 = vst [vmem:[#allocation2 + $0x5b0] sm:$0xf] %v892
      %935 = vst [vmem:[#allocation2 + $0x5d4] sm:$0xf] %v893
      %v936 = vld [vmem:[%s300 + $0x19] sm:$0xff]
      %v937 = vld [vmem:[%s300 + $0x21] sm:$0xff]
      %v938 = vld [vmem:[%s300 + $0x29] sm:$0xff]
      %v939 = vld [vmem:[%s300 + $0x31] sm:$0xff]
      %v940 = vld [vmem:[%s300 + $0x39] sm:$0xff]
      %v941 = vld [vmem:[%s300 + $0x41] sm:$0xff]
      %v942 = vld [vmem:[%s300 + $0x49] sm:$0xff]
      %v943 = vld [vmem:[%s300 + $0x51] sm:$0xff]
      %v944 = vld [vmem:[%s300 + $0x59] sm:$0xff]
      %v945 = vld [vmem:[%s300 + $0x61] sm:$0xff]
      %v946 = vld [vmem:[%s300 + $0x69] sm:$0xff]
      %v947 = vld [vmem:[%s300 + $0x71] sm:$0xff]
      %v948 = vld [vmem:[%s300 + $0x79] sm:$0xff]
      %v949 = vld [vmem:[%s300 + $0x81] sm:$0xff]
      %v950 = vld [vmem:[%s300 + $0x89] sm:$0xff]
      %v951 = vld [vmem:[%s300 + $0x91] sm:$0xff]
      %v952 = vld [vmem:[%s300 + $0x99] sm:$0xff]
      %v953 = vld [vmem:[%s300 + $0xa1] sm:$0xff]
      %v954 = vld [vmem:[%s300 + $0xa9] sm:$0xff]
      %v955 = vld [vmem:[%s300 + $0xb1] sm:$0xff]
      %v956 = vld [vmem:[%s300 + $0xb9] sm:$0xff]
      %v957 = vld [vmem:[%s300 + $0xc1] sm:$0xff]
      %v958 = vld [vmem:[%s300 + $0xc9] sm:$0xff]
      %v959 = vld [vmem:[%s300 + $0xd1] sm:$0xff]
      %v960 = vld [vmem:[%s300 + $0xd9] sm:$0xff]
      %v961 = vld [vmem:[%s300 + $0xe1] sm:$0xff]
      %v962 = vld [vmem:[%s300 + $0xe9] sm:$0xff]
      %v963 = vld [vmem:[%s300 + $0xf1] sm:$0xff]
      %v964 = vld [vmem:[%s300 + $0xf9] sm:$0xff]
      %v965 = vld [vmem:[%s300 + $0x101] sm:$0xff]
      %v966 = vld [vmem:[%s300 + $0x109] sm:$0xff]
      %v967 = vld [vmem:[%s300 + $0x111] sm:$0xff]
      %v968 = vld [vmem:[%s300 + $0x119] sm:$0xff]
      %v969 = vld [vmem:[%s300 + $0x121] sm:$0xff]
      %v970 = vld [vmem:[%s300 + $0x129] sm:$0xff]
      %v971 = vld [vmem:[%s300 + $0x131] sm:$0xff]
      %v972 = vld [vmem:[%s300 + $0x139] sm:$0xff]
      %v973 = vld [vmem:[%s300 + $0x141] sm:$0xff]
      %v974 = vld [vmem:[%s300 + $0x149] sm:$0xff]
      %v975 = vld [vmem:[%s300 + $0x151] sm:$0xff]
      %v976 = vld [vmem:[%s300 + $0x159] sm:$0xff]
      %v977 = vld [vmem:[%s300 + $0x161] sm:$0xff]
      %v978 = vpack.c.bf16 %v936, %v936
      %v979 = vpack.c.bf16 %v937, %v937
      %v980 = vpack.c.bf16 %v938, %v938
      %v981 = vpack.c.bf16 %v939, %v939
      %v982 = vpack.c.bf16 %v940, %v940
      %v983 = vpack.c.bf16 %v941, %v941
      %v984 = vpack.c.bf16 %v942, %v942
      %v985 = vpack.c.bf16 %v943, %v943
      %v986 = vpack.c.bf16 %v944, %v944
      %v987 = vpack.c.bf16 %v945, %v945
      %v988 = vpack.c.bf16 %v946, %v946
      %v989 = vpack.c.bf16 %v947, %v947
      %v990 = vpack.c.bf16 %v948, %v948
      %v991 = vpack.c.bf16 %v949, %v949
      %v992 = vpack.c.bf16 %v950, %v950
      %v993 = vpack.c.bf16 %v951, %v951
      %v994 = vpack.c.bf16 %v952, %v952
      %v995 = vpack.c.bf16 %v953, %v953
      %v996 = vpack.c.bf16 %v954, %v954
      %v997 = vpack.c.bf16 %v955, %v955
      %v998 = vpack.c.bf16 %v956, %v956
      %v999 = vpack.c.bf16 %v957, %v957
      %v1000 = vpack.c.bf16 %v958, %v958
      %v1001 = vpack.c.bf16 %v959, %v959
      %v1002 = vpack.c.bf16 %v960, %v960
      %v1003 = vpack.c.bf16 %v961, %v961
      %v1004 = vpack.c.bf16 %v962, %v962
      %v1005 = vpack.c.bf16 %v963, %v963
      %v1006 = vpack.c.bf16 %v964, %v964
      %v1007 = vpack.c.bf16 %v965, %v965
      %v1008 = vpack.c.bf16 %v966, %v966
      %v1009 = vpack.c.bf16 %v967, %v967
      %v1010 = vpack.c.bf16 %v968, %v968
      %v1011 = vpack.c.bf16 %v969, %v969
      %v1012 = vpack.c.bf16 %v970, %v970
      %v1013 = vpack.c.bf16 %v971, %v971
      %v1014 = vpack.c.bf16 %v972, %v972
      %v1015 = vpack.c.bf16 %v973, %v973
      %v1016 = vpack.c.bf16 %v974, %v974
      %v1017 = vpack.c.bf16 %v975, %v975
      %v1018 = vpack.c.bf16 %v976, %v976
      %v1019 = vpack.c.bf16 %v977, %v977
      %1020 = vst [vmem:[#allocation2 + $0x14] sm:$0xf] %v978
      %1021 = vst [vmem:[#allocation2 + $0x38] sm:$0xf] %v979
      %1022 = vst [vmem:[#allocation2 + $0x5c] sm:$0xf] %v980
      %1023 = vst [vmem:[#allocation2 + $0x80] sm:$0xf] %v981
      %1024 = vst [vmem:[#allocation2 + $0xa4] sm:$0xf] %v982
      %1025 = vst [vmem:[#allocation2 + $0xc8] sm:$0xf] %v983
      %1026 = vst [vmem:[#allocation2 + $0xec] sm:$0xf] %v984
      %1027 = vst [vmem:[#allocation2 + $0x110] sm:$0xf] %v985
      %1028 = vst [vmem:[#allocation2 + $0x134] sm:$0xf] %v986
      %1029 = vst [vmem:[#allocation2 + $0x158] sm:$0xf] %v987
      %1030 = vst [vmem:[#allocation2 + $0x17c] sm:$0xf] %v988
      %1031 = vst [vmem:[#allocation2 + $0x1a0] sm:$0xf] %v989
      %1032 = vst [vmem:[#allocation2 + $0x1c4] sm:$0xf] %v990
      %1033 = vst [vmem:[#allocation2 + $0x1e8] sm:$0xf] %v991
      %1034 = vst [vmem:[#allocation2 + $0x20c] sm:$0xf] %v992
      %1035 = vst [vmem:[#allocation2 + $0x230] sm:$0xf] %v993
      %1036 = vst [vmem:[#allocation2 + $0x254] sm:$0xf] %v994
      %1037 = vst [vmem:[#allocation2 + $0x278] sm:$0xf] %v995
      %1038 = vst [vmem:[#allocation2 + $0x29c] sm:$0xf] %v996
      %1039 = vst [vmem:[#allocation2 + $0x2c0] sm:$0xf] %v997
      %1040 = vst [vmem:[#allocation2 + $0x2e4] sm:$0xf] %v998
      %1041 = vst [vmem:[#allocation2 + $0x308] sm:$0xf] %v999
      %1042 = vst [vmem:[#allocation2 + $0x32c] sm:$0xf] %v1000
      %1043 = vst [vmem:[#allocation2 + $0x350] sm:$0xf] %v1001
      %1044 = vst [vmem:[#allocation2 + $0x374] sm:$0xf] %v1002
      %1045 = vst [vmem:[#allocation2 + $0x398] sm:$0xf] %v1003
      %1046 = vst [vmem:[#allocation2 + $0x3bc] sm:$0xf] %v1004
      %1047 = vst [vmem:[#allocation2 + $0x3e0] sm:$0xf] %v1005
      %1048 = vst [vmem:[#allocation2 + $0x404] sm:$0xf] %v1006
      %1049 = vst [vmem:[#allocation2 + $0x428] sm:$0xf] %v1007
      %1050 = vst [vmem:[#allocation2 + $0x44c] sm:$0xf] %v1008
      %1051 = vst [vmem:[#allocation2 + $0x470] sm:$0xf] %v1009
      %1052 = vst [vmem:[#allocation2 + $0x494] sm:$0xf] %v1010
      %1053 = vst [vmem:[#allocation2 + $0x4b8] sm:$0xf] %v1011
      %1054 = vst [vmem:[#allocation2 + $0x4dc] sm:$0xf] %v1012
      %1055 = vst [vmem:[#allocation2 + $0x500] sm:$0xf] %v1013
      %1056 = vst [vmem:[#allocation2 + $0x524] sm:$0xf] %v1014
      %1057 = vst [vmem:[#allocation2 + $0x548] sm:$0xf] %v1015
      %1058 = vst [vmem:[#allocation2 + $0x56c] sm:$0xf] %v1016
      %1059 = vst [vmem:[#allocation2 + $0x590] sm:$0xf] %v1017
      %1060 = vst [vmem:[#allocation2 + $0x5b4] sm:$0xf] %v1018
      %1061 = vst [vmem:[#allocation2 + $0x5d8] sm:$0xf] %v1019
      %v1062 = vld [vmem:[%s300 + $0x29] sm:$0xff]
      %v1063 = vld [vmem:[%s300 + $0x31] sm:$0xff]
      %v1064 = vld [vmem:[%s300 + $0x39] sm:$0xff]
      %v1065 = vld [vmem:[%s300 + $0x41] sm:$0xff]
      %v1066 = vld [vmem:[%s300 + $0x49] sm:$0xff]
      %v1067 = vld [vmem:[%s300 + $0x51] sm:$0xff]
      %v1068 = vld [vmem:[%s300 + $0x59] sm:$0xff]
      %v1069 = vld [vmem:[%s300 + $0x61] sm:$0xff]
      %v1070 = vld [vmem:[%s300 + $0x69] sm:$0xff]
      %v1071 = vld [vmem:[%s300 + $0x71] sm:$0xff]
      %v1072 = vld [vmem:[%s300 + $0x79] sm:$0xff]
      %v1073 = vld [vmem:[%s300 + $0x81] sm:$0xff]
      %v1074 = vld [vmem:[%s300 + $0x89] sm:$0xff]
      %v1075 = vld [vmem:[%s300 + $0x91] sm:$0xff]
      %v1076 = vld [vmem:[%s300 + $0x99] sm:$0xff]
      %v1077 = vld [vmem:[%s300 + $0xa1] sm:$0xff]
      %v1078 = vld [vmem:[%s300 + $0xa9] sm:$0xff]
      %v1079 = vld [vmem:[%s300 + $0xb1] sm:$0xff]
      %v1080 = vld [vmem:[%s300 + $0xb9] sm:$0xff]
      %v1081 = vld [vmem:[%s300 + $0xc1] sm:$0xff]
      %v1082 = vld [vmem:[%s300 + $0xc9] sm:$0xff]
      %v1083 = vld [vmem:[%s300 + $0xd1] sm:$0xff]
      %v1084 = vld [vmem:[%s300 + $0xd9] sm:$0xff]
      %v1085 = vld [vmem:[%s300 + $0xe1] sm:$0xff]
      %v1086 = vld [vmem:[%s300 + $0xe9] sm:$0xff]
      %v1087 = vld [vmem:[%s300 + $0xf1] sm:$0xff]
      %v1088 = vld [vmem:[%s300 + $0xf9] sm:$0xff]
      %v1089 = vld [vmem:[%s300 + $0x101] sm:$0xff]
      %v1090 = vld [vmem:[%s300 + $0x109] sm:$0xff]
      %v1091 = vld [vmem:[%s300 + $0x111] sm:$0xff]
      %v1092 = vld [vmem:[%s300 + $0x119] sm:$0xff]
      %v1093 = vld [vmem:[%s300 + $0x121] sm:$0xff]
      %v1094 = vld [vmem:[%s300 + $0x129] sm:$0xff]
      %v1095 = vld [vmem:[%s300 + $0x131] sm:$0xff]
      %v1096 = vld [vmem:[%s300 + $0x139] sm:$0xff]
      %v1097 = vld [vmem:[%s300 + $0x141] sm:$0xff]
      %v1098 = vld [vmem:[%s300 + $0x149] sm:$0xff]
      %v1099 = vld [vmem:[%s300 + $0x151] sm:$0xff]
      %v1100 = vld [vmem:[%s300 + $0x159] sm:$0xff]
      %v1101 = vld [vmem:[%s300 + $0x161] sm:$0xff]
      %v1102 = vld [vmem:[%s300 + $0x169] sm:$0xff]
      %v1103 = vld [vmem:[%s300 + $0x171] sm:$0xff]
      %v1104 = vpack.c.bf16 %v1062, %v1062
      %v1105 = vpack.c.bf16 %v1063, %v1063
      %v1106 = vpack.c.bf16 %v1064, %v1064
      %v1107 = vpack.c.bf16 %v1065, %v1065
      %v1108 = vpack.c.bf16 %v1066, %v1066
      %v1109 = vpack.c.bf16 %v1067, %v1067
      %v1110 = vpack.c.bf16 %v1068, %v1068
      %v1111 = vpack.c.bf16 %v1069, %v1069
      %v1112 = vpack.c.bf16 %v1070, %v1070
      %v1113 = vpack.c.bf16 %v1071, %v1071
      %v1114 = vpack.c.bf16 %v1072, %v1072
      %v1115 = vpack.c.bf16 %v1073, %v1073
      %v1116 = vpack.c.bf16 %v1074, %v1074
      %v1117 = vpack.c.bf16 %v1075, %v1075
      %v1118 = vpack.c.bf16 %v1076, %v1076
      %v1119 = vpack.c.bf16 %v1077, %v1077
      %v1120 = vpack.c.bf16 %v1078, %v1078
      %v1121 = vpack.c.bf16 %v1079, %v1079
      %v1122 = vpack.c.bf16 %v1080, %v1080
      %v1123 = vpack.c.bf16 %v1081, %v1081
      %v1124 = vpack.c.bf16 %v1082, %v1082
      %v1125 = vpack.c.bf16 %v1083, %v1083
      %v1126 = vpack.c.bf16 %v1084, %v1084
      %v1127 = vpack.c.bf16 %v1085, %v1085
      %v1128 = vpack.c.bf16 %v1086, %v1086
      %v1129 = vpack.c.bf16 %v1087, %v1087
      %v1130 = vpack.c.bf16 %v1088, %v1088
      %v1131 = vpack.c.bf16 %v1089, %v1089
      %v1132 = vpack.c.bf16 %v1090, %v1090
      %v1133 = vpack.c.bf16 %v1091, %v1091
      %v1134 = vpack.c.bf16 %v1092, %v1092
      %v1135 = vpack.c.bf16 %v1093, %v1093
      %v1136 = vpack.c.bf16 %v1094, %v1094
      %v1137 = vpack.c.bf16 %v1095, %v1095
      %v1138 = vpack.c.bf16 %v1096, %v1096
      %v1139 = vpack.c.bf16 %v1097, %v1097
      %v1140 = vpack.c.bf16 %v1098, %v1098
      %v1141 = vpack.c.bf16 %v1099, %v1099
      %v1142 = vpack.c.bf16 %v1100, %v1100
      %v1143 = vpack.c.bf16 %v1101, %v1101
      %v1144 = vpack.c.bf16 %v1102, %v1102
      %v1145 = vpack.c.bf16 %v1103, %v1103
      %1146 = vst [vmem:[#allocation2 + $0x18] sm:$0xf] %v1104
      %1147 = vst [vmem:[#allocation2 + $0x3c] sm:$0xf] %v1105
      %1148 = vst [vmem:[#allocation2 + $0x60] sm:$0xf] %v1106
      %1149 = vst [vmem:[#allocation2 + $0x84] sm:$0xf] %v1107
      %1150 = vst [vmem:[#allocation2 + $0xa8] sm:$0xf] %v1108
      %1151 = vst [vmem:[#allocation2 + $0xcc] sm:$0xf] %v1109
      %1152 = vst [vmem:[#allocation2 + $0xf0] sm:$0xf] %v1110
      %1153 = vst [vmem:[#allocation2 + $0x114] sm:$0xf] %v1111
      %1154 = vst [vmem:[#allocation2 + $0x138] sm:$0xf] %v1112
      %1155 = vst [vmem:[#allocation2 + $0x15c] sm:$0xf] %v1113
      %1156 = vst [vmem:[#allocation2 + $0x180] sm:$0xf] %v1114
      %1157 = vst [vmem:[#allocation2 + $0x1a4] sm:$0xf] %v1115
      %1158 = vst [vmem:[#allocation2 + $0x1c8] sm:$0xf] %v1116
      %1159 = vst [vmem:[#allocation2 + $0x1ec] sm:$0xf] %v1117
      %1160 = vst [vmem:[#allocation2 + $0x210] sm:$0xf] %v1118
      %1161 = vst [vmem:[#allocation2 + $0x234] sm:$0xf] %v1119
      %1162 = vst [vmem:[#allocation2 + $0x258] sm:$0xf] %v1120
      %1163 = vst [vmem:[#allocation2 + $0x27c] sm:$0xf] %v1121
      %1164 = vst [vmem:[#allocation2 + $0x2a0] sm:$0xf] %v1122
      %1165 = vst [vmem:[#allocation2 + $0x2c4] sm:$0xf] %v1123
      %1166 = vst [vmem:[#allocation2 + $0x2e8] sm:$0xf] %v1124
      %1167 = vst [vmem:[#allocation2 + $0x30c] sm:$0xf] %v1125
      %1168 = vst [vmem:[#allocation2 + $0x330] sm:$0xf] %v1126
      %1169 = vst [vmem:[#allocation2 + $0x354] sm:$0xf] %v1127
      %1170 = vst [vmem:[#allocation2 + $0x378] sm:$0xf] %v1128
      %1171 = vst [vmem:[#allocation2 + $0x39c] sm:$0xf] %v1129
      %1172 = vst [vmem:[#allocation2 + $0x3c0] sm:$0xf] %v1130
      %1173 = vst [vmem:[#allocation2 + $0x3e4] sm:$0xf] %v1131
      %1174 = vst [vmem:[#allocation2 + $0x408] sm:$0xf] %v1132
      %1175 = vst [vmem:[#allocation2 + $0x42c] sm:$0xf] %v1133
      %1176 = vst [vmem:[#allocation2 + $0x450] sm:$0xf] %v1134
      %1177 = vst [vmem:[#allocation2 + $0x474] sm:$0xf] %v1135
      %1178 = vst [vmem:[#allocation2 + $0x498] sm:$0xf] %v1136
      %1179 = vst [vmem:[#allocation2 + $0x4bc] sm:$0xf] %v1137
      %1180 = vst [vmem:[#allocation2 + $0x4e0] sm:$0xf] %v1138
      %1181 = vst [vmem:[#allocation2 + $0x504] sm:$0xf] %v1139
      %1182 = vst [vmem:[#allocation2 + $0x528] sm:$0xf] %v1140
      %1183 = vst [vmem:[#allocation2 + $0x54c] sm:$0xf] %v1141
      %1184 = vst [vmem:[#allocation2 + $0x570] sm:$0xf] %v1142
      %1185 = vst [vmem:[#allocation2 + $0x594] sm:$0xf] %v1143
      %1186 = vst [vmem:[#allocation2 + $0x5b8] sm:$0xf] %v1144
      %1187 = vst [vmem:[#allocation2 + $0x5dc] sm:$0xf] %v1145
      %v1188 = vld [vmem:[%s300 + $0x2a] sm:$0xff]
      %v1189 = vld [vmem:[%s300 + $0x32] sm:$0xff]
      %v1190 = vld [vmem:[%s300 + $0x3a] sm:$0xff]
      %v1191 = vld [vmem:[%s300 + $0x42] sm:$0xff]
      %v1192 = vld [vmem:[%s300 + $0x4a] sm:$0xff]
      %v1193 = vld [vmem:[%s300 + $0x52] sm:$0xff]
      %v1194 = vld [vmem:[%s300 + $0x5a] sm:$0xff]
      %v1195 = vld [vmem:[%s300 + $0x62] sm:$0xff]
      %v1196 = vld [vmem:[%s300 + $0x6a] sm:$0xff]
      %v1197 = vld [vmem:[%s300 + $0x72] sm:$0xff]
      %v1198 = vld [vmem:[%s300 + $0x7a] sm:$0xff]
      %v1199 = vld [vmem:[%s300 + $0x82] sm:$0xff]
      %v1200 = vld [vmem:[%s300 + $0x8a] sm:$0xff]
      %v1201 = vld [vmem:[%s300 + $0x92] sm:$0xff]
      %v1202 = vld [vmem:[%s300 + $0x9a] sm:$0xff]
      %v1203 = vld [vmem:[%s300 + $0xa2] sm:$0xff]
      %v1204 = vld [vmem:[%s300 + $0xaa] sm:$0xff]
      %v1205 = vld [vmem:[%s300 + $0xb2] sm:$0xff]
      %v1206 = vld [vmem:[%s300 + $0xba] sm:$0xff]
      %v1207 = vld [vmem:[%s300 + $0xc2] sm:$0xff]
      %v1208 = vld [vmem:[%s300 + $0xca] sm:$0xff]
      %v1209 = vld [vmem:[%s300 + $0xd2] sm:$0xff]
      %v1210 = vld [vmem:[%s300 + $0xda] sm:$0xff]
      %v1211 = vld [vmem:[%s300 + $0xe2] sm:$0xff]
      %v1212 = vld [vmem:[%s300 + $0xea] sm:$0xff]
      %v1213 = vld [vmem:[%s300 + $0xf2] sm:$0xff]
      %v1214 = vld [vmem:[%s300 + $0xfa] sm:$0xff]
      %v1215 = vld [vmem:[%s300 + $0x102] sm:$0xff]
      %v1216 = vld [vmem:[%s300 + $0x10a] sm:$0xff]
      %v1217 = vld [vmem:[%s300 + $0x112] sm:$0xff]
      %v1218 = vld [vmem:[%s300 + $0x11a] sm:$0xff]
      %v1219 = vld [vmem:[%s300 + $0x122] sm:$0xff]
      %v1220 = vld [vmem:[%s300 + $0x12a] sm:$0xff]
      %v1221 = vld [vmem:[%s300 + $0x132] sm:$0xff]
      %v1222 = vld [vmem:[%s300 + $0x13a] sm:$0xff]
      %v1223 = vld [vmem:[%s300 + $0x142] sm:$0xff]
      %v1224 = vld [vmem:[%s300 + $0x14a] sm:$0xff]
      %v1225 = vld [vmem:[%s300 + $0x152] sm:$0xff]
      %v1226 = vld [vmem:[%s300 + $0x15a] sm:$0xff]
      %v1227 = vld [vmem:[%s300 + $0x162] sm:$0xff]
      %v1228 = vld [vmem:[%s300 + $0x16a] sm:$0xff]
      %v1229 = vld [vmem:[%s300 + $0x172] sm:$0xff]
      %v1230 = vpack.c.bf16 %v1188, %v1188
      %v1231 = vpack.c.bf16 %v1189, %v1189
      %v1232 = vpack.c.bf16 %v1190, %v1190
      %v1233 = vpack.c.bf16 %v1191, %v1191
      %v1234 = vpack.c.bf16 %v1192, %v1192
      %v1235 = vpack.c.bf16 %v1193, %v1193
      %v1236 = vpack.c.bf16 %v1194, %v1194
      %v1237 = vpack.c.bf16 %v1195, %v1195
      %v1238 = vpack.c.bf16 %v1196, %v1196
      %v1239 = vpack.c.bf16 %v1197, %v1197
      %v1240 = vpack.c.bf16 %v1198, %v1198
      %v1241 = vpack.c.bf16 %v1199, %v1199
      %v1242 = vpack.c.bf16 %v1200, %v1200
      %v1243 = vpack.c.bf16 %v1201, %v1201
      %v1244 = vpack.c.bf16 %v1202, %v1202
      %v1245 = vpack.c.bf16 %v1203, %v1203
      %v1246 = vpack.c.bf16 %v1204, %v1204
      %v1247 = vpack.c.bf16 %v1205, %v1205
      %v1248 = vpack.c.bf16 %v1206, %v1206
      %v1249 = vpack.c.bf16 %v1207, %v1207
      %v1250 = vpack.c.bf16 %v1208, %v1208
      %v1251 = vpack.c.bf16 %v1209, %v1209
      %v1252 = vpack.c.bf16 %v1210, %v1210
      %v1253 = vpack.c.bf16 %v1211, %v1211
      %v1254 = vpack.c.bf16 %v1212, %v1212
      %v1255 = vpack.c.bf16 %v1213, %v1213
      %v1256 = vpack.c.bf16 %v1214, %v1214
      %v1257 = vpack.c.bf16 %v1215, %v1215
      %v1258 = vpack.c.bf16 %v1216, %v1216
      %v1259 = vpack.c.bf16 %v1217, %v1217
      %v1260 = vpack.c.bf16 %v1218, %v1218
      %v1261 = vpack.c.bf16 %v1219, %v1219
      %v1262 = vpack.c.bf16 %v1220, %v1220
      %v1263 = vpack.c.bf16 %v1221, %v1221
      %v1264 = vpack.c.bf16 %v1222, %v1222
      %v1265 = vpack.c.bf16 %v1223, %v1223
      %v1266 = vpack.c.bf16 %v1224, %v1224
      %v1267 = vpack.c.bf16 %v1225, %v1225
      %v1268 = vpack.c.bf16 %v1226, %v1226
      %v1269 = vpack.c.bf16 %v1227, %v1227
      %v1270 = vpack.c.bf16 %v1228, %v1228
      %v1271 = vpack.c.bf16 %v1229, %v1229
      %1272 = vst [vmem:[#allocation2 + $0x1c] sm:$0xf] %v1230
      %1273 = vst [vmem:[#allocation2 + $0x40] sm:$0xf] %v1231
      %1274 = vst [vmem:[#allocation2 + $0x64] sm:$0xf] %v1232
      %1275 = vst [vmem:[#allocation2 + $0x88] sm:$0xf] %v1233
      %1276 = vst [vmem:[#allocation2 + $0xac] sm:$0xf] %v1234
      %1277 = vst [vmem:[#allocation2 + $0xd0] sm:$0xf] %v1235
      %1278 = vst [vmem:[#allocation2 + $0xf4] sm:$0xf] %v1236
      %1279 = vst [vmem:[#allocation2 + $0x118] sm:$0xf] %v1237
      %1280 = vst [vmem:[#allocation2 + $0x13c] sm:$0xf] %v1238
      %1281 = vst [vmem:[#allocation2 + $0x160] sm:$0xf] %v1239
      %1282 = vst [vmem:[#allocation2 + $0x184] sm:$0xf] %v1240
      %1283 = vst [vmem:[#allocation2 + $0x1a8] sm:$0xf] %v1241
      %1284 = vst [vmem:[#allocation2 + $0x1cc] sm:$0xf] %v1242
      %1285 = vst [vmem:[#allocation2 + $0x1f0] sm:$0xf] %v1243
      %1286 = vst [vmem:[#allocation2 + $0x214] sm:$0xf] %v1244
      %1287 = vst [vmem:[#allocation2 + $0x238] sm:$0xf] %v1245
      %1288 = vst [vmem:[#allocation2 + $0x25c] sm:$0xf] %v1246
      %1289 = vst [vmem:[#allocation2 + $0x280] sm:$0xf] %v1247
      %1290 = vst [vmem:[#allocation2 + $0x2a4] sm:$0xf] %v1248
      %1291 = vst [vmem:[#allocation2 + $0x2c8] sm:$0xf] %v1249
      %1292 = vst [vmem:[#allocation2 + $0x2ec] sm:$0xf] %v1250
      %1293 = vst [vmem:[#allocation2 + $0x310] sm:$0xf] %v1251
      %1294 = vst [vmem:[#allocation2 + $0x334] sm:$0xf] %v1252
      %1295 = vst [vmem:[#allocation2 + $0x358] sm:$0xf] %v1253
      %1296 = vst [vmem:[#allocation2 + $0x37c] sm:$0xf] %v1254
      %1297 = vst [vmem:[#allocation2 + $0x3a0] sm:$0xf] %v1255
      %1298 = vst [vmem:[#allocation2 + $0x3c4] sm:$0xf] %v1256
      %1299 = vst [vmem:[#allocation2 + $0x3e8] sm:$0xf] %v1257
      %1300 = vst [vmem:[#allocation2 + $0x40c] sm:$0xf] %v1258
      %1301 = vst [vmem:[#allocation2 + $0x430] sm:$0xf] %v1259
      %1302 = vst [vmem:[#allocation2 + $0x454] sm:$0xf] %v1260
      %1303 = vst [vmem:[#allocation2 + $0x478] sm:$0xf] %v1261
      %1304 = vst [vmem:[#allocation2 + $0x49c] sm:$0xf] %v1262
      %1305 = vst [vmem:[#allocation2 + $0x4c0] sm:$0xf] %v1263
      %1306 = vst [vmem:[#allocation2 + $0x4e4] sm:$0xf] %v1264
      %1307 = vst [vmem:[#allocation2 + $0x508] sm:$0xf] %v1265
      %1308 = vst [vmem:[#allocation2 + $0x52c] sm:$0xf] %v1266
      %1309 = vst [vmem:[#allocation2 + $0x550] sm:$0xf] %v1267
      %1310 = vst [vmem:[#allocation2 + $0x574] sm:$0xf] %v1268
      %1311 = vst [vmem:[#allocation2 + $0x598] sm:$0xf] %v1269
      %1312 = vst [vmem:[#allocation2 + $0x5bc] sm:$0xf] %v1270
      %1313 = vst [vmem:[#allocation2 + $0x5e0] sm:$0xf] %v1271
      %v1314 = vld [vmem:[%s300 + $0x2b] sm:$0xff]
      %v1315 = vld [vmem:[%s300 + $0x33] sm:$0xff]
      %v1316 = vld [vmem:[%s300 + $0x3b] sm:$0xff]
      %v1317 = vld [vmem:[%s300 + $0x43] sm:$0xff]
      %v1318 = vld [vmem:[%s300 + $0x4b] sm:$0xff]
      %v1319 = vld [vmem:[%s300 + $0x53] sm:$0xff]
      %v1320 = vld [vmem:[%s300 + $0x5b] sm:$0xff]
      %v1321 = vld [vmem:[%s300 + $0x63] sm:$0xff]
      %v1322 = vld [vmem:[%s300 + $0x6b] sm:$0xff]
      %v1323 = vld [vmem:[%s300 + $0x73] sm:$0xff]
      %v1324 = vld [vmem:[%s300 + $0x7b] sm:$0xff]
      %v1325 = vld [vmem:[%s300 + $0x83] sm:$0xff]
      %v1326 = vld [vmem:[%s300 + $0x8b] sm:$0xff]
      %v1327 = vld [vmem:[%s300 + $0x93] sm:$0xff]
      %v1328 = vld [vmem:[%s300 + $0x9b] sm:$0xff]
      %v1329 = vld [vmem:[%s300 + $0xa3] sm:$0xff]
      %v1330 = vld [vmem:[%s300 + $0xab] sm:$0xff]
      %v1331 = vld [vmem:[%s300 + $0xb3] sm:$0xff]
      %v1332 = vld [vmem:[%s300 + $0xbb] sm:$0xff]
      %v1333 = vld [vmem:[%s300 + $0xc3] sm:$0xff]
      %v1334 = vld [vmem:[%s300 + $0xcb] sm:$0xff]
      %v1335 = vld [vmem:[%s300 + $0xd3] sm:$0xff]
      %v1336 = vld [vmem:[%s300 + $0xdb] sm:$0xff]
      %v1337 = vld [vmem:[%s300 + $0xe3] sm:$0xff]
      %v1338 = vld [vmem:[%s300 + $0xeb] sm:$0xff]
      %v1339 = vld [vmem:[%s300 + $0xf3] sm:$0xff]
      %v1340 = vld [vmem:[%s300 + $0xfb] sm:$0xff]
      %v1341 = vld [vmem:[%s300 + $0x103] sm:$0xff]
      %v1342 = vld [vmem:[%s300 + $0x10b] sm:$0xff]
      %v1343 = vld [vmem:[%s300 + $0x113] sm:$0xff]
      %v1344 = vld [vmem:[%s300 + $0x11b] sm:$0xff]
      %v1345 = vld [vmem:[%s300 + $0x123] sm:$0xff]
      %v1346 = vld [vmem:[%s300 + $0x12b] sm:$0xff]
      %v1347 = vld [vmem:[%s300 + $0x133] sm:$0xff]
      %v1348 = vld [vmem:[%s300 + $0x13b] sm:$0xff]
      %v1349 = vld [vmem:[%s300 + $0x143] sm:$0xff]
      %v1350 = vld [vmem:[%s300 + $0x14b] sm:$0xff]
      %v1351 = vld [vmem:[%s300 + $0x153] sm:$0xff]
      %v1352 = vld [vmem:[%s300 + $0x15b] sm:$0xff]
      %v1353 = vld [vmem:[%s300 + $0x163] sm:$0xff]
      %v1354 = vld [vmem:[%s300 + $0x16b] sm:$0xff]
      %v1355 = vld [vmem:[%s300 + $0x173] sm:$0xff]
      %v1356 = vpack.c.bf16 %v1314, %v1314
      %v1357 = vpack.c.bf16 %v1315, %v1315
      %v1358 = vpack.c.bf16 %v1316, %v1316
      %v1359 = vpack.c.bf16 %v1317, %v1317
      %v1360 = vpack.c.bf16 %v1318, %v1318
      %v1361 = vpack.c.bf16 %v1319, %v1319
      %v1362 = vpack.c.bf16 %v1320, %v1320
      %v1363 = vpack.c.bf16 %v1321, %v1321
      %v1364 = vpack.c.bf16 %v1322, %v1322
      %v1365 = vpack.c.bf16 %v1323, %v1323
      %v1366 = vpack.c.bf16 %v1324, %v1324
      %v1367 = vpack.c.bf16 %v1325, %v1325
      %v1368 = vpack.c.bf16 %v1326, %v1326
      %v1369 = vpack.c.bf16 %v1327, %v1327
      %v1370 = vpack.c.bf16 %v1328, %v1328
      %v1371 = vpack.c.bf16 %v1329, %v1329
      %v1372 = vpack.c.bf16 %v1330, %v1330
      %v1373 = vpack.c.bf16 %v1331, %v1331
      %v1374 = vpack.c.bf16 %v1332, %v1332
      %v1375 = vpack.c.bf16 %v1333, %v1333
      %v1376 = vpack.c.bf16 %v1334, %v1334
      %v1377 = vpack.c.bf16 %v1335, %v1335
      %v1378 = vpack.c.bf16 %v1336, %v1336
      %v1379 = vpack.c.bf16 %v1337, %v1337
      %v1380 = vpack.c.bf16 %v1338, %v1338
      %v1381 = vpack.c.bf16 %v1339, %v1339
      %v1382 = vpack.c.bf16 %v1340, %v1340
      %v1383 = vpack.c.bf16 %v1341, %v1341
      %v1384 = vpack.c.bf16 %v1342, %v1342
      %v1385 = vpack.c.bf16 %v1343, %v1343
      %v1386 = vpack.c.bf16 %v1344, %v1344
      %v1387 = vpack.c.bf16 %v1345, %v1345
      %v1388 = vpack.c.bf16 %v1346, %v1346
      %v1389 = vpack.c.bf16 %v1347, %v1347
      %v1390 = vpack.c.bf16 %v1348, %v1348
      %v1391 = vpack.c.bf16 %v1349, %v1349
      %v1392 = vpack.c.bf16 %v1350, %v1350
      %v1393 = vpack.c.bf16 %v1351, %v1351
      %v1394 = vpack.c.bf16 %v1352, %v1352
      %v1395 = vpack.c.bf16 %v1353, %v1353
      %v1396 = vpack.c.bf16 %v1354, %v1354
      %v1397 = vpack.c.bf16 %v1355, %v1355
      %1398 = vst [vmem:[#allocation2 + $0x20] sm:$0xf] %v1356
      %1399 = vst [vmem:[#allocation2 + $0x44] sm:$0xf] %v1357
      %1400 = vst [vmem:[#allocation2 + $0x68] sm:$0xf] %v1358
      %1401 = vst [vmem:[#allocation2 + $0x8c] sm:$0xf] %v1359
      %1402 = vst [vmem:[#allocation2 + $0xb0] sm:$0xf] %v1360
      %1403 = vst [vmem:[#allocation2 + $0xd4] sm:$0xf] %v1361
      %1404 = vst [vmem:[#allocation2 + $0xf8] sm:$0xf] %v1362
      %1405 = vst [vmem:[#allocation2 + $0x11c] sm:$0xf] %v1363
      %1406 = vst [vmem:[#allocation2 + $0x140] sm:$0xf] %v1364
      %1407 = vst [vmem:[#allocation2 + $0x164] sm:$0xf] %v1365
      %1408 = vst [vmem:[#allocation2 + $0x188] sm:$0xf] %v1366
      %1409 = vst [vmem:[#allocation2 + $0x1ac] sm:$0xf] %v1367
      %1410 = vst [vmem:[#allocation2 + $0x1d0] sm:$0xf] %v1368
      %1411 = vst [vmem:[#allocation2 + $0x1f4] sm:$0xf] %v1369
      %1412 = vst [vmem:[#allocation2 + $0x218] sm:$0xf] %v1370
      %1413 = vst [vmem:[#allocation2 + $0x23c] sm:$0xf] %v1371
      %1414 = vst [vmem:[#allocation2 + $0x260] sm:$0xf] %v1372
      %1415 = vst [vmem:[#allocation2 + $0x284] sm:$0xf] %v1373
      %1416 = vst [vmem:[#allocation2 + $0x2a8] sm:$0xf] %v1374
      %1417 = vst [vmem:[#allocation2 + $0x2cc] sm:$0xf] %v1375
      %1418 = vst [vmem:[#allocation2 + $0x2f0] sm:$0xf] %v1376
      %1419 = vst [vmem:[#allocation2 + $0x314] sm:$0xf] %v1377
      %1420 = vst [vmem:[#allocation2 + $0x338] sm:$0xf] %v1378
      %1421 = vst [vmem:[#allocation2 + $0x35c] sm:$0xf] %v1379
      %1422 = vst [vmem:[#allocation2 + $0x380] sm:$0xf] %v1380
      %1423 = vst [vmem:[#allocation2 + $0x3a4] sm:$0xf] %v1381
      %1424 = vst [vmem:[#allocation2 + $0x3c8] sm:$0xf] %v1382
      %1425 = vst [vmem:[#allocation2 + $0x3ec] sm:$0xf] %v1383
      %1426 = vst [vmem:[#allocation2 + $0x410] sm:$0xf] %v1384
      %1427 = vst [vmem:[#allocation2 + $0x434] sm:$0xf] %v1385
      %1428 = vst [vmem:[#allocation2 + $0x458] sm:$0xf] %v1386
      %1429 = vst [vmem:[#allocation2 + $0x47c] sm:$0xf] %v1387
      %1430 = vst [vmem:[#allocation2 + $0x4a0] sm:$0xf] %v1388
      %1431 = vst [vmem:[#allocation2 + $0x4c4] sm:$0xf] %v1389
      %1432 = vst [vmem:[#allocation2 + $0x4e8] sm:$0xf] %v1390
      %1433 = vst [vmem:[#allocation2 + $0x50c] sm:$0xf] %v1391
      %1434 = vst [vmem:[#allocation2 + $0x530] sm:$0xf] %v1392
      %1435 = vst [vmem:[#allocation2 + $0x554] sm:$0xf] %v1393
      %1436 = vst [vmem:[#allocation2 + $0x578] sm:$0xf] %v1394
      %1437 = vst [vmem:[#allocation2 + $0x59c] sm:$0xf] %v1395
      %1438 = vst [vmem:[#allocation2 + $0x5c0] sm:$0xf] %v1396
      %1439 = vst [vmem:[#allocation2 + $0x5e4] sm:$0xf] %v1397
      %v1440 = vld [vmem:[#allocation2] sm:$0xff]
      %v1441 = vld [vmem:[#allocation2 + $0x8] sm:$0xff]
      %v1442 = vld [vmem:[#allocation2 + $0x10] sm:$0xff]
      %v1443 = vld [vmem:[#allocation2 + $0x18] sm:$0xff]
      %v1444 = vld [vmem:[#allocation2 + $0x20] sm:$0xf]
      %v1445 = vld [vmem:[#allocation2 + $0x24] sm:$0xff]
      %v1446 = vld [vmem:[#allocation2 + $0x2c] sm:$0xff]
      %v1447 = vld [vmem:[#allocation2 + $0x34] sm:$0xff]
      %v1448 = vld [vmem:[#allocation2 + $0x3c] sm:$0xff]
      %v1449 = vld [vmem:[#allocation2 + $0x44] sm:$0xf]
      %v1450 = vld [vmem:[#allocation2 + $0x48] sm:$0xff]
      %v1451 = vld [vmem:[#allocation2 + $0x50] sm:$0xff]
      %v1452 = vld [vmem:[#allocation2 + $0x58] sm:$0xff]
      %v1453 = vld [vmem:[#allocation2 + $0x60] sm:$0xff]
      %v1454 = vld [vmem:[#allocation2 + $0x68] sm:$0xf]
      %v1455 = vld [vmem:[#allocation2 + $0x6c] sm:$0xff]
      %v1456 = vld [vmem:[#allocation2 + $0x74] sm:$0xff]
      %v1457 = vld [vmem:[#allocation2 + $0x7c] sm:$0xff]
      %v1458 = vld [vmem:[#allocation2 + $0x84] sm:$0xff]
      %v1459 = vld [vmem:[#allocation2 + $0x8c] sm:$0xf]
      %v1460 = vld [vmem:[#allocation2 + $0x90] sm:$0xff]
      %v1461 = vld [vmem:[#allocation2 + $0x98] sm:$0xff]
      %v1462 = vld [vmem:[#allocation2 + $0xa0] sm:$0xff]
      %v1463 = vld [vmem:[#allocation2 + $0xa8] sm:$0xff]
      %v1464 = vld [vmem:[#allocation2 + $0xb0] sm:$0xf]
      %v1465 = vld [vmem:[#allocation2 + $0xb4] sm:$0xff]
      %v1466 = vld [vmem:[#allocation2 + $0xbc] sm:$0xff]
      %v1467 = vld [vmem:[#allocation2 + $0xc4] sm:$0xff]
      %v1468 = vld [vmem:[#allocation2 + $0xcc] sm:$0xff]
      %v1469 = vld [vmem:[#allocation2 + $0xd4] sm:$0xf]
      %v1470 = vld [vmem:[#allocation2 + $0xd8] sm:$0xff]
      %v1471 = vld [vmem:[#allocation2 + $0xe0] sm:$0xff]
      %v1472 = vld [vmem:[#allocation2 + $0xe8] sm:$0xff]
      %v1473 = vld [vmem:[#allocation2 + $0xf0] sm:$0xff]
      %v1474 = vld [vmem:[#allocation2 + $0xf8] sm:$0xf]
      %v1475 = vld [vmem:[#allocation2 + $0xfc] sm:$0xff]
      %v1476 = vld [vmem:[#allocation2 + $0x104] sm:$0xff]
      %v1477 = vld [vmem:[#allocation2 + $0x10c] sm:$0xff]
      %v1478 = vld [vmem:[#allocation2 + $0x114] sm:$0xff]
      %v1479 = vld [vmem:[#allocation2 + $0x11c] sm:$0xf]
      %v1480 = vld [vmem:[#allocation2 + $0x120] sm:$0xff]
      %v1481 = vld [vmem:[#allocation2 + $0x128] sm:$0xff]
      %v1482 = vld [vmem:[#allocation2 + $0x130] sm:$0xff]
      %v1483 = vld [vmem:[#allocation2 + $0x138] sm:$0xff]
      %v1484 = vld [vmem:[#allocation2 + $0x140] sm:$0xf]
      %v1485 = vld [vmem:[#allocation2 + $0x144] sm:$0xff]
      %v1486 = vld [vmem:[#allocation2 + $0x14c] sm:$0xff]
      %v1487 = vld [vmem:[#allocation2 + $0x154] sm:$0xff]
      %v1488 = vld [vmem:[#allocation2 + $0x15c] sm:$0xff]
      %v1489 = vld [vmem:[#allocation2 + $0x164] sm:$0xf]
      %v1490 = vld [vmem:[#allocation2 + $0x168] sm:$0xff]
      %v1491 = vld [vmem:[#allocation2 + $0x170] sm:$0xff]
      %v1492 = vld [vmem:[#allocation2 + $0x178] sm:$0xff]
      %v1493 = vld [vmem:[#allocation2 + $0x180] sm:$0xff]
      %v1494 = vld [vmem:[#allocation2 + $0x188] sm:$0xf]
      %v1495 = vld [vmem:[#allocation2 + $0x18c] sm:$0xff]
      %v1496 = vld [vmem:[#allocation2 + $0x194] sm:$0xff]
      %v1497 = vld [vmem:[#allocation2 + $0x19c] sm:$0xff]
      %v1498 = vld [vmem:[#allocation2 + $0x1a4] sm:$0xff]
      %v1499 = vld [vmem:[#allocation2 + $0x1ac] sm:$0xf]
      %v1500 = vld [vmem:[#allocation2 + $0x1b0] sm:$0xff]
      %v1501 = vld [vmem:[#allocation2 + $0x1b8] sm:$0xff]
      %v1502 = vld [vmem:[#allocation2 + $0x1c0] sm:$0xff]
      %v1503 = vld [vmem:[#allocation2 + $0x1c8] sm:$0xff]
      %v1504 = vld [vmem:[#allocation2 + $0x1d0] sm:$0xf]
      %v1505 = vld [vmem:[#allocation2 + $0x1d4] sm:$0xff]
      %v1506 = vld [vmem:[#allocation2 + $0x1dc] sm:$0xff]
      %v1507 = vld [vmem:[#allocation2 + $0x1e4] sm:$0xff]
      %v1508 = vld [vmem:[#allocation2 + $0x1ec] sm:$0xff]
      %v1509 = vld [vmem:[#allocation2 + $0x1f4] sm:$0xf]
      %v1510 = vld [vmem:[#allocation2 + $0x1f8] sm:$0xff]
      %v1511 = vld [vmem:[#allocation2 + $0x200] sm:$0xff]
      %v1512 = vld [vmem:[#allocation2 + $0x208] sm:$0xff]
      %v1513 = vld [vmem:[#allocation2 + $0x210] sm:$0xff]
      %v1514 = vld [vmem:[#allocation2 + $0x218] sm:$0xf]
      %v1515 = vld [vmem:[#allocation2 + $0x21c] sm:$0xff]
      %v1516 = vld [vmem:[#allocation2 + $0x224] sm:$0xff]
      %v1517 = vld [vmem:[#allocation2 + $0x22c] sm:$0xff]
      %v1518 = vld [vmem:[#allocation2 + $0x234] sm:$0xff]
      %v1519 = vld [vmem:[#allocation2 + $0x23c] sm:$0xf]
      %v1520 = vld [vmem:[#allocation2 + $0x240] sm:$0xff]
      %v1521 = vld [vmem:[#allocation2 + $0x248] sm:$0xff]
      %v1522 = vld [vmem:[#allocation2 + $0x250] sm:$0xff]
      %v1523 = vld [vmem:[#allocation2 + $0x258] sm:$0xff]
      %v1524 = vld [vmem:[#allocation2 + $0x260] sm:$0xf]
      %v1525 = vld [vmem:[#allocation2 + $0x264] sm:$0xff]
      %v1526 = vld [vmem:[#allocation2 + $0x26c] sm:$0xff]
      %v1527 = vld [vmem:[#allocation2 + $0x274] sm:$0xff]
      %v1528 = vld [vmem:[#allocation2 + $0x27c] sm:$0xff]
      %v1529 = vld [vmem:[#allocation2 + $0x284] sm:$0xf]
      %v1530 = vld [vmem:[#allocation2 + $0x288] sm:$0xff]
      %v1531 = vld [vmem:[#allocation2 + $0x290] sm:$0xff]
      %v1532 = vld [vmem:[#allocation2 + $0x298] sm:$0xff]
      %v1533 = vld [vmem:[#allocation2 + $0x2a0] sm:$0xff]
      %v1534 = vld [vmem:[#allocation2 + $0x2a8] sm:$0xf]
      %v1535 = vld [vmem:[#allocation2 + $0x2ac] sm:$0xff]
      %v1536 = vld [vmem:[#allocation2 + $0x2b4] sm:$0xff]
      %v1537 = vld [vmem:[#allocation2 + $0x2bc] sm:$0xff]
      %v1538 = vld [vmem:[#allocation2 + $0x2c4] sm:$0xff]
      %v1539 = vld [vmem:[#allocation2 + $0x2cc] sm:$0xf]
      %v1540 = vld [vmem:[#allocation2 + $0x2d0] sm:$0xff]
      %v1541 = vld [vmem:[#allocation2 + $0x2d8] sm:$0xff]
      %v1542 = vld [vmem:[#allocation2 + $0x2e0] sm:$0xff]
      %v1543 = vld [vmem:[#allocation2 + $0x2e8] sm:$0xff]
      %v1544 = vld [vmem:[#allocation2 + $0x2f0] sm:$0xf]
      %v1545 = vld [vmem:[#allocation2 + $0x2f4] sm:$0xff]
      %v1546 = vld [vmem:[#allocation2 + $0x2fc] sm:$0xff]
      %v1547 = vld [vmem:[#allocation2 + $0x304] sm:$0xff]
      %v1548 = vld [vmem:[#allocation2 + $0x30c] sm:$0xff]
      %v1549 = vld [vmem:[#allocation2 + $0x314] sm:$0xf]
      %v1550 = vld [vmem:[#allocation2 + $0x318] sm:$0xff]
      %v1551 = vld [vmem:[#allocation2 + $0x320] sm:$0xff]
      %v1552 = vld [vmem:[#allocation2 + $0x328] sm:$0xff]
      %v1553 = vld [vmem:[#allocation2 + $0x330] sm:$0xff]
      %v1554 = vld [vmem:[#allocation2 + $0x338] sm:$0xf]
      %v1555 = vld [vmem:[#allocation2 + $0x33c] sm:$0xff]
      %v1556 = vld [vmem:[#allocation2 + $0x344] sm:$0xff]
      %v1557 = vld [vmem:[#allocation2 + $0x34c] sm:$0xff]
      %v1558 = vld [vmem:[#allocation2 + $0x354] sm:$0xff]
      %v1559 = vld [vmem:[#allocation2 + $0x35c] sm:$0xf]
      %v1560 = vld [vmem:[#allocation2 + $0x360] sm:$0xff]
      %v1561 = vld [vmem:[#allocation2 + $0x368] sm:$0xff]
      %v1562 = vld [vmem:[#allocation2 + $0x370] sm:$0xff]
      %v1563 = vld [vmem:[#allocation2 + $0x378] sm:$0xff]
      %v1564 = vld [vmem:[#allocation2 + $0x380] sm:$0xf]
      %v1565 = vld [vmem:[#allocation2 + $0x384] sm:$0xff]
      %v1566 = vld [vmem:[#allocation2 + $0x38c] sm:$0xff]
      %v1567 = vld [vmem:[#allocation2 + $0x394] sm:$0xff]
      %v1568 = vld [vmem:[#allocation2 + $0x39c] sm:$0xff]
      %v1569 = vld [vmem:[#allocation2 + $0x3a4] sm:$0xf]
      %v1570 = vld [vmem:[#allocation2 + $0x3a8] sm:$0xff]
      %v1571 = vld [vmem:[#allocation2 + $0x3b0] sm:$0xff]
      %v1572 = vld [vmem:[#allocation2 + $0x3b8] sm:$0xff]
      %v1573 = vld [vmem:[#allocation2 + $0x3c0] sm:$0xff]
      %v1574 = vld [vmem:[#allocation2 + $0x3c8] sm:$0xf]
      %v1575 = vld [vmem:[#allocation2 + $0x3cc] sm:$0xff]
      %v1576 = vld [vmem:[#allocation2 + $0x3d4] sm:$0xff]
      %v1577 = vld [vmem:[#allocation2 + $0x3dc] sm:$0xff]
      %v1578 = vld [vmem:[#allocation2 + $0x3e4] sm:$0xff]
      %v1579 = vld [vmem:[#allocation2 + $0x3ec] sm:$0xf]
      %v1580 = vld [vmem:[#allocation2 + $0x3f0] sm:$0xff]
      %v1581 = vld [vmem:[#allocation2 + $0x3f8] sm:$0xff]
      %v1582 = vld [vmem:[#allocation2 + $0x400] sm:$0xff]
      %v1583 = vld [vmem:[#allocation2 + $0x408] sm:$0xff]
      %v1584 = vld [vmem:[#allocation2 + $0x410] sm:$0xf]
      %v1585 = vld [vmem:[#allocation2 + $0x414] sm:$0xff]
      %v1586 = vld [vmem:[#allocation2 + $0x41c] sm:$0xff]
      %v1587 = vld [vmem:[#allocation2 + $0x424] sm:$0xff]
      %v1588 = vld [vmem:[#allocation2 + $0x42c] sm:$0xff]
      %v1589 = vld [vmem:[#allocation2 + $0x434] sm:$0xf]
      %v1590 = vld [vmem:[#allocation2 + $0x438] sm:$0xff]
      %v1591 = vld [vmem:[#allocation2 + $0x440] sm:$0xff]
      %v1592 = vld [vmem:[#allocation2 + $0x448] sm:$0xff]
      %v1593 = vld [vmem:[#allocation2 + $0x450] sm:$0xff]
      %v1594 = vld [vmem:[#allocation2 + $0x458] sm:$0xf]
      %v1595 = vld [vmem:[#allocation2 + $0x45c] sm:$0xff]
      %v1596 = vld [vmem:[#allocation2 + $0x464] sm:$0xff]
      %v1597 = vld [vmem:[#allocation2 + $0x46c] sm:$0xff]
      %v1598 = vld [vmem:[#allocation2 + $0x474] sm:$0xff]
      %v1599 = vld [vmem:[#allocation2 + $0x47c] sm:$0xf]
      %v1600 = vld [vmem:[#allocation2 + $0x480] sm:$0xff]
      %v1601 = vld [vmem:[#allocation2 + $0x488] sm:$0xff]
      %v1602 = vld [vmem:[#allocation2 + $0x490] sm:$0xff]
      %v1603 = vld [vmem:[#allocation2 + $0x498] sm:$0xff]
      %v1604 = vld [vmem:[#allocation2 + $0x4a0] sm:$0xf]
      %v1605 = vld [vmem:[#allocation2 + $0x4a4] sm:$0xff]
      %v1606 = vld [vmem:[#allocation2 + $0x4ac] sm:$0xff]
      %v1607 = vld [vmem:[#allocation2 + $0x4b4] sm:$0xff]
      %v1608 = vld [vmem:[#allocation2 + $0x4bc] sm:$0xff]
      %v1609 = vld [vmem:[#allocation2 + $0x4c4] sm:$0xf]
      %v1610 = vld [vmem:[#allocation2 + $0x4c8] sm:$0xff]
      %v1611 = vld [vmem:[#allocation2 + $0x4d0] sm:$0xff]
      %v1612 = vld [vmem:[#allocation2 + $0x4d8] sm:$0xff]
      %v1613 = vld [vmem:[#allocation2 + $0x4e0] sm:$0xff]
      %v1614 = vld [vmem:[#allocation2 + $0x4e8] sm:$0xf]
      %v1615 = vld [vmem:[#allocation2 + $0x4ec] sm:$0xff]
      %v1616 = vld [vmem:[#allocation2 + $0x4f4] sm:$0xff]
      %v1617 = vld [vmem:[#allocation2 + $0x4fc] sm:$0xff]
      %v1618 = vld [vmem:[#allocation2 + $0x504] sm:$0xff]
      %v1619 = vld [vmem:[#allocation2 + $0x50c] sm:$0xf]
      %v1620 = vld [vmem:[#allocation2 + $0x510] sm:$0xff]
      %v1621 = vld [vmem:[#allocation2 + $0x518] sm:$0xff]
      %v1622 = vld [vmem:[#allocation2 + $0x520] sm:$0xff]
      %v1623 = vld [vmem:[#allocation2 + $0x528] sm:$0xff]
      %v1624 = vld [vmem:[#allocation2 + $0x530] sm:$0xf]
      %v1625 = vld [vmem:[#allocation2 + $0x534] sm:$0xff]
      %v1626 = vld [vmem:[#allocation2 + $0x53c] sm:$0xff]
      %v1627 = vld [vmem:[#allocation2 + $0x544] sm:$0xff]
      %v1628 = vld [vmem:[#allocation2 + $0x54c] sm:$0xff]
      %v1629 = vld [vmem:[#allocation2 + $0x554] sm:$0xf]
      %v1630 = vld [vmem:[#allocation2 + $0x558] sm:$0xff]
      %v1631 = vld [vmem:[#allocation2 + $0x560] sm:$0xff]
      %v1632 = vld [vmem:[#allocation2 + $0x568] sm:$0xff]
      %v1633 = vld [vmem:[#allocation2 + $0x570] sm:$0xff]
      %v1634 = vld [vmem:[#allocation2 + $0x578] sm:$0xf]
      %v1635 = vld [vmem:[#allocation2 + $0x57c] sm:$0xff]
      %v1636 = vld [vmem:[#allocation2 + $0x584] sm:$0xff]
      %v1637 = vld [vmem:[#allocation2 + $0x58c] sm:$0xff]
      %v1638 = vld [vmem:[#allocation2 + $0x594] sm:$0xff]
      %v1639 = vld [vmem:[#allocation2 + $0x59c] sm:$0xf]
      %v1640 = vld [vmem:[#allocation2 + $0x5a0] sm:$0xff]
      %v1641 = vld [vmem:[#allocation2 + $0x5a8] sm:$0xff]
      %v1642 = vld [vmem:[#allocation2 + $0x5b0] sm:$0xff]
      %v1643 = vld [vmem:[#allocation2 + $0x5b8] sm:$0xff]
      %v1644 = vld [vmem:[#allocation2 + $0x5c0] sm:$0xf]
      %v1645 = vld [vmem:[#allocation2 + $0x5c4] sm:$0xff]
      %v1646 = vld [vmem:[#allocation2 + $0x5cc] sm:$0xff]
      %v1647 = vld [vmem:[#allocation2 + $0x5d4] sm:$0xff]
      %v1648 = vld [vmem:[#allocation2 + $0x5dc] sm:$0xff]
      %v1649 = vld [vmem:[#allocation2 + $0x5e4] sm:$0xf]
      %v1650 = vld [vmem:[%s1] sm:$0xf]
      %v1651 = vld [vmem:[%s1 + $0x4] sm:$0xf]
      %v1652 = vld [vmem:[%s1 + $0x8] sm:$0xf]
      %v1653 = vld [vmem:[%s1 + $0xc] sm:$0xf]
      %v1654 = vld [vmem:[%s1 + $0x10] sm:$0xf]
      %v1655 = vld [vmem:[%s1 + $0x14] sm:$0xf]
      %v1656 = vld [vmem:[%s1 + $0x18] sm:$0xf]
      %v1657 = vld [vmem:[%s1 + $0x1c] sm:$0xf]
      %v1658 = vld [vmem:[%s1 + $0x20] sm:$0xf]
      %v1659 = vld [vmem:[%s1 + $0x24] sm:$0xf]
      %v1660 = vld [vmem:[%s1 + $0x28] sm:$0xf]
      %v1661 = vld [vmem:[%s1 + $0x2c] sm:$0xf]
      %v1662 = vld [vmem:[%s1 + $0x30] sm:$0xf]
      %v1663 = vld [vmem:[%s1 + $0x34] sm:$0xf]
      %v1664 = vld [vmem:[%s1 + $0x38] sm:$0xf]
      %v1665 = vld [vmem:[%s1 + $0x3c] sm:$0xf]
      %v1666 = vld [vmem:[%s1 + $0x40] sm:$0xf]
      %v1667 = vld [vmem:[%s1 + $0x44] sm:$0xf]
      %v1668 = vld [vmem:[%s1 + $0x48] sm:$0xf]
      %v1669 = vld [vmem:[%s1 + $0x4c] sm:$0xf]
      %v1670 = vld [vmem:[%s1 + $0x50] sm:$0xf]
      %v1671 = vld [vmem:[%s1 + $0x54] sm:$0xf]
      %v1672 = vld [vmem:[%s1 + $0x58] sm:$0xf]
      %v1673 = vld [vmem:[%s1 + $0x5c] sm:$0xf]
      %v1674 = vld [vmem:[%s1 + $0x60] sm:$0xf]
      %v1675 = vld [vmem:[%s1 + $0x64] sm:$0xf]
      %v1676 = vld [vmem:[%s1 + $0x68] sm:$0xf]
      %v1677 = vld [vmem:[%s1 + $0x6c] sm:$0xf]
      %v1678 = vld [vmem:[%s1 + $0x70] sm:$0xf]
      %v1679 = vld [vmem:[%s1 + $0x74] sm:$0xf]
      %v1680 = vld [vmem:[%s1 + $0x78] sm:$0xf]
      %v1681 = vld [vmem:[%s1 + $0x7c] sm:$0xf]
      %v1682 = vld [vmem:[%s1 + $0x80] sm:$0xf]
      %v1683 = vld [vmem:[%s1 + $0x84] sm:$0xf]
      %v1684 = vld [vmem:[%s1 + $0x88] sm:$0xf]
      %v1685 = vld [vmem:[%s1 + $0x8c] sm:$0xf]
      %v1686 = vld [vmem:[%s1 + $0x90] sm:$0xf]
      %v1687 = vld [vmem:[%s1 + $0x94] sm:$0xf]
      %v1688 = vld [vmem:[%s1 + $0x98] sm:$0xf]
      %v1689 = vld [vmem:[%s1 + $0x9c] sm:$0xf]
      %v1690 = vld [vmem:[%s1 + $0xa0] sm:$0xf]
      %v1691 = vld [vmem:[%s1 + $0xa4] sm:$0xf]
      %v1692 = vld [vmem:[%s1 + $0xa8] sm:$0xf]
      %v1693 = vld [vmem:[%s1 + $0xac] sm:$0xf]
      %v1694 = vld [vmem:[%s1 + $0xb0] sm:$0xf]
      %v1695 = vld [vmem:[%s1 + $0xb4] sm:$0xf]
      %v1696 = vld [vmem:[%s1 + $0xb8] sm:$0xf]
      %v1697 = vld [vmem:[%s1 + $0xbc] sm:$0xf]
      %v1698 = vld [vmem:[%s1 + $0xc0] sm:$0xf]
      %v1699 = vld [vmem:[%s1 + $0xc4] sm:$0xf]
      %v1700 = vld [vmem:[%s1 + $0xc8] sm:$0xf]
      %v1701 = vld [vmem:[%s1 + $0xcc] sm:$0xf]
      %v1702 = vld [vmem:[%s1 + $0xd0] sm:$0xf]
      %v1703 = vld [vmem:[%s1 + $0xd4] sm:$0xf]
      %v1704 = vld [vmem:[%s1 + $0xd8] sm:$0xf]
      %v1705 = vld [vmem:[%s1 + $0xdc] sm:$0xf]
      %v1706 = vld [vmem:[%s1 + $0xe0] sm:$0xf]
      %v1707 = vld [vmem:[%s1 + $0xe4] sm:$0xf]
      %v1708 = vld [vmem:[%s1 + $0xe8] sm:$0xf]
      %v1709 = vld [vmem:[%s1 + $0xec] sm:$0xf]
      %v1710 = vld [vmem:[%s1 + $0xf0] sm:$0xf]
      %v1711 = vld [vmem:[%s1 + $0xf4] sm:$0xf]
      %v1712 = vld [vmem:[%s1 + $0xf8] sm:$0xf]
      %v1713 = vld [vmem:[%s1 + $0xfc] sm:$0xf]
      %v1714 = vld [vmem:[%s1 + $0x100] sm:$0xf]
      %v1715 = vld [vmem:[%s1 + $0x104] sm:$0xf]
      %v1716 = vld [vmem:[%s1 + $0x108] sm:$0xf]
      %v1717 = vld [vmem:[%s1 + $0x10c] sm:$0xf]
      %v1718 = vld [vmem:[%s1 + $0x110] sm:$0xf]
      %v1719 = vld [vmem:[%s1 + $0x114] sm:$0xf]
      %v1720 = vld [vmem:[%s1 + $0x118] sm:$0xf]
      %v1721 = vld [vmem:[%s1 + $0x11c] sm:$0xf]
      %v1722 = vld [vmem:[%s1 + $0x120] sm:$0xf]
      %v1723 = vld [vmem:[%s1 + $0x124] sm:$0xf]
      %v1724 = vld [vmem:[%s1 + $0x128] sm:$0xf]
      %v1725 = vld [vmem:[%s1 + $0x12c] sm:$0xf]
      %v1726 = vld [vmem:[%s1 + $0x130] sm:$0xf]
      %v1727 = vld [vmem:[%s1 + $0x134] sm:$0xf]
      %v1728 = vld [vmem:[%s1 + $0x138] sm:$0xf]
      %v1729 = vld [vmem:[%s1 + $0x13c] sm:$0xf]
      %v1730 = vld [vmem:[%s1 + $0x140] sm:$0xf]
      %v1731 = vld [vmem:[%s1 + $0x144] sm:$0xf]
      %v1732 = vld [vmem:[%s1 + $0x148] sm:$0xf]
      %v1733 = vld [vmem:[%s1 + $0x14c] sm:$0xf]
      %v1734 = vld [vmem:[%s1 + $0x150] sm:$0xf]
      %v1735 = vld [vmem:[%s1 + $0x154] sm:$0xf]
      %v1736 = vld [vmem:[%s1 + $0x158] sm:$0xf]
      %v1737 = vld [vmem:[%s1 + $0x15c] sm:$0xf]
      %v1738 = vld [vmem:[%s1 + $0x160] sm:$0xf]
      %v1739 = vld [vmem:[%s1 + $0x164] sm:$0xf]
      %v1740 = vld [vmem:[%s1 + $0x168] sm:$0xf]
      %v1741 = vld [vmem:[%s1 + $0x16c] sm:$0xf]
      %v1742 = vld [vmem:[%s1 + $0x170] sm:$0xf]
      %v1743 = vld [vmem:[%s1 + $0x174] sm:$0xf]
      %v1744 = vld [vmem:[%s1 + $0x178] sm:$0xf]
      %v1745 = vld [vmem:[%s1 + $0x17c] sm:$0xf]
      %v1746 = vld [vmem:[%s1 + $0x180] sm:$0xf]
      %v1747 = vld [vmem:[%s1 + $0x184] sm:$0xf]
      %v1748 = vld [vmem:[%s1 + $0x188] sm:$0xf]
      %v1749 = vld [vmem:[%s1 + $0x18c] sm:$0xf]
      %v1750 = vld [vmem:[%s1 + $0x190] sm:$0xf]
      %v1751 = vld [vmem:[%s1 + $0x194] sm:$0xf]
      %v1752 = vld [vmem:[%s1 + $0x198] sm:$0xf]
      %v1753 = vld [vmem:[%s1 + $0x19c] sm:$0xf]
      %v1754 = vld [vmem:[%s1 + $0x1a0] sm:$0xf]
      %v1755 = vld [vmem:[%s1 + $0x1a4] sm:$0xf]
      %v1756 = vld [vmem:[%s1 + $0x1a8] sm:$0xf]
      %v1757 = vld [vmem:[%s1 + $0x1ac] sm:$0xf]
      %v1758 = vld [vmem:[%s1 + $0x1b0] sm:$0xf]
      %v1759 = vld [vmem:[%s1 + $0x1b4] sm:$0xf]
      %v1760 = vld [vmem:[%s1 + $0x1b8] sm:$0xf]
      %v1761 = vld [vmem:[%s1 + $0x1bc] sm:$0xf]
      %v1762 = vld [vmem:[%s1 + $0x1c0] sm:$0xf]
      %v1763 = vld [vmem:[%s1 + $0x1c4] sm:$0xf]
      %v1764 = vld [vmem:[%s1 + $0x1c8] sm:$0xf]
      %v1765 = vld [vmem:[%s1 + $0x1cc] sm:$0xf]
      %v1766 = vld [vmem:[%s1 + $0x1d0] sm:$0xf]
      %v1767 = vld [vmem:[%s1 + $0x1d4] sm:$0xf]
      %v1768 = vld [vmem:[%s1 + $0x1d8] sm:$0xf]
      %v1769 = vld [vmem:[%s1 + $0x1dc] sm:$0xf]
      %v1770 = vld [vmem:[%s1 + $0x1e0] sm:$0xf]
      %v1771 = vld [vmem:[%s1 + $0x1e4] sm:$0xf]
      %v1772 = vld [vmem:[%s1 + $0x1e8] sm:$0xf]
      %v1773 = vld [vmem:[%s1 + $0x1ec] sm:$0xf]
      %v1774 = vld [vmem:[%s1 + $0x1f0] sm:$0xf]
      %v1775 = vld [vmem:[%s1 + $0x1f4] sm:$0xf]
      %v1776 = vld [vmem:[%s1 + $0x1f8] sm:$0xf]
      %v1777 = vld [vmem:[%s1 + $0x1fc] sm:$0xf]
      %v1778 = vld [vmem:[%s1 + $0x200] sm:$0xf]
      %v1779 = vld [vmem:[%s1 + $0x204] sm:$0xf]
      %v1780 = vld [vmem:[%s1 + $0x208] sm:$0xf]
      %v1781 = vld [vmem:[%s1 + $0x20c] sm:$0xf]
      %v1782 = vld [vmem:[%s1 + $0x210] sm:$0xf]
      %v1783 = vld [vmem:[%s1 + $0x214] sm:$0xf]
      %v1784 = vld [vmem:[%s1 + $0x218] sm:$0xf]
      %v1785 = vld [vmem:[%s1 + $0x21c] sm:$0xf]
      %v1786 = vld [vmem:[%s1 + $0x220] sm:$0xf]
      %v1787 = vld [vmem:[%s1 + $0x224] sm:$0xf]
      %v1788 = vld [vmem:[%s1 + $0x228] sm:$0xf]
      %v1789 = vld [vmem:[%s1 + $0x22c] sm:$0xf]
      %v1790 = vld [vmem:[%s1 + $0x230] sm:$0xf]
      %v1791 = vld [vmem:[%s1 + $0x234] sm:$0xf]
      %v1792 = vld [vmem:[%s1 + $0x238] sm:$0xf]
      %v1793 = vld [vmem:[%s1 + $0x23c] sm:$0xf]
      %v2004 = vunpack.c.l.b16 %v1440
      %v2005 = vunpack.c.h.b16 %v1440
      %v2006 = vunpack.c.l.b16 %v1441
      %v2007 = vunpack.c.h.b16 %v1441
      %v2008 = vunpack.c.l.b16 %v1442
      %v2009 = vunpack.c.h.b16 %v1442
      %v2010 = vunpack.c.l.b16 %v1443
      %v2011 = vunpack.c.h.b16 %v1443
      %v2012 = vunpack.c.l.b16 %v1444
      %v2013 = vunpack.c.l.b16 %v1445
      %v2014 = vunpack.c.h.b16 %v1445
      %v2015 = vunpack.c.l.b16 %v1446
      %v2016 = vunpack.c.h.b16 %v1446
      %v2017 = vunpack.c.l.b16 %v1447
      %v2018 = vunpack.c.h.b16 %v1447
      %v2019 = vunpack.c.l.b16 %v1448
      %v2020 = vunpack.c.h.b16 %v1448
      %v2021 = vunpack.c.l.b16 %v1449
      %v2022 = vunpack.c.l.b16 %v1450
      %v2023 = vunpack.c.h.b16 %v1450
      %v2024 = vunpack.c.l.b16 %v1451
      %v2025 = vunpack.c.h.b16 %v1451
      %v2026 = vunpack.c.l.b16 %v1452
      %v2027 = vunpack.c.h.b16 %v1452
      %v2028 = vunpack.c.l.b16 %v1453
      %v2029 = vunpack.c.h.b16 %v1453
      %v2030 = vunpack.c.l.b16 %v1454
      %v2031 = vunpack.c.l.b16 %v1455
      %v2032 = vunpack.c.h.b16 %v1455
      %v2033 = vunpack.c.l.b16 %v1456
      %v2034 = vunpack.c.h.b16 %v1456
      %v2035 = vunpack.c.l.b16 %v1457
      %v2036 = vunpack.c.h.b16 %v1457
      %v2037 = vunpack.c.l.b16 %v1458
      %v2038 = vunpack.c.h.b16 %v1458
      %v2039 = vunpack.c.l.b16 %v1459
      %v2040 = vunpack.c.l.b16 %v1460
      %v2041 = vunpack.c.h.b16 %v1460
      %v2042 = vunpack.c.l.b16 %v1461
      %v2043 = vunpack.c.h.b16 %v1461
      %v2044 = vunpack.c.l.b16 %v1462
      %v2045 = vunpack.c.h.b16 %v1462
      %v2046 = vunpack.c.l.b16 %v1463
      %v2047 = vunpack.c.h.b16 %v1463
      %v2048 = vunpack.c.l.b16 %v1464
      %v2049 = vunpack.c.l.b16 %v1465
      %v2050 = vunpack.c.h.b16 %v1465
      %v2051 = vunpack.c.l.b16 %v1466
      %v2052 = vunpack.c.h.b16 %v1466
      %v2053 = vunpack.c.l.b16 %v1467
      %v2054 = vunpack.c.h.b16 %v1467
      %v2055 = vunpack.c.l.b16 %v1468
      %v2056 = vunpack.c.h.b16 %v1468
      %v2057 = vunpack.c.l.b16 %v1469
      %v2058 = vunpack.c.l.b16 %v1470
      %v2059 = vunpack.c.h.b16 %v1470
      %v2060 = vunpack.c.l.b16 %v1471
      %v2061 = vunpack.c.h.b16 %v1471
      %v2062 = vunpack.c.l.b16 %v1472
      %v2063 = vunpack.c.h.b16 %v1472
      %v2064 = vunpack.c.l.b16 %v1473
      %v2065 = vunpack.c.h.b16 %v1473
      %v2066 = vunpack.c.l.b16 %v1474
      %v2067 = vunpack.c.l.b16 %v1475
      %v2068 = vunpack.c.h.b16 %v1475
      %v2069 = vunpack.c.l.b16 %v1476
      %v2070 = vunpack.c.h.b16 %v1476
      %v2071 = vunpack.c.l.b16 %v1477
      %v2072 = vunpack.c.h.b16 %v1477
      %v2073 = vunpack.c.l.b16 %v1478
      %v2074 = vunpack.c.h.b16 %v1478
      %v2075 = vunpack.c.l.b16 %v1479
      %v2076 = vunpack.c.l.b16 %v1480
      %v2077 = vunpack.c.h.b16 %v1480
      %v2078 = vunpack.c.l.b16 %v1481
      %v2079 = vunpack.c.h.b16 %v1481
      %v2080 = vunpack.c.l.b16 %v1482
      %v2081 = vunpack.c.h.b16 %v1482
      %v2082 = vunpack.c.l.b16 %v1483
      %v2083 = vunpack.c.h.b16 %v1483
      %v2084 = vunpack.c.l.b16 %v1484
      %v2085 = vunpack.c.l.b16 %v1485
      %v2086 = vunpack.c.h.b16 %v1485
      %v2087 = vunpack.c.l.b16 %v1486
      %v2088 = vunpack.c.h.b16 %v1486
      %v2089 = vunpack.c.l.b16 %v1487
      %v2090 = vunpack.c.h.b16 %v1487
      %v2091 = vunpack.c.l.b16 %v1488
      %v2092 = vunpack.c.h.b16 %v1488
      %v2093 = vunpack.c.l.b16 %v1489
      %v2094 = vunpack.c.l.b16 %v1490
      %v2095 = vunpack.c.h.b16 %v1490
      %v2096 = vunpack.c.l.b16 %v1491
      %v2097 = vunpack.c.h.b16 %v1491
      %v2098 = vunpack.c.l.b16 %v1492
      %v2099 = vunpack.c.h.b16 %v1492
      %v2100 = vunpack.c.l.b16 %v1493
      %v2101 = vunpack.c.h.b16 %v1493
      %v2102 = vunpack.c.l.b16 %v1494
      %v2103 = vunpack.c.l.b16 %v1495
      %v2104 = vunpack.c.h.b16 %v1495
      %v2105 = vunpack.c.l.b16 %v1496
      %v2106 = vunpack.c.h.b16 %v1496
      %v2107 = vunpack.c.l.b16 %v1497
      %v2108 = vunpack.c.h.b16 %v1497
      %v2109 = vunpack.c.l.b16 %v1498
      %v2110 = vunpack.c.h.b16 %v1498
      %v2111 = vunpack.c.l.b16 %v1499
      %v2112 = vunpack.c.l.b16 %v1500
      %v2113 = vunpack.c.h.b16 %v1500
      %v2114 = vunpack.c.l.b16 %v1501
      %v2115 = vunpack.c.h.b16 %v1501
      %v2116 = vunpack.c.l.b16 %v1502
      %v2117 = vunpack.c.h.b16 %v1502
      %v2118 = vunpack.c.l.b16 %v1503
      %v2119 = vunpack.c.h.b16 %v1503
      %v2120 = vunpack.c.l.b16 %v1504
      %v2121 = vunpack.c.l.b16 %v1505
      %v2122 = vunpack.c.h.b16 %v1505
      %v2123 = vunpack.c.l.b16 %v1506
      %v2124 = vunpack.c.h.b16 %v1506
      %v2125 = vunpack.c.l.b16 %v1507
      %v2126 = vunpack.c.h.b16 %v1507
      %v2127 = vunpack.c.l.b16 %v1508
      %v2128 = vunpack.c.h.b16 %v1508
      %v2129 = vunpack.c.l.b16 %v1509
      %v2130 = vunpack.c.l.b16 %v1510
      %v2131 = vunpack.c.h.b16 %v1510
      %v2132 = vunpack.c.l.b16 %v1511
      %v2133 = vunpack.c.h.b16 %v1511
      %v2134 = vunpack.c.l.b16 %v1512
      %v2135 = vunpack.c.h.b16 %v1512
      %v2136 = vunpack.c.l.b16 %v1513
      %v2137 = vunpack.c.h.b16 %v1513
      %v2138 = vunpack.c.l.b16 %v1514
      %v2139 = vunpack.c.l.b16 %v1515
      %v2140 = vunpack.c.h.b16 %v1515
      %v2141 = vunpack.c.l.b16 %v1516
      %v2142 = vunpack.c.h.b16 %v1516
      %v2143 = vunpack.c.l.b16 %v1517
      %v2144 = vunpack.c.h.b16 %v1517
      %v2145 = vunpack.c.l.b16 %v1518
      %v2146 = vunpack.c.h.b16 %v1518
      %v2147 = vunpack.c.l.b16 %v1519
      %v2148 = vunpack.c.l.b16 %v1520
      %v2149 = vunpack.c.h.b16 %v1520
      %v2150 = vunpack.c.l.b16 %v1521
      %v2151 = vunpack.c.h.b16 %v1521
      %v2152 = vunpack.c.l.b16 %v1522
      %v2153 = vunpack.c.h.b16 %v1522
      %v2154 = vunpack.c.l.b16 %v1523
      %v2155 = vunpack.c.h.b16 %v1523
      %v2156 = vunpack.c.l.b16 %v1524
      %v2157 = vunpack.c.l.b16 %v1525
      %v2158 = vunpack.c.h.b16 %v1525
      %v2159 = vunpack.c.l.b16 %v1526
      %v2160 = vunpack.c.h.b16 %v1526
      %v2161 = vunpack.c.l.b16 %v1527
      %v2162 = vunpack.c.h.b16 %v1527
      %v2163 = vunpack.c.l.b16 %v1528
      %v2164 = vunpack.c.h.b16 %v1528
      %v2165 = vunpack.c.l.b16 %v1529
      %v2166 = vunpack.c.l.b16 %v1530
      %v2167 = vunpack.c.h.b16 %v1530
      %v2168 = vunpack.c.l.b16 %v1531
      %v2169 = vunpack.c.h.b16 %v1531
      %v2170 = vunpack.c.l.b16 %v1532
      %v2171 = vunpack.c.h.b16 %v1532
      %v2172 = vunpack.c.l.b16 %v1533
      %v2173 = vunpack.c.h.b16 %v1533
      %v2174 = vunpack.c.l.b16 %v1534
      %v2175 = vunpack.c.l.b16 %v1535
      %v2176 = vunpack.c.h.b16 %v1535
      %v2177 = vunpack.c.l.b16 %v1536
      %v2178 = vunpack.c.h.b16 %v1536
      %v2179 = vunpack.c.l.b16 %v1537
      %v2180 = vunpack.c.h.b16 %v1537
      %v2181 = vunpack.c.l.b16 %v1538
      %v2182 = vunpack.c.h.b16 %v1538
      %v2183 = vunpack.c.l.b16 %v1539
      %v2184 = vunpack.c.l.b16 %v1540
      %v2185 = vunpack.c.h.b16 %v1540
      %v2186 = vunpack.c.l.b16 %v1541
      %v2187 = vunpack.c.h.b16 %v1541
      %v2188 = vunpack.c.l.b16 %v1542
      %v2189 = vunpack.c.h.b16 %v1542
      %v2190 = vunpack.c.l.b16 %v1543
      %v2191 = vunpack.c.h.b16 %v1543
      %v2192 = vunpack.c.l.b16 %v1544
      %v2193 = vunpack.c.l.b16 %v1545
      %v2194 = vunpack.c.h.b16 %v1545
      %v2195 = vunpack.c.l.b16 %v1546
      %v2196 = vunpack.c.h.b16 %v1546
      %v2197 = vunpack.c.l.b16 %v1547
      %v2198 = vunpack.c.h.b16 %v1547
      %v2199 = vunpack.c.l.b16 %v1548
      %v2200 = vunpack.c.h.b16 %v1548
      %v2201 = vunpack.c.l.b16 %v1549
      %v2202 = vunpack.c.l.b16 %v1550
      %v2203 = vunpack.c.h.b16 %v1550
      %v2204 = vunpack.c.l.b16 %v1551
      %v2205 = vunpack.c.h.b16 %v1551
      %v2206 = vunpack.c.l.b16 %v1552
      %v2207 = vunpack.c.h.b16 %v1552
      %v2208 = vunpack.c.l.b16 %v1553
      %v2209 = vunpack.c.h.b16 %v1553
      %v2210 = vunpack.c.l.b16 %v1554
      %v2211 = vunpack.c.l.b16 %v1555
      %v2212 = vunpack.c.h.b16 %v1555
      %v2213 = vunpack.c.l.b16 %v1556
      %v2214 = vunpack.c.h.b16 %v1556
      %v2215 = vunpack.c.l.b16 %v1557
      %v2216 = vunpack.c.h.b16 %v1557
      %v2217 = vunpack.c.l.b16 %v1558
      %v2218 = vunpack.c.h.b16 %v1558
      %v2219 = vunpack.c.l.b16 %v1559
      %v2220 = vunpack.c.l.b16 %v1560
      %v2221 = vunpack.c.h.b16 %v1560
      %v2222 = vunpack.c.l.b16 %v1561
      %v2223 = vunpack.c.h.b16 %v1561
      %v2224 = vunpack.c.l.b16 %v1562
      %v2225 = vunpack.c.h.b16 %v1562
      %v2226 = vunpack.c.l.b16 %v1563
      %v2227 = vunpack.c.h.b16 %v1563
      %v2228 = vunpack.c.l.b16 %v1564
      %v2229 = vunpack.c.l.b16 %v1565
      %v2230 = vunpack.c.h.b16 %v1565
      %v2231 = vunpack.c.l.b16 %v1566
      %v2232 = vunpack.c.h.b16 %v1566
      %v2233 = vunpack.c.l.b16 %v1567
      %v2234 = vunpack.c.h.b16 %v1567
      %v2235 = vunpack.c.l.b16 %v1568
      %v2236 = vunpack.c.h.b16 %v1568
      %v2237 = vunpack.c.l.b16 %v1569
      %v2238 = vunpack.c.l.b16 %v1570
      %v2239 = vunpack.c.h.b16 %v1570
      %v2240 = vunpack.c.l.b16 %v1571
      %v2241 = vunpack.c.h.b16 %v1571
      %v2242 = vunpack.c.l.b16 %v1572
      %v2243 = vunpack.c.h.b16 %v1572
      %v2244 = vunpack.c.l.b16 %v1573
      %v2245 = vunpack.c.h.b16 %v1573
      %v2246 = vunpack.c.l.b16 %v1574
      %v2247 = vunpack.c.l.b16 %v1575
      %v2248 = vunpack.c.h.b16 %v1575
      %v2249 = vunpack.c.l.b16 %v1576
      %v2250 = vunpack.c.h.b16 %v1576
      %v2251 = vunpack.c.l.b16 %v1577
      %v2252 = vunpack.c.h.b16 %v1577
      %v2253 = vunpack.c.l.b16 %v1578
      %v2254 = vunpack.c.h.b16 %v1578
      %v2255 = vunpack.c.l.b16 %v1579
      %v2256 = vunpack.c.l.b16 %v1580
      %v2257 = vunpack.c.h.b16 %v1580
      %v2258 = vunpack.c.l.b16 %v1581
      %v2259 = vunpack.c.h.b16 %v1581
      %v2260 = vunpack.c.l.b16 %v1582
      %v2261 = vunpack.c.h.b16 %v1582
      %v2262 = vunpack.c.l.b16 %v1583
      %v2263 = vunpack.c.h.b16 %v1583
      %v2264 = vunpack.c.l.b16 %v1584
      %v2265 = vunpack.c.l.b16 %v1585
      %v2266 = vunpack.c.h.b16 %v1585
      %v2267 = vunpack.c.l.b16 %v1586
      %v2268 = vunpack.c.h.b16 %v1586
      %v2269 = vunpack.c.l.b16 %v1587
      %v2270 = vunpack.c.h.b16 %v1587
      %v2271 = vunpack.c.l.b16 %v1588
      %v2272 = vunpack.c.h.b16 %v1588
      %v2273 = vunpack.c.l.b16 %v1589
      %v2274 = vunpack.c.l.b16 %v1590
      %v2275 = vunpack.c.h.b16 %v1590
      %v2276 = vunpack.c.l.b16 %v1591
      %v2277 = vunpack.c.h.b16 %v1591
      %v2278 = vunpack.c.l.b16 %v1592
      %v2279 = vunpack.c.h.b16 %v1592
      %v2280 = vunpack.c.l.b16 %v1593
      %v2281 = vunpack.c.h.b16 %v1593
      %v2282 = vunpack.c.l.b16 %v1594
      %v2283 = vunpack.c.l.b16 %v1595
      %v2284 = vunpack.c.h.b16 %v1595
      %v2285 = vunpack.c.l.b16 %v1596
      %v2286 = vunpack.c.h.b16 %v1596
      %v2287 = vunpack.c.l.b16 %v1597
      %v2288 = vunpack.c.h.b16 %v1597
      %v2289 = vunpack.c.l.b16 %v1598
      %v2290 = vunpack.c.h.b16 %v1598
      %v2291 = vunpack.c.l.b16 %v1599
      %v2292 = vunpack.c.l.b16 %v1600
      %v2293 = vunpack.c.h.b16 %v1600
      %v2294 = vunpack.c.l.b16 %v1601
      %v2295 = vunpack.c.h.b16 %v1601
      %v2296 = vunpack.c.l.b16 %v1602
      %v2297 = vunpack.c.h.b16 %v1602
      %v2298 = vunpack.c.l.b16 %v1603
      %v2299 = vunpack.c.h.b16 %v1603
      %v2300 = vunpack.c.l.b16 %v1604
      %v2301 = vunpack.c.l.b16 %v1605
      %v2302 = vunpack.c.h.b16 %v1605
      %v2303 = vunpack.c.l.b16 %v1606
      %v2304 = vunpack.c.h.b16 %v1606
      %v2305 = vunpack.c.l.b16 %v1607
      %v2306 = vunpack.c.h.b16 %v1607
      %v2307 = vunpack.c.l.b16 %v1608
      %v2308 = vunpack.c.h.b16 %v1608
      %v2309 = vunpack.c.l.b16 %v1609
      %v2310 = vunpack.c.l.b16 %v1610
      %v2311 = vunpack.c.h.b16 %v1610
      %v2312 = vunpack.c.l.b16 %v1611
      %v2313 = vunpack.c.h.b16 %v1611
      %v2314 = vunpack.c.l.b16 %v1612
      %v2315 = vunpack.c.h.b16 %v1612
      %v2316 = vunpack.c.l.b16 %v1613
      %v2317 = vunpack.c.h.b16 %v1613
      %v2318 = vunpack.c.l.b16 %v1614
      %v2319 = vunpack.c.l.b16 %v1615
      %v2320 = vunpack.c.h.b16 %v1615
      %v2321 = vunpack.c.l.b16 %v1616
      %v2322 = vunpack.c.h.b16 %v1616
      %v2323 = vunpack.c.l.b16 %v1617
      %v2324 = vunpack.c.h.b16 %v1617
      %v2325 = vunpack.c.l.b16 %v1618
      %v2326 = vunpack.c.h.b16 %v1618
      %v2327 = vunpack.c.l.b16 %v1619
      %v2328 = vunpack.c.l.b16 %v1620
      %v2329 = vunpack.c.h.b16 %v1620
      %v2330 = vunpack.c.l.b16 %v1621
      %v2331 = vunpack.c.h.b16 %v1621
      %v2332 = vunpack.c.l.b16 %v1622
      %v2333 = vunpack.c.h.b16 %v1622
      %v2334 = vunpack.c.l.b16 %v1623
      %v2335 = vunpack.c.h.b16 %v1623
      %v2336 = vunpack.c.l.b16 %v1624
      %v2337 = vunpack.c.l.b16 %v1625
      %v2338 = vunpack.c.h.b16 %v1625
      %v2339 = vunpack.c.l.b16 %v1626
      %v2340 = vunpack.c.h.b16 %v1626
      %v2341 = vunpack.c.l.b16 %v1627
      %v2342 = vunpack.c.h.b16 %v1627
      %v2343 = vunpack.c.l.b16 %v1628
      %v2344 = vunpack.c.h.b16 %v1628
      %v2345 = vunpack.c.l.b16 %v1629
      %v2346 = vunpack.c.l.b16 %v1630
      %v2347 = vunpack.c.h.b16 %v1630
      %v2348 = vunpack.c.l.b16 %v1631
      %v2349 = vunpack.c.h.b16 %v1631
      %v2350 = vunpack.c.l.b16 %v1632
      %v2351 = vunpack.c.h.b16 %v1632
      %v2352 = vunpack.c.l.b16 %v1633
      %v2353 = vunpack.c.h.b16 %v1633
      %v2354 = vunpack.c.l.b16 %v1634
      %v2355 = vunpack.c.l.b16 %v1635
      %v2356 = vunpack.c.h.b16 %v1635
      %v2357 = vunpack.c.l.b16 %v1636
      %v2358 = vunpack.c.h.b16 %v1636
      %v2359 = vunpack.c.l.b16 %v1637
      %v2360 = vunpack.c.h.b16 %v1637
      %v2361 = vunpack.c.l.b16 %v1638
      %v2362 = vunpack.c.h.b16 %v1638
      %v2363 = vunpack.c.l.b16 %v1639
      %v2364 = vunpack.c.l.b16 %v1640
      %v2365 = vunpack.c.h.b16 %v1640
      %v2366 = vunpack.c.l.b16 %v1641
      %v2367 = vunpack.c.h.b16 %v1641
      %v2368 = vunpack.c.l.b16 %v1642
      %v2369 = vunpack.c.h.b16 %v1642
      %v2370 = vunpack.c.l.b16 %v1643
      %v2371 = vunpack.c.h.b16 %v1643
      %v2372 = vunpack.c.l.b16 %v1644
      %v2373 = vunpack.c.l.b16 %v1645
      %v2374 = vunpack.c.h.b16 %v1645
      %v2375 = vunpack.c.l.b16 %v1646
      %v2376 = vunpack.c.h.b16 %v1646
      %v2377 = vunpack.c.l.b16 %v1647
      %v2378 = vunpack.c.h.b16 %v1647
      %v2379 = vunpack.c.l.b16 %v1648
      %v2380 = vunpack.c.h.b16 %v1648
      %v2381 = vunpack.c.l.b16 %v1649
      %v2382 = vpack.c.b16 %v2013, %v2004
      %v2383 = vpack.c.b16 %v2014, %v2005
      %v2384 = vpack.c.b16 %v2015, %v2006
      %v2385 = vpack.c.b16 %v2016, %v2007
      %v2386 = vpack.c.b16 %v2017, %v2008
      %v2387 = vpack.c.b16 %v2018, %v2009
      %v2388 = vpack.c.b16 %v2019, %v2010
      %v2389 = vpack.c.b16 %v2020, %v2011
      %v2390 = vpack.c.b16 %v2021, %v2012
      %v2391 = vpack.c.b16 %v2031, %v2022
      %v2392 = vpack.c.b16 %v2032, %v2023
      %v2393 = vpack.c.b16 %v2033, %v2024
      %v2394 = vpack.c.b16 %v2034, %v2025
      %v2395 = vpack.c.b16 %v2035, %v2026
      %v2396 = vpack.c.b16 %v2036, %v2027
      %v2397 = vpack.c.b16 %v2037, %v2028
      %v2398 = vpack.c.b16 %v2038, %v2029
      %v2399 = vpack.c.b16 %v2039, %v2030
      %v2400 = vpack.c.b16 %v2049, %v2040
      %v2401 = vpack.c.b16 %v2050, %v2041
      %v2402 = vpack.c.b16 %v2051, %v2042
      %v2403 = vpack.c.b16 %v2052, %v2043
      %v2404 = vpack.c.b16 %v2053, %v2044
      %v2405 = vpack.c.b16 %v2054, %v2045
      %v2406 = vpack.c.b16 %v2055, %v2046
      %v2407 = vpack.c.b16 %v2056, %v2047
      %v2408 = vpack.c.b16 %v2057, %v2048
      %v2409 = vpack.c.b16 %v2067, %v2058
      %v2410 = vpack.c.b16 %v2068, %v2059
      %v2411 = vpack.c.b16 %v2069, %v2060
      %v2412 = vpack.c.b16 %v2070, %v2061
      %v2413 = vpack.c.b16 %v2071, %v2062
      %v2414 = vpack.c.b16 %v2072, %v2063
      %v2415 = vpack.c.b16 %v2073, %v2064
      %v2416 = vpack.c.b16 %v2074, %v2065
      %v2417 = vpack.c.b16 %v2075, %v2066
      %v2418 = vpack.c.b16 %v2085, %v2076
      %v2419 = vpack.c.b16 %v2086, %v2077
      %v2420 = vpack.c.b16 %v2087, %v2078
      %v2421 = vpack.c.b16 %v2088, %v2079
      %v2422 = vpack.c.b16 %v2089, %v2080
      %v2423 = vpack.c.b16 %v2090, %v2081
      %v2424 = vpack.c.b16 %v2091, %v2082
      %v2425 = vpack.c.b16 %v2092, %v2083
      %v2426 = vpack.c.b16 %v2093, %v2084
      %v2427 = vpack.c.b16 %v2103, %v2094
      %v2428 = vpack.c.b16 %v2104, %v2095
      %v2429 = vpack.c.b16 %v2105, %v2096
      %v2430 = vpack.c.b16 %v2106, %v2097
      %v2431 = vpack.c.b16 %v2107, %v2098
      %v2432 = vpack.c.b16 %v2108, %v2099
      %v2433 = vpack.c.b16 %v2109, %v2100
      %v2434 = vpack.c.b16 %v2110, %v2101
      %v2435 = vpack.c.b16 %v2111, %v2102
      %v2436 = vpack.c.b16 %v2121, %v2112
      %v2437 = vpack.c.b16 %v2122, %v2113
      %v2438 = vpack.c.b16 %v2123, %v2114
      %v2439 = vpack.c.b16 %v2124, %v2115
      %v2440 = vpack.c.b16 %v2125, %v2116
      %v2441 = vpack.c.b16 %v2126, %v2117
      %v2442 = vpack.c.b16 %v2127, %v2118
      %v2443 = vpack.c.b16 %v2128, %v2119
      %v2444 = vpack.c.b16 %v2129, %v2120
      %v2445 = vpack.c.b16 %v2139, %v2130
      %v2446 = vpack.c.b16 %v2140, %v2131
      %v2447 = vpack.c.b16 %v2141, %v2132
      %v2448 = vpack.c.b16 %v2142, %v2133
      %v2449 = vpack.c.b16 %v2143, %v2134
      %v2450 = vpack.c.b16 %v2144, %v2135
      %v2451 = vpack.c.b16 %v2145, %v2136
      %v2452 = vpack.c.b16 %v2146, %v2137
      %v2453 = vpack.c.b16 %v2147, %v2138
      %v2454 = vpack.c.b16 %v2157, %v2148
      %v2455 = vpack.c.b16 %v2158, %v2149
      %v2456 = vpack.c.b16 %v2159, %v2150
      %v2457 = vpack.c.b16 %v2160, %v2151
      %v2458 = vpack.c.b16 %v2161, %v2152
      %v2459 = vpack.c.b16 %v2162, %v2153
      %v2460 = vpack.c.b16 %v2163, %v2154
      %v2461 = vpack.c.b16 %v2164, %v2155
      %v2462 = vpack.c.b16 %v2165, %v2156
      %v2463 = vpack.c.b16 %v2175, %v2166
      %v2464 = vpack.c.b16 %v2176, %v2167
      %v2465 = vpack.c.b16 %v2177, %v2168
      %v2466 = vpack.c.b16 %v2178, %v2169
      %v2467 = vpack.c.b16 %v2179, %v2170
      %v2468 = vpack.c.b16 %v2180, %v2171
      %v2469 = vpack.c.b16 %v2181, %v2172
      %v2470 = vpack.c.b16 %v2182, %v2173
      %v2471 = vpack.c.b16 %v2183, %v2174
      %v2472 = vpack.c.b16 %v2193, %v2184
      %v2473 = vpack.c.b16 %v2194, %v2185
      %v2474 = vpack.c.b16 %v2195, %v2186
      %v2475 = vpack.c.b16 %v2196, %v2187
      %v2476 = vpack.c.b16 %v2197, %v2188
      %v2477 = vpack.c.b16 %v2198, %v2189
      %v2478 = vpack.c.b16 %v2199, %v2190
      %v2479 = vpack.c.b16 %v2200, %v2191
      %v2480 = vpack.c.b16 %v2201, %v2192
      %v2481 = vpack.c.b16 %v2211, %v2202
      %v2482 = vpack.c.b16 %v2212, %v2203
      %v2483 = vpack.c.b16 %v2213, %v2204
      %v2484 = vpack.c.b16 %v2214, %v2205
      %v2485 = vpack.c.b16 %v2215, %v2206
      %v2486 = vpack.c.b16 %v2216, %v2207
      %v2487 = vpack.c.b16 %v2217, %v2208
      %v2488 = vpack.c.b16 %v2218, %v2209
      %v2489 = vpack.c.b16 %v2219, %v2210
      %v2490 = vpack.c.b16 %v2229, %v2220
      %v2491 = vpack.c.b16 %v2230, %v2221
      %v2492 = vpack.c.b16 %v2231, %v2222
      %v2493 = vpack.c.b16 %v2232, %v2223
      %v2494 = vpack.c.b16 %v2233, %v2224
      %v2495 = vpack.c.b16 %v2234, %v2225
      %v2496 = vpack.c.b16 %v2235, %v2226
      %v2497 = vpack.c.b16 %v2236, %v2227
      %v2498 = vpack.c.b16 %v2237, %v2228
      %v2499 = vpack.c.b16 %v2247, %v2238
      %v2500 = vpack.c.b16 %v2248, %v2239
      %v2501 = vpack.c.b16 %v2249, %v2240
      %v2502 = vpack.c.b16 %v2250, %v2241
      %v2503 = vpack.c.b16 %v2251, %v2242
      %v2504 = vpack.c.b16 %v2252, %v2243
      %v2505 = vpack.c.b16 %v2253, %v2244
      %v2506 = vpack.c.b16 %v2254, %v2245
      %v2507 = vpack.c.b16 %v2255, %v2246
      %v2508 = vpack.c.b16 %v2265, %v2256
      %v2509 = vpack.c.b16 %v2266, %v2257
      %v2510 = vpack.c.b16 %v2267, %v2258
      %v2511 = vpack.c.b16 %v2268, %v2259
      %v2512 = vpack.c.b16 %v2269, %v2260
      %v2513 = vpack.c.b16 %v2270, %v2261
      %v2514 = vpack.c.b16 %v2271, %v2262
      %v2515 = vpack.c.b16 %v2272, %v2263
      %v2516 = vpack.c.b16 %v2273, %v2264
      %v2517 = vpack.c.b16 %v2283, %v2274
      %v2518 = vpack.c.b16 %v2284, %v2275
      %v2519 = vpack.c.b16 %v2285, %v2276
      %v2520 = vpack.c.b16 %v2286, %v2277
      %v2521 = vpack.c.b16 %v2287, %v2278
      %v2522 = vpack.c.b16 %v2288, %v2279
      %v2523 = vpack.c.b16 %v2289, %v2280
      %v2524 = vpack.c.b16 %v2290, %v2281
      %v2525 = vpack.c.b16 %v2291, %v2282
      %v2526 = vpack.c.b16 %v2301, %v2292
      %v2527 = vpack.c.b16 %v2302, %v2293
      %v2528 = vpack.c.b16 %v2303, %v2294
      %v2529 = vpack.c.b16 %v2304, %v2295
      %v2530 = vpack.c.b16 %v2305, %v2296
      %v2531 = vpack.c.b16 %v2306, %v2297
      %v2532 = vpack.c.b16 %v2307, %v2298
      %v2533 = vpack.c.b16 %v2308, %v2299
      %v2534 = vpack.c.b16 %v2309, %v2300
      %v2535 = vpack.c.b16 %v2319, %v2310
      %v2536 = vpack.c.b16 %v2320, %v2311
      %v2537 = vpack.c.b16 %v2321, %v2312
      %v2538 = vpack.c.b16 %v2322, %v2313
      %v2539 = vpack.c.b16 %v2323, %v2314
      %v2540 = vpack.c.b16 %v2324, %v2315
      %v2541 = vpack.c.b16 %v2325, %v2316
      %v2542 = vpack.c.b16 %v2326, %v2317
      %v2543 = vpack.c.b16 %v2327, %v2318
      %v2544 = vpack.c.b16 %v2337, %v2328
      %v2545 = vpack.c.b16 %v2338, %v2329
      %v2546 = vpack.c.b16 %v2339, %v2330
      %v2547 = vpack.c.b16 %v2340, %v2331
      %v2548 = vpack.c.b16 %v2341, %v2332
      %v2549 = vpack.c.b16 %v2342, %v2333
      %v2550 = vpack.c.b16 %v2343, %v2334
      %v2551 = vpack.c.b16 %v2344, %v2335
      %v2552 = vpack.c.b16 %v2345, %v2336
      %v2553 = vpack.c.b16 %v2355, %v2346
      %v2554 = vpack.c.b16 %v2356, %v2347
      %v2555 = vpack.c.b16 %v2357, %v2348
      %v2556 = vpack.c.b16 %v2358, %v2349
      %v2557 = vpack.c.b16 %v2359, %v2350
      %v2558 = vpack.c.b16 %v2360, %v2351
      %v2559 = vpack.c.b16 %v2361, %v2352
      %v2560 = vpack.c.b16 %v2362, %v2353
      %v2561 = vpack.c.b16 %v2363, %v2354
      %v2562 = vpack.c.b16 %v2373, %v2364
      %v2563 = vpack.c.b16 %v2374, %v2365
      %v2564 = vpack.c.b16 %v2375, %v2366
      %v2565 = vpack.c.b16 %v2376, %v2367
      %v2566 = vpack.c.b16 %v2377, %v2368
      %v2567 = vpack.c.b16 %v2378, %v2369
      %v2568 = vpack.c.b16 %v2379, %v2370
      %v2569 = vpack.c.b16 %v2380, %v2371
      %v2570 = vpack.c.b16 %v2381, %v2372
      %v2904 = vunpack.c.l.b16 %v1650
      %v2905 = vunpack.c.l.b16 %v1651
      %v2906 = vunpack.c.l.b16 %v1652
      %v2907 = vunpack.c.l.b16 %v1653
      %v2908 = vunpack.c.l.b16 %v1654
      %v2909 = vunpack.c.l.b16 %v1655
      %v2910 = vunpack.c.l.b16 %v1656
      %v2911 = vunpack.c.l.b16 %v1657
      %v2912 = vunpack.c.l.b16 %v1658
      %v2913 = vunpack.c.l.b16 %v1659
      %v2914 = vunpack.c.l.b16 %v1660
      %v2915 = vunpack.c.l.b16 %v1661
      %v2916 = vunpack.c.l.b16 %v1662
      %v2917 = vunpack.c.l.b16 %v1663
      %v2918 = vunpack.c.l.b16 %v1664
      %v2919 = vunpack.c.l.b16 %v1665
      %v2920 = vunpack.c.l.b16 %v1666
      %v2921 = vunpack.c.l.b16 %v1667
      %v2922 = vunpack.c.l.b16 %v1668
      %v2923 = vunpack.c.l.b16 %v1669
      %v2924 = vunpack.c.l.b16 %v1670
      %v2925 = vunpack.c.l.b16 %v1671
      %v2926 = vunpack.c.l.b16 %v1672
      %v2927 = vunpack.c.l.b16 %v1673
      %v2928 = vunpack.c.l.b16 %v1674
      %v2929 = vunpack.c.l.b16 %v1675
      %v2930 = vunpack.c.l.b16 %v1676
      %v2931 = vunpack.c.l.b16 %v1677
      %v2932 = vunpack.c.l.b16 %v1678
      %v2933 = vunpack.c.l.b16 %v1679
      %v2934 = vunpack.c.l.b16 %v1680
      %v2935 = vunpack.c.l.b16 %v1681
      %v2936 = vunpack.c.l.b16 %v1682
      %v2937 = vunpack.c.l.b16 %v1683
      %v2938 = vunpack.c.l.b16 %v1684
      %v2939 = vunpack.c.l.b16 %v1685
      %v2940 = vunpack.c.l.b16 %v1686
      %v2941 = vunpack.c.l.b16 %v1687
      %v2942 = vunpack.c.l.b16 %v1688
      %v2943 = vunpack.c.l.b16 %v1689
      %v2944 = vunpack.c.l.b16 %v1690
      %v2945 = vunpack.c.l.b16 %v1691
      %v2946 = vunpack.c.l.b16 %v1692
      %v2947 = vunpack.c.l.b16 %v1693
      %v2948 = vunpack.c.l.b16 %v1694
      %v2949 = vunpack.c.l.b16 %v1695
      %v2950 = vunpack.c.l.b16 %v1696
      %v2951 = vunpack.c.l.b16 %v1697
      %v2952 = vunpack.c.l.b16 %v1698
      %v2953 = vunpack.c.l.b16 %v1699
      %v2954 = vunpack.c.l.b16 %v1700
      %v2955 = vunpack.c.l.b16 %v1701
      %v2956 = vunpack.c.l.b16 %v1702
      %v2957 = vunpack.c.l.b16 %v1703
      %v2958 = vunpack.c.l.b16 %v1704
      %v2959 = vunpack.c.l.b16 %v1705
      %v2960 = vunpack.c.l.b16 %v1706
      %v2961 = vunpack.c.l.b16 %v1707
      %v2962 = vunpack.c.l.b16 %v1708
      %v2963 = vunpack.c.l.b16 %v1709
      %v2964 = vunpack.c.l.b16 %v1710
      %v2965 = vunpack.c.l.b16 %v1711
      %v2966 = vunpack.c.l.b16 %v1712
      %v2967 = vunpack.c.l.b16 %v1713
      %v2968 = vunpack.c.l.b16 %v1714
      %v2969 = vunpack.c.l.b16 %v1715
      %v2970 = vunpack.c.l.b16 %v1716
      %v2971 = vunpack.c.l.b16 %v1717
      %v2972 = vunpack.c.l.b16 %v1718
      %v2973 = vunpack.c.l.b16 %v1719
      %v2974 = vunpack.c.l.b16 %v1720
      %v2975 = vunpack.c.l.b16 %v1721
      %v2976 = vunpack.c.l.b16 %v1722
      %v2977 = vunpack.c.l.b16 %v1723
      %v2978 = vunpack.c.l.b16 %v1724
      %v2979 = vunpack.c.l.b16 %v1725
      %v2980 = vunpack.c.l.b16 %v1726
      %v2981 = vunpack.c.l.b16 %v1727
      %v2982 = vunpack.c.l.b16 %v1728
      %v2983 = vunpack.c.l.b16 %v1729
      %v2984 = vunpack.c.l.b16 %v1730
      %v2985 = vunpack.c.l.b16 %v1731
      %v2986 = vunpack.c.l.b16 %v1732
      %v2987 = vunpack.c.l.b16 %v1733
      %v2988 = vunpack.c.l.b16 %v1734
      %v2989 = vunpack.c.l.b16 %v1735
      %v2990 = vunpack.c.l.b16 %v1736
      %v2991 = vunpack.c.l.b16 %v1737
      %v2992 = vunpack.c.l.b16 %v1738
      %v2993 = vunpack.c.l.b16 %v1739
      %v2994 = vunpack.c.l.b16 %v1740
      %v2995 = vunpack.c.l.b16 %v1741
      %v2996 = vunpack.c.l.b16 %v1742
      %v2997 = vunpack.c.l.b16 %v1743
      %v2998 = vunpack.c.l.b16 %v1744
      %v2999 = vunpack.c.l.b16 %v1745
      %v3000 = vunpack.c.l.b16 %v1746
      %v3001 = vunpack.c.l.b16 %v1747
      %v3002 = vunpack.c.l.b16 %v1748
      %v3003 = vunpack.c.l.b16 %v1749
      %v3004 = vunpack.c.l.b16 %v1750
      %v3005 = vunpack.c.l.b16 %v1751
      %v3006 = vunpack.c.l.b16 %v1752
      %v3007 = vunpack.c.l.b16 %v1753
      %v3008 = vunpack.c.l.b16 %v1754
      %v3009 = vunpack.c.l.b16 %v1755
      %v3010 = vunpack.c.l.b16 %v1756
      %v3011 = vunpack.c.l.b16 %v1757
      %v3012 = vunpack.c.l.b16 %v1758
      %v3013 = vunpack.c.l.b16 %v1759
      %v3014 = vunpack.c.l.b16 %v1760
      %v3015 = vunpack.c.l.b16 %v1761
      %v3016 = vunpack.c.l.b16 %v1762
      %v3017 = vunpack.c.l.b16 %v1763
      %v3018 = vunpack.c.l.b16 %v1764
      %v3019 = vunpack.c.l.b16 %v1765
      %v3020 = vunpack.c.l.b16 %v1766
      %v3021 = vunpack.c.l.b16 %v1767
      %v3022 = vunpack.c.l.b16 %v1768
      %v3023 = vunpack.c.l.b16 %v1769
      %v3024 = vunpack.c.l.b16 %v1770
      %v3025 = vunpack.c.l.b16 %v1771
      %v3026 = vunpack.c.l.b16 %v1772
      %v3027 = vunpack.c.l.b16 %v1773
      %v3028 = vunpack.c.l.b16 %v1774
      %v3029 = vunpack.c.l.b16 %v1775
      %v3030 = vunpack.c.l.b16 %v1776
      %v3031 = vunpack.c.l.b16 %v1777
      %v3032 = vunpack.c.l.b16 %v1778
      %v3033 = vunpack.c.l.b16 %v1779
      %v3034 = vunpack.c.l.b16 %v1780
      %v3035 = vunpack.c.l.b16 %v1781
      %v3036 = vunpack.c.l.b16 %v1782
      %v3037 = vunpack.c.l.b16 %v1783
      %v3038 = vunpack.c.l.b16 %v1784
      %v3039 = vunpack.c.l.b16 %v1785
      %v3040 = vunpack.c.l.b16 %v1786
      %v3041 = vunpack.c.l.b16 %v1787
      %v3042 = vunpack.c.l.b16 %v1788
      %v3043 = vunpack.c.l.b16 %v1789
      %v3044 = vunpack.c.l.b16 %v1790
      %v3045 = vunpack.c.l.b16 %v1791
      %v3046 = vunpack.c.l.b16 %v1792
      %v3047 = vunpack.c.l.b16 %v1793
      %v3048 = vpack.c.b16 %v2905, %v2904
      %v3049 = vpack.c.b16 %v2907, %v2906
      %v3050 = vpack.c.b16 %v2909, %v2908
      %v3051 = vpack.c.b16 %v2911, %v2910
      %v3052 = vpack.c.b16 %v2913, %v2912
      %v3053 = vpack.c.b16 %v2915, %v2914
      %v3054 = vpack.c.b16 %v2917, %v2916
      %v3055 = vpack.c.b16 %v2919, %v2918
      %v3056 = vpack.c.b16 %v2921, %v2920
      %v3057 = vpack.c.b16 %v2923, %v2922
      %v3058 = vpack.c.b16 %v2925, %v2924
      %v3059 = vpack.c.b16 %v2927, %v2926
      %v3060 = vpack.c.b16 %v2929, %v2928
      %v3061 = vpack.c.b16 %v2931, %v2930
      %v3062 = vpack.c.b16 %v2933, %v2932
      %v3063 = vpack.c.b16 %v2935, %v2934
      %v3064 = vpack.c.b16 %v2937, %v2936
      %v3065 = vpack.c.b16 %v2939, %v2938
      %v3066 = vpack.c.b16 %v2941, %v2940
      %v3067 = vpack.c.b16 %v2943, %v2942
      %v3068 = vpack.c.b16 %v2945, %v2944
      %v3069 = vpack.c.b16 %v2947, %v2946
      %v3070 = vpack.c.b16 %v2949, %v2948
      %v3071 = vpack.c.b16 %v2951, %v2950
      %v3072 = vpack.c.b16 %v2953, %v2952
      %v3073 = vpack.c.b16 %v2955, %v2954
      %v3074 = vpack.c.b16 %v2957, %v2956
      %v3075 = vpack.c.b16 %v2959, %v2958
      %v3076 = vpack.c.b16 %v2961, %v2960
      %v3077 = vpack.c.b16 %v2963, %v2962
      %v3078 = vpack.c.b16 %v2965, %v2964
      %v3079 = vpack.c.b16 %v2967, %v2966
      %v3080 = vpack.c.b16 %v2969, %v2968
      %v3081 = vpack.c.b16 %v2971, %v2970
      %v3082 = vpack.c.b16 %v2973, %v2972
      %v3083 = vpack.c.b16 %v2975, %v2974
      %v3084 = vpack.c.b16 %v2977, %v2976
      %v3085 = vpack.c.b16 %v2979, %v2978
      %v3086 = vpack.c.b16 %v2981, %v2980
      %v3087 = vpack.c.b16 %v2983, %v2982
      %v3088 = vpack.c.b16 %v2985, %v2984
      %v3089 = vpack.c.b16 %v2987, %v2986
      %v3090 = vpack.c.b16 %v2989, %v2988
      %v3091 = vpack.c.b16 %v2991, %v2990
      %v3092 = vpack.c.b16 %v2993, %v2992
      %v3093 = vpack.c.b16 %v2995, %v2994
      %v3094 = vpack.c.b16 %v2997, %v2996
      %v3095 = vpack.c.b16 %v2999, %v2998
      %v3096 = vpack.c.b16 %v3001, %v3000
      %v3097 = vpack.c.b16 %v3003, %v3002
      %v3098 = vpack.c.b16 %v3005, %v3004
      %v3099 = vpack.c.b16 %v3007, %v3006
      %v3100 = vpack.c.b16 %v3009, %v3008
      %v3101 = vpack.c.b16 %v3011, %v3010
      %v3102 = vpack.c.b16 %v3013, %v3012
      %v3103 = vpack.c.b16 %v3015, %v3014
      %v3104 = vpack.c.b16 %v3017, %v3016
      %v3105 = vpack.c.b16 %v3019, %v3018
      %v3106 = vpack.c.b16 %v3021, %v3020
      %v3107 = vpack.c.b16 %v3023, %v3022
      %v3108 = vpack.c.b16 %v3025, %v3024
      %v3109 = vpack.c.b16 %v3027, %v3026
      %v3110 = vpack.c.b16 %v3029, %v3028
      %v3111 = vpack.c.b16 %v3031, %v3030
      %v3112 = vpack.c.b16 %v3033, %v3032
      %v3113 = vpack.c.b16 %v3035, %v3034
      %v3114 = vpack.c.b16 %v3037, %v3036
      %v3115 = vpack.c.b16 %v3039, %v3038
      %v3116 = vpack.c.b16 %v3041, %v3040
      %v3117 = vpack.c.b16 %v3043, %v3042
      %v3118 = vpack.c.b16 %v3045, %v3044
      %v3119 = vpack.c.b16 %v3047, %v3046
      %3192 = vmatpush.bf16.msra.mxu0 %v3055
      %3193 = vmatpush.bf16.msra.mxu0 %v3054
      %3194 = vmatpush.bf16.msra.mxu0 %v3053
      %3195 = vmatpush.bf16.msra.mxu0 %v3052
      %3196 = vmatpush.bf16.msra.mxu0 %v3051
      %3197 = vmatpush.bf16.msra.mxu0 %v3050
      %3198 = vmatpush.bf16.msra.mxu0 %v3049
      %3199 = vmatpush.bf16.msra.mxu0 %v3048
      %3200 = vmatmul.bf16.gmra.mxu0 %v2382
      %v3201 = vpop.f32.mrf.mxu0
      %v3202 = vadd.f32 0.0, %v3201
      %v3203 = vpop.f32.mrf.mxu0
      %v3204 = vadd.f32 0.0, %v3203
      %3205 = vmatmul.bf16.gmra.mxu0 %v2391
      %v3206 = vpop.f32.mrf.mxu0
      %v3207 = vadd.f32 0.0, %v3206
      %v3208 = vpop.f32.mrf.mxu0
      %v3209 = vadd.f32 0.0, %v3208
      %3210 = vmatmul.bf16.gmra.mxu0 %v2400
      %v3211 = vpop.f32.mrf.mxu0
      %v3212 = vadd.f32 0.0, %v3211
      %v3213 = vpop.f32.mrf.mxu0
      %v3214 = vadd.f32 0.0, %v3213
      %3215 = vmatmul.bf16.gmra.mxu0 %v2409
      %v3216 = vpop.f32.mrf.mxu0
      %v3217 = vadd.f32 0.0, %v3216
      %v3218 = vpop.f32.mrf.mxu0
      %v3219 = vadd.f32 0.0, %v3218
      %3220 = vmatmul.bf16.gmra.mxu0 %v2418
      %v3221 = vpop.f32.mrf.mxu0
      %v3222 = vadd.f32 0.0, %v3221
      %v3223 = vpop.f32.mrf.mxu0
      %v3224 = vadd.f32 0.0, %v3223
      %3225 = vmatmul.bf16.gmra.mxu0 %v2427
      %v3226 = vpop.f32.mrf.mxu0
      %v3227 = vadd.f32 0.0, %v3226
      %v3228 = vpop.f32.mrf.mxu0
      %v3229 = vadd.f32 0.0, %v3228
      %3230 = vmatmul.bf16.gmra.mxu0 %v2436
      %v3231 = vpop.f32.mrf.mxu0
      %v3232 = vadd.f32 0.0, %v3231
      %v3233 = vpop.f32.mrf.mxu0
      %v3234 = vadd.f32 0.0, %v3233
      %3235 = vmatmul.bf16.gmra.mxu0 %v2445
      %v3236 = vpop.f32.mrf.mxu0
      %v3237 = vadd.f32 0.0, %v3236
      %v3238 = vpop.f32.mrf.mxu0
      %v3239 = vadd.f32 0.0, %v3238
      %3240 = vmatmul.bf16.gmra.mxu0 %v2454
      %v3241 = vpop.f32.mrf.mxu0
      %v3242 = vadd.f32 0.0, %v3241
      %v3243 = vpop.f32.mrf.mxu0
      %v3244 = vadd.f32 0.0, %v3243
      %3245 = vmatmul.bf16.gmra.mxu0 %v2463
      %v3246 = vpop.f32.mrf.mxu0
      %v3247 = vadd.f32 0.0, %v3246
      %v3248 = vpop.f32.mrf.mxu0
      %v3249 = vadd.f32 0.0, %v3248
      %3250 = vmatmul.bf16.gmra.mxu0 %v2472
      %v3251 = vpop.f32.mrf.mxu0
      %v3252 = vadd.f32 0.0, %v3251
      %v3253 = vpop.f32.mrf.mxu0
      %v3254 = vadd.f32 0.0, %v3253
      %3255 = vmatmul.bf16.gmra.mxu0 %v2481
      %v3256 = vpop.f32.mrf.mxu0
      %v3257 = vadd.f32 0.0, %v3256
      %v3258 = vpop.f32.mrf.mxu0
      %v3259 = vadd.f32 0.0, %v3258
      %3260 = vmatmul.bf16.gmra.mxu0 %v2490
      %v3261 = vpop.f32.mrf.mxu0
      %v3262 = vadd.f32 0.0, %v3261
      %v3263 = vpop.f32.mrf.mxu0
      %v3264 = vadd.f32 0.0, %v3263
      %3265 = vmatmul.bf16.gmra.mxu0 %v2499
      %v3266 = vpop.f32.mrf.mxu0
      %v3267 = vadd.f32 0.0, %v3266
      %v3268 = vpop.f32.mrf.mxu0
      %v3269 = vadd.f32 0.0, %v3268
      %3270 = vmatmul.bf16.gmra.mxu0 %v2508
      %v3271 = vpop.f32.mrf.mxu0
      %v3272 = vadd.f32 0.0, %v3271
      %v3273 = vpop.f32.mrf.mxu0
      %v3274 = vadd.f32 0.0, %v3273
      %3275 = vmatmul.bf16.gmra.mxu0 %v2517
      %v3276 = vpop.f32.mrf.mxu0
      %v3277 = vadd.f32 0.0, %v3276
      %v3278 = vpop.f32.mrf.mxu0
      %v3279 = vadd.f32 0.0, %v3278
      %3280 = vmatmul.bf16.gmra.mxu0 %v2526
      %v3281 = vpop.f32.mrf.mxu0
      %v3282 = vadd.f32 0.0, %v3281
      %v3283 = vpop.f32.mrf.mxu0
      %v3284 = vadd.f32 0.0, %v3283
      %3285 = vmatmul.bf16.gmra.mxu0 %v2535
      %v3286 = vpop.f32.mrf.mxu0
      %v3287 = vadd.f32 0.0, %v3286
      %v3288 = vpop.f32.mrf.mxu0
      %v3289 = vadd.f32 0.0, %v3288
      %3290 = vmatmul.bf16.gmra.mxu0 %v2544
      %v3291 = vpop.f32.mrf.mxu0
      %v3292 = vadd.f32 0.0, %v3291
      %v3293 = vpop.f32.mrf.mxu0
      %v3294 = vadd.f32 0.0, %v3293
      %3295 = vmatmul.bf16.gmra.mxu0 %v2553
      %v3296 = vpop.f32.mrf.mxu0
      %v3297 = vadd.f32 0.0, %v3296
      %v3298 = vpop.f32.mrf.mxu0
      %v3299 = vadd.f32 0.0, %v3298
      %3300 = vmatmul.bf16.gmra.mxu0 %v2562
      %v3301 = vpop.f32.mrf.mxu0
      %v3302 = vadd.f32 0.0, %v3301
      %v3303 = vpop.f32.mrf.mxu0
      %v3304 = vadd.f32 0.0, %v3303
      %3305 = vdwg.mxu0
      %3306 = vmatpush.bf16.msra.mxu0 %v3063
      %3307 = vmatpush.bf16.msra.mxu0 %v3062
      %3308 = vmatpush.bf16.msra.mxu0 %v3061
      %3309 = vmatpush.bf16.msra.mxu0 %v3060
      %3310 = vmatpush.bf16.msra.mxu0 %v3059
      %3311 = vmatpush.bf16.msra.mxu0 %v3058
      %3312 = vmatpush.bf16.msra.mxu0 %v3057
      %3313 = vmatpush.bf16.msra.mxu0 %v3056
      %3314 = vmatmul.bf16.gmra.mxu0 %v2383
      %v3315 = vpop.f32.mrf.mxu0
      %v3316 = vadd.f32 %v3202, %v3315
      %v3317 = vpop.f32.mrf.mxu0
      %v3318 = vadd.f32 %v3204, %v3317
      %3319 = vmatmul.bf16.gmra.mxu0 %v2392
      %v3320 = vpop.f32.mrf.mxu0
      %v3321 = vadd.f32 %v3207, %v3320
      %v3322 = vpop.f32.mrf.mxu0
      %v3323 = vadd.f32 %v3209, %v3322
      %3324 = vmatmul.bf16.gmra.mxu0 %v2401
      %v3325 = vpop.f32.mrf.mxu0
      %v3326 = vadd.f32 %v3212, %v3325
      %v3327 = vpop.f32.mrf.mxu0
      %v3328 = vadd.f32 %v3214, %v3327
      %3329 = vmatmul.bf16.gmra.mxu0 %v2410
      %v3330 = vpop.f32.mrf.mxu0
      %v3331 = vadd.f32 %v3217, %v3330
      %v3332 = vpop.f32.mrf.mxu0
      %v3333 = vadd.f32 %v3219, %v3332
      %3334 = vmatmul.bf16.gmra.mxu0 %v2419
      %v3335 = vpop.f32.mrf.mxu0
      %v3336 = vadd.f32 %v3222, %v3335
      %v3337 = vpop.f32.mrf.mxu0
      %v3338 = vadd.f32 %v3224, %v3337
      %3339 = vmatmul.bf16.gmra.mxu0 %v2428
      %v3340 = vpop.f32.mrf.mxu0
      %v3341 = vadd.f32 %v3227, %v3340
      %v3342 = vpop.f32.mrf.mxu0
      %v3343 = vadd.f32 %v3229, %v3342
      %3344 = vmatmul.bf16.gmra.mxu0 %v2437
      %v3345 = vpop.f32.mrf.mxu0
      %v3346 = vadd.f32 %v3232, %v3345
      %v3347 = vpop.f32.mrf.mxu0
      %v3348 = vadd.f32 %v3234, %v3347
      %3349 = vmatmul.bf16.gmra.mxu0 %v2446
      %v3350 = vpop.f32.mrf.mxu0
      %v3351 = vadd.f32 %v3237, %v3350
      %v3352 = vpop.f32.mrf.mxu0
      %v3353 = vadd.f32 %v3239, %v3352
      %3354 = vmatmul.bf16.gmra.mxu0 %v2455
      %v3355 = vpop.f32.mrf.mxu0
      %v3356 = vadd.f32 %v3242, %v3355
      %v3357 = vpop.f32.mrf.mxu0
      %v3358 = vadd.f32 %v3244, %v3357
      %3359 = vmatmul.bf16.gmra.mxu0 %v2464
      %v3360 = vpop.f32.mrf.mxu0
      %v3361 = vadd.f32 %v3247, %v3360
      %v3362 = vpop.f32.mrf.mxu0
      %v3363 = vadd.f32 %v3249, %v3362
      %3364 = vmatmul.bf16.gmra.mxu0 %v2473
      %v3365 = vpop.f32.mrf.mxu0
      %v3366 = vadd.f32 %v3252, %v3365
      %v3367 = vpop.f32.mrf.mxu0
      %v3368 = vadd.f32 %v3254, %v3367
      %3369 = vmatmul.bf16.gmra.mxu0 %v2482
      %v3370 = vpop.f32.mrf.mxu0
      %v3371 = vadd.f32 %v3257, %v3370
      %v3372 = vpop.f32.mrf.mxu0
      %v3373 = vadd.f32 %v3259, %v3372
      %3374 = vmatmul.bf16.gmra.mxu0 %v2491
      %v3375 = vpop.f32.mrf.mxu0
      %v3376 = vadd.f32 %v3262, %v3375
      %v3377 = vpop.f32.mrf.mxu0
      %v3378 = vadd.f32 %v3264, %v3377
      %3379 = vmatmul.bf16.gmra.mxu0 %v2500
      %v3380 = vpop.f32.mrf.mxu0
      %v3381 = vadd.f32 %v3267, %v3380
      %v3382 = vpop.f32.mrf.mxu0
      %v3383 = vadd.f32 %v3269, %v3382
      %3384 = vmatmul.bf16.gmra.mxu0 %v2509
      %v3385 = vpop.f32.mrf.mxu0
      %v3386 = vadd.f32 %v3272, %v3385
      %v3387 = vpop.f32.mrf.mxu0
      %v3388 = vadd.f32 %v3274, %v3387
      %3389 = vmatmul.bf16.gmra.mxu0 %v2518
      %v3390 = vpop.f32.mrf.mxu0
      %v3391 = vadd.f32 %v3277, %v3390
      %v3392 = vpop.f32.mrf.mxu0
      %v3393 = vadd.f32 %v3279, %v3392
      %3394 = vmatmul.bf16.gmra.mxu0 %v2527
      %v3395 = vpop.f32.mrf.mxu0
      %v3396 = vadd.f32 %v3282, %v3395
      %v3397 = vpop.f32.mrf.mxu0
      %v3398 = vadd.f32 %v3284, %v3397
      %3399 = vmatmul.bf16.gmra.mxu0 %v2536
      %v3400 = vpop.f32.mrf.mxu0
      %v3401 = vadd.f32 %v3287, %v3400
      %v3402 = vpop.f32.mrf.mxu0
      %v3403 = vadd.f32 %v3289, %v3402
      %3404 = vmatmul.bf16.gmra.mxu0 %v2545
      %v3405 = vpop.f32.mrf.mxu0
      %v3406 = vadd.f32 %v3292, %v3405
      %v3407 = vpop.f32.mrf.mxu0
      %v3408 = vadd.f32 %v3294, %v3407
      %3409 = vmatmul.bf16.gmra.mxu0 %v2554
      %v3410 = vpop.f32.mrf.mxu0
      %v3411 = vadd.f32 %v3297, %v3410
      %v3412 = vpop.f32.mrf.mxu0
      %v3413 = vadd.f32 %v3299, %v3412
      %3414 = vmatmul.bf16.gmra.mxu0 %v2563
      %v3415 = vpop.f32.mrf.mxu0
      %v3416 = vadd.f32 %v3302, %v3415
      %v3417 = vpop.f32.mrf.mxu0
      %v3418 = vadd.f32 %v3304, %v3417
      %3419 = vdwg.mxu0
      %3420 = vmatpush.bf16.msra.mxu0 %v3071
      %3421 = vmatpush.bf16.msra.mxu0 %v3070
      %3422 = vmatpush.bf16.msra.mxu0 %v3069
      %3423 = vmatpush.bf16.msra.mxu0 %v3068
      %3424 = vmatpush.bf16.msra.mxu0 %v3067
      %3425 = vmatpush.bf16.msra.mxu0 %v3066
      %3426 = vmatpush.bf16.msra.mxu0 %v3065
      %3427 = vmatpush.bf16.msra.mxu0 %v3064
      %3428 = vmatmul.bf16.gmra.mxu0 %v2384
      %v3429 = vpop.f32.mrf.mxu0
      %v3430 = vadd.f32 %v3316, %v3429
      %v3431 = vpop.f32.mrf.mxu0
      %v3432 = vadd.f32 %v3318, %v3431
      %3433 = vmatmul.bf16.gmra.mxu0 %v2393
      %v3434 = vpop.f32.mrf.mxu0
      %v3435 = vadd.f32 %v3321, %v3434
      %v3436 = vpop.f32.mrf.mxu0
      %v3437 = vadd.f32 %v3323, %v3436
      %3438 = vmatmul.bf16.gmra.mxu0 %v2402
      %v3439 = vpop.f32.mrf.mxu0
      %v3440 = vadd.f32 %v3326, %v3439
      %v3441 = vpop.f32.mrf.mxu0
      %v3442 = vadd.f32 %v3328, %v3441
      %3443 = vmatmul.bf16.gmra.mxu0 %v2411
      %v3444 = vpop.f32.mrf.mxu0
      %v3445 = vadd.f32 %v3331, %v3444
      %v3446 = vpop.f32.mrf.mxu0
      %v3447 = vadd.f32 %v3333, %v3446
      %3448 = vmatmul.bf16.gmra.mxu0 %v2420
      %v3449 = vpop.f32.mrf.mxu0
      %v3450 = vadd.f32 %v3336, %v3449
      %v3451 = vpop.f32.mrf.mxu0
      %v3452 = vadd.f32 %v3338, %v3451
      %3453 = vmatmul.bf16.gmra.mxu0 %v2429
      %v3454 = vpop.f32.mrf.mxu0
      %v3455 = vadd.f32 %v3341, %v3454
      %v3456 = vpop.f32.mrf.mxu0
      %v3457 = vadd.f32 %v3343, %v3456
      %3458 = vmatmul.bf16.gmra.mxu0 %v2438
      %v3459 = vpop.f32.mrf.mxu0
      %v3460 = vadd.f32 %v3346, %v3459
      %v3461 = vpop.f32.mrf.mxu0
      %v3462 = vadd.f32 %v3348, %v3461
      %3463 = vmatmul.bf16.gmra.mxu0 %v2447
      %v3464 = vpop.f32.mrf.mxu0
      %v3465 = vadd.f32 %v3351, %v3464
      %v3466 = vpop.f32.mrf.mxu0
      %v3467 = vadd.f32 %v3353, %v3466
      %3468 = vmatmul.bf16.gmra.mxu0 %v2456
      %v3469 = vpop.f32.mrf.mxu0
      %v3470 = vadd.f32 %v3356, %v3469
      %v3471 = vpop.f32.mrf.mxu0
      %v3472 = vadd.f32 %v3358, %v3471
      %3473 = vmatmul.bf16.gmra.mxu0 %v2465
      %v3474 = vpop.f32.mrf.mxu0
      %v3475 = vadd.f32 %v3361, %v3474
      %v3476 = vpop.f32.mrf.mxu0
      %v3477 = vadd.f32 %v3363, %v3476
      %3478 = vmatmul.bf16.gmra.mxu0 %v2474
      %v3479 = vpop.f32.mrf.mxu0
      %v3480 = vadd.f32 %v3366, %v3479
      %v3481 = vpop.f32.mrf.mxu0
      %v3482 = vadd.f32 %v3368, %v3481
      %3483 = vmatmul.bf16.gmra.mxu0 %v2483
      %v3484 = vpop.f32.mrf.mxu0
      %v3485 = vadd.f32 %v3371, %v3484
      %v3486 = vpop.f32.mrf.mxu0
      %v3487 = vadd.f32 %v3373, %v3486
      %3488 = vmatmul.bf16.gmra.mxu0 %v2492
      %v3489 = vpop.f32.mrf.mxu0
      %v3490 = vadd.f32 %v3376, %v3489
      %v3491 = vpop.f32.mrf.mxu0
      %v3492 = vadd.f32 %v3378, %v3491
      %3493 = vmatmul.bf16.gmra.mxu0 %v2501
      %v3494 = vpop.f32.mrf.mxu0
      %v3495 = vadd.f32 %v3381, %v3494
      %v3496 = vpop.f32.mrf.mxu0
      %v3497 = vadd.f32 %v3383, %v3496
      %3498 = vmatmul.bf16.gmra.mxu0 %v2510
      %v3499 = vpop.f32.mrf.mxu0
      %v3500 = vadd.f32 %v3386, %v3499
      %v3501 = vpop.f32.mrf.mxu0
      %v3502 = vadd.f32 %v3388, %v3501
      %3503 = vmatmul.bf16.gmra.mxu0 %v2519
      %v3504 = vpop.f32.mrf.mxu0
      %v3505 = vadd.f32 %v3391, %v3504
      %v3506 = vpop.f32.mrf.mxu0
      %v3507 = vadd.f32 %v3393, %v3506
      %3508 = vmatmul.bf16.gmra.mxu0 %v2528
      %v3509 = vpop.f32.mrf.mxu0
      %v3510 = vadd.f32 %v3396, %v3509
      %v3511 = vpop.f32.mrf.mxu0
      %v3512 = vadd.f32 %v3398, %v3511
      %3513 = vmatmul.bf16.gmra.mxu0 %v2537
      %v3514 = vpop.f32.mrf.mxu0
      %v3515 = vadd.f32 %v3401, %v3514
      %v3516 = vpop.f32.mrf.mxu0
      %v3517 = vadd.f32 %v3403, %v3516
      %3518 = vmatmul.bf16.gmra.mxu0 %v2546
      %v3519 = vpop.f32.mrf.mxu0
      %v3520 = vadd.f32 %v3406, %v3519
      %v3521 = vpop.f32.mrf.mxu0
      %v3522 = vadd.f32 %v3408, %v3521
      %3523 = vmatmul.bf16.gmra.mxu0 %v2555
      %v3524 = vpop.f32.mrf.mxu0
      %v3525 = vadd.f32 %v3411, %v3524
      %v3526 = vpop.f32.mrf.mxu0
      %v3527 = vadd.f32 %v3413, %v3526
      %3528 = vmatmul.bf16.gmra.mxu0 %v2564
      %v3529 = vpop.f32.mrf.mxu0
      %v3530 = vadd.f32 %v3416, %v3529
      %v3531 = vpop.f32.mrf.mxu0
      %v3532 = vadd.f32 %v3418, %v3531
      %3533 = vdwg.mxu0
      %3534 = vmatpush.bf16.msra.mxu0 %v3079
      %3535 = vmatpush.bf16.msra.mxu0 %v3078
      %3536 = vmatpush.bf16.msra.mxu0 %v3077
      %3537 = vmatpush.bf16.msra.mxu0 %v3076
      %3538 = vmatpush.bf16.msra.mxu0 %v3075
      %3539 = vmatpush.bf16.msra.mxu0 %v3074
      %3540 = vmatpush.bf16.msra.mxu0 %v3073
      %3541 = vmatpush.bf16.msra.mxu0 %v3072
      %3542 = vmatmul.bf16.gmra.mxu0 %v2385
      %v3543 = vpop.f32.mrf.mxu0
      %v3544 = vadd.f32 %v3430, %v3543
      %v3545 = vpop.f32.mrf.mxu0
      %v3546 = vadd.f32 %v3432, %v3545
      %3547 = vmatmul.bf16.gmra.mxu0 %v2394
      %v3548 = vpop.f32.mrf.mxu0
      %v3549 = vadd.f32 %v3435, %v3548
      %v3550 = vpop.f32.mrf.mxu0
      %v3551 = vadd.f32 %v3437, %v3550
      %3552 = vmatmul.bf16.gmra.mxu0 %v2403
      %v3553 = vpop.f32.mrf.mxu0
      %v3554 = vadd.f32 %v3440, %v3553
      %v3555 = vpop.f32.mrf.mxu0
      %v3556 = vadd.f32 %v3442, %v3555
      %3557 = vmatmul.bf16.gmra.mxu0 %v2412
      %v3558 = vpop.f32.mrf.mxu0
      %v3559 = vadd.f32 %v3445, %v3558
      %v3560 = vpop.f32.mrf.mxu0
      %v3561 = vadd.f32 %v3447, %v3560
      %3562 = vmatmul.bf16.gmra.mxu0 %v2421
      %v3563 = vpop.f32.mrf.mxu0
      %v3564 = vadd.f32 %v3450, %v3563
      %v3565 = vpop.f32.mrf.mxu0
      %v3566 = vadd.f32 %v3452, %v3565
      %3567 = vmatmul.bf16.gmra.mxu0 %v2430
      %v3568 = vpop.f32.mrf.mxu0
      %v3569 = vadd.f32 %v3455, %v3568
      %v3570 = vpop.f32.mrf.mxu0
      %v3571 = vadd.f32 %v3457, %v3570
      %3572 = vmatmul.bf16.gmra.mxu0 %v2439
      %v3573 = vpop.f32.mrf.mxu0
      %v3574 = vadd.f32 %v3460, %v3573
      %v3575 = vpop.f32.mrf.mxu0
      %v3576 = vadd.f32 %v3462, %v3575
      %3577 = vmatmul.bf16.gmra.mxu0 %v2448
      %v3578 = vpop.f32.mrf.mxu0
      %v3579 = vadd.f32 %v3465, %v3578
      %v3580 = vpop.f32.mrf.mxu0
      %v3581 = vadd.f32 %v3467, %v3580
      %3582 = vmatmul.bf16.gmra.mxu0 %v2457
      %v3583 = vpop.f32.mrf.mxu0
      %v3584 = vadd.f32 %v3470, %v3583
      %v3585 = vpop.f32.mrf.mxu0
      %v3586 = vadd.f32 %v3472, %v3585
      %3587 = vmatmul.bf16.gmra.mxu0 %v2466
      %v3588 = vpop.f32.mrf.mxu0
      %v3589 = vadd.f32 %v3475, %v3588
      %v3590 = vpop.f32.mrf.mxu0
      %v3591 = vadd.f32 %v3477, %v3590
      %3592 = vmatmul.bf16.gmra.mxu0 %v2475
      %v3593 = vpop.f32.mrf.mxu0
      %v3594 = vadd.f32 %v3480, %v3593
      %v3595 = vpop.f32.mrf.mxu0
      %v3596 = vadd.f32 %v3482, %v3595
      %3597 = vmatmul.bf16.gmra.mxu0 %v2484
      %v3598 = vpop.f32.mrf.mxu0
      %v3599 = vadd.f32 %v3485, %v3598
      %v3600 = vpop.f32.mrf.mxu0
      %v3601 = vadd.f32 %v3487, %v3600
      %3602 = vmatmul.bf16.gmra.mxu0 %v2493
      %v3603 = vpop.f32.mrf.mxu0
      %v3604 = vadd.f32 %v3490, %v3603
      %v3605 = vpop.f32.mrf.mxu0
      %v3606 = vadd.f32 %v3492, %v3605
      %3607 = vmatmul.bf16.gmra.mxu0 %v2502
      %v3608 = vpop.f32.mrf.mxu0
      %v3609 = vadd.f32 %v3495, %v3608
      %v3610 = vpop.f32.mrf.mxu0
      %v3611 = vadd.f32 %v3497, %v3610
      %3612 = vmatmul.bf16.gmra.mxu0 %v2511
      %v3613 = vpop.f32.mrf.mxu0
      %v3614 = vadd.f32 %v3500, %v3613
      %v3615 = vpop.f32.mrf.mxu0
      %v3616 = vadd.f32 %v3502, %v3615
      %3617 = vmatmul.bf16.gmra.mxu0 %v2520
      %v3618 = vpop.f32.mrf.mxu0
      %v3619 = vadd.f32 %v3505, %v3618
      %v3620 = vpop.f32.mrf.mxu0
      %v3621 = vadd.f32 %v3507, %v3620
      %3622 = vmatmul.bf16.gmra.mxu0 %v2529
      %v3623 = vpop.f32.mrf.mxu0
      %v3624 = vadd.f32 %v3510, %v3623
      %v3625 = vpop.f32.mrf.mxu0
      %v3626 = vadd.f32 %v3512, %v3625
      %3627 = vmatmul.bf16.gmra.mxu0 %v2538
      %v3628 = vpop.f32.mrf.mxu0
      %v3629 = vadd.f32 %v3515, %v3628
      %v3630 = vpop.f32.mrf.mxu0
      %v3631 = vadd.f32 %v3517, %v3630
      %3632 = vmatmul.bf16.gmra.mxu0 %v2547
      %v3633 = vpop.f32.mrf.mxu0
      %v3634 = vadd.f32 %v3520, %v3633
      %v3635 = vpop.f32.mrf.mxu0
      %v3636 = vadd.f32 %v3522, %v3635
      %3637 = vmatmul.bf16.gmra.mxu0 %v2556
      %v3638 = vpop.f32.mrf.mxu0
      %v3639 = vadd.f32 %v3525, %v3638
      %v3640 = vpop.f32.mrf.mxu0
      %v3641 = vadd.f32 %v3527, %v3640
      %3642 = vmatmul.bf16.gmra.mxu0 %v2565
      %v3643 = vpop.f32.mrf.mxu0
      %v3644 = vadd.f32 %v3530, %v3643
      %v3645 = vpop.f32.mrf.mxu0
      %v3646 = vadd.f32 %v3532, %v3645
      %3647 = vdwg.mxu0
      %3648 = vmatpush.bf16.msra.mxu0 %v3087
      %3649 = vmatpush.bf16.msra.mxu0 %v3086
      %3650 = vmatpush.bf16.msra.mxu0 %v3085
      %3651 = vmatpush.bf16.msra.mxu0 %v3084
      %3652 = vmatpush.bf16.msra.mxu0 %v3083
      %3653 = vmatpush.bf16.msra.mxu0 %v3082
      %3654 = vmatpush.bf16.msra.mxu0 %v3081
      %3655 = vmatpush.bf16.msra.mxu0 %v3080
      %3656 = vmatmul.bf16.gmra.mxu0 %v2386
      %v3657 = vpop.f32.mrf.mxu0
      %v3658 = vadd.f32 %v3544, %v3657
      %v3659 = vpop.f32.mrf.mxu0
      %v3660 = vadd.f32 %v3546, %v3659
      %3661 = vmatmul.bf16.gmra.mxu0 %v2395
      %v3662 = vpop.f32.mrf.mxu0
      %v3663 = vadd.f32 %v3549, %v3662
      %v3664 = vpop.f32.mrf.mxu0
      %v3665 = vadd.f32 %v3551, %v3664
      %3666 = vmatmul.bf16.gmra.mxu0 %v2404
      %v3667 = vpop.f32.mrf.mxu0
      %v3668 = vadd.f32 %v3554, %v3667
      %v3669 = vpop.f32.mrf.mxu0
      %v3670 = vadd.f32 %v3556, %v3669
      %3671 = vmatmul.bf16.gmra.mxu0 %v2413
      %v3672 = vpop.f32.mrf.mxu0
      %v3673 = vadd.f32 %v3559, %v3672
      %v3674 = vpop.f32.mrf.mxu0
      %v3675 = vadd.f32 %v3561, %v3674
      %3676 = vmatmul.bf16.gmra.mxu0 %v2422
      %v3677 = vpop.f32.mrf.mxu0
      %v3678 = vadd.f32 %v3564, %v3677
      %v3679 = vpop.f32.mrf.mxu0
      %v3680 = vadd.f32 %v3566, %v3679
      %3681 = vmatmul.bf16.gmra.mxu0 %v2431
      %v3682 = vpop.f32.mrf.mxu0
      %v3683 = vadd.f32 %v3569, %v3682
      %v3684 = vpop.f32.mrf.mxu0
      %v3685 = vadd.f32 %v3571, %v3684
      %3686 = vmatmul.bf16.gmra.mxu0 %v2440
      %v3687 = vpop.f32.mrf.mxu0
      %v3688 = vadd.f32 %v3574, %v3687
      %v3689 = vpop.f32.mrf.mxu0
      %v3690 = vadd.f32 %v3576, %v3689
      %3691 = vmatmul.bf16.gmra.mxu0 %v2449
      %v3692 = vpop.f32.mrf.mxu0
      %v3693 = vadd.f32 %v3579, %v3692
      %v3694 = vpop.f32.mrf.mxu0
      %v3695 = vadd.f32 %v3581, %v3694
      %3696 = vmatmul.bf16.gmra.mxu0 %v2458
      %v3697 = vpop.f32.mrf.mxu0
      %v3698 = vadd.f32 %v3584, %v3697
      %v3699 = vpop.f32.mrf.mxu0
      %v3700 = vadd.f32 %v3586, %v3699
      %3701 = vmatmul.bf16.gmra.mxu0 %v2467
      %v3702 = vpop.f32.mrf.mxu0
      %v3703 = vadd.f32 %v3589, %v3702
      %v3704 = vpop.f32.mrf.mxu0
      %v3705 = vadd.f32 %v3591, %v3704
      %3706 = vmatmul.bf16.gmra.mxu0 %v2476
      %v3707 = vpop.f32.mrf.mxu0
      %v3708 = vadd.f32 %v3594, %v3707
      %v3709 = vpop.f32.mrf.mxu0
      %v3710 = vadd.f32 %v3596, %v3709
      %3711 = vmatmul.bf16.gmra.mxu0 %v2485
      %v3712 = vpop.f32.mrf.mxu0
      %v3713 = vadd.f32 %v3599, %v3712
      %v3714 = vpop.f32.mrf.mxu0
      %v3715 = vadd.f32 %v3601, %v3714
      %3716 = vmatmul.bf16.gmra.mxu0 %v2494
      %v3717 = vpop.f32.mrf.mxu0
      %v3718 = vadd.f32 %v3604, %v3717
      %v3719 = vpop.f32.mrf.mxu0
      %v3720 = vadd.f32 %v3606, %v3719
      %3721 = vmatmul.bf16.gmra.mxu0 %v2503
      %v3722 = vpop.f32.mrf.mxu0
      %v3723 = vadd.f32 %v3609, %v3722
      %v3724 = vpop.f32.mrf.mxu0
      %v3725 = vadd.f32 %v3611, %v3724
      %3726 = vmatmul.bf16.gmra.mxu0 %v2512
      %v3727 = vpop.f32.mrf.mxu0
      %v3728 = vadd.f32 %v3614, %v3727
      %v3729 = vpop.f32.mrf.mxu0
      %v3730 = vadd.f32 %v3616, %v3729
      %3731 = vmatmul.bf16.gmra.mxu0 %v2521
      %v3732 = vpop.f32.mrf.mxu0
      %v3733 = vadd.f32 %v3619, %v3732
      %v3734 = vpop.f32.mrf.mxu0
      %v3735 = vadd.f32 %v3621, %v3734
      %3736 = vmatmul.bf16.gmra.mxu0 %v2530
      %v3737 = vpop.f32.mrf.mxu0
      %v3738 = vadd.f32 %v3624, %v3737
      %v3739 = vpop.f32.mrf.mxu0
      %v3740 = vadd.f32 %v3626, %v3739
      %3741 = vmatmul.bf16.gmra.mxu0 %v2539
      %v3742 = vpop.f32.mrf.mxu0
      %v3743 = vadd.f32 %v3629, %v3742
      %v3744 = vpop.f32.mrf.mxu0
      %v3745 = vadd.f32 %v3631, %v3744
      %3746 = vmatmul.bf16.gmra.mxu0 %v2548
      %v3747 = vpop.f32.mrf.mxu0
      %v3748 = vadd.f32 %v3634, %v3747
      %v3749 = vpop.f32.mrf.mxu0
      %v3750 = vadd.f32 %v3636, %v3749
      %3751 = vmatmul.bf16.gmra.mxu0 %v2557
      %v3752 = vpop.f32.mrf.mxu0
      %v3753 = vadd.f32 %v3639, %v3752
      %v3754 = vpop.f32.mrf.mxu0
      %v3755 = vadd.f32 %v3641, %v3754
      %3756 = vmatmul.bf16.gmra.mxu0 %v2566
      %v3757 = vpop.f32.mrf.mxu0
      %v3758 = vadd.f32 %v3644, %v3757
      %v3759 = vpop.f32.mrf.mxu0
      %v3760 = vadd.f32 %v3646, %v3759
      %3761 = vdwg.mxu0
      %3762 = vmatpush.bf16.msra.mxu0 %v3095
      %3763 = vmatpush.bf16.msra.mxu0 %v3094
      %3764 = vmatpush.bf16.msra.mxu0 %v3093
      %3765 = vmatpush.bf16.msra.mxu0 %v3092
      %3766 = vmatpush.bf16.msra.mxu0 %v3091
      %3767 = vmatpush.bf16.msra.mxu0 %v3090
      %3768 = vmatpush.bf16.msra.mxu0 %v3089
      %3769 = vmatpush.bf16.msra.mxu0 %v3088
      %3770 = vmatmul.bf16.gmra.mxu0 %v2387
      %v3771 = vpop.f32.mrf.mxu0
      %v3772 = vadd.f32 %v3658, %v3771
      %v3773 = vpop.f32.mrf.mxu0
      %v3774 = vadd.f32 %v3660, %v3773
      %3775 = vmatmul.bf16.gmra.mxu0 %v2396
      %v3776 = vpop.f32.mrf.mxu0
      %v3777 = vadd.f32 %v3663, %v3776
      %v3778 = vpop.f32.mrf.mxu0
      %v3779 = vadd.f32 %v3665, %v3778
      %3780 = vmatmul.bf16.gmra.mxu0 %v2405
      %v3781 = vpop.f32.mrf.mxu0
      %v3782 = vadd.f32 %v3668, %v3781
      %v3783 = vpop.f32.mrf.mxu0
      %v3784 = vadd.f32 %v3670, %v3783
      %3785 = vmatmul.bf16.gmra.mxu0 %v2414
      %v3786 = vpop.f32.mrf.mxu0
      %v3787 = vadd.f32 %v3673, %v3786
      %v3788 = vpop.f32.mrf.mxu0
      %v3789 = vadd.f32 %v3675, %v3788
      %3790 = vmatmul.bf16.gmra.mxu0 %v2423
      %v3791 = vpop.f32.mrf.mxu0
      %v3792 = vadd.f32 %v3678, %v3791
      %v3793 = vpop.f32.mrf.mxu0
      %v3794 = vadd.f32 %v3680, %v3793
      %3795 = vmatmul.bf16.gmra.mxu0 %v2432
      %v3796 = vpop.f32.mrf.mxu0
      %v3797 = vadd.f32 %v3683, %v3796
      %v3798 = vpop.f32.mrf.mxu0
      %v3799 = vadd.f32 %v3685, %v3798
      %3800 = vmatmul.bf16.gmra.mxu0 %v2441
      %v3801 = vpop.f32.mrf.mxu0
      %v3802 = vadd.f32 %v3688, %v3801
      %v3803 = vpop.f32.mrf.mxu0
      %v3804 = vadd.f32 %v3690, %v3803
      %3805 = vmatmul.bf16.gmra.mxu0 %v2450
      %v3806 = vpop.f32.mrf.mxu0
      %v3807 = vadd.f32 %v3693, %v3806
      %v3808 = vpop.f32.mrf.mxu0
      %v3809 = vadd.f32 %v3695, %v3808
      %3810 = vmatmul.bf16.gmra.mxu0 %v2459
      %v3811 = vpop.f32.mrf.mxu0
      %v3812 = vadd.f32 %v3698, %v3811
      %v3813 = vpop.f32.mrf.mxu0
      %v3814 = vadd.f32 %v3700, %v3813
      %3815 = vmatmul.bf16.gmra.mxu0 %v2468
      %v3816 = vpop.f32.mrf.mxu0
      %v3817 = vadd.f32 %v3703, %v3816
      %v3818 = vpop.f32.mrf.mxu0
      %v3819 = vadd.f32 %v3705, %v3818
      %3820 = vmatmul.bf16.gmra.mxu0 %v2477
      %v3821 = vpop.f32.mrf.mxu0
      %v3822 = vadd.f32 %v3708, %v3821
      %v3823 = vpop.f32.mrf.mxu0
      %v3824 = vadd.f32 %v3710, %v3823
      %3825 = vmatmul.bf16.gmra.mxu0 %v2486
      %v3826 = vpop.f32.mrf.mxu0
      %v3827 = vadd.f32 %v3713, %v3826
      %v3828 = vpop.f32.mrf.mxu0
      %v3829 = vadd.f32 %v3715, %v3828
      %3830 = vmatmul.bf16.gmra.mxu0 %v2495
      %v3831 = vpop.f32.mrf.mxu0
      %v3832 = vadd.f32 %v3718, %v3831
      %v3833 = vpop.f32.mrf.mxu0
      %v3834 = vadd.f32 %v3720, %v3833
      %3835 = vmatmul.bf16.gmra.mxu0 %v2504
      %v3836 = vpop.f32.mrf.mxu0
      %v3837 = vadd.f32 %v3723, %v3836
      %v3838 = vpop.f32.mrf.mxu0
      %v3839 = vadd.f32 %v3725, %v3838
      %3840 = vmatmul.bf16.gmra.mxu0 %v2513
      %v3841 = vpop.f32.mrf.mxu0
      %v3842 = vadd.f32 %v3728, %v3841
      %v3843 = vpop.f32.mrf.mxu0
      %v3844 = vadd.f32 %v3730, %v3843
      %3845 = vmatmul.bf16.gmra.mxu0 %v2522
      %v3846 = vpop.f32.mrf.mxu0
      %v3847 = vadd.f32 %v3733, %v3846
      %v3848 = vpop.f32.mrf.mxu0
      %v3849 = vadd.f32 %v3735, %v3848
      %3850 = vmatmul.bf16.gmra.mxu0 %v2531
      %v3851 = vpop.f32.mrf.mxu0
      %v3852 = vadd.f32 %v3738, %v3851
      %v3853 = vpop.f32.mrf.mxu0
      %v3854 = vadd.f32 %v3740, %v3853
      %3855 = vmatmul.bf16.gmra.mxu0 %v2540
      %v3856 = vpop.f32.mrf.mxu0
      %v3857 = vadd.f32 %v3743, %v3856
      %v3858 = vpop.f32.mrf.mxu0
      %v3859 = vadd.f32 %v3745, %v3858
      %3860 = vmatmul.bf16.gmra.mxu0 %v2549
      %v3861 = vpop.f32.mrf.mxu0
      %v3862 = vadd.f32 %v3748, %v3861
      %v3863 = vpop.f32.mrf.mxu0
      %v3864 = vadd.f32 %v3750, %v3863
      %3865 = vmatmul.bf16.gmra.mxu0 %v2558
      %v3866 = vpop.f32.mrf.mxu0
      %v3867 = vadd.f32 %v3753, %v3866
      %v3868 = vpop.f32.mrf.mxu0
      %v3869 = vadd.f32 %v3755, %v3868
      %3870 = vmatmul.bf16.gmra.mxu0 %v2567
      %v3871 = vpop.f32.mrf.mxu0
      %v3872 = vadd.f32 %v3758, %v3871
      %v3873 = vpop.f32.mrf.mxu0
      %v3874 = vadd.f32 %v3760, %v3873
      %3875 = vdwg.mxu0
      %3876 = vmatpush.bf16.msra.mxu0 %v3103
      %3877 = vmatpush.bf16.msra.mxu0 %v3102
      %3878 = vmatpush.bf16.msra.mxu0 %v3101
      %3879 = vmatpush.bf16.msra.mxu0 %v3100
      %3880 = vmatpush.bf16.msra.mxu0 %v3099
      %3881 = vmatpush.bf16.msra.mxu0 %v3098
      %3882 = vmatpush.bf16.msra.mxu0 %v3097
      %3883 = vmatpush.bf16.msra.mxu0 %v3096
      %3884 = vmatmul.bf16.gmra.mxu0 %v2388
      %v3885 = vpop.f32.mrf.mxu0
      %v3886 = vadd.f32 %v3772, %v3885
      %v3887 = vpop.f32.mrf.mxu0
      %v3888 = vadd.f32 %v3774, %v3887
      %3889 = vmatmul.bf16.gmra.mxu0 %v2397
      %v3890 = vpop.f32.mrf.mxu0
      %v3891 = vadd.f32 %v3777, %v3890
      %v3892 = vpop.f32.mrf.mxu0
      %v3893 = vadd.f32 %v3779, %v3892
      %3894 = vmatmul.bf16.gmra.mxu0 %v2406
      %v3895 = vpop.f32.mrf.mxu0
      %v3896 = vadd.f32 %v3782, %v3895
      %v3897 = vpop.f32.mrf.mxu0
      %v3898 = vadd.f32 %v3784, %v3897
      %3899 = vmatmul.bf16.gmra.mxu0 %v2415
      %v3900 = vpop.f32.mrf.mxu0
      %v3901 = vadd.f32 %v3787, %v3900
      %v3902 = vpop.f32.mrf.mxu0
      %v3903 = vadd.f32 %v3789, %v3902
      %3904 = vmatmul.bf16.gmra.mxu0 %v2424
      %v3905 = vpop.f32.mrf.mxu0
      %v3906 = vadd.f32 %v3792, %v3905
      %v3907 = vpop.f32.mrf.mxu0
      %v3908 = vadd.f32 %v3794, %v3907
      %3909 = vmatmul.bf16.gmra.mxu0 %v2433
      %v3910 = vpop.f32.mrf.mxu0
      %v3911 = vadd.f32 %v3797, %v3910
      %v3912 = vpop.f32.mrf.mxu0
      %v3913 = vadd.f32 %v3799, %v3912
      %3914 = vmatmul.bf16.gmra.mxu0 %v2442
      %v3915 = vpop.f32.mrf.mxu0
      %v3916 = vadd.f32 %v3802, %v3915
      %v3917 = vpop.f32.mrf.mxu0
      %v3918 = vadd.f32 %v3804, %v3917
      %3919 = vmatmul.bf16.gmra.mxu0 %v2451
      %v3920 = vpop.f32.mrf.mxu0
      %v3921 = vadd.f32 %v3807, %v3920
      %v3922 = vpop.f32.mrf.mxu0
      %v3923 = vadd.f32 %v3809, %v3922
      %3924 = vmatmul.bf16.gmra.mxu0 %v2460
      %v3925 = vpop.f32.mrf.mxu0
      %v3926 = vadd.f32 %v3812, %v3925
      %v3927 = vpop.f32.mrf.mxu0
      %v3928 = vadd.f32 %v3814, %v3927
      %3929 = vmatmul.bf16.gmra.mxu0 %v2469
      %v3930 = vpop.f32.mrf.mxu0
      %v3931 = vadd.f32 %v3817, %v3930
      %v3932 = vpop.f32.mrf.mxu0
      %v3933 = vadd.f32 %v3819, %v3932
      %3934 = vmatmul.bf16.gmra.mxu0 %v2478
      %v3935 = vpop.f32.mrf.mxu0
      %v3936 = vadd.f32 %v3822, %v3935
      %v3937 = vpop.f32.mrf.mxu0
      %v3938 = vadd.f32 %v3824, %v3937
      %3939 = vmatmul.bf16.gmra.mxu0 %v2487
      %v3940 = vpop.f32.mrf.mxu0
      %v3941 = vadd.f32 %v3827, %v3940
      %v3942 = vpop.f32.mrf.mxu0
      %v3943 = vadd.f32 %v3829, %v3942
      %3944 = vmatmul.bf16.gmra.mxu0 %v2496
      %v3945 = vpop.f32.mrf.mxu0
      %v3946 = vadd.f32 %v3832, %v3945
      %v3947 = vpop.f32.mrf.mxu0
      %v3948 = vadd.f32 %v3834, %v3947
      %3949 = vmatmul.bf16.gmra.mxu0 %v2505
      %v3950 = vpop.f32.mrf.mxu0
      %v3951 = vadd.f32 %v3837, %v3950
      %v3952 = vpop.f32.mrf.mxu0
      %v3953 = vadd.f32 %v3839, %v3952
      %3954 = vmatmul.bf16.gmra.mxu0 %v2514
      %v3955 = vpop.f32.mrf.mxu0
      %v3956 = vadd.f32 %v3842, %v3955
      %v3957 = vpop.f32.mrf.mxu0
      %v3958 = vadd.f32 %v3844, %v3957
      %3959 = vmatmul.bf16.gmra.mxu0 %v2523
      %v3960 = vpop.f32.mrf.mxu0
      %v3961 = vadd.f32 %v3847, %v3960
      %v3962 = vpop.f32.mrf.mxu0
      %v3963 = vadd.f32 %v3849, %v3962
      %3964 = vmatmul.bf16.gmra.mxu0 %v2532
      %v3965 = vpop.f32.mrf.mxu0
      %v3966 = vadd.f32 %v3852, %v3965
      %v3967 = vpop.f32.mrf.mxu0
      %v3968 = vadd.f32 %v3854, %v3967
      %3969 = vmatmul.bf16.gmra.mxu0 %v2541
      %v3970 = vpop.f32.mrf.mxu0
      %v3971 = vadd.f32 %v3857, %v3970
      %v3972 = vpop.f32.mrf.mxu0
      %v3973 = vadd.f32 %v3859, %v3972
      %3974 = vmatmul.bf16.gmra.mxu0 %v2550
      %v3975 = vpop.f32.mrf.mxu0
      %v3976 = vadd.f32 %v3862, %v3975
      %v3977 = vpop.f32.mrf.mxu0
      %v3978 = vadd.f32 %v3864, %v3977
      %3979 = vmatmul.bf16.gmra.mxu0 %v2559
      %v3980 = vpop.f32.mrf.mxu0
      %v3981 = vadd.f32 %v3867, %v3980
      %v3982 = vpop.f32.mrf.mxu0
      %v3983 = vadd.f32 %v3869, %v3982
      %3984 = vmatmul.bf16.gmra.mxu0 %v2568
      %v3985 = vpop.f32.mrf.mxu0
      %v3986 = vadd.f32 %v3872, %v3985
      %v3987 = vpop.f32.mrf.mxu0
      %v3988 = vadd.f32 %v3874, %v3987
      %3989 = vdwg.mxu0
      %3990 = vmatpush.bf16.msra.mxu0 %v3111
      %3991 = vmatpush.bf16.msra.mxu0 %v3110
      %3992 = vmatpush.bf16.msra.mxu0 %v3109
      %3993 = vmatpush.bf16.msra.mxu0 %v3108
      %3994 = vmatpush.bf16.msra.mxu0 %v3107
      %3995 = vmatpush.bf16.msra.mxu0 %v3106
      %3996 = vmatpush.bf16.msra.mxu0 %v3105
      %3997 = vmatpush.bf16.msra.mxu0 %v3104
      %3998 = vmatmul.bf16.gmra.mxu0 %v2389
      %v3999 = vpop.f32.mrf.mxu0
      %v4000 = vadd.f32 %v3886, %v3999
      %v4001 = vpop.f32.mrf.mxu0
      %v4002 = vadd.f32 %v3888, %v4001
      %4003 = vmatmul.bf16.gmra.mxu0 %v2398
      %v4004 = vpop.f32.mrf.mxu0
      %v4005 = vadd.f32 %v3891, %v4004
      %v4006 = vpop.f32.mrf.mxu0
      %v4007 = vadd.f32 %v3893, %v4006
      %4008 = vmatmul.bf16.gmra.mxu0 %v2407
      %v4009 = vpop.f32.mrf.mxu0
      %v4010 = vadd.f32 %v3896, %v4009
      %v4011 = vpop.f32.mrf.mxu0
      %v4012 = vadd.f32 %v3898, %v4011
      %4013 = vmatmul.bf16.gmra.mxu0 %v2416
      %v4014 = vpop.f32.mrf.mxu0
      %v4015 = vadd.f32 %v3901, %v4014
      %v4016 = vpop.f32.mrf.mxu0
      %v4017 = vadd.f32 %v3903, %v4016
      %4018 = vmatmul.bf16.gmra.mxu0 %v2425
      %v4019 = vpop.f32.mrf.mxu0
      %v4020 = vadd.f32 %v3906, %v4019
      %v4021 = vpop.f32.mrf.mxu0
      %v4022 = vadd.f32 %v3908, %v4021
      %4023 = vmatmul.bf16.gmra.mxu0 %v2434
      %v4024 = vpop.f32.mrf.mxu0
      %v4025 = vadd.f32 %v3911, %v4024
      %v4026 = vpop.f32.mrf.mxu0
      %v4027 = vadd.f32 %v3913, %v4026
      %4028 = vmatmul.bf16.gmra.mxu0 %v2443
      %v4029 = vpop.f32.mrf.mxu0
      %v4030 = vadd.f32 %v3916, %v4029
      %v4031 = vpop.f32.mrf.mxu0
      %v4032 = vadd.f32 %v3918, %v4031
      %4033 = vmatmul.bf16.gmra.mxu0 %v2452
      %v4034 = vpop.f32.mrf.mxu0
      %v4035 = vadd.f32 %v3921, %v4034
      %v4036 = vpop.f32.mrf.mxu0
      %v4037 = vadd.f32 %v3923, %v4036
      %4038 = vmatmul.bf16.gmra.mxu0 %v2461
      %v4039 = vpop.f32.mrf.mxu0
      %v4040 = vadd.f32 %v3926, %v4039
      %v4041 = vpop.f32.mrf.mxu0
      %v4042 = vadd.f32 %v3928, %v4041
      %4043 = vmatmul.bf16.gmra.mxu0 %v2470
      %v4044 = vpop.f32.mrf.mxu0
      %v4045 = vadd.f32 %v3931, %v4044
      %v4046 = vpop.f32.mrf.mxu0
      %v4047 = vadd.f32 %v3933, %v4046
      %4048 = vmatmul.bf16.gmra.mxu0 %v2479
      %v4049 = vpop.f32.mrf.mxu0
      %v4050 = vadd.f32 %v3936, %v4049
      %v4051 = vpop.f32.mrf.mxu0
      %v4052 = vadd.f32 %v3938, %v4051
      %4053 = vmatmul.bf16.gmra.mxu0 %v2488
      %v4054 = vpop.f32.mrf.mxu0
      %v4055 = vadd.f32 %v3941, %v4054
      %v4056 = vpop.f32.mrf.mxu0
      %v4057 = vadd.f32 %v3943, %v4056
      %4058 = vmatmul.bf16.gmra.mxu0 %v2497
      %v4059 = vpop.f32.mrf.mxu0
      %v4060 = vadd.f32 %v3946, %v4059
      %v4061 = vpop.f32.mrf.mxu0
      %v4062 = vadd.f32 %v3948, %v4061
      %4063 = vmatmul.bf16.gmra.mxu0 %v2506
      %v4064 = vpop.f32.mrf.mxu0
      %v4065 = vadd.f32 %v3951, %v4064
      %v4066 = vpop.f32.mrf.mxu0
      %v4067 = vadd.f32 %v3953, %v4066
      %4068 = vmatmul.bf16.gmra.mxu0 %v2515
      %v4069 = vpop.f32.mrf.mxu0
      %v4070 = vadd.f32 %v3956, %v4069
      %v4071 = vpop.f32.mrf.mxu0
      %v4072 = vadd.f32 %v3958, %v4071
      %4073 = vmatmul.bf16.gmra.mxu0 %v2524
      %v4074 = vpop.f32.mrf.mxu0
      %v4075 = vadd.f32 %v3961, %v4074
      %v4076 = vpop.f32.mrf.mxu0
      %v4077 = vadd.f32 %v3963, %v4076
      %4078 = vmatmul.bf16.gmra.mxu0 %v2533
      %v4079 = vpop.f32.mrf.mxu0
      %v4080 = vadd.f32 %v3966, %v4079
      %v4081 = vpop.f32.mrf.mxu0
      %v4082 = vadd.f32 %v3968, %v4081
      %4083 = vmatmul.bf16.gmra.mxu0 %v2542
      %v4084 = vpop.f32.mrf.mxu0
      %v4085 = vadd.f32 %v3971, %v4084
      %v4086 = vpop.f32.mrf.mxu0
      %v4087 = vadd.f32 %v3973, %v4086
      %4088 = vmatmul.bf16.gmra.mxu0 %v2551
      %v4089 = vpop.f32.mrf.mxu0
      %v4090 = vadd.f32 %v3976, %v4089
      %v4091 = vpop.f32.mrf.mxu0
      %v4092 = vadd.f32 %v3978, %v4091
      %4093 = vmatmul.bf16.gmra.mxu0 %v2560
      %v4094 = vpop.f32.mrf.mxu0
      %v4095 = vadd.f32 %v3981, %v4094
      %v4096 = vpop.f32.mrf.mxu0
      %v4097 = vadd.f32 %v3983, %v4096
      %4098 = vmatmul.bf16.gmra.mxu0 %v2569
      %v4099 = vpop.f32.mrf.mxu0
      %v4100 = vadd.f32 %v3986, %v4099
      %v4101 = vpop.f32.mrf.mxu0
      %v4102 = vadd.f32 %v3988, %v4101
      %4103 = vdwg.mxu0
      %4104 = vmatpush.bf16.msra.mxu0 %v3119
      %4105 = vmatpush.bf16.msra.mxu0 %v3118
      %4106 = vmatpush.bf16.msra.mxu0 %v3117
      %4107 = vmatpush.bf16.msra.mxu0 %v3116
      %4108 = vmatpush.bf16.msra.mxu0 %v3115
      %4109 = vmatpush.bf16.msra.mxu0 %v3114
      %4110 = vmatpush.bf16.msra.mxu0 %v3113
      %4111 = vmatpush.bf16.msra.mxu0 %v3112
      %4112 = vmatmul.bf16.gmra.mxu0 %v2390
      %v4113 = vpop.f32.mrf.mxu0
      %v4114 = vadd.f32 %v4000, %v4113
      %v4115 = vpop.f32.mrf.mxu0
      %v4116 = vadd.f32 %v4002, %v4115
      %4117 = vmatmul.bf16.gmra.mxu0 %v2399
      %v4118 = vpop.f32.mrf.mxu0
      %v4119 = vadd.f32 %v4005, %v4118
      %v4120 = vpop.f32.mrf.mxu0
      %v4121 = vadd.f32 %v4007, %v4120
      %4122 = vmatmul.bf16.gmra.mxu0 %v2408
      %v4123 = vpop.f32.mrf.mxu0
      %v4124 = vadd.f32 %v4010, %v4123
      %v4125 = vpop.f32.mrf.mxu0
      %v4126 = vadd.f32 %v4012, %v4125
      %4127 = vmatmul.bf16.gmra.mxu0 %v2417
      %v4128 = vpop.f32.mrf.mxu0
      %v4129 = vadd.f32 %v4015, %v4128
      %v4130 = vpop.f32.mrf.mxu0
      %v4131 = vadd.f32 %v4017, %v4130
      %4132 = vmatmul.bf16.gmra.mxu0 %v2426
      %v4133 = vpop.f32.mrf.mxu0
      %v4134 = vadd.f32 %v4020, %v4133
      %v4135 = vpop.f32.mrf.mxu0
      %v4136 = vadd.f32 %v4022, %v4135
      %4137 = vmatmul.bf16.gmra.mxu0 %v2435
      %v4138 = vpop.f32.mrf.mxu0
      %v4139 = vadd.f32 %v4025, %v4138
      %v4140 = vpop.f32.mrf.mxu0
      %v4141 = vadd.f32 %v4027, %v4140
      %4142 = vmatmul.bf16.gmra.mxu0 %v2444
      %v4143 = vpop.f32.mrf.mxu0
      %v4144 = vadd.f32 %v4030, %v4143
      %v4145 = vpop.f32.mrf.mxu0
      %v4146 = vadd.f32 %v4032, %v4145
      %4147 = vmatmul.bf16.gmra.mxu0 %v2453
      %v4148 = vpop.f32.mrf.mxu0
      %v4149 = vadd.f32 %v4035, %v4148
      %v4150 = vpop.f32.mrf.mxu0
      %v4151 = vadd.f32 %v4037, %v4150
      %4152 = vmatmul.bf16.gmra.mxu0 %v2462
      %v4153 = vpop.f32.mrf.mxu0
      %v4154 = vadd.f32 %v4040, %v4153
      %v4155 = vpop.f32.mrf.mxu0
      %v4156 = vadd.f32 %v4042, %v4155
      %4157 = vmatmul.bf16.gmra.mxu0 %v2471
      %v4158 = vpop.f32.mrf.mxu0
      %v4159 = vadd.f32 %v4045, %v4158
      %v4160 = vpop.f32.mrf.mxu0
      %v4161 = vadd.f32 %v4047, %v4160
      %4162 = vmatmul.bf16.gmra.mxu0 %v2480
      %v4163 = vpop.f32.mrf.mxu0
      %v4164 = vadd.f32 %v4050, %v4163
      %v4165 = vpop.f32.mrf.mxu0
      %v4166 = vadd.f32 %v4052, %v4165
      %4167 = vmatmul.bf16.gmra.mxu0 %v2489
      %v4168 = vpop.f32.mrf.mxu0
      %v4169 = vadd.f32 %v4055, %v4168
      %v4170 = vpop.f32.mrf.mxu0
      %v4171 = vadd.f32 %v4057, %v4170
      %4172 = vmatmul.bf16.gmra.mxu0 %v2498
      %v4173 = vpop.f32.mrf.mxu0
      %v4174 = vadd.f32 %v4060, %v4173
      %v4175 = vpop.f32.mrf.mxu0
      %v4176 = vadd.f32 %v4062, %v4175
      %4177 = vmatmul.bf16.gmra.mxu0 %v2507
      %v4178 = vpop.f32.mrf.mxu0
      %v4179 = vadd.f32 %v4065, %v4178
      %v4180 = vpop.f32.mrf.mxu0
      %v4181 = vadd.f32 %v4067, %v4180
      %4182 = vmatmul.bf16.gmra.mxu0 %v2516
      %v4183 = vpop.f32.mrf.mxu0
      %v4184 = vadd.f32 %v4070, %v4183
      %v4185 = vpop.f32.mrf.mxu0
      %v4186 = vadd.f32 %v4072, %v4185
      %4187 = vmatmul.bf16.gmra.mxu0 %v2525
      %v4188 = vpop.f32.mrf.mxu0
      %v4189 = vadd.f32 %v4075, %v4188
      %v4190 = vpop.f32.mrf.mxu0
      %v4191 = vadd.f32 %v4077, %v4190
      %4192 = vmatmul.bf16.gmra.mxu0 %v2534
      %v4193 = vpop.f32.mrf.mxu0
      %v4194 = vadd.f32 %v4080, %v4193
      %v4195 = vpop.f32.mrf.mxu0
      %v4196 = vadd.f32 %v4082, %v4195
      %4197 = vmatmul.bf16.gmra.mxu0 %v2543
      %v4198 = vpop.f32.mrf.mxu0
      %v4199 = vadd.f32 %v4085, %v4198
      %v4200 = vpop.f32.mrf.mxu0
      %v4201 = vadd.f32 %v4087, %v4200
      %4202 = vmatmul.bf16.gmra.mxu0 %v2552
      %v4203 = vpop.f32.mrf.mxu0
      %v4204 = vadd.f32 %v4090, %v4203
      %v4205 = vpop.f32.mrf.mxu0
      %v4206 = vadd.f32 %v4092, %v4205
      %4207 = vmatmul.bf16.gmra.mxu0 %v2561
      %v4208 = vpop.f32.mrf.mxu0
      %v4209 = vadd.f32 %v4095, %v4208
      %v4210 = vpop.f32.mrf.mxu0
      %v4211 = vadd.f32 %v4097, %v4210
      %4212 = vmatmul.bf16.gmra.mxu0 %v2570
      %v4213 = vpop.f32.mrf.mxu0
      %v4214 = vadd.f32 %v4100, %v4213
      %v4215 = vpop.f32.mrf.mxu0
      %v4216 = vadd.f32 %v4102, %v4215
      %4217 = vdwg.mxu0
      %v4218 = vld [vmem:[%s3] sm:$0x1]
      %v4220 = vperm.slane %v4218, 0
      %v4222 = vmul.f32 %v4114, %v4220
      %v4223 = vmul.f32 %v4116, %v4220
      %v4224 = vmul.f32 %v4119, %v4220
      %v4225 = vmul.f32 %v4121, %v4220
      %v4226 = vmul.f32 %v4124, %v4220
      %v4227 = vmul.f32 %v4126, %v4220
      %v4228 = vmul.f32 %v4129, %v4220
      %v4229 = vmul.f32 %v4131, %v4220
      %v4230 = vmul.f32 %v4134, %v4220
      %v4231 = vmul.f32 %v4136, %v4220
      %v4232 = vmul.f32 %v4139, %v4220
      %v4233 = vmul.f32 %v4141, %v4220
      %v4234 = vmul.f32 %v4144, %v4220
      %v4235 = vmul.f32 %v4146, %v4220
      %v4236 = vmul.f32 %v4149, %v4220
      %v4237 = vmul.f32 %v4151, %v4220
      %v4238 = vmul.f32 %v4154, %v4220
      %v4239 = vmul.f32 %v4156, %v4220
      %v4240 = vmul.f32 %v4159, %v4220
      %v4241 = vmul.f32 %v4161, %v4220
      %v4242 = vmul.f32 %v4164, %v4220
      %v4243 = vmul.f32 %v4166, %v4220
      %v4244 = vmul.f32 %v4169, %v4220
      %v4245 = vmul.f32 %v4171, %v4220
      %v4246 = vmul.f32 %v4174, %v4220
      %v4247 = vmul.f32 %v4176, %v4220
      %v4248 = vmul.f32 %v4179, %v4220
      %v4249 = vmul.f32 %v4181, %v4220
      %v4250 = vmul.f32 %v4184, %v4220
      %v4251 = vmul.f32 %v4186, %v4220
      %v4252 = vmul.f32 %v4189, %v4220
      %v4253 = vmul.f32 %v4191, %v4220
      %v4254 = vmul.f32 %v4194, %v4220
      %v4255 = vmul.f32 %v4196, %v4220
      %v4256 = vmul.f32 %v4199, %v4220
      %v4257 = vmul.f32 %v4201, %v4220
      %v4258 = vmul.f32 %v4204, %v4220
      %v4259 = vmul.f32 %v4206, %v4220
      %v4260 = vmul.f32 %v4209, %v4220
      %v4261 = vmul.f32 %v4211, %v4220
      %v4262 = vmul.f32 %v4214, %v4220
      %v4263 = vmul.f32 %v4216, %v4220
      %v4264 = vld [vmem:[%s4] sm:$0x1]
      %v4266 = vperm.slane %v4264, 0
      %v4268 = vadd.f32 %v4222, %v4266
      %v4269 = vadd.f32 %v4223, %v4266
      %v4270 = vadd.f32 %v4224, %v4266
      %v4271 = vadd.f32 %v4225, %v4266
      %v4272 = vadd.f32 %v4226, %v4266
      %v4273 = vadd.f32 %v4227, %v4266
      %v4274 = vadd.f32 %v4228, %v4266
      %v4275 = vadd.f32 %v4229, %v4266
      %v4276 = vadd.f32 %v4230, %v4266
      %v4277 = vadd.f32 %v4231, %v4266
      %v4278 = vadd.f32 %v4232, %v4266
      %v4279 = vadd.f32 %v4233, %v4266
      %v4280 = vadd.f32 %v4234, %v4266
      %v4281 = vadd.f32 %v4235, %v4266
      %v4282 = vadd.f32 %v4236, %v4266
      %v4283 = vadd.f32 %v4237, %v4266
      %v4284 = vadd.f32 %v4238, %v4266
      %v4285 = vadd.f32 %v4239, %v4266
      %v4286 = vadd.f32 %v4240, %v4266
      %v4287 = vadd.f32 %v4241, %v4266
      %v4288 = vadd.f32 %v4242, %v4266
      %v4289 = vadd.f32 %v4243, %v4266
      %v4290 = vadd.f32 %v4244, %v4266
      %v4291 = vadd.f32 %v4245, %v4266
      %v4292 = vadd.f32 %v4246, %v4266
      %v4293 = vadd.f32 %v4247, %v4266
      %v4294 = vadd.f32 %v4248, %v4266
      %v4295 = vadd.f32 %v4249, %v4266
      %v4296 = vadd.f32 %v4250, %v4266
      %v4297 = vadd.f32 %v4251, %v4266
      %v4298 = vadd.f32 %v4252, %v4266
      %v4299 = vadd.f32 %v4253, %v4266
      %v4300 = vadd.f32 %v4254, %v4266
      %v4301 = vadd.f32 %v4255, %v4266
      %v4302 = vadd.f32 %v4256, %v4266
      %v4303 = vadd.f32 %v4257, %v4266
      %v4304 = vadd.f32 %v4258, %v4266
      %v4305 = vadd.f32 %v4259, %v4266
      %v4306 = vadd.f32 %v4260, %v4266
      %v4307 = vadd.f32 %v4261, %v4266
      %v4308 = vadd.f32 %v4262, %v4266
      %v4309 = vadd.f32 %v4263, %v4266
      %v4310 = vmax.f32 %v4268, 0.0
      %v4311 = vmax.f32 %v4269, 0.0
      %v4312 = vmax.f32 %v4270, 0.0
      %v4313 = vmax.f32 %v4271, 0.0
      %v4314 = vmax.f32 %v4272, 0.0
      %v4315 = vmax.f32 %v4273, 0.0
      %v4316 = vmax.f32 %v4274, 0.0
      %v4317 = vmax.f32 %v4275, 0.0
      %v4318 = vmax.f32 %v4276, 0.0
      %v4319 = vmax.f32 %v4277, 0.0
      %v4320 = vmax.f32 %v4278, 0.0
      %v4321 = vmax.f32 %v4279, 0.0
      %v4322 = vmax.f32 %v4280, 0.0
      %v4323 = vmax.f32 %v4281, 0.0
      %v4324 = vmax.f32 %v4282, 0.0
      %v4325 = vmax.f32 %v4283, 0.0
      %v4326 = vmax.f32 %v4284, 0.0
      %v4327 = vmax.f32 %v4285, 0.0
      %v4328 = vmax.f32 %v4286, 0.0
      %v4329 = vmax.f32 %v4287, 0.0
      %v4330 = vmax.f32 %v4288, 0.0
      %v4331 = vmax.f32 %v4289, 0.0
      %v4332 = vmax.f32 %v4290, 0.0
      %v4333 = vmax.f32 %v4291, 0.0
      %v4334 = vmax.f32 %v4292, 0.0
      %v4335 = vmax.f32 %v4293, 0.0
      %v4336 = vmax.f32 %v4294, 0.0
      %v4337 = vmax.f32 %v4295, 0.0
      %v4338 = vmax.f32 %v4296, 0.0
      %v4339 = vmax.f32 %v4297, 0.0
      %v4340 = vmax.f32 %v4298, 0.0
      %v4341 = vmax.f32 %v4299, 0.0
      %v4342 = vmax.f32 %v4300, 0.0
      %v4343 = vmax.f32 %v4301, 0.0
      %v4344 = vmax.f32 %v4302, 0.0
      %v4345 = vmax.f32 %v4303, 0.0
      %v4346 = vmax.f32 %v4304, 0.0
      %v4347 = vmax.f32 %v4305, 0.0
      %v4348 = vmax.f32 %v4306, 0.0
      %v4349 = vmax.f32 %v4307, 0.0
      %v4350 = vmax.f32 %v4308, 0.0
      %v4351 = vmax.f32 %v4309, 0.0
      %v4352 = vld [vmem:[%s7] sm:$0xff]
      %v4353 = vld [vmem:[%s7 + $0x8] sm:$0xff]
      %v4354 = vld [vmem:[%s7 + $0x10] sm:$0xff]
      %v4355 = vld [vmem:[%s7 + $0x18] sm:$0xff]
      %v4356 = vld [vmem:[%s7 + $0x20] sm:$0xff]
      %v4357 = vld [vmem:[%s7 + $0x28] sm:$0xff]
      %v4358 = vld [vmem:[%s7 + $0x30] sm:$0xff]
      %v4359 = vld [vmem:[%s7 + $0x38] sm:$0xff]
      %v4360 = vld [vmem:[%s7 + $0x40] sm:$0xff]
      %v4361 = vld [vmem:[%s7 + $0x48] sm:$0xff]
      %v4362 = vld [vmem:[%s7 + $0x50] sm:$0xff]
      %v4363 = vld [vmem:[%s7 + $0x58] sm:$0xff]
      %v4364 = vld [vmem:[%s7 + $0x60] sm:$0xff]
      %v4365 = vld [vmem:[%s7 + $0x68] sm:$0xff]
      %v4366 = vld [vmem:[%s7 + $0x70] sm:$0xff]
      %v4367 = vld [vmem:[%s7 + $0x78] sm:$0xff]
      %v4368 = vld [vmem:[%s7 + $0x80] sm:$0xff]
      %v4369 = vld [vmem:[%s7 + $0x88] sm:$0xff]
      %v4370 = vld [vmem:[%s7 + $0x90] sm:$0xff]
      %v4371 = vld [vmem:[%s7 + $0x98] sm:$0xff]
      %v4372 = vld [vmem:[%s7 + $0xa0] sm:$0xff]
      %v4373 = vld [vmem:[%s7 + $0xa8] sm:$0xff]
      %v4374 = vld [vmem:[%s7 + $0xb0] sm:$0xff]
      %v4375 = vld [vmem:[%s7 + $0xb8] sm:$0xff]
      %v4376 = vld [vmem:[%s7 + $0xc0] sm:$0xff]
      %v4377 = vld [vmem:[%s7 + $0xc8] sm:$0xff]
      %v4378 = vld [vmem:[%s7 + $0xd0] sm:$0xff]
      %v4379 = vld [vmem:[%s7 + $0xd8] sm:$0xff]
      %v4380 = vld [vmem:[%s7 + $0xe0] sm:$0xff]
      %v4381 = vld [vmem:[%s7 + $0xe8] sm:$0xff]
      %v4382 = vld [vmem:[%s7 + $0xf0] sm:$0xff]
      %v4383 = vld [vmem:[%s7 + $0xf8] sm:$0xff]
      %v4384 = vld [vmem:[%s7 + $0x100] sm:$0xff]
      %v4385 = vld [vmem:[%s7 + $0x108] sm:$0xff]
      %v4386 = vld [vmem:[%s7 + $0x110] sm:$0xff]
      %v4387 = vld [vmem:[%s7 + $0x118] sm:$0xff]
      %v4388 = vld [vmem:[%s7 + $0x120] sm:$0xff]
      %v4389 = vld [vmem:[%s7 + $0x128] sm:$0xff]
      %v4390 = vld [vmem:[%s7 + $0x130] sm:$0xff]
      %v4391 = vld [vmem:[%s7 + $0x138] sm:$0xff]
      %v4392 = vld [vmem:[%s7 + $0x140] sm:$0xff]
      %v4393 = vld [vmem:[%s7 + $0x148] sm:$0xff]
      %4395 = vset.pattern.permute.xlu0 0
      %4396 = vperm.xlu0 %4395, %v4352
      %v4397 = vpop.permute.xlu0 %4396
      %4400 = vset.pattern.permute.xlu0 0
      %4401 = vperm.xlu0 %4400, %v4353
      %v4402 = vpop.permute.xlu0 %4401
      %4405 = vset.pattern.permute.xlu0 0
      %4406 = vperm.xlu0 %4405, %v4354
      %v4407 = vpop.permute.xlu0 %4406
      %4410 = vset.pattern.permute.xlu0 0
      %4411 = vperm.xlu0 %4410, %v4355
      %v4412 = vpop.permute.xlu0 %4411
      %4415 = vset.pattern.permute.xlu0 0
      %4416 = vperm.xlu0 %4415, %v4356
      %v4417 = vpop.permute.xlu0 %4416
      %4420 = vset.pattern.permute.xlu0 0
      %4421 = vperm.xlu0 %4420, %v4357
      %v4422 = vpop.permute.xlu0 %4421
      %4425 = vset.pattern.permute.xlu0 0
      %4426 = vperm.xlu0 %4425, %v4358
      %v4427 = vpop.permute.xlu0 %4426
      %4430 = vset.pattern.permute.xlu0 0
      %4431 = vperm.xlu0 %4430, %v4359
      %v4432 = vpop.permute.xlu0 %4431
      %4435 = vset.pattern.permute.xlu0 0
      %4436 = vperm.xlu0 %4435, %v4360
      %v4437 = vpop.permute.xlu0 %4436
      %4440 = vset.pattern.permute.xlu0 0
      %4441 = vperm.xlu0 %4440, %v4361
      %v4442 = vpop.permute.xlu0 %4441
      %4445 = vset.pattern.permute.xlu0 0
      %4446 = vperm.xlu0 %4445, %v4362
      %v4447 = vpop.permute.xlu0 %4446
      %4450 = vset.pattern.permute.xlu0 0
      %4451 = vperm.xlu0 %4450, %v4363
      %v4452 = vpop.permute.xlu0 %4451
      %4455 = vset.pattern.permute.xlu0 0
      %4456 = vperm.xlu0 %4455, %v4364
      %v4457 = vpop.permute.xlu0 %4456
      %4460 = vset.pattern.permute.xlu0 0
      %4461 = vperm.xlu0 %4460, %v4365
      %v4462 = vpop.permute.xlu0 %4461
      %4465 = vset.pattern.permute.xlu0 0
      %4466 = vperm.xlu0 %4465, %v4366
      %v4467 = vpop.permute.xlu0 %4466
      %4470 = vset.pattern.permute.xlu0 0
      %4471 = vperm.xlu0 %4470, %v4367
      %v4472 = vpop.permute.xlu0 %4471
      %4475 = vset.pattern.permute.xlu0 0
      %4476 = vperm.xlu0 %4475, %v4368
      %v4477 = vpop.permute.xlu0 %4476
      %4480 = vset.pattern.permute.xlu0 0
      %4481 = vperm.xlu0 %4480, %v4369
      %v4482 = vpop.permute.xlu0 %4481
      %4485 = vset.pattern.permute.xlu0 0
      %4486 = vperm.xlu0 %4485, %v4370
      %v4487 = vpop.permute.xlu0 %4486
      %4490 = vset.pattern.permute.xlu0 0
      %4491 = vperm.xlu0 %4490, %v4371
      %v4492 = vpop.permute.xlu0 %4491
      %4495 = vset.pattern.permute.xlu0 0
      %4496 = vperm.xlu0 %4495, %v4372
      %v4497 = vpop.permute.xlu0 %4496
      %4500 = vset.pattern.permute.xlu0 0
      %4501 = vperm.xlu0 %4500, %v4373
      %v4502 = vpop.permute.xlu0 %4501
      %4505 = vset.pattern.permute.xlu0 0
      %4506 = vperm.xlu0 %4505, %v4374
      %v4507 = vpop.permute.xlu0 %4506
      %4510 = vset.pattern.permute.xlu0 0
      %4511 = vperm.xlu0 %4510, %v4375
      %v4512 = vpop.permute.xlu0 %4511
      %4515 = vset.pattern.permute.xlu0 0
      %4516 = vperm.xlu0 %4515, %v4376
      %v4517 = vpop.permute.xlu0 %4516
      %4520 = vset.pattern.permute.xlu0 0
      %4521 = vperm.xlu0 %4520, %v4377
      %v4522 = vpop.permute.xlu0 %4521
      %4525 = vset.pattern.permute.xlu0 0
      %4526 = vperm.xlu0 %4525, %v4378
      %v4527 = vpop.permute.xlu0 %4526
      %4530 = vset.pattern.permute.xlu0 0
      %4531 = vperm.xlu0 %4530, %v4379
      %v4532 = vpop.permute.xlu0 %4531
      %4535 = vset.pattern.permute.xlu0 0
      %4536 = vperm.xlu0 %4535, %v4380
      %v4537 = vpop.permute.xlu0 %4536
      %4540 = vset.pattern.permute.xlu0 0
      %4541 = vperm.xlu0 %4540, %v4381
      %v4542 = vpop.permute.xlu0 %4541
      %4545 = vset.pattern.permute.xlu0 0
      %4546 = vperm.xlu0 %4545, %v4382
      %v4547 = vpop.permute.xlu0 %4546
      %4550 = vset.pattern.permute.xlu0 0
      %4551 = vperm.xlu0 %4550, %v4383
      %v4552 = vpop.permute.xlu0 %4551
      %4555 = vset.pattern.permute.xlu0 0
      %4556 = vperm.xlu0 %4555, %v4384
      %v4557 = vpop.permute.xlu0 %4556
      %4560 = vset.pattern.permute.xlu0 0
      %4561 = vperm.xlu0 %4560, %v4385
      %v4562 = vpop.permute.xlu0 %4561
      %4565 = vset.pattern.permute.xlu0 0
      %4566 = vperm.xlu0 %4565, %v4386
      %v4567 = vpop.permute.xlu0 %4566
      %4570 = vset.pattern.permute.xlu0 0
      %4571 = vperm.xlu0 %4570, %v4387
      %v4572 = vpop.permute.xlu0 %4571
      %4575 = vset.pattern.permute.xlu0 0
      %4576 = vperm.xlu0 %4575, %v4388
      %v4577 = vpop.permute.xlu0 %4576
      %4580 = vset.pattern.permute.xlu0 0
      %4581 = vperm.xlu0 %4580, %v4389
      %v4582 = vpop.permute.xlu0 %4581
      %4585 = vset.pattern.permute.xlu0 0
      %4586 = vperm.xlu0 %4585, %v4390
      %v4587 = vpop.permute.xlu0 %4586
      %4590 = vset.pattern.permute.xlu0 0
      %4591 = vperm.xlu0 %4590, %v4391
      %v4592 = vpop.permute.xlu0 %4591
      %4595 = vset.pattern.permute.xlu0 0
      %4596 = vperm.xlu0 %4595, %v4392
      %v4597 = vpop.permute.xlu0 %4596
      %4600 = vset.pattern.permute.xlu0 0
      %4601 = vperm.xlu0 %4600, %v4393
      %v4602 = vpop.permute.xlu0 %4601
      %v4604 = vmul.f32 %v4310, %v4397
      %v4605 = vmul.f32 %v4311, %v4402
      %v4606 = vmul.f32 %v4312, %v4407
      %v4607 = vmul.f32 %v4313, %v4412
      %v4608 = vmul.f32 %v4314, %v4417
      %v4609 = vmul.f32 %v4315, %v4422
      %v4610 = vmul.f32 %v4316, %v4427
      %v4611 = vmul.f32 %v4317, %v4432
      %v4612 = vmul.f32 %v4318, %v4437
      %v4613 = vmul.f32 %v4319, %v4442
      %v4614 = vmul.f32 %v4320, %v4447
      %v4615 = vmul.f32 %v4321, %v4452
      %v4616 = vmul.f32 %v4322, %v4457
      %v4617 = vmul.f32 %v4323, %v4462
      %v4618 = vmul.f32 %v4324, %v4467
      %v4619 = vmul.f32 %v4325, %v4472
      %v4620 = vmul.f32 %v4326, %v4477
      %v4621 = vmul.f32 %v4327, %v4482
      %v4622 = vmul.f32 %v4328, %v4487
      %v4623 = vmul.f32 %v4329, %v4492
      %v4624 = vmul.f32 %v4330, %v4497
      %v4625 = vmul.f32 %v4331, %v4502
      %v4626 = vmul.f32 %v4332, %v4507
      %v4627 = vmul.f32 %v4333, %v4512
      %v4628 = vmul.f32 %v4334, %v4517
      %v4629 = vmul.f32 %v4335, %v4522
      %v4630 = vmul.f32 %v4336, %v4527
      %v4631 = vmul.f32 %v4337, %v4532
      %v4632 = vmul.f32 %v4338, %v4537
      %v4633 = vmul.f32 %v4339, %v4542
      %v4634 = vmul.f32 %v4340, %v4547
      %v4635 = vmul.f32 %v4341, %v4552
      %v4636 = vmul.f32 %v4342, %v4557
      %v4637 = vmul.f32 %v4343, %v4562
      %v4638 = vmul.f32 %v4344, %v4567
      %v4639 = vmul.f32 %v4345, %v4572
      %v4640 = vmul.f32 %v4346, %v4577
      %v4641 = vmul.f32 %v4347, %v4582
      %v4642 = vmul.f32 %v4348, %v4587
      %v4643 = vmul.f32 %v4349, %v4592
      %v4644 = vmul.f32 %v4350, %v4597
      %v4645 = vmul.f32 %v4351, %v4602
      %4646 = vst [vmem:[#allocation3] sm:$0xff] 0.0
      %4647 = vst [vmem:[#allocation3 + $0x8] sm:$0xff] 0.0
      %4648 = vst [vmem:[#allocation3 + $0x10] sm:$0xff] 0.0
      %4649 = vst [vmem:[#allocation3 + $0x168] sm:$0xff] 0.0
      %4650 = vst [vmem:[#allocation3 + $0x170] sm:$0xff] 0.0
      %4651 = vst [vmem:[#allocation3 + $0x178] sm:$0xff] 0.0
      %4652 = vst [vmem:[#allocation3 + $0x18] sm:$0xff] %v4604
      %4653 = vst [vmem:[#allocation3 + $0x20] sm:$0xff] %v4605
      %4654 = vst [vmem:[#allocation3 + $0x28] sm:$0xff] %v4606
      %4655 = vst [vmem:[#allocation3 + $0x30] sm:$0xff] %v4607
      %4656 = vst [vmem:[#allocation3 + $0x38] sm:$0xff] %v4608
      %4657 = vst [vmem:[#allocation3 + $0x40] sm:$0xff] %v4609
      %4658 = vst [vmem:[#allocation3 + $0x48] sm:$0xff] %v4610
      %4659 = vst [vmem:[#allocation3 + $0x50] sm:$0xff] %v4611
      %4660 = vst [vmem:[#allocation3 + $0x58] sm:$0xff] %v4612
      %4661 = vst [vmem:[#allocation3 + $0x60] sm:$0xff] %v4613
      %4662 = vst [vmem:[#allocation3 + $0x68] sm:$0xff] %v4614
      %4663 = vst [vmem:[#allocation3 + $0x70] sm:$0xff] %v4615
      %4664 = vst [vmem:[#allocation3 + $0x78] sm:$0xff] %v4616
      %4665 = vst [vmem:[#allocation3 + $0x80] sm:$0xff] %v4617
      %4666 = vst [vmem:[#allocation3 + $0x88] sm:$0xff] %v4618
      %4667 = vst [vmem:[#allocation3 + $0x90] sm:$0xff] %v4619
      %4668 = vst [vmem:[#allocation3 + $0x98] sm:$0xff] %v4620
      %4669 = vst [vmem:[#allocation3 + $0xa0] sm:$0xff] %v4621
      %4670 = vst [vmem:[#allocation3 + $0xa8] sm:$0xff] %v4622
      %4671 = vst [vmem:[#allocation3 + $0xb0] sm:$0xff] %v4623
      %4672 = vst [vmem:[#allocation3 + $0xb8] sm:$0xff] %v4624
      %4673 = vst [vmem:[#allocation3 + $0xc0] sm:$0xff] %v4625
      %4674 = vst [vmem:[#allocation3 + $0xc8] sm:$0xff] %v4626
      %4675 = vst [vmem:[#allocation3 + $0xd0] sm:$0xff] %v4627
      %4676 = vst [vmem:[#allocation3 + $0xd8] sm:$0xff] %v4628
      %4677 = vst [vmem:[#allocation3 + $0xe0] sm:$0xff] %v4629
      %4678 = vst [vmem:[#allocation3 + $0xe8] sm:$0xff] %v4630
      %4679 = vst [vmem:[#allocation3 + $0xf0] sm:$0xff] %v4631
      %4680 = vst [vmem:[#allocation3 + $0xf8] sm:$0xff] %v4632
      %4681 = vst [vmem:[#allocation3 + $0x100] sm:$0xff] %v4633
      %4682 = vst [vmem:[#allocation3 + $0x108] sm:$0xff] %v4634
      %4683 = vst [vmem:[#allocation3 + $0x110] sm:$0xff] %v4635
      %4684 = vst [vmem:[#allocation3 + $0x118] sm:$0xff] %v4636
      %4685 = vst [vmem:[#allocation3 + $0x120] sm:$0xff] %v4637
      %4686 = vst [vmem:[#allocation3 + $0x128] sm:$0xff] %v4638
      %4687 = vst [vmem:[#allocation3 + $0x130] sm:$0xff] %v4639
      %4688 = vst [vmem:[#allocation3 + $0x138] sm:$0xff] %v4640
      %4689 = vst [vmem:[#allocation3 + $0x140] sm:$0xff] %v4641
      %4690 = vst [vmem:[#allocation3 + $0x148] sm:$0xff] %v4642
      %4691 = vst [vmem:[#allocation3 + $0x150] sm:$0xff] %v4643
      %4692 = vst [vmem:[#allocation3 + $0x158] sm:$0xff] %v4644
      %4693 = vst [vmem:[#allocation3 + $0x160] sm:$0xff] %v4645
      %v4694 = vld [vmem:[#allocation3 + $0x5] sm:$0xff]
      %v4695 = vld [vmem:[#allocation3 + $0xd] sm:$0xff]
      %v4696 = vld [vmem:[#allocation3 + $0x15] sm:$0xff]
      %v4697 = vld [vmem:[#allocation3 + $0x1d] sm:$0xff]
      %v4698 = vld [vmem:[#allocation3 + $0x25] sm:$0xff]
      %v4699 = vld [vmem:[#allocation3 + $0x2d] sm:$0xff]
      %v4700 = vld [vmem:[#allocation3 + $0x35] sm:$0xff]
      %v4701 = vld [vmem:[#allocation3 + $0x3d] sm:$0xff]
      %v4702 = vld [vmem:[#allocation3 + $0x45] sm:$0xff]
      %v4703 = vld [vmem:[#allocation3 + $0x4d] sm:$0xff]
      %v4704 = vld [vmem:[#allocation3 + $0x55] sm:$0xff]
      %v4705 = vld [vmem:[#allocation3 + $0x5d] sm:$0xff]
      %v4706 = vld [vmem:[#allocation3 + $0x65] sm:$0xff]
      %v4707 = vld [vmem:[#allocation3 + $0x6d] sm:$0xff]
      %v4708 = vld [vmem:[#allocation3 + $0x75] sm:$0xff]
      %v4709 = vld [vmem:[#allocation3 + $0x7d] sm:$0xff]
      %v4710 = vld [vmem:[#allocation3 + $0x85] sm:$0xff]
      %v4711 = vld [vmem:[#allocation3 + $0x8d] sm:$0xff]
      %v4712 = vld [vmem:[#allocation3 + $0x95] sm:$0xff]
      %v4713 = vld [vmem:[#allocation3 + $0x9d] sm:$0xff]
      %v4714 = vld [vmem:[#allocation3 + $0xa5] sm:$0xff]
      %v4715 = vld [vmem:[#allocation3 + $0xad] sm:$0xff]
      %v4716 = vld [vmem:[#allocation3 + $0xb5] sm:$0xff]
      %v4717 = vld [vmem:[#allocation3 + $0xbd] sm:$0xff]
      %v4718 = vld [vmem:[#allocation3 + $0xc5] sm:$0xff]
      %v4719 = vld [vmem:[#allocation3 + $0xcd] sm:$0xff]
      %v4720 = vld [vmem:[#allocation3 + $0xd5] sm:$0xff]
      %v4721 = vld [vmem:[#allocation3 + $0xdd] sm:$0xff]
      %v4722 = vld [vmem:[#allocation3 + $0xe5] sm:$0xff]
      %v4723 = vld [vmem:[#allocation3 + $0xed] sm:$0xff]
      %v4724 = vld [vmem:[#allocation3 + $0xf5] sm:$0xff]
      %v4725 = vld [vmem:[#allocation3 + $0xfd] sm:$0xff]
      %v4726 = vld [vmem:[#allocation3 + $0x105] sm:$0xff]
      %v4727 = vld [vmem:[#allocation3 + $0x10d] sm:$0xff]
      %v4728 = vld [vmem:[#allocation3 + $0x115] sm:$0xff]
      %v4729 = vld [vmem:[#allocation3 + $0x11d] sm:$0xff]
      %v4730 = vld [vmem:[#allocation3 + $0x125] sm:$0xff]
      %v4731 = vld [vmem:[#allocation3 + $0x12d] sm:$0xff]
      %v4732 = vld [vmem:[#allocation3 + $0x135] sm:$0xff]
      %v4733 = vld [vmem:[#allocation3 + $0x13d] sm:$0xff]
      %v4734 = vld [vmem:[#allocation3 + $0x145] sm:$0xff]
      %v4735 = vld [vmem:[#allocation3 + $0x14d] sm:$0xff]
      %v4736 = vpack.c.bf16 %v4694, %v4694
      %v4737 = vpack.c.bf16 %v4695, %v4695
      %v4738 = vpack.c.bf16 %v4696, %v4696
      %v4739 = vpack.c.bf16 %v4697, %v4697
      %v4740 = vpack.c.bf16 %v4698, %v4698
      %v4741 = vpack.c.bf16 %v4699, %v4699
      %v4742 = vpack.c.bf16 %v4700, %v4700
      %v4743 = vpack.c.bf16 %v4701, %v4701
      %v4744 = vpack.c.bf16 %v4702, %v4702
      %v4745 = vpack.c.bf16 %v4703, %v4703
      %v4746 = vpack.c.bf16 %v4704, %v4704
      %v4747 = vpack.c.bf16 %v4705, %v4705
      %v4748 = vpack.c.bf16 %v4706, %v4706
      %v4749 = vpack.c.bf16 %v4707, %v4707
      %v4750 = vpack.c.bf16 %v4708, %v4708
      %v4751 = vpack.c.bf16 %v4709, %v4709
      %v4752 = vpack.c.bf16 %v4710, %v4710
      %v4753 = vpack.c.bf16 %v4711, %v4711
      %v4754 = vpack.c.bf16 %v4712, %v4712
      %v4755 = vpack.c.bf16 %v4713, %v4713
      %v4756 = vpack.c.bf16 %v4714, %v4714
      %v4757 = vpack.c.bf16 %v4715, %v4715
      %v4758 = vpack.c.bf16 %v4716, %v4716
      %v4759 = vpack.c.bf16 %v4717, %v4717
      %v4760 = vpack.c.bf16 %v4718, %v4718
      %v4761 = vpack.c.bf16 %v4719, %v4719
      %v4762 = vpack.c.bf16 %v4720, %v4720
      %v4763 = vpack.c.bf16 %v4721, %v4721
      %v4764 = vpack.c.bf16 %v4722, %v4722
      %v4765 = vpack.c.bf16 %v4723, %v4723
      %v4766 = vpack.c.bf16 %v4724, %v4724
      %v4767 = vpack.c.bf16 %v4725, %v4725
      %v4768 = vpack.c.bf16 %v4726, %v4726
      %v4769 = vpack.c.bf16 %v4727, %v4727
      %v4770 = vpack.c.bf16 %v4728, %v4728
      %v4771 = vpack.c.bf16 %v4729, %v4729
      %v4772 = vpack.c.bf16 %v4730, %v4730
      %v4773 = vpack.c.bf16 %v4731, %v4731
      %v4774 = vpack.c.bf16 %v4732, %v4732
      %v4775 = vpack.c.bf16 %v4733, %v4733
      %v4776 = vpack.c.bf16 %v4734, %v4734
      %v4777 = vpack.c.bf16 %v4735, %v4735
      %4778 = vst [vmem:[#allocation2] sm:$0xf] %v4736
      %4779 = vst [vmem:[#allocation2 + $0x24] sm:$0xf] %v4737
      %4780 = vst [vmem:[#allocation2 + $0x48] sm:$0xf] %v4738
      %4781 = vst [vmem:[#allocation2 + $0x6c] sm:$0xf] %v4739
      %4782 = vst [vmem:[#allocation2 + $0x90] sm:$0xf] %v4740
      %4783 = vst [vmem:[#allocation2 + $0xb4] sm:$0xf] %v4741
      %4784 = vst [vmem:[#allocation2 + $0xd8] sm:$0xf] %v4742
      %4785 = vst [vmem:[#allocation2 + $0xfc] sm:$0xf] %v4743
      %4786 = vst [vmem:[#allocation2 + $0x120] sm:$0xf] %v4744
      %4787 = vst [vmem:[#allocation2 + $0x144] sm:$0xf] %v4745
      %4788 = vst [vmem:[#allocation2 + $0x168] sm:$0xf] %v4746
      %4789 = vst [vmem:[#allocation2 + $0x18c] sm:$0xf] %v4747
      %4790 = vst [vmem:[#allocation2 + $0x1b0] sm:$0xf] %v4748
      %4791 = vst [vmem:[#allocation2 + $0x1d4] sm:$0xf] %v4749
      %4792 = vst [vmem:[#allocation2 + $0x1f8] sm:$0xf] %v4750
      %4793 = vst [vmem:[#allocation2 + $0x21c] sm:$0xf] %v4751
      %4794 = vst [vmem:[#allocation2 + $0x240] sm:$0xf] %v4752
      %4795 = vst [vmem:[#allocation2 + $0x264] sm:$0xf] %v4753
      %4796 = vst [vmem:[#allocation2 + $0x288] sm:$0xf] %v4754
      %4797 = vst [vmem:[#allocation2 + $0x2ac] sm:$0xf] %v4755
      %4798 = vst [vmem:[#allocation2 + $0x2d0] sm:$0xf] %v4756
      %4799 = vst [vmem:[#allocation2 + $0x2f4] sm:$0xf] %v4757
      %4800 = vst [vmem:[#allocation2 + $0x318] sm:$0xf] %v4758
      %4801 = vst [vmem:[#allocation2 + $0x33c] sm:$0xf] %v4759
      %4802 = vst [vmem:[#allocation2 + $0x360] sm:$0xf] %v4760
      %4803 = vst [vmem:[#allocation2 + $0x384] sm:$0xf] %v4761
      %4804 = vst [vmem:[#allocation2 + $0x3a8] sm:$0xf] %v4762
      %4805 = vst [vmem:[#allocation2 + $0x3cc] sm:$0xf] %v4763
      %4806 = vst [vmem:[#allocation2 + $0x3f0] sm:$0xf] %v4764
      %4807 = vst [vmem:[#allocation2 + $0x414] sm:$0xf] %v4765
      %4808 = vst [vmem:[#allocation2 + $0x438] sm:$0xf] %v4766
      %4809 = vst [vmem:[#allocation2 + $0x45c] sm:$0xf] %v4767
      %4810 = vst [vmem:[#allocation2 + $0x480] sm:$0xf] %v4768
      %4811 = vst [vmem:[#allocation2 + $0x4a4] sm:$0xf] %v4769
      %4812 = vst [vmem:[#allocation2 + $0x4c8] sm:$0xf] %v4770
      %4813 = vst [vmem:[#allocation2 + $0x4ec] sm:$0xf] %v4771
      %4814 = vst [vmem:[#allocation2 + $0x510] sm:$0xf] %v4772
      %4815 = vst [vmem:[#allocation2 + $0x534] sm:$0xf] %v4773
      %4816 = vst [vmem:[#allocation2 + $0x558] sm:$0xf] %v4774
      %4817 = vst [vmem:[#allocation2 + $0x57c] sm:$0xf] %v4775
      %4818 = vst [vmem:[#allocation2 + $0x5a0] sm:$0xf] %v4776
      %4819 = vst [vmem:[#allocation2 + $0x5c4] sm:$0xf] %v4777
      %v4820 = vld [vmem:[#allocation3 + $0x6] sm:$0xff]
      %v4821 = vld [vmem:[#allocation3 + $0xe] sm:$0xff]
      %v4822 = vld [vmem:[#allocation3 + $0x16] sm:$0xff]
      %v4823 = vld [vmem:[#allocation3 + $0x1e] sm:$0xff]
      %v4824 = vld [vmem:[#allocation3 + $0x26] sm:$0xff]
      %v4825 = vld [vmem:[#allocation3 + $0x2e] sm:$0xff]
      %v4826 = vld [vmem:[#allocation3 + $0x36] sm:$0xff]
      %v4827 = vld [vmem:[#allocation3 + $0x3e] sm:$0xff]
      %v4828 = vld [vmem:[#allocation3 + $0x46] sm:$0xff]
      %v4829 = vld [vmem:[#allocation3 + $0x4e] sm:$0xff]
      %v4830 = vld [vmem:[#allocation3 + $0x56] sm:$0xff]
      %v4831 = vld [vmem:[#allocation3 + $0x5e] sm:$0xff]
      %v4832 = vld [vmem:[#allocation3 + $0x66] sm:$0xff]
      %v4833 = vld [vmem:[#allocation3 + $0x6e] sm:$0xff]
      %v4834 = vld [vmem:[#allocation3 + $0x76] sm:$0xff]
      %v4835 = vld [vmem:[#allocation3 + $0x7e] sm:$0xff]
      %v4836 = vld [vmem:[#allocation3 + $0x86] sm:$0xff]
      %v4837 = vld [vmem:[#allocation3 + $0x8e] sm:$0xff]
      %v4838 = vld [vmem:[#allocation3 + $0x96] sm:$0xff]
      %v4839 = vld [vmem:[#allocation3 + $0x9e] sm:$0xff]
      %v4840 = vld [vmem:[#allocation3 + $0xa6] sm:$0xff]
      %v4841 = vld [vmem:[#allocation3 + $0xae] sm:$0xff]
      %v4842 = vld [vmem:[#allocation3 + $0xb6] sm:$0xff]
      %v4843 = vld [vmem:[#allocation3 + $0xbe] sm:$0xff]
      %v4844 = vld [vmem:[#allocation3 + $0xc6] sm:$0xff]
      %v4845 = vld [vmem:[#allocation3 + $0xce] sm:$0xff]
      %v4846 = vld [vmem:[#allocation3 + $0xd6] sm:$0xff]
      %v4847 = vld [vmem:[#allocation3 + $0xde] sm:$0xff]
      %v4848 = vld [vmem:[#allocation3 + $0xe6] sm:$0xff]
      %v4849 = vld [vmem:[#allocation3 + $0xee] sm:$0xff]
      %v4850 = vld [vmem:[#allocation3 + $0xf6] sm:$0xff]
      %v4851 = vld [vmem:[#allocation3 + $0xfe] sm:$0xff]
      %v4852 = vld [vmem:[#allocation3 + $0x106] sm:$0xff]
      %v4853 = vld [vmem:[#allocation3 + $0x10e] sm:$0xff]
      %v4854 = vld [vmem:[#allocation3 + $0x116] sm:$0xff]
      %v4855 = vld [vmem:[#allocation3 + $0x11e] sm:$0xff]
      %v4856 = vld [vmem:[#allocation3 + $0x126] sm:$0xff]
      %v4857 = vld [vmem:[#allocation3 + $0x12e] sm:$0xff]
      %v4858 = vld [vmem:[#allocation3 + $0x136] sm:$0xff]
      %v4859 = vld [vmem:[#allocation3 + $0x13e] sm:$0xff]
      %v4860 = vld [vmem:[#allocation3 + $0x146] sm:$0xff]
      %v4861 = vld [vmem:[#allocation3 + $0x14e] sm:$0xff]
      %v4862 = vpack.c.bf16 %v4820, %v4820
      %v4863 = vpack.c.bf16 %v4821, %v4821
      %v4864 = vpack.c.bf16 %v4822, %v4822
      %v4865 = vpack.c.bf16 %v4823, %v4823
      %v4866 = vpack.c.bf16 %v4824, %v4824
      %v4867 = vpack.c.bf16 %v4825, %v4825
      %v4868 = vpack.c.bf16 %v4826, %v4826
      %v4869 = vpack.c.bf16 %v4827, %v4827
      %v4870 = vpack.c.bf16 %v4828, %v4828
      %v4871 = vpack.c.bf16 %v4829, %v4829
      %v4872 = vpack.c.bf16 %v4830, %v4830
      %v4873 = vpack.c.bf16 %v4831, %v4831
      %v4874 = vpack.c.bf16 %v4832, %v4832
      %v4875 = vpack.c.bf16 %v4833, %v4833
      %v4876 = vpack.c.bf16 %v4834, %v4834
      %v4877 = vpack.c.bf16 %v4835, %v4835
      %v4878 = vpack.c.bf16 %v4836, %v4836
      %v4879 = vpack.c.bf16 %v4837, %v4837
      %v4880 = vpack.c.bf16 %v4838, %v4838
      %v4881 = vpack.c.bf16 %v4839, %v4839
      %v4882 = vpack.c.bf16 %v4840, %v4840
      %v4883 = vpack.c.bf16 %v4841, %v4841
      %v4884 = vpack.c.bf16 %v4842, %v4842
      %v4885 = vpack.c.bf16 %v4843, %v4843
      %v4886 = vpack.c.bf16 %v4844, %v4844
      %v4887 = vpack.c.bf16 %v4845, %v4845
      %v4888 = vpack.c.bf16 %v4846, %v4846
      %v4889 = vpack.c.bf16 %v4847, %v4847
      %v4890 = vpack.c.bf16 %v4848, %v4848
      %v4891 = vpack.c.bf16 %v4849, %v4849
      %v4892 = vpack.c.bf16 %v4850, %v4850
      %v4893 = vpack.c.bf16 %v4851, %v4851
      %v4894 = vpack.c.bf16 %v4852, %v4852
      %v4895 = vpack.c.bf16 %v4853, %v4853
      %v4896 = vpack.c.bf16 %v4854, %v4854
      %v4897 = vpack.c.bf16 %v4855, %v4855
      %v4898 = vpack.c.bf16 %v4856, %v4856
      %v4899 = vpack.c.bf16 %v4857, %v4857
      %v4900 = vpack.c.bf16 %v4858, %v4858
      %v4901 = vpack.c.bf16 %v4859, %v4859
      %v4902 = vpack.c.bf16 %v4860, %v4860
      %v4903 = vpack.c.bf16 %v4861, %v4861
      %4904 = vst [vmem:[#allocation2 + $0x4] sm:$0xf] %v4862
      %4905 = vst [vmem:[#allocation2 + $0x28] sm:$0xf] %v4863
      %4906 = vst [vmem:[#allocation2 + $0x4c] sm:$0xf] %v4864
      %4907 = vst [vmem:[#allocation2 + $0x70] sm:$0xf] %v4865
      %4908 = vst [vmem:[#allocation2 + $0x94] sm:$0xf] %v4866
      %4909 = vst [vmem:[#allocation2 + $0xb8] sm:$0xf] %v4867
      %4910 = vst [vmem:[#allocation2 + $0xdc] sm:$0xf] %v4868
      %4911 = vst [vmem:[#allocation2 + $0x100] sm:$0xf] %v4869
      %4912 = vst [vmem:[#allocation2 + $0x124] sm:$0xf] %v4870
      %4913 = vst [vmem:[#allocation2 + $0x148] sm:$0xf] %v4871
      %4914 = vst [vmem:[#allocation2 + $0x16c] sm:$0xf] %v4872
      %4915 = vst [vmem:[#allocation2 + $0x190] sm:$0xf] %v4873
      %4916 = vst [vmem:[#allocation2 + $0x1b4] sm:$0xf] %v4874
      %4917 = vst [vmem:[#allocation2 + $0x1d8] sm:$0xf] %v4875
      %4918 = vst [vmem:[#allocation2 + $0x1fc] sm:$0xf] %v4876
      %4919 = vst [vmem:[#allocation2 + $0x220] sm:$0xf] %v4877
      %4920 = vst [vmem:[#allocation2 + $0x244] sm:$0xf] %v4878
      %4921 = vst [vmem:[#allocation2 + $0x268] sm:$0xf] %v4879
      %4922 = vst [vmem:[#allocation2 + $0x28c] sm:$0xf] %v4880
      %4923 = vst [vmem:[#allocation2 + $0x2b0] sm:$0xf] %v4881
      %4924 = vst [vmem:[#allocation2 + $0x2d4] sm:$0xf] %v4882
      %4925 = vst [vmem:[#allocation2 + $0x2f8] sm:$0xf] %v4883
      %4926 = vst [vmem:[#allocation2 + $0x31c] sm:$0xf] %v4884
      %4927 = vst [vmem:[#allocation2 + $0x340] sm:$0xf] %v4885
      %4928 = vst [vmem:[#allocation2 + $0x364] sm:$0xf] %v4886
      %4929 = vst [vmem:[#allocation2 + $0x388] sm:$0xf] %v4887
      %4930 = vst [vmem:[#allocation2 + $0x3ac] sm:$0xf] %v4888
      %4931 = vst [vmem:[#allocation2 + $0x3d0] sm:$0xf] %v4889
      %4932 = vst [vmem:[#allocation2 + $0x3f4] sm:$0xf] %v4890
      %4933 = vst [vmem:[#allocation2 + $0x418] sm:$0xf] %v4891
      %4934 = vst [vmem:[#allocation2 + $0x43c] sm:$0xf] %v4892
      %4935 = vst [vmem:[#allocation2 + $0x460] sm:$0xf] %v4893
      %4936 = vst [vmem:[#allocation2 + $0x484] sm:$0xf] %v4894
      %4937 = vst [vmem:[#allocation2 + $0x4a8] sm:$0xf] %v4895
      %4938 = vst [vmem:[#allocation2 + $0x4cc] sm:$0xf] %v4896
      %4939 = vst [vmem:[#allocation2 + $0x4f0] sm:$0xf] %v4897
      %4940 = vst [vmem:[#allocation2 + $0x514] sm:$0xf] %v4898
      %4941 = vst [vmem:[#allocation2 + $0x538] sm:$0xf] %v4899
      %4942 = vst [vmem:[#allocation2 + $0x55c] sm:$0xf] %v4900
      %4943 = vst [vmem:[#allocation2 + $0x580] sm:$0xf] %v4901
      %4944 = vst [vmem:[#allocation2 + $0x5a4] sm:$0xf] %v4902
      %4945 = vst [vmem:[#allocation2 + $0x5c8] sm:$0xf] %v4903
      %v4946 = vld [vmem:[#allocation3 + $0x7] sm:$0xff]
      %v4947 = vld [vmem:[#allocation3 + $0xf] sm:$0xff]
      %v4948 = vld [vmem:[#allocation3 + $0x17] sm:$0xff]
      %v4949 = vld [vmem:[#allocation3 + $0x1f] sm:$0xff]
      %v4950 = vld [vmem:[#allocation3 + $0x27] sm:$0xff]
      %v4951 = vld [vmem:[#allocation3 + $0x2f] sm:$0xff]
      %v4952 = vld [vmem:[#allocation3 + $0x37] sm:$0xff]
      %v4953 = vld [vmem:[#allocation3 + $0x3f] sm:$0xff]
      %v4954 = vld [vmem:[#allocation3 + $0x47] sm:$0xff]
      %v4955 = vld [vmem:[#allocation3 + $0x4f] sm:$0xff]
      %v4956 = vld [vmem:[#allocation3 + $0x57] sm:$0xff]
      %v4957 = vld [vmem:[#allocation3 + $0x5f] sm:$0xff]
      %v4958 = vld [vmem:[#allocation3 + $0x67] sm:$0xff]
      %v4959 = vld [vmem:[#allocation3 + $0x6f] sm:$0xff]
      %v4960 = vld [vmem:[#allocation3 + $0x77] sm:$0xff]
      %v4961 = vld [vmem:[#allocation3 + $0x7f] sm:$0xff]
      %v4962 = vld [vmem:[#allocation3 + $0x87] sm:$0xff]
      %v4963 = vld [vmem:[#allocation3 + $0x8f] sm:$0xff]
      %v4964 = vld [vmem:[#allocation3 + $0x97] sm:$0xff]
      %v4965 = vld [vmem:[#allocation3 + $0x9f] sm:$0xff]
      %v4966 = vld [vmem:[#allocation3 + $0xa7] sm:$0xff]
      %v4967 = vld [vmem:[#allocation3 + $0xaf] sm:$0xff]
      %v4968 = vld [vmem:[#allocation3 + $0xb7] sm:$0xff]
      %v4969 = vld [vmem:[#allocation3 + $0xbf] sm:$0xff]
      %v4970 = vld [vmem:[#allocation3 + $0xc7] sm:$0xff]
      %v4971 = vld [vmem:[#allocation3 + $0xcf] sm:$0xff]
      %v4972 = vld [vmem:[#allocation3 + $0xd7] sm:$0xff]
      %v4973 = vld [vmem:[#allocation3 + $0xdf] sm:$0xff]
      %v4974 = vld [vmem:[#allocation3 + $0xe7] sm:$0xff]
      %v4975 = vld [vmem:[#allocation3 + $0xef] sm:$0xff]
      %v4976 = vld [vmem:[#allocation3 + $0xf7] sm:$0xff]
      %v4977 = vld [vmem:[#allocation3 + $0xff] sm:$0xff]
      %v4978 = vld [vmem:[#allocation3 + $0x107] sm:$0xff]
      %v4979 = vld [vmem:[#allocation3 + $0x10f] sm:$0xff]
      %v4980 = vld [vmem:[#allocation3 + $0x117] sm:$0xff]
      %v4981 = vld [vmem:[#allocation3 + $0x11f] sm:$0xff]
      %v4982 = vld [vmem:[#allocation3 + $0x127] sm:$0xff]
      %v4983 = vld [vmem:[#allocation3 + $0x12f] sm:$0xff]
      %v4984 = vld [vmem:[#allocation3 + $0x137] sm:$0xff]
      %v4985 = vld [vmem:[#allocation3 + $0x13f] sm:$0xff]
      %v4986 = vld [vmem:[#allocation3 + $0x147] sm:$0xff]
      %v4987 = vld [vmem:[#allocation3 + $0x14f] sm:$0xff]
      %v4988 = vpack.c.bf16 %v4946, %v4946
      %v4989 = vpack.c.bf16 %v4947, %v4947
      %v4990 = vpack.c.bf16 %v4948, %v4948
      %v4991 = vpack.c.bf16 %v4949, %v4949
      %v4992 = vpack.c.bf16 %v4950, %v4950
      %v4993 = vpack.c.bf16 %v4951, %v4951
      %v4994 = vpack.c.bf16 %v4952, %v4952
      %v4995 = vpack.c.bf16 %v4953, %v4953
      %v4996 = vpack.c.bf16 %v4954, %v4954
      %v4997 = vpack.c.bf16 %v4955, %v4955
      %v4998 = vpack.c.bf16 %v4956, %v4956
      %v4999 = vpack.c.bf16 %v4957, %v4957
      %v5000 = vpack.c.bf16 %v4958, %v4958
      %v5001 = vpack.c.bf16 %v4959, %v4959
      %v5002 = vpack.c.bf16 %v4960, %v4960
      %v5003 = vpack.c.bf16 %v4961, %v4961
      %v5004 = vpack.c.bf16 %v4962, %v4962
      %v5005 = vpack.c.bf16 %v4963, %v4963
      %v5006 = vpack.c.bf16 %v4964, %v4964
      %v5007 = vpack.c.bf16 %v4965, %v4965
      %v5008 = vpack.c.bf16 %v4966, %v4966
      %v5009 = vpack.c.bf16 %v4967, %v4967
      %v5010 = vpack.c.bf16 %v4968, %v4968
      %v5011 = vpack.c.bf16 %v4969, %v4969
      %v5012 = vpack.c.bf16 %v4970, %v4970
      %v5013 = vpack.c.bf16 %v4971, %v4971
      %v5014 = vpack.c.bf16 %v4972, %v4972
      %v5015 = vpack.c.bf16 %v4973, %v4973
      %v5016 = vpack.c.bf16 %v4974, %v4974
      %v5017 = vpack.c.bf16 %v4975, %v4975
      %v5018 = vpack.c.bf16 %v4976, %v4976
      %v5019 = vpack.c.bf16 %v4977, %v4977
      %v5020 = vpack.c.bf16 %v4978, %v4978
      %v5021 = vpack.c.bf16 %v4979, %v4979
      %v5022 = vpack.c.bf16 %v4980, %v4980
      %v5023 = vpack.c.bf16 %v4981, %v4981
      %v5024 = vpack.c.bf16 %v4982, %v4982
      %v5025 = vpack.c.bf16 %v4983, %v4983
      %v5026 = vpack.c.bf16 %v4984, %v4984
      %v5027 = vpack.c.bf16 %v4985, %v4985
      %v5028 = vpack.c.bf16 %v4986, %v4986
      %v5029 = vpack.c.bf16 %v4987, %v4987
      %5030 = vst [vmem:[#allocation2 + $0x8] sm:$0xf] %v4988
      %5031 = vst [vmem:[#allocation2 + $0x2c] sm:$0xf] %v4989
      %5032 = vst [vmem:[#allocation2 + $0x50] sm:$0xf] %v4990
      %5033 = vst [vmem:[#allocation2 + $0x74] sm:$0xf] %v4991
      %5034 = vst [vmem:[#allocation2 + $0x98] sm:$0xf] %v4992
      %5035 = vst [vmem:[#allocation2 + $0xbc] sm:$0xf] %v4993
      %5036 = vst [vmem:[#allocation2 + $0xe0] sm:$0xf] %v4994
      %5037 = vst [vmem:[#allocation2 + $0x104] sm:$0xf] %v4995
      %5038 = vst [vmem:[#allocation2 + $0x128] sm:$0xf] %v4996
      %5039 = vst [vmem:[#allocation2 + $0x14c] sm:$0xf] %v4997
      %5040 = vst [vmem:[#allocation2 + $0x170] sm:$0xf] %v4998
      %5041 = vst [vmem:[#allocation2 + $0x194] sm:$0xf] %v4999
      %5042 = vst [vmem:[#allocation2 + $0x1b8] sm:$0xf] %v5000
      %5043 = vst [vmem:[#allocation2 + $0x1dc] sm:$0xf] %v5001
      %5044 = vst [vmem:[#allocation2 + $0x200] sm:$0xf] %v5002
      %5045 = vst [vmem:[#allocation2 + $0x224] sm:$0xf] %v5003
      %5046 = vst [vmem:[#allocation2 + $0x248] sm:$0xf] %v5004
      %5047 = vst [vmem:[#allocation2 + $0x26c] sm:$0xf] %v5005
      %5048 = vst [vmem:[#allocation2 + $0x290] sm:$0xf] %v5006
      %5049 = vst [vmem:[#allocation2 + $0x2b4] sm:$0xf] %v5007
      %5050 = vst [vmem:[#allocation2 + $0x2d8] sm:$0xf] %v5008
      %5051 = vst [vmem:[#allocation2 + $0x2fc] sm:$0xf] %v5009
      %5052 = vst [vmem:[#allocation2 + $0x320] sm:$0xf] %v5010
      %5053 = vst [vmem:[#allocation2 + $0x344] sm:$0xf] %v5011
      %5054 = vst [vmem:[#allocation2 + $0x368] sm:$0xf] %v5012
      %5055 = vst [vmem:[#allocation2 + $0x38c] sm:$0xf] %v5013
      %5056 = vst [vmem:[#allocation2 + $0x3b0] sm:$0xf] %v5014
      %5057 = vst [vmem:[#allocation2 + $0x3d4] sm:$0xf] %v5015
      %5058 = vst [vmem:[#allocation2 + $0x3f8] sm:$0xf] %v5016
      %5059 = vst [vmem:[#allocation2 + $0x41c] sm:$0xf] %v5017
      %5060 = vst [vmem:[#allocation2 + $0x440] sm:$0xf] %v5018
      %5061 = vst [vmem:[#allocation2 + $0x464] sm:$0xf] %v5019
      %5062 = vst [vmem:[#allocation2 + $0x488] sm:$0xf] %v5020
      %5063 = vst [vmem:[#allocation2 + $0x4ac] sm:$0xf] %v5021
      %5064 = vst [vmem:[#allocation2 + $0x4d0] sm:$0xf] %v5022
      %5065 = vst [vmem:[#allocation2 + $0x4f4] sm:$0xf] %v5023
      %5066 = vst [vmem:[#allocation2 + $0x518] sm:$0xf] %v5024
      %5067 = vst [vmem:[#allocation2 + $0x53c] sm:$0xf] %v5025
      %5068 = vst [vmem:[#allocation2 + $0x560] sm:$0xf] %v5026
      %5069 = vst [vmem:[#allocation2 + $0x584] sm:$0xf] %v5027
      %5070 = vst [vmem:[#allocation2 + $0x5a8] sm:$0xf] %v5028
      %5071 = vst [vmem:[#allocation2 + $0x5cc] sm:$0xf] %v5029
      %v5072 = vld [vmem:[#allocation3 + $0x17] sm:$0xff]
      %v5073 = vld [vmem:[#allocation3 + $0x1f] sm:$0xff]
      %v5074 = vld [vmem:[#allocation3 + $0x27] sm:$0xff]
      %v5075 = vld [vmem:[#allocation3 + $0x2f] sm:$0xff]
      %v5076 = vld [vmem:[#allocation3 + $0x37] sm:$0xff]
      %v5077 = vld [vmem:[#allocation3 + $0x3f] sm:$0xff]
      %v5078 = vld [vmem:[#allocation3 + $0x47] sm:$0xff]
      %v5079 = vld [vmem:[#allocation3 + $0x4f] sm:$0xff]
      %v5080 = vld [vmem:[#allocation3 + $0x57] sm:$0xff]
      %v5081 = vld [vmem:[#allocation3 + $0x5f] sm:$0xff]
      %v5082 = vld [vmem:[#allocation3 + $0x67] sm:$0xff]
      %v5083 = vld [vmem:[#allocation3 + $0x6f] sm:$0xff]
      %v5084 = vld [vmem:[#allocation3 + $0x77] sm:$0xff]
      %v5085 = vld [vmem:[#allocation3 + $0x7f] sm:$0xff]
      %v5086 = vld [vmem:[#allocation3 + $0x87] sm:$0xff]
      %v5087 = vld [vmem:[#allocation3 + $0x8f] sm:$0xff]
      %v5088 = vld [vmem:[#allocation3 + $0x97] sm:$0xff]
      %v5089 = vld [vmem:[#allocation3 + $0x9f] sm:$0xff]
      %v5090 = vld [vmem:[#allocation3 + $0xa7] sm:$0xff]
      %v5091 = vld [vmem:[#allocation3 + $0xaf] sm:$0xff]
      %v5092 = vld [vmem:[#allocation3 + $0xb7] sm:$0xff]
      %v5093 = vld [vmem:[#allocation3 + $0xbf] sm:$0xff]
      %v5094 = vld [vmem:[#allocation3 + $0xc7] sm:$0xff]
      %v5095 = vld [vmem:[#allocation3 + $0xcf] sm:$0xff]
      %v5096 = vld [vmem:[#allocation3 + $0xd7] sm:$0xff]
      %v5097 = vld [vmem:[#allocation3 + $0xdf] sm:$0xff]
      %v5098 = vld [vmem:[#allocation3 + $0xe7] sm:$0xff]
      %v5099 = vld [vmem:[#allocation3 + $0xef] sm:$0xff]
      %v5100 = vld [vmem:[#allocation3 + $0xf7] sm:$0xff]
      %v5101 = vld [vmem:[#allocation3 + $0xff] sm:$0xff]
      %v5102 = vld [vmem:[#allocation3 + $0x107] sm:$0xff]
      %v5103 = vld [vmem:[#allocation3 + $0x10f] sm:$0xff]
      %v5104 = vld [vmem:[#allocation3 + $0x117] sm:$0xff]
      %v5105 = vld [vmem:[#allocation3 + $0x11f] sm:$0xff]
      %v5106 = vld [vmem:[#allocation3 + $0x127] sm:$0xff]
      %v5107 = vld [vmem:[#allocation3 + $0x12f] sm:$0xff]
      %v5108 = vld [vmem:[#allocation3 + $0x137] sm:$0xff]
      %v5109 = vld [vmem:[#allocation3 + $0x13f] sm:$0xff]
      %v5110 = vld [vmem:[#allocation3 + $0x147] sm:$0xff]
      %v5111 = vld [vmem:[#allocation3 + $0x14f] sm:$0xff]
      %v5112 = vld [vmem:[#allocation3 + $0x157] sm:$0xff]
      %v5113 = vld [vmem:[#allocation3 + $0x15f] sm:$0xff]
      %v5114 = vpack.c.bf16 %v5072, %v5072
      %v5115 = vpack.c.bf16 %v5073, %v5073
      %v5116 = vpack.c.bf16 %v5074, %v5074
      %v5117 = vpack.c.bf16 %v5075, %v5075
      %v5118 = vpack.c.bf16 %v5076, %v5076
      %v5119 = vpack.c.bf16 %v5077, %v5077
      %v5120 = vpack.c.bf16 %v5078, %v5078
      %v5121 = vpack.c.bf16 %v5079, %v5079
      %v5122 = vpack.c.bf16 %v5080, %v5080
      %v5123 = vpack.c.bf16 %v5081, %v5081
      %v5124 = vpack.c.bf16 %v5082, %v5082
      %v5125 = vpack.c.bf16 %v5083, %v5083
      %v5126 = vpack.c.bf16 %v5084, %v5084
      %v5127 = vpack.c.bf16 %v5085, %v5085
      %v5128 = vpack.c.bf16 %v5086, %v5086
      %v5129 = vpack.c.bf16 %v5087, %v5087
      %v5130 = vpack.c.bf16 %v5088, %v5088
      %v5131 = vpack.c.bf16 %v5089, %v5089
      %v5132 = vpack.c.bf16 %v5090, %v5090
      %v5133 = vpack.c.bf16 %v5091, %v5091
      %v5134 = vpack.c.bf16 %v5092, %v5092
      %v5135 = vpack.c.bf16 %v5093, %v5093
      %v5136 = vpack.c.bf16 %v5094, %v5094
      %v5137 = vpack.c.bf16 %v5095, %v5095
      %v5138 = vpack.c.bf16 %v5096, %v5096
      %v5139 = vpack.c.bf16 %v5097, %v5097
      %v5140 = vpack.c.bf16 %v5098, %v5098
      %v5141 = vpack.c.bf16 %v5099, %v5099
      %v5142 = vpack.c.bf16 %v5100, %v5100
      %v5143 = vpack.c.bf16 %v5101, %v5101
      %v5144 = vpack.c.bf16 %v5102, %v5102
      %v5145 = vpack.c.bf16 %v5103, %v5103
      %v5146 = vpack.c.bf16 %v5104, %v5104
      %v5147 = vpack.c.bf16 %v5105, %v5105
      %v5148 = vpack.c.bf16 %v5106, %v5106
      %v5149 = vpack.c.bf16 %v5107, %v5107
      %v5150 = vpack.c.bf16 %v5108, %v5108
      %v5151 = vpack.c.bf16 %v5109, %v5109
      %v5152 = vpack.c.bf16 %v5110, %v5110
      %v5153 = vpack.c.bf16 %v5111, %v5111
      %v5154 = vpack.c.bf16 %v5112, %v5112
      %v5155 = vpack.c.bf16 %v5113, %v5113
      %5156 = vst [vmem:[#allocation2 + $0xc] sm:$0xf] %v5114
      %5157 = vst [vmem:[#allocation2 + $0x30] sm:$0xf] %v5115
      %5158 = vst [vmem:[#allocation2 + $0x54] sm:$0xf] %v5116
      %5159 = vst [vmem:[#allocation2 + $0x78] sm:$0xf] %v5117
      %5160 = vst [vmem:[#allocation2 + $0x9c] sm:$0xf] %v5118
      %5161 = vst [vmem:[#allocation2 + $0xc0] sm:$0xf] %v5119
      %5162 = vst [vmem:[#allocation2 + $0xe4] sm:$0xf] %v5120
      %5163 = vst [vmem:[#allocation2 + $0x108] sm:$0xf] %v5121
      %5164 = vst [vmem:[#allocation2 + $0x12c] sm:$0xf] %v5122
      %5165 = vst [vmem:[#allocation2 + $0x150] sm:$0xf] %v5123
      %5166 = vst [vmem:[#allocation2 + $0x174] sm:$0xf] %v5124
      %5167 = vst [vmem:[#allocation2 + $0x198] sm:$0xf] %v5125
      %5168 = vst [vmem:[#allocation2 + $0x1bc] sm:$0xf] %v5126
      %5169 = vst [vmem:[#allocation2 + $0x1e0] sm:$0xf] %v5127
      %5170 = vst [vmem:[#allocation2 + $0x204] sm:$0xf] %v5128
      %5171 = vst [vmem:[#allocation2 + $0x228] sm:$0xf] %v5129
      %5172 = vst [vmem:[#allocation2 + $0x24c] sm:$0xf] %v5130
      %5173 = vst [vmem:[#allocation2 + $0x270] sm:$0xf] %v5131
      %5174 = vst [vmem:[#allocation2 + $0x294] sm:$0xf] %v5132
      %5175 = vst [vmem:[#allocation2 + $0x2b8] sm:$0xf] %v5133
      %5176 = vst [vmem:[#allocation2 + $0x2dc] sm:$0xf] %v5134
      %5177 = vst [vmem:[#allocation2 + $0x300] sm:$0xf] %v5135
      %5178 = vst [vmem:[#allocation2 + $0x324] sm:$0xf] %v5136
      %5179 = vst [vmem:[#allocation2 + $0x348] sm:$0xf] %v5137
      %5180 = vst [vmem:[#allocation2 + $0x36c] sm:$0xf] %v5138
      %5181 = vst [vmem:[#allocation2 + $0x390] sm:$0xf] %v5139
      %5182 = vst [vmem:[#allocation2 + $0x3b4] sm:$0xf] %v5140
      %5183 = vst [vmem:[#allocation2 + $0x3d8] sm:$0xf] %v5141
      %5184 = vst [vmem:[#allocation2 + $0x3fc] sm:$0xf] %v5142
      %5185 = vst [vmem:[#allocation2 + $0x420] sm:$0xf] %v5143
      %5186 = vst [vmem:[#allocation2 + $0x444] sm:$0xf] %v5144
      %5187 = vst [vmem:[#allocation2 + $0x468] sm:$0xf] %v5145
      %5188 = vst [vmem:[#allocation2 + $0x48c] sm:$0xf] %v5146
      %5189 = vst [vmem:[#allocation2 + $0x4b0] sm:$0xf] %v5147
      %5190 = vst [vmem:[#allocation2 + $0x4d4] sm:$0xf] %v5148
      %5191 = vst [vmem:[#allocation2 + $0x4f8] sm:$0xf] %v5149
      %5192 = vst [vmem:[#allocation2 + $0x51c] sm:$0xf] %v5150
      %5193 = vst [vmem:[#allocation2 + $0x540] sm:$0xf] %v5151
      %5194 = vst [vmem:[#allocation2 + $0x564] sm:$0xf] %v5152
      %5195 = vst [vmem:[#allocation2 + $0x588] sm:$0xf] %v5153
      %5196 = vst [vmem:[#allocation2 + $0x5ac] sm:$0xf] %v5154
      %5197 = vst [vmem:[#allocation2 + $0x5d0] sm:$0xf] %v5155
      %v5198 = vld [vmem:[#allocation3 + $0x18] sm:$0xff]
      %v5199 = vld [vmem:[#allocation3 + $0x20] sm:$0xff]
      %v5200 = vld [vmem:[#allocation3 + $0x28] sm:$0xff]
      %v5201 = vld [vmem:[#allocation3 + $0x30] sm:$0xff]
      %v5202 = vld [vmem:[#allocation3 + $0x38] sm:$0xff]
      %v5203 = vld [vmem:[#allocation3 + $0x40] sm:$0xff]
      %v5204 = vld [vmem:[#allocation3 + $0x48] sm:$0xff]
      %v5205 = vld [vmem:[#allocation3 + $0x50] sm:$0xff]
      %v5206 = vld [vmem:[#allocation3 + $0x58] sm:$0xff]
      %v5207 = vld [vmem:[#allocation3 + $0x60] sm:$0xff]
      %v5208 = vld [vmem:[#allocation3 + $0x68] sm:$0xff]
      %v5209 = vld [vmem:[#allocation3 + $0x70] sm:$0xff]
      %v5210 = vld [vmem:[#allocation3 + $0x78] sm:$0xff]
      %v5211 = vld [vmem:[#allocation3 + $0x80] sm:$0xff]
      %v5212 = vld [vmem:[#allocation3 + $0x88] sm:$0xff]
      %v5213 = vld [vmem:[#allocation3 + $0x90] sm:$0xff]
      %v5214 = vld [vmem:[#allocation3 + $0x98] sm:$0xff]
      %v5215 = vld [vmem:[#allocation3 + $0xa0] sm:$0xff]
      %v5216 = vld [vmem:[#allocation3 + $0xa8] sm:$0xff]
      %v5217 = vld [vmem:[#allocation3 + $0xb0] sm:$0xff]
      %v5218 = vld [vmem:[#allocation3 + $0xb8] sm:$0xff]
      %v5219 = vld [vmem:[#allocation3 + $0xc0] sm:$0xff]
      %v5220 = vld [vmem:[#allocation3 + $0xc8] sm:$0xff]
      %v5221 = vld [vmem:[#allocation3 + $0xd0] sm:$0xff]
      %v5222 = vld [vmem:[#allocation3 + $0xd8] sm:$0xff]
      %v5223 = vld [vmem:[#allocation3 + $0xe0] sm:$0xff]
      %v5224 = vld [vmem:[#allocation3 + $0xe8] sm:$0xff]
      %v5225 = vld [vmem:[#allocation3 + $0xf0] sm:$0xff]
      %v5226 = vld [vmem:[#allocation3 + $0xf8] sm:$0xff]
      %v5227 = vld [vmem:[#allocation3 + $0x100] sm:$0xff]
      %v5228 = vld [vmem:[#allocation3 + $0x108] sm:$0xff]
      %v5229 = vld [vmem:[#allocation3 + $0x110] sm:$0xff]
      %v5230 = vld [vmem:[#allocation3 + $0x118] sm:$0xff]
      %v5231 = vld [vmem:[#allocation3 + $0x120] sm:$0xff]
      %v5232 = vld [vmem:[#allocation3 + $0x128] sm:$0xff]
      %v5233 = vld [vmem:[#allocation3 + $0x130] sm:$0xff]
      %v5234 = vld [vmem:[#allocation3 + $0x138] sm:$0xff]
      %v5235 = vld [vmem:[#allocation3 + $0x140] sm:$0xff]
      %v5236 = vld [vmem:[#allocation3 + $0x148] sm:$0xff]
      %v5237 = vld [vmem:[#allocation3 + $0x150] sm:$0xff]
      %v5238 = vld [vmem:[#allocation3 + $0x158] sm:$0xff]
      %v5239 = vld [vmem:[#allocation3 + $0x160] sm:$0xff]
      %v5240 = vpack.c.bf16 %v5198, %v5198
      %v5241 = vpack.c.bf16 %v5199, %v5199
      %v5242 = vpack.c.bf16 %v5200, %v5200
      %v5243 = vpack.c.bf16 %v5201, %v5201
      %v5244 = vpack.c.bf16 %v5202, %v5202
      %v5245 = vpack.c.bf16 %v5203, %v5203
      %v5246 = vpack.c.bf16 %v5204, %v5204
      %v5247 = vpack.c.bf16 %v5205, %v5205
      %v5248 = vpack.c.bf16 %v5206, %v5206
      %v5249 = vpack.c.bf16 %v5207, %v5207
      %v5250 = vpack.c.bf16 %v5208, %v5208
      %v5251 = vpack.c.bf16 %v5209, %v5209
      %v5252 = vpack.c.bf16 %v5210, %v5210
      %v5253 = vpack.c.bf16 %v5211, %v5211
      %v5254 = vpack.c.bf16 %v5212, %v5212
      %v5255 = vpack.c.bf16 %v5213, %v5213
      %v5256 = vpack.c.bf16 %v5214, %v5214
      %v5257 = vpack.c.bf16 %v5215, %v5215
      %v5258 = vpack.c.bf16 %v5216, %v5216
      %v5259 = vpack.c.bf16 %v5217, %v5217
      %v5260 = vpack.c.bf16 %v5218, %v5218
      %v5261 = vpack.c.bf16 %v5219, %v5219
      %v5262 = vpack.c.bf16 %v5220, %v5220
      %v5263 = vpack.c.bf16 %v5221, %v5221
      %v5264 = vpack.c.bf16 %v5222, %v5222
      %v5265 = vpack.c.bf16 %v5223, %v5223
      %v5266 = vpack.c.bf16 %v5224, %v5224
      %v5267 = vpack.c.bf16 %v5225, %v5225
      %v5268 = vpack.c.bf16 %v5226, %v5226
      %v5269 = vpack.c.bf16 %v5227, %v5227
      %v5270 = vpack.c.bf16 %v5228, %v5228
      %v5271 = vpack.c.bf16 %v5229, %v5229
      %v5272 = vpack.c.bf16 %v5230, %v5230
      %v5273 = vpack.c.bf16 %v5231, %v5231
      %v5274 = vpack.c.bf16 %v5232, %v5232
      %v5275 = vpack.c.bf16 %v5233, %v5233
      %v5276 = vpack.c.bf16 %v5234, %v5234
      %v5277 = vpack.c.bf16 %v5235, %v5235
      %v5278 = vpack.c.bf16 %v5236, %v5236
      %v5279 = vpack.c.bf16 %v5237, %v5237
      %v5280 = vpack.c.bf16 %v5238, %v5238
      %v5281 = vpack.c.bf16 %v5239, %v5239
      %5282 = vst [vmem:[#allocation2 + $0x10] sm:$0xf] %v5240
      %5283 = vst [vmem:[#allocation2 + $0x34] sm:$0xf] %v5241
      %5284 = vst [vmem:[#allocation2 + $0x58] sm:$0xf] %v5242
      %5285 = vst [vmem:[#allocation2 + $0x7c] sm:$0xf] %v5243
      %5286 = vst [vmem:[#allocation2 + $0xa0] sm:$0xf] %v5244
      %5287 = vst [vmem:[#allocation2 + $0xc4] sm:$0xf] %v5245
      %5288 = vst [vmem:[#allocation2 + $0xe8] sm:$0xf] %v5246
      %5289 = vst [vmem:[#allocation2 + $0x10c] sm:$0xf] %v5247
      %5290 = vst [vmem:[#allocation2 + $0x130] sm:$0xf] %v5248
      %5291 = vst [vmem:[#allocation2 + $0x154] sm:$0xf] %v5249
      %5292 = vst [vmem:[#allocation2 + $0x178] sm:$0xf] %v5250
      %5293 = vst [vmem:[#allocation2 + $0x19c] sm:$0xf] %v5251
      %5294 = vst [vmem:[#allocation2 + $0x1c0] sm:$0xf] %v5252
      %5295 = vst [vmem:[#allocation2 + $0x1e4] sm:$0xf] %v5253
      %5296 = vst [vmem:[#allocation2 + $0x208] sm:$0xf] %v5254
      %5297 = vst [vmem:[#allocation2 + $0x22c] sm:$0xf] %v5255
      %5298 = vst [vmem:[#allocation2 + $0x250] sm:$0xf] %v5256
      %5299 = vst [vmem:[#allocation2 + $0x274] sm:$0xf] %v5257
      %5300 = vst [vmem:[#allocation2 + $0x298] sm:$0xf] %v5258
      %5301 = vst [vmem:[#allocation2 + $0x2bc] sm:$0xf] %v5259
      %5302 = vst [vmem:[#allocation2 + $0x2e0] sm:$0xf] %v5260
      %5303 = vst [vmem:[#allocation2 + $0x304] sm:$0xf] %v5261
      %5304 = vst [vmem:[#allocation2 + $0x328] sm:$0xf] %v5262
      %5305 = vst [vmem:[#allocation2 + $0x34c] sm:$0xf] %v5263
      %5306 = vst [vmem:[#allocation2 + $0x370] sm:$0xf] %v5264
      %5307 = vst [vmem:[#allocation2 + $0x394] sm:$0xf] %v5265
      %5308 = vst [vmem:[#allocation2 + $0x3b8] sm:$0xf] %v5266
      %5309 = vst [vmem:[#allocation2 + $0x3dc] sm:$0xf] %v5267
      %5310 = vst [vmem:[#allocation2 + $0x400] sm:$0xf] %v5268
      %5311 = vst [vmem:[#allocation2 + $0x424] sm:$0xf] %v5269
      %5312 = vst [vmem:[#allocation2 + $0x448] sm:$0xf] %v5270
      %5313 = vst [vmem:[#allocation2 + $0x46c] sm:$0xf] %v5271
      %5314 = vst [vmem:[#allocation2 + $0x490] sm:$0xf] %v5272
      %5315 = vst [vmem:[#allocation2 + $0x4b4] sm:$0xf] %v5273
      %5316 = vst [vmem:[#allocation2 + $0x4d8] sm:$0xf] %v5274
      %5317 = vst [vmem:[#allocation2 + $0x4fc] sm:$0xf] %v5275
      %5318 = vst [vmem:[#allocation2 + $0x520] sm:$0xf] %v5276
      %5319 = vst [vmem:[#allocation2 + $0x544] sm:$0xf] %v5277
      %5320 = vst [vmem:[#allocation2 + $0x568] sm:$0xf] %v5278
      %5321 = vst [vmem:[#allocation2 + $0x58c] sm:$0xf] %v5279
      %5322 = vst [vmem:[#allocation2 + $0x5b0] sm:$0xf] %v5280
      %5323 = vst [vmem:[#allocation2 + $0x5d4] sm:$0xf] %v5281
      %v5324 = vld [vmem:[#allocation3 + $0x19] sm:$0xff]
      %v5325 = vld [vmem:[#allocation3 + $0x21] sm:$0xff]
      %v5326 = vld [vmem:[#allocation3 + $0x29] sm:$0xff]
      %v5327 = vld [vmem:[#allocation3 + $0x31] sm:$0xff]
      %v5328 = vld [vmem:[#allocation3 + $0x39] sm:$0xff]
      %v5329 = vld [vmem:[#allocation3 + $0x41] sm:$0xff]
      %v5330 = vld [vmem:[#allocation3 + $0x49] sm:$0xff]
      %v5331 = vld [vmem:[#allocation3 + $0x51] sm:$0xff]
      %v5332 = vld [vmem:[#allocation3 + $0x59] sm:$0xff]
      %v5333 = vld [vmem:[#allocation3 + $0x61] sm:$0xff]
      %v5334 = vld [vmem:[#allocation3 + $0x69] sm:$0xff]
      %v5335 = vld [vmem:[#allocation3 + $0x71] sm:$0xff]
      %v5336 = vld [vmem:[#allocation3 + $0x79] sm:$0xff]
      %v5337 = vld [vmem:[#allocation3 + $0x81] sm:$0xff]
      %v5338 = vld [vmem:[#allocation3 + $0x89] sm:$0xff]
      %v5339 = vld [vmem:[#allocation3 + $0x91] sm:$0xff]
      %v5340 = vld [vmem:[#allocation3 + $0x99] sm:$0xff]
      %v5341 = vld [vmem:[#allocation3 + $0xa1] sm:$0xff]
      %v5342 = vld [vmem:[#allocation3 + $0xa9] sm:$0xff]
      %v5343 = vld [vmem:[#allocation3 + $0xb1] sm:$0xff]
      %v5344 = vld [vmem:[#allocation3 + $0xb9] sm:$0xff]
      %v5345 = vld [vmem:[#allocation3 + $0xc1] sm:$0xff]
      %v5346 = vld [vmem:[#allocation3 + $0xc9] sm:$0xff]
      %v5347 = vld [vmem:[#allocation3 + $0xd1] sm:$0xff]
      %v5348 = vld [vmem:[#allocation3 + $0xd9] sm:$0xff]
      %v5349 = vld [vmem:[#allocation3 + $0xe1] sm:$0xff]
      %v5350 = vld [vmem:[#allocation3 + $0xe9] sm:$0xff]
      %v5351 = vld [vmem:[#allocation3 + $0xf1] sm:$0xff]
      %v5352 = vld [vmem:[#allocation3 + $0xf9] sm:$0xff]
      %v5353 = vld [vmem:[#allocation3 + $0x101] sm:$0xff]
      %v5354 = vld [vmem:[#allocation3 + $0x109] sm:$0xff]
      %v5355 = vld [vmem:[#allocation3 + $0x111] sm:$0xff]
      %v5356 = vld [vmem:[#allocation3 + $0x119] sm:$0xff]
      %v5357 = vld [vmem:[#allocation3 + $0x121] sm:$0xff]
      %v5358 = vld [vmem:[#allocation3 + $0x129] sm:$0xff]
      %v5359 = vld [vmem:[#allocation3 + $0x131] sm:$0xff]
      %v5360 = vld [vmem:[#allocation3 + $0x139] sm:$0xff]
      %v5361 = vld [vmem:[#allocation3 + $0x141] sm:$0xff]
      %v5362 = vld [vmem:[#allocation3 + $0x149] sm:$0xff]
      %v5363 = vld [vmem:[#allocation3 + $0x151] sm:$0xff]
      %v5364 = vld [vmem:[#allocation3 + $0x159] sm:$0xff]
      %v5365 = vld [vmem:[#allocation3 + $0x161] sm:$0xff]
      %v5366 = vpack.c.bf16 %v5324, %v5324
      %v5367 = vpack.c.bf16 %v5325, %v5325
      %v5368 = vpack.c.bf16 %v5326, %v5326
      %v5369 = vpack.c.bf16 %v5327, %v5327
      %v5370 = vpack.c.bf16 %v5328, %v5328
      %v5371 = vpack.c.bf16 %v5329, %v5329
      %v5372 = vpack.c.bf16 %v5330, %v5330
      %v5373 = vpack.c.bf16 %v5331, %v5331
      %v5374 = vpack.c.bf16 %v5332, %v5332
      %v5375 = vpack.c.bf16 %v5333, %v5333
      %v5376 = vpack.c.bf16 %v5334, %v5334
      %v5377 = vpack.c.bf16 %v5335, %v5335
      %v5378 = vpack.c.bf16 %v5336, %v5336
      %v5379 = vpack.c.bf16 %v5337, %v5337
      %v5380 = vpack.c.bf16 %v5338, %v5338
      %v5381 = vpack.c.bf16 %v5339, %v5339
      %v5382 = vpack.c.bf16 %v5340, %v5340
      %v5383 = vpack.c.bf16 %v5341, %v5341
      %v5384 = vpack.c.bf16 %v5342, %v5342
      %v5385 = vpack.c.bf16 %v5343, %v5343
      %v5386 = vpack.c.bf16 %v5344, %v5344
      %v5387 = vpack.c.bf16 %v5345, %v5345
      %v5388 = vpack.c.bf16 %v5346, %v5346
      %v5389 = vpack.c.bf16 %v5347, %v5347
      %v5390 = vpack.c.bf16 %v5348, %v5348
      %v5391 = vpack.c.bf16 %v5349, %v5349
      %v5392 = vpack.c.bf16 %v5350, %v5350
      %v5393 = vpack.c.bf16 %v5351, %v5351
      %v5394 = vpack.c.bf16 %v5352, %v5352
      %v5395 = vpack.c.bf16 %v5353, %v5353
      %v5396 = vpack.c.bf16 %v5354, %v5354
      %v5397 = vpack.c.bf16 %v5355, %v5355
      %v5398 = vpack.c.bf16 %v5356, %v5356
      %v5399 = vpack.c.bf16 %v5357, %v5357
      %v5400 = vpack.c.bf16 %v5358, %v5358
      %v5401 = vpack.c.bf16 %v5359, %v5359
      %v5402 = vpack.c.bf16 %v5360, %v5360
      %v5403 = vpack.c.bf16 %v5361, %v5361
      %v5404 = vpack.c.bf16 %v5362, %v5362
      %v5405 = vpack.c.bf16 %v5363, %v5363
      %v5406 = vpack.c.bf16 %v5364, %v5364
      %v5407 = vpack.c.bf16 %v5365, %v5365
      %5408 = vst [vmem:[#allocation2 + $0x14] sm:$0xf] %v5366
      %5409 = vst [vmem:[#allocation2 + $0x38] sm:$0xf] %v5367
      %5410 = vst [vmem:[#allocation2 + $0x5c] sm:$0xf] %v5368
      %5411 = vst [vmem:[#allocation2 + $0x80] sm:$0xf] %v5369
      %5412 = vst [vmem:[#allocation2 + $0xa4] sm:$0xf] %v5370
      %5413 = vst [vmem:[#allocation2 + $0xc8] sm:$0xf] %v5371
      %5414 = vst [vmem:[#allocation2 + $0xec] sm:$0xf] %v5372
      %5415 = vst [vmem:[#allocation2 + $0x110] sm:$0xf] %v5373
      %5416 = vst [vmem:[#allocation2 + $0x134] sm:$0xf] %v5374
      %5417 = vst [vmem:[#allocation2 + $0x158] sm:$0xf] %v5375
      %5418 = vst [vmem:[#allocation2 + $0x17c] sm:$0xf] %v5376
      %5419 = vst [vmem:[#allocation2 + $0x1a0] sm:$0xf] %v5377
      %5420 = vst [vmem:[#allocation2 + $0x1c4] sm:$0xf] %v5378
      %5421 = vst [vmem:[#allocation2 + $0x1e8] sm:$0xf] %v5379
      %5422 = vst [vmem:[#allocation2 + $0x20c] sm:$0xf] %v5380
      %5423 = vst [vmem:[#allocation2 + $0x230] sm:$0xf] %v5381
      %5424 = vst [vmem:[#allocation2 + $0x254] sm:$0xf] %v5382
      %5425 = vst [vmem:[#allocation2 + $0x278] sm:$0xf] %v5383
      %5426 = vst [vmem:[#allocation2 + $0x29c] sm:$0xf] %v5384
      %5427 = vst [vmem:[#allocation2 + $0x2c0] sm:$0xf] %v5385
      %5428 = vst [vmem:[#allocation2 + $0x2e4] sm:$0xf] %v5386
      %5429 = vst [vmem:[#allocation2 + $0x308] sm:$0xf] %v5387
      %5430 = vst [vmem:[#allocation2 + $0x32c] sm:$0xf] %v5388
      %5431 = vst [vmem:[#allocation2 + $0x350] sm:$0xf] %v5389
      %5432 = vst [vmem:[#allocation2 + $0x374] sm:$0xf] %v5390
      %5433 = vst [vmem:[#allocation2 + $0x398] sm:$0xf] %v5391
      %5434 = vst [vmem:[#allocation2 + $0x3bc] sm:$0xf] %v5392
      %5435 = vst [vmem:[#allocation2 + $0x3e0] sm:$0xf] %v5393
      %5436 = vst [vmem:[#allocation2 + $0x404] sm:$0xf] %v5394
      %5437 = vst [vmem:[#allocation2 + $0x428] sm:$0xf] %v5395
      %5438 = vst [vmem:[#allocation2 + $0x44c] sm:$0xf] %v5396
      %5439 = vst [vmem:[#allocation2 + $0x470] sm:$0xf] %v5397
      %5440 = vst [vmem:[#allocation2 + $0x494] sm:$0xf] %v5398
      %5441 = vst [vmem:[#allocation2 + $0x4b8] sm:$0xf] %v5399
      %5442 = vst [vmem:[#allocation2 + $0x4dc] sm:$0xf] %v5400
      %5443 = vst [vmem:[#allocation2 + $0x500] sm:$0xf] %v5401
      %5444 = vst [vmem:[#allocation2 + $0x524] sm:$0xf] %v5402
      %5445 = vst [vmem:[#allocation2 + $0x548] sm:$0xf] %v5403
      %5446 = vst [vmem:[#allocation2 + $0x56c] sm:$0xf] %v5404
      %5447 = vst [vmem:[#allocation2 + $0x590] sm:$0xf] %v5405
      %5448 = vst [vmem:[#allocation2 + $0x5b4] sm:$0xf] %v5406
      %5449 = vst [vmem:[#allocation2 + $0x5d8] sm:$0xf] %v5407
      %v5450 = vld [vmem:[#allocation3 + $0x29] sm:$0xff]
      %v5451 = vld [vmem:[#allocation3 + $0x31] sm:$0xff]
      %v5452 = vld [vmem:[#allocation3 + $0x39] sm:$0xff]
      %v5453 = vld [vmem:[#allocation3 + $0x41] sm:$0xff]
      %v5454 = vld [vmem:[#allocation3 + $0x49] sm:$0xff]
      %v5455 = vld [vmem:[#allocation3 + $0x51] sm:$0xff]
      %v5456 = vld [vmem:[#allocation3 + $0x59] sm:$0xff]
      %v5457 = vld [vmem:[#allocation3 + $0x61] sm:$0xff]
      %v5458 = vld [vmem:[#allocation3 + $0x69] sm:$0xff]
      %v5459 = vld [vmem:[#allocation3 + $0x71] sm:$0xff]
      %v5460 = vld [vmem:[#allocation3 + $0x79] sm:$0xff]
      %v5461 = vld [vmem:[#allocation3 + $0x81] sm:$0xff]
      %v5462 = vld [vmem:[#allocation3 + $0x89] sm:$0xff]
      %v5463 = vld [vmem:[#allocation3 + $0x91] sm:$0xff]
      %v5464 = vld [vmem:[#allocation3 + $0x99] sm:$0xff]
      %v5465 = vld [vmem:[#allocation3 + $0xa1] sm:$0xff]
      %v5466 = vld [vmem:[#allocation3 + $0xa9] sm:$0xff]
      %v5467 = vld [vmem:[#allocation3 + $0xb1] sm:$0xff]
      %v5468 = vld [vmem:[#allocation3 + $0xb9] sm:$0xff]
      %v5469 = vld [vmem:[#allocation3 + $0xc1] sm:$0xff]
      %v5470 = vld [vmem:[#allocation3 + $0xc9] sm:$0xff]
      %v5471 = vld [vmem:[#allocation3 + $0xd1] sm:$0xff]
      %v5472 = vld [vmem:[#allocation3 + $0xd9] sm:$0xff]
      %v5473 = vld [vmem:[#allocation3 + $0xe1] sm:$0xff]
      %v5474 = vld [vmem:[#allocation3 + $0xe9] sm:$0xff]
      %v5475 = vld [vmem:[#allocation3 + $0xf1] sm:$0xff]
      %v5476 = vld [vmem:[#allocation3 + $0xf9] sm:$0xff]
      %v5477 = vld [vmem:[#allocation3 + $0x101] sm:$0xff]
      %v5478 = vld [vmem:[#allocation3 + $0x109] sm:$0xff]
      %v5479 = vld [vmem:[#allocation3 + $0x111] sm:$0xff]
      %v5480 = vld [vmem:[#allocation3 + $0x119] sm:$0xff]
      %v5481 = vld [vmem:[#allocation3 + $0x121] sm:$0xff]
      %v5482 = vld [vmem:[#allocation3 + $0x129] sm:$0xff]
      %v5483 = vld [vmem:[#allocation3 + $0x131] sm:$0xff]
      %v5484 = vld [vmem:[#allocation3 + $0x139] sm:$0xff]
      %v5485 = vld [vmem:[#allocation3 + $0x141] sm:$0xff]
      %v5486 = vld [vmem:[#allocation3 + $0x149] sm:$0xff]
      %v5487 = vld [vmem:[#allocation3 + $0x151] sm:$0xff]
      %v5488 = vld [vmem:[#allocation3 + $0x159] sm:$0xff]
      %v5489 = vld [vmem:[#allocation3 + $0x161] sm:$0xff]
      %v5490 = vld [vmem:[#allocation3 + $0x169] sm:$0xff]
      %v5491 = vld [vmem:[#allocation3 + $0x171] sm:$0xff]
      %v5492 = vpack.c.bf16 %v5450, %v5450
      %v5493 = vpack.c.bf16 %v5451, %v5451
      %v5494 = vpack.c.bf16 %v5452, %v5452
      %v5495 = vpack.c.bf16 %v5453, %v5453
      %v5496 = vpack.c.bf16 %v5454, %v5454
      %v5497 = vpack.c.bf16 %v5455, %v5455
      %v5498 = vpack.c.bf16 %v5456, %v5456
      %v5499 = vpack.c.bf16 %v5457, %v5457
      %v5500 = vpack.c.bf16 %v5458, %v5458
      %v5501 = vpack.c.bf16 %v5459, %v5459
      %v5502 = vpack.c.bf16 %v5460, %v5460
      %v5503 = vpack.c.bf16 %v5461, %v5461
      %v5504 = vpack.c.bf16 %v5462, %v5462
      %v5505 = vpack.c.bf16 %v5463, %v5463
      %v5506 = vpack.c.bf16 %v5464, %v5464
      %v5507 = vpack.c.bf16 %v5465, %v5465
      %v5508 = vpack.c.bf16 %v5466, %v5466
      %v5509 = vpack.c.bf16 %v5467, %v5467
      %v5510 = vpack.c.bf16 %v5468, %v5468
      %v5511 = vpack.c.bf16 %v5469, %v5469
      %v5512 = vpack.c.bf16 %v5470, %v5470
      %v5513 = vpack.c.bf16 %v5471, %v5471
      %v5514 = vpack.c.bf16 %v5472, %v5472
      %v5515 = vpack.c.bf16 %v5473, %v5473
      %v5516 = vpack.c.bf16 %v5474, %v5474
      %v5517 = vpack.c.bf16 %v5475, %v5475
      %v5518 = vpack.c.bf16 %v5476, %v5476
      %v5519 = vpack.c.bf16 %v5477, %v5477
      %v5520 = vpack.c.bf16 %v5478, %v5478
      %v5521 = vpack.c.bf16 %v5479, %v5479
      %v5522 = vpack.c.bf16 %v5480, %v5480
      %v5523 = vpack.c.bf16 %v5481, %v5481
      %v5524 = vpack.c.bf16 %v5482, %v5482
      %v5525 = vpack.c.bf16 %v5483, %v5483
      %v5526 = vpack.c.bf16 %v5484, %v5484
      %v5527 = vpack.c.bf16 %v5485, %v5485
      %v5528 = vpack.c.bf16 %v5486, %v5486
      %v5529 = vpack.c.bf16 %v5487, %v5487
      %v5530 = vpack.c.bf16 %v5488, %v5488
      %v5531 = vpack.c.bf16 %v5489, %v5489
      %v5532 = vpack.c.bf16 %v5490, %v5490
      %v5533 = vpack.c.bf16 %v5491, %v5491
      %5534 = vst [vmem:[#allocation2 + $0x18] sm:$0xf] %v5492
      %5535 = vst [vmem:[#allocation2 + $0x3c] sm:$0xf] %v5493
      %5536 = vst [vmem:[#allocation2 + $0x60] sm:$0xf] %v5494
      %5537 = vst [vmem:[#allocation2 + $0x84] sm:$0xf] %v5495
      %5538 = vst [vmem:[#allocation2 + $0xa8] sm:$0xf] %v5496
      %5539 = vst [vmem:[#allocation2 + $0xcc] sm:$0xf] %v5497
      %5540 = vst [vmem:[#allocation2 + $0xf0] sm:$0xf] %v5498
      %5541 = vst [vmem:[#allocation2 + $0x114] sm:$0xf] %v5499
      %5542 = vst [vmem:[#allocation2 + $0x138] sm:$0xf] %v5500
      %5543 = vst [vmem:[#allocation2 + $0x15c] sm:$0xf] %v5501
      %5544 = vst [vmem:[#allocation2 + $0x180] sm:$0xf] %v5502
      %5545 = vst [vmem:[#allocation2 + $0x1a4] sm:$0xf] %v5503
      %5546 = vst [vmem:[#allocation2 + $0x1c8] sm:$0xf] %v5504
      %5547 = vst [vmem:[#allocation2 + $0x1ec] sm:$0xf] %v5505
      %5548 = vst [vmem:[#allocation2 + $0x210] sm:$0xf] %v5506
      %5549 = vst [vmem:[#allocation2 + $0x234] sm:$0xf] %v5507
      %5550 = vst [vmem:[#allocation2 + $0x258] sm:$0xf] %v5508
      %5551 = vst [vmem:[#allocation2 + $0x27c] sm:$0xf] %v5509
      %5552 = vst [vmem:[#allocation2 + $0x2a0] sm:$0xf] %v5510
      %5553 = vst [vmem:[#allocation2 + $0x2c4] sm:$0xf] %v5511
      %5554 = vst [vmem:[#allocation2 + $0x2e8] sm:$0xf] %v5512
      %5555 = vst [vmem:[#allocation2 + $0x30c] sm:$0xf] %v5513
      %5556 = vst [vmem:[#allocation2 + $0x330] sm:$0xf] %v5514
      %5557 = vst [vmem:[#allocation2 + $0x354] sm:$0xf] %v5515
      %5558 = vst [vmem:[#allocation2 + $0x378] sm:$0xf] %v5516
      %5559 = vst [vmem:[#allocation2 + $0x39c] sm:$0xf] %v5517
      %5560 = vst [vmem:[#allocation2 + $0x3c0] sm:$0xf] %v5518
      %5561 = vst [vmem:[#allocation2 + $0x3e4] sm:$0xf] %v5519
      %5562 = vst [vmem:[#allocation2 + $0x408] sm:$0xf] %v5520
      %5563 = vst [vmem:[#allocation2 + $0x42c] sm:$0xf] %v5521
      %5564 = vst [vmem:[#allocation2 + $0x450] sm:$0xf] %v5522
      %5565 = vst [vmem:[#allocation2 + $0x474] sm:$0xf] %v5523
      %5566 = vst [vmem:[#allocation2 + $0x498] sm:$0xf] %v5524
      %5567 = vst [vmem:[#allocation2 + $0x4bc] sm:$0xf] %v5525
      %5568 = vst [vmem:[#allocation2 + $0x4e0] sm:$0xf] %v5526
      %5569 = vst [vmem:[#allocation2 + $0x504] sm:$0xf] %v5527
      %5570 = vst [vmem:[#allocation2 + $0x528] sm:$0xf] %v5528
      %5571 = vst [vmem:[#allocation2 + $0x54c] sm:$0xf] %v5529
      %5572 = vst [vmem:[#allocation2 + $0x570] sm:$0xf] %v5530
      %5573 = vst [vmem:[#allocation2 + $0x594] sm:$0xf] %v5531
      %5574 = vst [vmem:[#allocation2 + $0x5b8] sm:$0xf] %v5532
      %5575 = vst [vmem:[#allocation2 + $0x5dc] sm:$0xf] %v5533
      %v5576 = vld [vmem:[#allocation3 + $0x2a] sm:$0xff]
      %v5577 = vld [vmem:[#allocation3 + $0x32] sm:$0xff]
      %v5578 = vld [vmem:[#allocation3 + $0x3a] sm:$0xff]
      %v5579 = vld [vmem:[#allocation3 + $0x42] sm:$0xff]
      %v5580 = vld [vmem:[#allocation3 + $0x4a] sm:$0xff]
      %v5581 = vld [vmem:[#allocation3 + $0x52] sm:$0xff]
      %v5582 = vld [vmem:[#allocation3 + $0x5a] sm:$0xff]
      %v5583 = vld [vmem:[#allocation3 + $0x62] sm:$0xff]
      %v5584 = vld [vmem:[#allocation3 + $0x6a] sm:$0xff]
      %v5585 = vld [vmem:[#allocation3 + $0x72] sm:$0xff]
      %v5586 = vld [vmem:[#allocation3 + $0x7a] sm:$0xff]
      %v5587 = vld [vmem:[#allocation3 + $0x82] sm:$0xff]
      %v5588 = vld [vmem:[#allocation3 + $0x8a] sm:$0xff]
      %v5589 = vld [vmem:[#allocation3 + $0x92] sm:$0xff]
      %v5590 = vld [vmem:[#allocation3 + $0x9a] sm:$0xff]
      %v5591 = vld [vmem:[#allocation3 + $0xa2] sm:$0xff]
      %v5592 = vld [vmem:[#allocation3 + $0xaa] sm:$0xff]
      %v5593 = vld [vmem:[#allocation3 + $0xb2] sm:$0xff]
      %v5594 = vld [vmem:[#allocation3 + $0xba] sm:$0xff]
      %v5595 = vld [vmem:[#allocation3 + $0xc2] sm:$0xff]
      %v5596 = vld [vmem:[#allocation3 + $0xca] sm:$0xff]
      %v5597 = vld [vmem:[#allocation3 + $0xd2] sm:$0xff]
      %v5598 = vld [vmem:[#allocation3 + $0xda] sm:$0xff]
      %v5599 = vld [vmem:[#allocation3 + $0xe2] sm:$0xff]
      %v5600 = vld [vmem:[#allocation3 + $0xea] sm:$0xff]
      %v5601 = vld [vmem:[#allocation3 + $0xf2] sm:$0xff]
      %v5602 = vld [vmem:[#allocation3 + $0xfa] sm:$0xff]
      %v5603 = vld [vmem:[#allocation3 + $0x102] sm:$0xff]
      %v5604 = vld [vmem:[#allocation3 + $0x10a] sm:$0xff]
      %v5605 = vld [vmem:[#allocation3 + $0x112] sm:$0xff]
      %v5606 = vld [vmem:[#allocation3 + $0x11a] sm:$0xff]
      %v5607 = vld [vmem:[#allocation3 + $0x122] sm:$0xff]
      %v5608 = vld [vmem:[#allocation3 + $0x12a] sm:$0xff]
      %v5609 = vld [vmem:[#allocation3 + $0x132] sm:$0xff]
      %v5610 = vld [vmem:[#allocation3 + $0x13a] sm:$0xff]
      %v5611 = vld [vmem:[#allocation3 + $0x142] sm:$0xff]
      %v5612 = vld [vmem:[#allocation3 + $0x14a] sm:$0xff]
      %v5613 = vld [vmem:[#allocation3 + $0x152] sm:$0xff]
      %v5614 = vld [vmem:[#allocation3 + $0x15a] sm:$0xff]
      %v5615 = vld [vmem:[#allocation3 + $0x162] sm:$0xff]
      %v5616 = vld [vmem:[#allocation3 + $0x16a] sm:$0xff]
      %v5617 = vld [vmem:[#allocation3 + $0x172] sm:$0xff]
      %v5618 = vpack.c.bf16 %v5576, %v5576
      %v5619 = vpack.c.bf16 %v5577, %v5577
      %v5620 = vpack.c.bf16 %v5578, %v5578
      %v5621 = vpack.c.bf16 %v5579, %v5579
      %v5622 = vpack.c.bf16 %v5580, %v5580
      %v5623 = vpack.c.bf16 %v5581, %v5581
      %v5624 = vpack.c.bf16 %v5582, %v5582
      %v5625 = vpack.c.bf16 %v5583, %v5583
      %v5626 = vpack.c.bf16 %v5584, %v5584
      %v5627 = vpack.c.bf16 %v5585, %v5585
      %v5628 = vpack.c.bf16 %v5586, %v5586
      %v5629 = vpack.c.bf16 %v5587, %v5587
      %v5630 = vpack.c.bf16 %v5588, %v5588
      %v5631 = vpack.c.bf16 %v5589, %v5589
      %v5632 = vpack.c.bf16 %v5590, %v5590
      %v5633 = vpack.c.bf16 %v5591, %v5591
      %v5634 = vpack.c.bf16 %v5592, %v5592
      %v5635 = vpack.c.bf16 %v5593, %v5593
      %v5636 = vpack.c.bf16 %v5594, %v5594
      %v5637 = vpack.c.bf16 %v5595, %v5595
      %v5638 = vpack.c.bf16 %v5596, %v5596
      %v5639 = vpack.c.bf16 %v5597, %v5597
      %v5640 = vpack.c.bf16 %v5598, %v5598
      %v5641 = vpack.c.bf16 %v5599, %v5599
      %v5642 = vpack.c.bf16 %v5600, %v5600
      %v5643 = vpack.c.bf16 %v5601, %v5601
      %v5644 = vpack.c.bf16 %v5602, %v5602
      %v5645 = vpack.c.bf16 %v5603, %v5603
      %v5646 = vpack.c.bf16 %v5604, %v5604
      %v5647 = vpack.c.bf16 %v5605, %v5605
      %v5648 = vpack.c.bf16 %v5606, %v5606
      %v5649 = vpack.c.bf16 %v5607, %v5607
      %v5650 = vpack.c.bf16 %v5608, %v5608
      %v5651 = vpack.c.bf16 %v5609, %v5609
      %v5652 = vpack.c.bf16 %v5610, %v5610
      %v5653 = vpack.c.bf16 %v5611, %v5611
      %v5654 = vpack.c.bf16 %v5612, %v5612
      %v5655 = vpack.c.bf16 %v5613, %v5613
      %v5656 = vpack.c.bf16 %v5614, %v5614
      %v5657 = vpack.c.bf16 %v5615, %v5615
      %v5658 = vpack.c.bf16 %v5616, %v5616
      %v5659 = vpack.c.bf16 %v5617, %v5617
      %5660 = vst [vmem:[#allocation2 + $0x1c] sm:$0xf] %v5618
      %5661 = vst [vmem:[#allocation2 + $0x40] sm:$0xf] %v5619
      %5662 = vst [vmem:[#allocation2 + $0x64] sm:$0xf] %v5620
      %5663 = vst [vmem:[#allocation2 + $0x88] sm:$0xf] %v5621
      %5664 = vst [vmem:[#allocation2 + $0xac] sm:$0xf] %v5622
      %5665 = vst [vmem:[#allocation2 + $0xd0] sm:$0xf] %v5623
      %5666 = vst [vmem:[#allocation2 + $0xf4] sm:$0xf] %v5624
      %5667 = vst [vmem:[#allocation2 + $0x118] sm:$0xf] %v5625
      %5668 = vst [vmem:[#allocation2 + $0x13c] sm:$0xf] %v5626
      %5669 = vst [vmem:[#allocation2 + $0x160] sm:$0xf] %v5627
      %5670 = vst [vmem:[#allocation2 + $0x184] sm:$0xf] %v5628
      %5671 = vst [vmem:[#allocation2 + $0x1a8] sm:$0xf] %v5629
      %5672 = vst [vmem:[#allocation2 + $0x1cc] sm:$0xf] %v5630
      %5673 = vst [vmem:[#allocation2 + $0x1f0] sm:$0xf] %v5631
      %5674 = vst [vmem:[#allocation2 + $0x214] sm:$0xf] %v5632
      %5675 = vst [vmem:[#allocation2 + $0x238] sm:$0xf] %v5633
      %5676 = vst [vmem:[#allocation2 + $0x25c] sm:$0xf] %v5634
      %5677 = vst [vmem:[#allocation2 + $0x280] sm:$0xf] %v5635
      %5678 = vst [vmem:[#allocation2 + $0x2a4] sm:$0xf] %v5636
      %5679 = vst [vmem:[#allocation2 + $0x2c8] sm:$0xf] %v5637
      %5680 = vst [vmem:[#allocation2 + $0x2ec] sm:$0xf] %v5638
      %5681 = vst [vmem:[#allocation2 + $0x310] sm:$0xf] %v5639
      %5682 = vst [vmem:[#allocation2 + $0x334] sm:$0xf] %v5640
      %5683 = vst [vmem:[#allocation2 + $0x358] sm:$0xf] %v5641
      %5684 = vst [vmem:[#allocation2 + $0x37c] sm:$0xf] %v5642
      %5685 = vst [vmem:[#allocation2 + $0x3a0] sm:$0xf] %v5643
      %5686 = vst [vmem:[#allocation2 + $0x3c4] sm:$0xf] %v5644
      %5687 = vst [vmem:[#allocation2 + $0x3e8] sm:$0xf] %v5645
      %5688 = vst [vmem:[#allocation2 + $0x40c] sm:$0xf] %v5646
      %5689 = vst [vmem:[#allocation2 + $0x430] sm:$0xf] %v5647
      %5690 = vst [vmem:[#allocation2 + $0x454] sm:$0xf] %v5648
      %5691 = vst [vmem:[#allocation2 + $0x478] sm:$0xf] %v5649
      %5692 = vst [vmem:[#allocation2 + $0x49c] sm:$0xf] %v5650
      %5693 = vst [vmem:[#allocation2 + $0x4c0] sm:$0xf] %v5651
      %5694 = vst [vmem:[#allocation2 + $0x4e4] sm:$0xf] %v5652
      %5695 = vst [vmem:[#allocation2 + $0x508] sm:$0xf] %v5653
      %5696 = vst [vmem:[#allocation2 + $0x52c] sm:$0xf] %v5654
      %5697 = vst [vmem:[#allocation2 + $0x550] sm:$0xf] %v5655
      %5698 = vst [vmem:[#allocation2 + $0x574] sm:$0xf] %v5656
      %5699 = vst [vmem:[#allocation2 + $0x598] sm:$0xf] %v5657
      %5700 = vst [vmem:[#allocation2 + $0x5bc] sm:$0xf] %v5658
      %5701 = vst [vmem:[#allocation2 + $0x5e0] sm:$0xf] %v5659
      %v5702 = vld [vmem:[#allocation3 + $0x2b] sm:$0xff]
      %v5703 = vld [vmem:[#allocation3 + $0x33] sm:$0xff]
      %v5704 = vld [vmem:[#allocation3 + $0x3b] sm:$0xff]
      %v5705 = vld [vmem:[#allocation3 + $0x43] sm:$0xff]
      %v5706 = vld [vmem:[#allocation3 + $0x4b] sm:$0xff]
      %v5707 = vld [vmem:[#allocation3 + $0x53] sm:$0xff]
      %v5708 = vld [vmem:[#allocation3 + $0x5b] sm:$0xff]
      %v5709 = vld [vmem:[#allocation3 + $0x63] sm:$0xff]
      %v5710 = vld [vmem:[#allocation3 + $0x6b] sm:$0xff]
      %v5711 = vld [vmem:[#allocation3 + $0x73] sm:$0xff]
      %v5712 = vld [vmem:[#allocation3 + $0x7b] sm:$0xff]
      %v5713 = vld [vmem:[#allocation3 + $0x83] sm:$0xff]
      %v5714 = vld [vmem:[#allocation3 + $0x8b] sm:$0xff]
      %v5715 = vld [vmem:[#allocation3 + $0x93] sm:$0xff]
      %v5716 = vld [vmem:[#allocation3 + $0x9b] sm:$0xff]
      %v5717 = vld [vmem:[#allocation3 + $0xa3] sm:$0xff]
      %v5718 = vld [vmem:[#allocation3 + $0xab] sm:$0xff]
      %v5719 = vld [vmem:[#allocation3 + $0xb3] sm:$0xff]
      %v5720 = vld [vmem:[#allocation3 + $0xbb] sm:$0xff]
      %v5721 = vld [vmem:[#allocation3 + $0xc3] sm:$0xff]
      %v5722 = vld [vmem:[#allocation3 + $0xcb] sm:$0xff]
      %v5723 = vld [vmem:[#allocation3 + $0xd3] sm:$0xff]
      %v5724 = vld [vmem:[#allocation3 + $0xdb] sm:$0xff]
      %v5725 = vld [vmem:[#allocation3 + $0xe3] sm:$0xff]
      %v5726 = vld [vmem:[#allocation3 + $0xeb] sm:$0xff]
      %v5727 = vld [vmem:[#allocation3 + $0xf3] sm:$0xff]
      %v5728 = vld [vmem:[#allocation3 + $0xfb] sm:$0xff]
      %v5729 = vld [vmem:[#allocation3 + $0x103] sm:$0xff]
      %v5730 = vld [vmem:[#allocation3 + $0x10b] sm:$0xff]
      %v5731 = vld [vmem:[#allocation3 + $0x113] sm:$0xff]
      %v5732 = vld [vmem:[#allocation3 + $0x11b] sm:$0xff]
      %v5733 = vld [vmem:[#allocation3 + $0x123] sm:$0xff]
      %v5734 = vld [vmem:[#allocation3 + $0x12b] sm:$0xff]
      %v5735 = vld [vmem:[#allocation3 + $0x133] sm:$0xff]
      %v5736 = vld [vmem:[#allocation3 + $0x13b] sm:$0xff]
      %v5737 = vld [vmem:[#allocation3 + $0x143] sm:$0xff]
      %v5738 = vld [vmem:[#allocation3 + $0x14b] sm:$0xff]
      %v5739 = vld [vmem:[#allocation3 + $0x153] sm:$0xff]
      %v5740 = vld [vmem:[#allocation3 + $0x15b] sm:$0xff]
      %v5741 = vld [vmem:[#allocation3 + $0x163] sm:$0xff]
      %v5742 = vld [vmem:[#allocation3 + $0x16b] sm:$0xff]
      %v5743 = vld [vmem:[#allocation3 + $0x173] sm:$0xff]
      %v5744 = vpack.c.bf16 %v5702, %v5702
      %v5745 = vpack.c.bf16 %v5703, %v5703
      %v5746 = vpack.c.bf16 %v5704, %v5704
      %v5747 = vpack.c.bf16 %v5705, %v5705
      %v5748 = vpack.c.bf16 %v5706, %v5706
      %v5749 = vpack.c.bf16 %v5707, %v5707
      %v5750 = vpack.c.bf16 %v5708, %v5708
      %v5751 = vpack.c.bf16 %v5709, %v5709
      %v5752 = vpack.c.bf16 %v5710, %v5710
      %v5753 = vpack.c.bf16 %v5711, %v5711
      %v5754 = vpack.c.bf16 %v5712, %v5712
      %v5755 = vpack.c.bf16 %v5713, %v5713
      %v5756 = vpack.c.bf16 %v5714, %v5714
      %v5757 = vpack.c.bf16 %v5715, %v5715
      %v5758 = vpack.c.bf16 %v5716, %v5716
      %v5759 = vpack.c.bf16 %v5717, %v5717
      %v5760 = vpack.c.bf16 %v5718, %v5718
      %v5761 = vpack.c.bf16 %v5719, %v5719
      %v5762 = vpack.c.bf16 %v5720, %v5720
      %v5763 = vpack.c.bf16 %v5721, %v5721
      %v5764 = vpack.c.bf16 %v5722, %v5722
      %v5765 = vpack.c.bf16 %v5723, %v5723
      %v5766 = vpack.c.bf16 %v5724, %v5724
      %v5767 = vpack.c.bf16 %v5725, %v5725
      %v5768 = vpack.c.bf16 %v5726, %v5726
      %v5769 = vpack.c.bf16 %v5727, %v5727
      %v5770 = vpack.c.bf16 %v5728, %v5728
      %v5771 = vpack.c.bf16 %v5729, %v5729
      %v5772 = vpack.c.bf16 %v5730, %v5730
      %v5773 = vpack.c.bf16 %v5731, %v5731
      %v5774 = vpack.c.bf16 %v5732, %v5732
      %v5775 = vpack.c.bf16 %v5733, %v5733
      %v5776 = vpack.c.bf16 %v5734, %v5734
      %v5777 = vpack.c.bf16 %v5735, %v5735
      %v5778 = vpack.c.bf16 %v5736, %v5736
      %v5779 = vpack.c.bf16 %v5737, %v5737
      %v5780 = vpack.c.bf16 %v5738, %v5738
      %v5781 = vpack.c.bf16 %v5739, %v5739
      %v5782 = vpack.c.bf16 %v5740, %v5740
      %v5783 = vpack.c.bf16 %v5741, %v5741
      %v5784 = vpack.c.bf16 %v5742, %v5742
      %v5785 = vpack.c.bf16 %v5743, %v5743
      %5786 = vst [vmem:[#allocation2 + $0x20] sm:$0xf] %v5744
      %5787 = vst [vmem:[#allocation2 + $0x44] sm:$0xf] %v5745
      %5788 = vst [vmem:[#allocation2 + $0x68] sm:$0xf] %v5746
      %5789 = vst [vmem:[#allocation2 + $0x8c] sm:$0xf] %v5747
      %5790 = vst [vmem:[#allocation2 + $0xb0] sm:$0xf] %v5748
      %5791 = vst [vmem:[#allocation2 + $0xd4] sm:$0xf] %v5749
      %5792 = vst [vmem:[#allocation2 + $0xf8] sm:$0xf] %v5750
      %5793 = vst [vmem:[#allocation2 + $0x11c] sm:$0xf] %v5751
      %5794 = vst [vmem:[#allocation2 + $0x140] sm:$0xf] %v5752
      %5795 = vst [vmem:[#allocation2 + $0x164] sm:$0xf] %v5753
      %5796 = vst [vmem:[#allocation2 + $0x188] sm:$0xf] %v5754
      %5797 = vst [vmem:[#allocation2 + $0x1ac] sm:$0xf] %v5755
      %5798 = vst [vmem:[#allocation2 + $0x1d0] sm:$0xf] %v5756
      %5799 = vst [vmem:[#allocation2 + $0x1f4] sm:$0xf] %v5757
      %5800 = vst [vmem:[#allocation2 + $0x218] sm:$0xf] %v5758
      %5801 = vst [vmem:[#allocation2 + $0x23c] sm:$0xf] %v5759
      %5802 = vst [vmem:[#allocation2 + $0x260] sm:$0xf] %v5760
      %5803 = vst [vmem:[#allocation2 + $0x284] sm:$0xf] %v5761
      %5804 = vst [vmem:[#allocation2 + $0x2a8] sm:$0xf] %v5762
      %5805 = vst [vmem:[#allocation2 + $0x2cc] sm:$0xf] %v5763
      %5806 = vst [vmem:[#allocation2 + $0x2f0] sm:$0xf] %v5764
      %5807 = vst [vmem:[#allocation2 + $0x314] sm:$0xf] %v5765
      %5808 = vst [vmem:[#allocation2 + $0x338] sm:$0xf] %v5766
      %5809 = vst [vmem:[#allocation2 + $0x35c] sm:$0xf] %v5767
      %5810 = vst [vmem:[#allocation2 + $0x380] sm:$0xf] %v5768
      %5811 = vst [vmem:[#allocation2 + $0x3a4] sm:$0xf] %v5769
      %5812 = vst [vmem:[#allocation2 + $0x3c8] sm:$0xf] %v5770
      %5813 = vst [vmem:[#allocation2 + $0x3ec] sm:$0xf] %v5771
      %5814 = vst [vmem:[#allocation2 + $0x410] sm:$0xf] %v5772
      %5815 = vst [vmem:[#allocation2 + $0x434] sm:$0xf] %v5773
      %5816 = vst [vmem:[#allocation2 + $0x458] sm:$0xf] %v5774
      %5817 = vst [vmem:[#allocation2 + $0x47c] sm:$0xf] %v5775
      %5818 = vst [vmem:[#allocation2 + $0x4a0] sm:$0xf] %v5776
      %5819 = vst [vmem:[#allocation2 + $0x4c4] sm:$0xf] %v5777
      %5820 = vst [vmem:[#allocation2 + $0x4e8] sm:$0xf] %v5778
      %5821 = vst [vmem:[#allocation2 + $0x50c] sm:$0xf] %v5779
      %5822 = vst [vmem:[#allocation2 + $0x530] sm:$0xf] %v5780
      %5823 = vst [vmem:[#allocation2 + $0x554] sm:$0xf] %v5781
      %5824 = vst [vmem:[#allocation2 + $0x578] sm:$0xf] %v5782
      %5825 = vst [vmem:[#allocation2 + $0x59c] sm:$0xf] %v5783
      %5826 = vst [vmem:[#allocation2 + $0x5c0] sm:$0xf] %v5784
      %5827 = vst [vmem:[#allocation2 + $0x5e4] sm:$0xf] %v5785
      %v5828 = vld [vmem:[#allocation2] sm:$0xff]
      %v5829 = vld [vmem:[#allocation2 + $0x8] sm:$0xff]
      %v5830 = vld [vmem:[#allocation2 + $0x10] sm:$0xff]
      %v5831 = vld [vmem:[#allocation2 + $0x18] sm:$0xff]
      %v5832 = vld [vmem:[#allocation2 + $0x20] sm:$0xf]
      %v5833 = vld [vmem:[#allocation2 + $0x24] sm:$0xff]
      %v5834 = vld [vmem:[#allocation2 + $0x2c] sm:$0xff]
      %v5835 = vld [vmem:[#allocation2 + $0x34] sm:$0xff]
      %v5836 = vld [vmem:[#allocation2 + $0x3c] sm:$0xff]
      %v5837 = vld [vmem:[#allocation2 + $0x44] sm:$0xf]
      %v5838 = vld [vmem:[#allocation2 + $0x48] sm:$0xff]
      %v5839 = vld [vmem:[#allocation2 + $0x50] sm:$0xff]
      %v5840 = vld [vmem:[#allocation2 + $0x58] sm:$0xff]
      %v5841 = vld [vmem:[#allocation2 + $0x60] sm:$0xff]
      %v5842 = vld [vmem:[#allocation2 + $0x68] sm:$0xf]
      %v5843 = vld [vmem:[#allocation2 + $0x6c] sm:$0xff]
      %v5844 = vld [vmem:[#allocation2 + $0x74] sm:$0xff]
      %v5845 = vld [vmem:[#allocation2 + $0x7c] sm:$0xff]
      %v5846 = vld [vmem:[#allocation2 + $0x84] sm:$0xff]
      %v5847 = vld [vmem:[#allocation2 + $0x8c] sm:$0xf]
      %v5848 = vld [vmem:[#allocation2 + $0x90] sm:$0xff]
      %v5849 = vld [vmem:[#allocation2 + $0x98] sm:$0xff]
      %v5850 = vld [vmem:[#allocation2 + $0xa0] sm:$0xff]
      %v5851 = vld [vmem:[#allocation2 + $0xa8] sm:$0xff]
      %v5852 = vld [vmem:[#allocation2 + $0xb0] sm:$0xf]
      %v5853 = vld [vmem:[#allocation2 + $0xb4] sm:$0xff]
      %v5854 = vld [vmem:[#allocation2 + $0xbc] sm:$0xff]
      %v5855 = vld [vmem:[#allocation2 + $0xc4] sm:$0xff]
      %v5856 = vld [vmem:[#allocation2 + $0xcc] sm:$0xff]
      %v5857 = vld [vmem:[#allocation2 + $0xd4] sm:$0xf]
      %v5858 = vld [vmem:[#allocation2 + $0xd8] sm:$0xff]
      %v5859 = vld [vmem:[#allocation2 + $0xe0] sm:$0xff]
      %v5860 = vld [vmem:[#allocation2 + $0xe8] sm:$0xff]
      %v5861 = vld [vmem:[#allocation2 + $0xf0] sm:$0xff]
      %v5862 = vld [vmem:[#allocation2 + $0xf8] sm:$0xf]
      %v5863 = vld [vmem:[#allocation2 + $0xfc] sm:$0xff]
      %v5864 = vld [vmem:[#allocation2 + $0x104] sm:$0xff]
      %v5865 = vld [vmem:[#allocation2 + $0x10c] sm:$0xff]
      %v5866 = vld [vmem:[#allocation2 + $0x114] sm:$0xff]
      %v5867 = vld [vmem:[#allocation2 + $0x11c] sm:$0xf]
      %v5868 = vld [vmem:[#allocation2 + $0x120] sm:$0xff]
      %v5869 = vld [vmem:[#allocation2 + $0x128] sm:$0xff]
      %v5870 = vld [vmem:[#allocation2 + $0x130] sm:$0xff]
      %v5871 = vld [vmem:[#allocation2 + $0x138] sm:$0xff]
      %v5872 = vld [vmem:[#allocation2 + $0x140] sm:$0xf]
      %v5873 = vld [vmem:[#allocation2 + $0x144] sm:$0xff]
      %v5874 = vld [vmem:[#allocation2 + $0x14c] sm:$0xff]
      %v5875 = vld [vmem:[#allocation2 + $0x154] sm:$0xff]
      %v5876 = vld [vmem:[#allocation2 + $0x15c] sm:$0xff]
      %v5877 = vld [vmem:[#allocation2 + $0x164] sm:$0xf]
      %v5878 = vld [vmem:[#allocation2 + $0x168] sm:$0xff]
      %v5879 = vld [vmem:[#allocation2 + $0x170] sm:$0xff]
      %v5880 = vld [vmem:[#allocation2 + $0x178] sm:$0xff]
      %v5881 = vld [vmem:[#allocation2 + $0x180] sm:$0xff]
      %v5882 = vld [vmem:[#allocation2 + $0x188] sm:$0xf]
      %v5883 = vld [vmem:[#allocation2 + $0x18c] sm:$0xff]
      %v5884 = vld [vmem:[#allocation2 + $0x194] sm:$0xff]
      %v5885 = vld [vmem:[#allocation2 + $0x19c] sm:$0xff]
      %v5886 = vld [vmem:[#allocation2 + $0x1a4] sm:$0xff]
      %v5887 = vld [vmem:[#allocation2 + $0x1ac] sm:$0xf]
      %v5888 = vld [vmem:[#allocation2 + $0x1b0] sm:$0xff]
      %v5889 = vld [vmem:[#allocation2 + $0x1b8] sm:$0xff]
      %v5890 = vld [vmem:[#allocation2 + $0x1c0] sm:$0xff]
      %v5891 = vld [vmem:[#allocation2 + $0x1c8] sm:$0xff]
      %v5892 = vld [vmem:[#allocation2 + $0x1d0] sm:$0xf]
      %v5893 = vld [vmem:[#allocation2 + $0x1d4] sm:$0xff]
      %v5894 = vld [vmem:[#allocation2 + $0x1dc] sm:$0xff]
      %v5895 = vld [vmem:[#allocation2 + $0x1e4] sm:$0xff]
      %v5896 = vld [vmem:[#allocation2 + $0x1ec] sm:$0xff]
      %v5897 = vld [vmem:[#allocation2 + $0x1f4] sm:$0xf]
      %v5898 = vld [vmem:[#allocation2 + $0x1f8] sm:$0xff]
      %v5899 = vld [vmem:[#allocation2 + $0x200] sm:$0xff]
      %v5900 = vld [vmem:[#allocation2 + $0x208] sm:$0xff]
      %v5901 = vld [vmem:[#allocation2 + $0x210] sm:$0xff]
      %v5902 = vld [vmem:[#allocation2 + $0x218] sm:$0xf]
      %v5903 = vld [vmem:[#allocation2 + $0x21c] sm:$0xff]
      %v5904 = vld [vmem:[#allocation2 + $0x224] sm:$0xff]
      %v5905 = vld [vmem:[#allocation2 + $0x22c] sm:$0xff]
      %v5906 = vld [vmem:[#allocation2 + $0x234] sm:$0xff]
      %v5907 = vld [vmem:[#allocation2 + $0x23c] sm:$0xf]
      %v5908 = vld [vmem:[#allocation2 + $0x240] sm:$0xff]
      %v5909 = vld [vmem:[#allocation2 + $0x248] sm:$0xff]
      %v5910 = vld [vmem:[#allocation2 + $0x250] sm:$0xff]
      %v5911 = vld [vmem:[#allocation2 + $0x258] sm:$0xff]
      %v5912 = vld [vmem:[#allocation2 + $0x260] sm:$0xf]
      %v5913 = vld [vmem:[#allocation2 + $0x264] sm:$0xff]
      %v5914 = vld [vmem:[#allocation2 + $0x26c] sm:$0xff]
      %v5915 = vld [vmem:[#allocation2 + $0x274] sm:$0xff]
      %v5916 = vld [vmem:[#allocation2 + $0x27c] sm:$0xff]
      %v5917 = vld [vmem:[#allocation2 + $0x284] sm:$0xf]
      %v5918 = vld [vmem:[#allocation2 + $0x288] sm:$0xff]
      %v5919 = vld [vmem:[#allocation2 + $0x290] sm:$0xff]
      %v5920 = vld [vmem:[#allocation2 + $0x298] sm:$0xff]
      %v5921 = vld [vmem:[#allocation2 + $0x2a0] sm:$0xff]
      %v5922 = vld [vmem:[#allocation2 + $0x2a8] sm:$0xf]
      %v5923 = vld [vmem:[#allocation2 + $0x2ac] sm:$0xff]
      %v5924 = vld [vmem:[#allocation2 + $0x2b4] sm:$0xff]
      %v5925 = vld [vmem:[#allocation2 + $0x2bc] sm:$0xff]
      %v5926 = vld [vmem:[#allocation2 + $0x2c4] sm:$0xff]
      %v5927 = vld [vmem:[#allocation2 + $0x2cc] sm:$0xf]
      %v5928 = vld [vmem:[#allocation2 + $0x2d0] sm:$0xff]
      %v5929 = vld [vmem:[#allocation2 + $0x2d8] sm:$0xff]
      %v5930 = vld [vmem:[#allocation2 + $0x2e0] sm:$0xff]
      %v5931 = vld [vmem:[#allocation2 + $0x2e8] sm:$0xff]
      %v5932 = vld [vmem:[#allocation2 + $0x2f0] sm:$0xf]
      %v5933 = vld [vmem:[#allocation2 + $0x2f4] sm:$0xff]
      %v5934 = vld [vmem:[#allocation2 + $0x2fc] sm:$0xff]
      %v5935 = vld [vmem:[#allocation2 + $0x304] sm:$0xff]
      %v5936 = vld [vmem:[#allocation2 + $0x30c] sm:$0xff]
      %v5937 = vld [vmem:[#allocation2 + $0x314] sm:$0xf]
      %v5938 = vld [vmem:[#allocation2 + $0x318] sm:$0xff]
      %v5939 = vld [vmem:[#allocation2 + $0x320] sm:$0xff]
      %v5940 = vld [vmem:[#allocation2 + $0x328] sm:$0xff]
      %v5941 = vld [vmem:[#allocation2 + $0x330] sm:$0xff]
      %v5942 = vld [vmem:[#allocation2 + $0x338] sm:$0xf]
      %v5943 = vld [vmem:[#allocation2 + $0x33c] sm:$0xff]
      %v5944 = vld [vmem:[#allocation2 + $0x344] sm:$0xff]
      %v5945 = vld [vmem:[#allocation2 + $0x34c] sm:$0xff]
      %v5946 = vld [vmem:[#allocation2 + $0x354] sm:$0xff]
      %v5947 = vld [vmem:[#allocation2 + $0x35c] sm:$0xf]
      %v5948 = vld [vmem:[#allocation2 + $0x360] sm:$0xff]
      %v5949 = vld [vmem:[#allocation2 + $0x368] sm:$0xff]
      %v5950 = vld [vmem:[#allocation2 + $0x370] sm:$0xff]
      %v5951 = vld [vmem:[#allocation2 + $0x378] sm:$0xff]
      %v5952 = vld [vmem:[#allocation2 + $0x380] sm:$0xf]
      %v5953 = vld [vmem:[#allocation2 + $0x384] sm:$0xff]
      %v5954 = vld [vmem:[#allocation2 + $0x38c] sm:$0xff]
      %v5955 = vld [vmem:[#allocation2 + $0x394] sm:$0xff]
      %v5956 = vld [vmem:[#allocation2 + $0x39c] sm:$0xff]
      %v5957 = vld [vmem:[#allocation2 + $0x3a4] sm:$0xf]
      %v5958 = vld [vmem:[#allocation2 + $0x3a8] sm:$0xff]
      %v5959 = vld [vmem:[#allocation2 + $0x3b0] sm:$0xff]
      %v5960 = vld [vmem:[#allocation2 + $0x3b8] sm:$0xff]
      %v5961 = vld [vmem:[#allocation2 + $0x3c0] sm:$0xff]
      %v5962 = vld [vmem:[#allocation2 + $0x3c8] sm:$0xf]
      %v5963 = vld [vmem:[#allocation2 + $0x3cc] sm:$0xff]
      %v5964 = vld [vmem:[#allocation2 + $0x3d4] sm:$0xff]
      %v5965 = vld [vmem:[#allocation2 + $0x3dc] sm:$0xff]
      %v5966 = vld [vmem:[#allocation2 + $0x3e4] sm:$0xff]
      %v5967 = vld [vmem:[#allocation2 + $0x3ec] sm:$0xf]
      %v5968 = vld [vmem:[#allocation2 + $0x3f0] sm:$0xff]
      %v5969 = vld [vmem:[#allocation2 + $0x3f8] sm:$0xff]
      %v5970 = vld [vmem:[#allocation2 + $0x400] sm:$0xff]
      %v5971 = vld [vmem:[#allocation2 + $0x408] sm:$0xff]
      %v5972 = vld [vmem:[#allocation2 + $0x410] sm:$0xf]
      %v5973 = vld [vmem:[#allocation2 + $0x414] sm:$0xff]
      %v5974 = vld [vmem:[#allocation2 + $0x41c] sm:$0xff]
      %v5975 = vld [vmem:[#allocation2 + $0x424] sm:$0xff]
      %v5976 = vld [vmem:[#allocation2 + $0x42c] sm:$0xff]
      %v5977 = vld [vmem:[#allocation2 + $0x434] sm:$0xf]
      %v5978 = vld [vmem:[#allocation2 + $0x438] sm:$0xff]
      %v5979 = vld [vmem:[#allocation2 + $0x440] sm:$0xff]
      %v5980 = vld [vmem:[#allocation2 + $0x448] sm:$0xff]
      %v5981 = vld [vmem:[#allocation2 + $0x450] sm:$0xff]
      %v5982 = vld [vmem:[#allocation2 + $0x458] sm:$0xf]
      %v5983 = vld [vmem:[#allocation2 + $0x45c] sm:$0xff]
      %v5984 = vld [vmem:[#allocation2 + $0x464] sm:$0xff]
      %v5985 = vld [vmem:[#allocation2 + $0x46c] sm:$0xff]
      %v5986 = vld [vmem:[#allocation2 + $0x474] sm:$0xff]
      %v5987 = vld [vmem:[#allocation2 + $0x47c] sm:$0xf]
      %v5988 = vld [vmem:[#allocation2 + $0x480] sm:$0xff]
      %v5989 = vld [vmem:[#allocation2 + $0x488] sm:$0xff]
      %v5990 = vld [vmem:[#allocation2 + $0x490] sm:$0xff]
      %v5991 = vld [vmem:[#allocation2 + $0x498] sm:$0xff]
      %v5992 = vld [vmem:[#allocation2 + $0x4a0] sm:$0xf]
      %v5993 = vld [vmem:[#allocation2 + $0x4a4] sm:$0xff]
      %v5994 = vld [vmem:[#allocation2 + $0x4ac] sm:$0xff]
      %v5995 = vld [vmem:[#allocation2 + $0x4b4] sm:$0xff]
      %v5996 = vld [vmem:[#allocation2 + $0x4bc] sm:$0xff]
      %v5997 = vld [vmem:[#allocation2 + $0x4c4] sm:$0xf]
      %v5998 = vld [vmem:[#allocation2 + $0x4c8] sm:$0xff]
      %v5999 = vld [vmem:[#allocation2 + $0x4d0] sm:$0xff]
      %v6000 = vld [vmem:[#allocation2 + $0x4d8] sm:$0xff]
      %v6001 = vld [vmem:[#allocation2 + $0x4e0] sm:$0xff]
      %v6002 = vld [vmem:[#allocation2 + $0x4e8] sm:$0xf]
      %v6003 = vld [vmem:[#allocation2 + $0x4ec] sm:$0xff]
      %v6004 = vld [vmem:[#allocation2 + $0x4f4] sm:$0xff]
      %v6005 = vld [vmem:[#allocation2 + $0x4fc] sm:$0xff]
      %v6006 = vld [vmem:[#allocation2 + $0x504] sm:$0xff]
      %v6007 = vld [vmem:[#allocation2 + $0x50c] sm:$0xf]
      %v6008 = vld [vmem:[#allocation2 + $0x510] sm:$0xff]
      %v6009 = vld [vmem:[#allocation2 + $0x518] sm:$0xff]
      %v6010 = vld [vmem:[#allocation2 + $0x520] sm:$0xff]
      %v6011 = vld [vmem:[#allocation2 + $0x528] sm:$0xff]
      %v6012 = vld [vmem:[#allocation2 + $0x530] sm:$0xf]
      %v6013 = vld [vmem:[#allocation2 + $0x534] sm:$0xff]
      %v6014 = vld [vmem:[#allocation2 + $0x53c] sm:$0xff]
      %v6015 = vld [vmem:[#allocation2 + $0x544] sm:$0xff]
      %v6016 = vld [vmem:[#allocation2 + $0x54c] sm:$0xff]
      %v6017 = vld [vmem:[#allocation2 + $0x554] sm:$0xf]
      %v6018 = vld [vmem:[#allocation2 + $0x558] sm:$0xff]
      %v6019 = vld [vmem:[#allocation2 + $0x560] sm:$0xff]
      %v6020 = vld [vmem:[#allocation2 + $0x568] sm:$0xff]
      %v6021 = vld [vmem:[#allocation2 + $0x570] sm:$0xff]
      %v6022 = vld [vmem:[#allocation2 + $0x578] sm:$0xf]
      %v6023 = vld [vmem:[#allocation2 + $0x57c] sm:$0xff]
      %v6024 = vld [vmem:[#allocation2 + $0x584] sm:$0xff]
      %v6025 = vld [vmem:[#allocation2 + $0x58c] sm:$0xff]
      %v6026 = vld [vmem:[#allocation2 + $0x594] sm:$0xff]
      %v6027 = vld [vmem:[#allocation2 + $0x59c] sm:$0xf]
      %v6028 = vld [vmem:[#allocation2 + $0x5a0] sm:$0xff]
      %v6029 = vld [vmem:[#allocation2 + $0x5a8] sm:$0xff]
      %v6030 = vld [vmem:[#allocation2 + $0x5b0] sm:$0xff]
      %v6031 = vld [vmem:[#allocation2 + $0x5b8] sm:$0xff]
      %v6032 = vld [vmem:[#allocation2 + $0x5c0] sm:$0xf]
      %v6033 = vld [vmem:[#allocation2 + $0x5c4] sm:$0xff]
      %v6034 = vld [vmem:[#allocation2 + $0x5cc] sm:$0xff]
      %v6035 = vld [vmem:[#allocation2 + $0x5d4] sm:$0xff]
      %v6036 = vld [vmem:[#allocation2 + $0x5dc] sm:$0xff]
      %v6037 = vld [vmem:[#allocation2 + $0x5e4] sm:$0xf]
      %v6038 = vld [vmem:[%s2] sm:$0xf]
      %v6039 = vld [vmem:[%s2 + $0x4] sm:$0xf]
      %v6040 = vld [vmem:[%s2 + $0x8] sm:$0xf]
      %v6041 = vld [vmem:[%s2 + $0xc] sm:$0xf]
      %v6042 = vld [vmem:[%s2 + $0x10] sm:$0xf]
      %v6043 = vld [vmem:[%s2 + $0x14] sm:$0xf]
      %v6044 = vld [vmem:[%s2 + $0x18] sm:$0xf]
      %v6045 = vld [vmem:[%s2 + $0x1c] sm:$0xf]
      %v6046 = vld [vmem:[%s2 + $0x20] sm:$0xf]
      %v6047 = vld [vmem:[%s2 + $0x24] sm:$0xf]
      %v6048 = vld [vmem:[%s2 + $0x28] sm:$0xf]
      %v6049 = vld [vmem:[%s2 + $0x2c] sm:$0xf]
      %v6050 = vld [vmem:[%s2 + $0x30] sm:$0xf]
      %v6051 = vld [vmem:[%s2 + $0x34] sm:$0xf]
      %v6052 = vld [vmem:[%s2 + $0x38] sm:$0xf]
      %v6053 = vld [vmem:[%s2 + $0x3c] sm:$0xf]
      %v6054 = vld [vmem:[%s2 + $0x40] sm:$0xf]
      %v6055 = vld [vmem:[%s2 + $0x44] sm:$0xf]
      %v6056 = vld [vmem:[%s2 + $0x48] sm:$0xf]
      %v6057 = vld [vmem:[%s2 + $0x4c] sm:$0xf]
      %v6058 = vld [vmem:[%s2 + $0x50] sm:$0xf]
      %v6059 = vld [vmem:[%s2 + $0x54] sm:$0xf]
      %v6060 = vld [vmem:[%s2 + $0x58] sm:$0xf]
      %v6061 = vld [vmem:[%s2 + $0x5c] sm:$0xf]
      %v6062 = vld [vmem:[%s2 + $0x60] sm:$0xf]
      %v6063 = vld [vmem:[%s2 + $0x64] sm:$0xf]
      %v6064 = vld [vmem:[%s2 + $0x68] sm:$0xf]
      %v6065 = vld [vmem:[%s2 + $0x6c] sm:$0xf]
      %v6066 = vld [vmem:[%s2 + $0x70] sm:$0xf]
      %v6067 = vld [vmem:[%s2 + $0x74] sm:$0xf]
      %v6068 = vld [vmem:[%s2 + $0x78] sm:$0xf]
      %v6069 = vld [vmem:[%s2 + $0x7c] sm:$0xf]
      %v6070 = vld [vmem:[%s2 + $0x80] sm:$0xf]
      %v6071 = vld [vmem:[%s2 + $0x84] sm:$0xf]
      %v6072 = vld [vmem:[%s2 + $0x88] sm:$0xf]
      %v6073 = vld [vmem:[%s2 + $0x8c] sm:$0xf]
      %v6074 = vld [vmem:[%s2 + $0x90] sm:$0xf]
      %v6075 = vld [vmem:[%s2 + $0x94] sm:$0xf]
      %v6076 = vld [vmem:[%s2 + $0x98] sm:$0xf]
      %v6077 = vld [vmem:[%s2 + $0x9c] sm:$0xf]
      %v6078 = vld [vmem:[%s2 + $0xa0] sm:$0xf]
      %v6079 = vld [vmem:[%s2 + $0xa4] sm:$0xf]
      %v6080 = vld [vmem:[%s2 + $0xa8] sm:$0xf]
      %v6081 = vld [vmem:[%s2 + $0xac] sm:$0xf]
      %v6082 = vld [vmem:[%s2 + $0xb0] sm:$0xf]
      %v6083 = vld [vmem:[%s2 + $0xb4] sm:$0xf]
      %v6084 = vld [vmem:[%s2 + $0xb8] sm:$0xf]
      %v6085 = vld [vmem:[%s2 + $0xbc] sm:$0xf]
      %v6086 = vld [vmem:[%s2 + $0xc0] sm:$0xf]
      %v6087 = vld [vmem:[%s2 + $0xc4] sm:$0xf]
      %v6088 = vld [vmem:[%s2 + $0xc8] sm:$0xf]
      %v6089 = vld [vmem:[%s2 + $0xcc] sm:$0xf]
      %v6090 = vld [vmem:[%s2 + $0xd0] sm:$0xf]
      %v6091 = vld [vmem:[%s2 + $0xd4] sm:$0xf]
      %v6092 = vld [vmem:[%s2 + $0xd8] sm:$0xf]
      %v6093 = vld [vmem:[%s2 + $0xdc] sm:$0xf]
      %v6094 = vld [vmem:[%s2 + $0xe0] sm:$0xf]
      %v6095 = vld [vmem:[%s2 + $0xe4] sm:$0xf]
      %v6096 = vld [vmem:[%s2 + $0xe8] sm:$0xf]
      %v6097 = vld [vmem:[%s2 + $0xec] sm:$0xf]
      %v6098 = vld [vmem:[%s2 + $0xf0] sm:$0xf]
      %v6099 = vld [vmem:[%s2 + $0xf4] sm:$0xf]
      %v6100 = vld [vmem:[%s2 + $0xf8] sm:$0xf]
      %v6101 = vld [vmem:[%s2 + $0xfc] sm:$0xf]
      %v6102 = vld [vmem:[%s2 + $0x100] sm:$0xf]
      %v6103 = vld [vmem:[%s2 + $0x104] sm:$0xf]
      %v6104 = vld [vmem:[%s2 + $0x108] sm:$0xf]
      %v6105 = vld [vmem:[%s2 + $0x10c] sm:$0xf]
      %v6106 = vld [vmem:[%s2 + $0x110] sm:$0xf]
      %v6107 = vld [vmem:[%s2 + $0x114] sm:$0xf]
      %v6108 = vld [vmem:[%s2 + $0x118] sm:$0xf]
      %v6109 = vld [vmem:[%s2 + $0x11c] sm:$0xf]
      %v6110 = vld [vmem:[%s2 + $0x120] sm:$0xf]
      %v6111 = vld [vmem:[%s2 + $0x124] sm:$0xf]
      %v6112 = vld [vmem:[%s2 + $0x128] sm:$0xf]
      %v6113 = vld [vmem:[%s2 + $0x12c] sm:$0xf]
      %v6114 = vld [vmem:[%s2 + $0x130] sm:$0xf]
      %v6115 = vld [vmem:[%s2 + $0x134] sm:$0xf]
      %v6116 = vld [vmem:[%s2 + $0x138] sm:$0xf]
      %v6117 = vld [vmem:[%s2 + $0x13c] sm:$0xf]
      %v6118 = vld [vmem:[%s2 + $0x140] sm:$0xf]
      %v6119 = vld [vmem:[%s2 + $0x144] sm:$0xf]
      %v6120 = vld [vmem:[%s2 + $0x148] sm:$0xf]
      %v6121 = vld [vmem:[%s2 + $0x14c] sm:$0xf]
      %v6122 = vld [vmem:[%s2 + $0x150] sm:$0xf]
      %v6123 = vld [vmem:[%s2 + $0x154] sm:$0xf]
      %v6124 = vld [vmem:[%s2 + $0x158] sm:$0xf]
      %v6125 = vld [vmem:[%s2 + $0x15c] sm:$0xf]
      %v6126 = vld [vmem:[%s2 + $0x160] sm:$0xf]
      %v6127 = vld [vmem:[%s2 + $0x164] sm:$0xf]
      %v6128 = vld [vmem:[%s2 + $0x168] sm:$0xf]
      %v6129 = vld [vmem:[%s2 + $0x16c] sm:$0xf]
      %v6130 = vld [vmem:[%s2 + $0x170] sm:$0xf]
      %v6131 = vld [vmem:[%s2 + $0x174] sm:$0xf]
      %v6132 = vld [vmem:[%s2 + $0x178] sm:$0xf]
      %v6133 = vld [vmem:[%s2 + $0x17c] sm:$0xf]
      %v6134 = vld [vmem:[%s2 + $0x180] sm:$0xf]
      %v6135 = vld [vmem:[%s2 + $0x184] sm:$0xf]
      %v6136 = vld [vmem:[%s2 + $0x188] sm:$0xf]
      %v6137 = vld [vmem:[%s2 + $0x18c] sm:$0xf]
      %v6138 = vld [vmem:[%s2 + $0x190] sm:$0xf]
      %v6139 = vld [vmem:[%s2 + $0x194] sm:$0xf]
      %v6140 = vld [vmem:[%s2 + $0x198] sm:$0xf]
      %v6141 = vld [vmem:[%s2 + $0x19c] sm:$0xf]
      %v6142 = vld [vmem:[%s2 + $0x1a0] sm:$0xf]
      %v6143 = vld [vmem:[%s2 + $0x1a4] sm:$0xf]
      %v6144 = vld [vmem:[%s2 + $0x1a8] sm:$0xf]
      %v6145 = vld [vmem:[%s2 + $0x1ac] sm:$0xf]
      %v6146 = vld [vmem:[%s2 + $0x1b0] sm:$0xf]
      %v6147 = vld [vmem:[%s2 + $0x1b4] sm:$0xf]
      %v6148 = vld [vmem:[%s2 + $0x1b8] sm:$0xf]
      %v6149 = vld [vmem:[%s2 + $0x1bc] sm:$0xf]
      %v6150 = vld [vmem:[%s2 + $0x1c0] sm:$0xf]
      %v6151 = vld [vmem:[%s2 + $0x1c4] sm:$0xf]
      %v6152 = vld [vmem:[%s2 + $0x1c8] sm:$0xf]
      %v6153 = vld [vmem:[%s2 + $0x1cc] sm:$0xf]
      %v6154 = vld [vmem:[%s2 + $0x1d0] sm:$0xf]
      %v6155 = vld [vmem:[%s2 + $0x1d4] sm:$0xf]
      %v6156 = vld [vmem:[%s2 + $0x1d8] sm:$0xf]
      %v6157 = vld [vmem:[%s2 + $0x1dc] sm:$0xf]
      %v6158 = vld [vmem:[%s2 + $0x1e0] sm:$0xf]
      %v6159 = vld [vmem:[%s2 + $0x1e4] sm:$0xf]
      %v6160 = vld [vmem:[%s2 + $0x1e8] sm:$0xf]
      %v6161 = vld [vmem:[%s2 + $0x1ec] sm:$0xf]
      %v6162 = vld [vmem:[%s2 + $0x1f0] sm:$0xf]
      %v6163 = vld [vmem:[%s2 + $0x1f4] sm:$0xf]
      %v6164 = vld [vmem:[%s2 + $0x1f8] sm:$0xf]
      %v6165 = vld [vmem:[%s2 + $0x1fc] sm:$0xf]
      %v6166 = vld [vmem:[%s2 + $0x200] sm:$0xf]
      %v6167 = vld [vmem:[%s2 + $0x204] sm:$0xf]
      %v6168 = vld [vmem:[%s2 + $0x208] sm:$0xf]
      %v6169 = vld [vmem:[%s2 + $0x20c] sm:$0xf]
      %v6170 = vld [vmem:[%s2 + $0x210] sm:$0xf]
      %v6171 = vld [vmem:[%s2 + $0x214] sm:$0xf]
      %v6172 = vld [vmem:[%s2 + $0x218] sm:$0xf]
      %v6173 = vld [vmem:[%s2 + $0x21c] sm:$0xf]
      %v6174 = vld [vmem:[%s2 + $0x220] sm:$0xf]
      %v6175 = vld [vmem:[%s2 + $0x224] sm:$0xf]
      %v6176 = vld [vmem:[%s2 + $0x228] sm:$0xf]
      %v6177 = vld [vmem:[%s2 + $0x22c] sm:$0xf]
      %v6178 = vld [vmem:[%s2 + $0x230] sm:$0xf]
      %v6179 = vld [vmem:[%s2 + $0x234] sm:$0xf]
      %v6180 = vld [vmem:[%s2 + $0x238] sm:$0xf]
      %v6181 = vld [vmem:[%s2 + $0x23c] sm:$0xf]
      %v6392 = vunpack.c.l.b16 %v5828
      %v6393 = vunpack.c.h.b16 %v5828
      %v6394 = vunpack.c.l.b16 %v5829
      %v6395 = vunpack.c.h.b16 %v5829
      %v6396 = vunpack.c.l.b16 %v5830
      %v6397 = vunpack.c.h.b16 %v5830
      %v6398 = vunpack.c.l.b16 %v5831
      %v6399 = vunpack.c.h.b16 %v5831
      %v6400 = vunpack.c.l.b16 %v5832
      %v6401 = vunpack.c.l.b16 %v5833
      %v6402 = vunpack.c.h.b16 %v5833
      %v6403 = vunpack.c.l.b16 %v5834
      %v6404 = vunpack.c.h.b16 %v5834
      %v6405 = vunpack.c.l.b16 %v5835
      %v6406 = vunpack.c.h.b16 %v5835
      %v6407 = vunpack.c.l.b16 %v5836
      %v6408 = vunpack.c.h.b16 %v5836
      %v6409 = vunpack.c.l.b16 %v5837
      %v6410 = vunpack.c.l.b16 %v5838
      %v6411 = vunpack.c.h.b16 %v5838
      %v6412 = vunpack.c.l.b16 %v5839
      %v6413 = vunpack.c.h.b16 %v5839
      %v6414 = vunpack.c.l.b16 %v5840
      %v6415 = vunpack.c.h.b16 %v5840
      %v6416 = vunpack.c.l.b16 %v5841
      %v6417 = vunpack.c.h.b16 %v5841
      %v6418 = vunpack.c.l.b16 %v5842
      %v6419 = vunpack.c.l.b16 %v5843
      %v6420 = vunpack.c.h.b16 %v5843
      %v6421 = vunpack.c.l.b16 %v5844
      %v6422 = vunpack.c.h.b16 %v5844
      %v6423 = vunpack.c.l.b16 %v5845
      %v6424 = vunpack.c.h.b16 %v5845
      %v6425 = vunpack.c.l.b16 %v5846
      %v6426 = vunpack.c.h.b16 %v5846
      %v6427 = vunpack.c.l.b16 %v5847
      %v6428 = vunpack.c.l.b16 %v5848
      %v6429 = vunpack.c.h.b16 %v5848
      %v6430 = vunpack.c.l.b16 %v5849
      %v6431 = vunpack.c.h.b16 %v5849
      %v6432 = vunpack.c.l.b16 %v5850
      %v6433 = vunpack.c.h.b16 %v5850
      %v6434 = vunpack.c.l.b16 %v5851
      %v6435 = vunpack.c.h.b16 %v5851
      %v6436 = vunpack.c.l.b16 %v5852
      %v6437 = vunpack.c.l.b16 %v5853
      %v6438 = vunpack.c.h.b16 %v5853
      %v6439 = vunpack.c.l.b16 %v5854
      %v6440 = vunpack.c.h.b16 %v5854
      %v6441 = vunpack.c.l.b16 %v5855
      %v6442 = vunpack.c.h.b16 %v5855
      %v6443 = vunpack.c.l.b16 %v5856
      %v6444 = vunpack.c.h.b16 %v5856
      %v6445 = vunpack.c.l.b16 %v5857
      %v6446 = vunpack.c.l.b16 %v5858
      %v6447 = vunpack.c.h.b16 %v5858
      %v6448 = vunpack.c.l.b16 %v5859
      %v6449 = vunpack.c.h.b16 %v5859
      %v6450 = vunpack.c.l.b16 %v5860
      %v6451 = vunpack.c.h.b16 %v5860
      %v6452 = vunpack.c.l.b16 %v5861
      %v6453 = vunpack.c.h.b16 %v5861
      %v6454 = vunpack.c.l.b16 %v5862
      %v6455 = vunpack.c.l.b16 %v5863
      %v6456 = vunpack.c.h.b16 %v5863
      %v6457 = vunpack.c.l.b16 %v5864
      %v6458 = vunpack.c.h.b16 %v5864
      %v6459 = vunpack.c.l.b16 %v5865
      %v6460 = vunpack.c.h.b16 %v5865
      %v6461 = vunpack.c.l.b16 %v5866
      %v6462 = vunpack.c.h.b16 %v5866
      %v6463 = vunpack.c.l.b16 %v5867
      %v6464 = vunpack.c.l.b16 %v5868
      %v6465 = vunpack.c.h.b16 %v5868
      %v6466 = vunpack.c.l.b16 %v5869
      %v6467 = vunpack.c.h.b16 %v5869
      %v6468 = vunpack.c.l.b16 %v5870
      %v6469 = vunpack.c.h.b16 %v5870
      %v6470 = vunpack.c.l.b16 %v5871
      %v6471 = vunpack.c.h.b16 %v5871
      %v6472 = vunpack.c.l.b16 %v5872
      %v6473 = vunpack.c.l.b16 %v5873
      %v6474 = vunpack.c.h.b16 %v5873
      %v6475 = vunpack.c.l.b16 %v5874
      %v6476 = vunpack.c.h.b16 %v5874
      %v6477 = vunpack.c.l.b16 %v5875
      %v6478 = vunpack.c.h.b16 %v5875
      %v6479 = vunpack.c.l.b16 %v5876
      %v6480 = vunpack.c.h.b16 %v5876
      %v6481 = vunpack.c.l.b16 %v5877
      %v6482 = vunpack.c.l.b16 %v5878
      %v6483 = vunpack.c.h.b16 %v5878
      %v6484 = vunpack.c.l.b16 %v5879
      %v6485 = vunpack.c.h.b16 %v5879
      %v6486 = vunpack.c.l.b16 %v5880
      %v6487 = vunpack.c.h.b16 %v5880
      %v6488 = vunpack.c.l.b16 %v5881
      %v6489 = vunpack.c.h.b16 %v5881
      %v6490 = vunpack.c.l.b16 %v5882
      %v6491 = vunpack.c.l.b16 %v5883
      %v6492 = vunpack.c.h.b16 %v5883
      %v6493 = vunpack.c.l.b16 %v5884
      %v6494 = vunpack.c.h.b16 %v5884
      %v6495 = vunpack.c.l.b16 %v5885
      %v6496 = vunpack.c.h.b16 %v5885
      %v6497 = vunpack.c.l.b16 %v5886
      %v6498 = vunpack.c.h.b16 %v5886
      %v6499 = vunpack.c.l.b16 %v5887
      %v6500 = vunpack.c.l.b16 %v5888
      %v6501 = vunpack.c.h.b16 %v5888
      %v6502 = vunpack.c.l.b16 %v5889
      %v6503 = vunpack.c.h.b16 %v5889
      %v6504 = vunpack.c.l.b16 %v5890
      %v6505 = vunpack.c.h.b16 %v5890
      %v6506 = vunpack.c.l.b16 %v5891
      %v6507 = vunpack.c.h.b16 %v5891
      %v6508 = vunpack.c.l.b16 %v5892
      %v6509 = vunpack.c.l.b16 %v5893
      %v6510 = vunpack.c.h.b16 %v5893
      %v6511 = vunpack.c.l.b16 %v5894
      %v6512 = vunpack.c.h.b16 %v5894
      %v6513 = vunpack.c.l.b16 %v5895
      %v6514 = vunpack.c.h.b16 %v5895
      %v6515 = vunpack.c.l.b16 %v5896
      %v6516 = vunpack.c.h.b16 %v5896
      %v6517 = vunpack.c.l.b16 %v5897
      %v6518 = vunpack.c.l.b16 %v5898
      %v6519 = vunpack.c.h.b16 %v5898
      %v6520 = vunpack.c.l.b16 %v5899
      %v6521 = vunpack.c.h.b16 %v5899
      %v6522 = vunpack.c.l.b16 %v5900
      %v6523 = vunpack.c.h.b16 %v5900
      %v6524 = vunpack.c.l.b16 %v5901
      %v6525 = vunpack.c.h.b16 %v5901
      %v6526 = vunpack.c.l.b16 %v5902
      %v6527 = vunpack.c.l.b16 %v5903
      %v6528 = vunpack.c.h.b16 %v5903
      %v6529 = vunpack.c.l.b16 %v5904
      %v6530 = vunpack.c.h.b16 %v5904
      %v6531 = vunpack.c.l.b16 %v5905
      %v6532 = vunpack.c.h.b16 %v5905
      %v6533 = vunpack.c.l.b16 %v5906
      %v6534 = vunpack.c.h.b16 %v5906
      %v6535 = vunpack.c.l.b16 %v5907
      %v6536 = vunpack.c.l.b16 %v5908
      %v6537 = vunpack.c.h.b16 %v5908
      %v6538 = vunpack.c.l.b16 %v5909
      %v6539 = vunpack.c.h.b16 %v5909
      %v6540 = vunpack.c.l.b16 %v5910
      %v6541 = vunpack.c.h.b16 %v5910
      %v6542 = vunpack.c.l.b16 %v5911
      %v6543 = vunpack.c.h.b16 %v5911
      %v6544 = vunpack.c.l.b16 %v5912
      %v6545 = vunpack.c.l.b16 %v5913
      %v6546 = vunpack.c.h.b16 %v5913
      %v6547 = vunpack.c.l.b16 %v5914
      %v6548 = vunpack.c.h.b16 %v5914
      %v6549 = vunpack.c.l.b16 %v5915
      %v6550 = vunpack.c.h.b16 %v5915
      %v6551 = vunpack.c.l.b16 %v5916
      %v6552 = vunpack.c.h.b16 %v5916
      %v6553 = vunpack.c.l.b16 %v5917
      %v6554 = vunpack.c.l.b16 %v5918
      %v6555 = vunpack.c.h.b16 %v5918
      %v6556 = vunpack.c.l.b16 %v5919
      %v6557 = vunpack.c.h.b16 %v5919
      %v6558 = vunpack.c.l.b16 %v5920
      %v6559 = vunpack.c.h.b16 %v5920
      %v6560 = vunpack.c.l.b16 %v5921
      %v6561 = vunpack.c.h.b16 %v5921
      %v6562 = vunpack.c.l.b16 %v5922
      %v6563 = vunpack.c.l.b16 %v5923
      %v6564 = vunpack.c.h.b16 %v5923
      %v6565 = vunpack.c.l.b16 %v5924
      %v6566 = vunpack.c.h.b16 %v5924
      %v6567 = vunpack.c.l.b16 %v5925
      %v6568 = vunpack.c.h.b16 %v5925
      %v6569 = vunpack.c.l.b16 %v5926
      %v6570 = vunpack.c.h.b16 %v5926
      %v6571 = vunpack.c.l.b16 %v5927
      %v6572 = vunpack.c.l.b16 %v5928
      %v6573 = vunpack.c.h.b16 %v5928
      %v6574 = vunpack.c.l.b16 %v5929
      %v6575 = vunpack.c.h.b16 %v5929
      %v6576 = vunpack.c.l.b16 %v5930
      %v6577 = vunpack.c.h.b16 %v5930
      %v6578 = vunpack.c.l.b16 %v5931
      %v6579 = vunpack.c.h.b16 %v5931
      %v6580 = vunpack.c.l.b16 %v5932
      %v6581 = vunpack.c.l.b16 %v5933
      %v6582 = vunpack.c.h.b16 %v5933
      %v6583 = vunpack.c.l.b16 %v5934
      %v6584 = vunpack.c.h.b16 %v5934
      %v6585 = vunpack.c.l.b16 %v5935
      %v6586 = vunpack.c.h.b16 %v5935
      %v6587 = vunpack.c.l.b16 %v5936
      %v6588 = vunpack.c.h.b16 %v5936
      %v6589 = vunpack.c.l.b16 %v5937
      %v6590 = vunpack.c.l.b16 %v5938
      %v6591 = vunpack.c.h.b16 %v5938
      %v6592 = vunpack.c.l.b16 %v5939
      %v6593 = vunpack.c.h.b16 %v5939
      %v6594 = vunpack.c.l.b16 %v5940
      %v6595 = vunpack.c.h.b16 %v5940
      %v6596 = vunpack.c.l.b16 %v5941
      %v6597 = vunpack.c.h.b16 %v5941
      %v6598 = vunpack.c.l.b16 %v5942
      %v6599 = vunpack.c.l.b16 %v5943
      %v6600 = vunpack.c.h.b16 %v5943
      %v6601 = vunpack.c.l.b16 %v5944
      %v6602 = vunpack.c.h.b16 %v5944
      %v6603 = vunpack.c.l.b16 %v5945
      %v6604 = vunpack.c.h.b16 %v5945
      %v6605 = vunpack.c.l.b16 %v5946
      %v6606 = vunpack.c.h.b16 %v5946
      %v6607 = vunpack.c.l.b16 %v5947
      %v6608 = vunpack.c.l.b16 %v5948
      %v6609 = vunpack.c.h.b16 %v5948
      %v6610 = vunpack.c.l.b16 %v5949
      %v6611 = vunpack.c.h.b16 %v5949
      %v6612 = vunpack.c.l.b16 %v5950
      %v6613 = vunpack.c.h.b16 %v5950
      %v6614 = vunpack.c.l.b16 %v5951
      %v6615 = vunpack.c.h.b16 %v5951
      %v6616 = vunpack.c.l.b16 %v5952
      %v6617 = vunpack.c.l.b16 %v5953
      %v6618 = vunpack.c.h.b16 %v5953
      %v6619 = vunpack.c.l.b16 %v5954
      %v6620 = vunpack.c.h.b16 %v5954
      %v6621 = vunpack.c.l.b16 %v5955
      %v6622 = vunpack.c.h.b16 %v5955
      %v6623 = vunpack.c.l.b16 %v5956
      %v6624 = vunpack.c.h.b16 %v5956
      %v6625 = vunpack.c.l.b16 %v5957
      %v6626 = vunpack.c.l.b16 %v5958
      %v6627 = vunpack.c.h.b16 %v5958
      %v6628 = vunpack.c.l.b16 %v5959
      %v6629 = vunpack.c.h.b16 %v5959
      %v6630 = vunpack.c.l.b16 %v5960
      %v6631 = vunpack.c.h.b16 %v5960
      %v6632 = vunpack.c.l.b16 %v5961
      %v6633 = vunpack.c.h.b16 %v5961
      %v6634 = vunpack.c.l.b16 %v5962
      %v6635 = vunpack.c.l.b16 %v5963
      %v6636 = vunpack.c.h.b16 %v5963
      %v6637 = vunpack.c.l.b16 %v5964
      %v6638 = vunpack.c.h.b16 %v5964
      %v6639 = vunpack.c.l.b16 %v5965
      %v6640 = vunpack.c.h.b16 %v5965
      %v6641 = vunpack.c.l.b16 %v5966
      %v6642 = vunpack.c.h.b16 %v5966
      %v6643 = vunpack.c.l.b16 %v5967
      %v6644 = vunpack.c.l.b16 %v5968
      %v6645 = vunpack.c.h.b16 %v5968
      %v6646 = vunpack.c.l.b16 %v5969
      %v6647 = vunpack.c.h.b16 %v5969
      %v6648 = vunpack.c.l.b16 %v5970
      %v6649 = vunpack.c.h.b16 %v5970
      %v6650 = vunpack.c.l.b16 %v5971
      %v6651 = vunpack.c.h.b16 %v5971
      %v6652 = vunpack.c.l.b16 %v5972
      %v6653 = vunpack.c.l.b16 %v5973
      %v6654 = vunpack.c.h.b16 %v5973
      %v6655 = vunpack.c.l.b16 %v5974
      %v6656 = vunpack.c.h.b16 %v5974
      %v6657 = vunpack.c.l.b16 %v5975
      %v6658 = vunpack.c.h.b16 %v5975
      %v6659 = vunpack.c.l.b16 %v5976
      %v6660 = vunpack.c.h.b16 %v5976
      %v6661 = vunpack.c.l.b16 %v5977
      %v6662 = vunpack.c.l.b16 %v5978
      %v6663 = vunpack.c.h.b16 %v5978
      %v6664 = vunpack.c.l.b16 %v5979
      %v6665 = vunpack.c.h.b16 %v5979
      %v6666 = vunpack.c.l.b16 %v5980
      %v6667 = vunpack.c.h.b16 %v5980
      %v6668 = vunpack.c.l.b16 %v5981
      %v6669 = vunpack.c.h.b16 %v5981
      %v6670 = vunpack.c.l.b16 %v5982
      %v6671 = vunpack.c.l.b16 %v5983
      %v6672 = vunpack.c.h.b16 %v5983
      %v6673 = vunpack.c.l.b16 %v5984
      %v6674 = vunpack.c.h.b16 %v5984
      %v6675 = vunpack.c.l.b16 %v5985
      %v6676 = vunpack.c.h.b16 %v5985
      %v6677 = vunpack.c.l.b16 %v5986
      %v6678 = vunpack.c.h.b16 %v5986
      %v6679 = vunpack.c.l.b16 %v5987
      %v6680 = vunpack.c.l.b16 %v5988
      %v6681 = vunpack.c.h.b16 %v5988
      %v6682 = vunpack.c.l.b16 %v5989
      %v6683 = vunpack.c.h.b16 %v5989
      %v6684 = vunpack.c.l.b16 %v5990
      %v6685 = vunpack.c.h.b16 %v5990
      %v6686 = vunpack.c.l.b16 %v5991
      %v6687 = vunpack.c.h.b16 %v5991
      %v6688 = vunpack.c.l.b16 %v5992
      %v6689 = vunpack.c.l.b16 %v5993
      %v6690 = vunpack.c.h.b16 %v5993
      %v6691 = vunpack.c.l.b16 %v5994
      %v6692 = vunpack.c.h.b16 %v5994
      %v6693 = vunpack.c.l.b16 %v5995
      %v6694 = vunpack.c.h.b16 %v5995
      %v6695 = vunpack.c.l.b16 %v5996
      %v6696 = vunpack.c.h.b16 %v5996
      %v6697 = vunpack.c.l.b16 %v5997
      %v6698 = vunpack.c.l.b16 %v5998
      %v6699 = vunpack.c.h.b16 %v5998
      %v6700 = vunpack.c.l.b16 %v5999
      %v6701 = vunpack.c.h.b16 %v5999
      %v6702 = vunpack.c.l.b16 %v6000
      %v6703 = vunpack.c.h.b16 %v6000
      %v6704 = vunpack.c.l.b16 %v6001
      %v6705 = vunpack.c.h.b16 %v6001
      %v6706 = vunpack.c.l.b16 %v6002
      %v6707 = vunpack.c.l.b16 %v6003
      %v6708 = vunpack.c.h.b16 %v6003
      %v6709 = vunpack.c.l.b16 %v6004
      %v6710 = vunpack.c.h.b16 %v6004
      %v6711 = vunpack.c.l.b16 %v6005
      %v6712 = vunpack.c.h.b16 %v6005
      %v6713 = vunpack.c.l.b16 %v6006
      %v6714 = vunpack.c.h.b16 %v6006
      %v6715 = vunpack.c.l.b16 %v6007
      %v6716 = vunpack.c.l.b16 %v6008
      %v6717 = vunpack.c.h.b16 %v6008
      %v6718 = vunpack.c.l.b16 %v6009
      %v6719 = vunpack.c.h.b16 %v6009
      %v6720 = vunpack.c.l.b16 %v6010
      %v6721 = vunpack.c.h.b16 %v6010
      %v6722 = vunpack.c.l.b16 %v6011
      %v6723 = vunpack.c.h.b16 %v6011
      %v6724 = vunpack.c.l.b16 %v6012
      %v6725 = vunpack.c.l.b16 %v6013
      %v6726 = vunpack.c.h.b16 %v6013
      %v6727 = vunpack.c.l.b16 %v6014
      %v6728 = vunpack.c.h.b16 %v6014
      %v6729 = vunpack.c.l.b16 %v6015
      %v6730 = vunpack.c.h.b16 %v6015
      %v6731 = vunpack.c.l.b16 %v6016
      %v6732 = vunpack.c.h.b16 %v6016
      %v6733 = vunpack.c.l.b16 %v6017
      %v6734 = vunpack.c.l.b16 %v6018
      %v6735 = vunpack.c.h.b16 %v6018
      %v6736 = vunpack.c.l.b16 %v6019
      %v6737 = vunpack.c.h.b16 %v6019
      %v6738 = vunpack.c.l.b16 %v6020
      %v6739 = vunpack.c.h.b16 %v6020
      %v6740 = vunpack.c.l.b16 %v6021
      %v6741 = vunpack.c.h.b16 %v6021
      %v6742 = vunpack.c.l.b16 %v6022
      %v6743 = vunpack.c.l.b16 %v6023
      %v6744 = vunpack.c.h.b16 %v6023
      %v6745 = vunpack.c.l.b16 %v6024
      %v6746 = vunpack.c.h.b16 %v6024
      %v6747 = vunpack.c.l.b16 %v6025
      %v6748 = vunpack.c.h.b16 %v6025
      %v6749 = vunpack.c.l.b16 %v6026
      %v6750 = vunpack.c.h.b16 %v6026
      %v6751 = vunpack.c.l.b16 %v6027
      %v6752 = vunpack.c.l.b16 %v6028
      %v6753 = vunpack.c.h.b16 %v6028
      %v6754 = vunpack.c.l.b16 %v6029
      %v6755 = vunpack.c.h.b16 %v6029
      %v6756 = vunpack.c.l.b16 %v6030
      %v6757 = vunpack.c.h.b16 %v6030
      %v6758 = vunpack.c.l.b16 %v6031
      %v6759 = vunpack.c.h.b16 %v6031
      %v6760 = vunpack.c.l.b16 %v6032
      %v6761 = vunpack.c.l.b16 %v6033
      %v6762 = vunpack.c.h.b16 %v6033
      %v6763 = vunpack.c.l.b16 %v6034
      %v6764 = vunpack.c.h.b16 %v6034
      %v6765 = vunpack.c.l.b16 %v6035
      %v6766 = vunpack.c.h.b16 %v6035
      %v6767 = vunpack.c.l.b16 %v6036
      %v6768 = vunpack.c.h.b16 %v6036
      %v6769 = vunpack.c.l.b16 %v6037
      %v6770 = vpack.c.b16 %v6401, %v6392
      %v6771 = vpack.c.b16 %v6402, %v6393
      %v6772 = vpack.c.b16 %v6403, %v6394
      %v6773 = vpack.c.b16 %v6404, %v6395
      %v6774 = vpack.c.b16 %v6405, %v6396
      %v6775 = vpack.c.b16 %v6406, %v6397
      %v6776 = vpack.c.b16 %v6407, %v6398
      %v6777 = vpack.c.b16 %v6408, %v6399
      %v6778 = vpack.c.b16 %v6409, %v6400
      %v6779 = vpack.c.b16 %v6419, %v6410
      %v6780 = vpack.c.b16 %v6420, %v6411
      %v6781 = vpack.c.b16 %v6421, %v6412
      %v6782 = vpack.c.b16 %v6422, %v6413
      %v6783 = vpack.c.b16 %v6423, %v6414
      %v6784 = vpack.c.b16 %v6424, %v6415
      %v6785 = vpack.c.b16 %v6425, %v6416
      %v6786 = vpack.c.b16 %v6426, %v6417
      %v6787 = vpack.c.b16 %v6427, %v6418
      %v6788 = vpack.c.b16 %v6437, %v6428
      %v6789 = vpack.c.b16 %v6438, %v6429
      %v6790 = vpack.c.b16 %v6439, %v6430
      %v6791 = vpack.c.b16 %v6440, %v6431
      %v6792 = vpack.c.b16 %v6441, %v6432
      %v6793 = vpack.c.b16 %v6442, %v6433
      %v6794 = vpack.c.b16 %v6443, %v6434
      %v6795 = vpack.c.b16 %v6444, %v6435
      %v6796 = vpack.c.b16 %v6445, %v6436
      %v6797 = vpack.c.b16 %v6455, %v6446
      %v6798 = vpack.c.b16 %v6456, %v6447
      %v6799 = vpack.c.b16 %v6457, %v6448
      %v6800 = vpack.c.b16 %v6458, %v6449
      %v6801 = vpack.c.b16 %v6459, %v6450
      %v6802 = vpack.c.b16 %v6460, %v6451
      %v6803 = vpack.c.b16 %v6461, %v6452
      %v6804 = vpack.c.b16 %v6462, %v6453
      %v6805 = vpack.c.b16 %v6463, %v6454
      %v6806 = vpack.c.b16 %v6473, %v6464
      %v6807 = vpack.c.b16 %v6474, %v6465
      %v6808 = vpack.c.b16 %v6475, %v6466
      %v6809 = vpack.c.b16 %v6476, %v6467
      %v6810 = vpack.c.b16 %v6477, %v6468
      %v6811 = vpack.c.b16 %v6478, %v6469
      %v6812 = vpack.c.b16 %v6479, %v6470
      %v6813 = vpack.c.b16 %v6480, %v6471
      %v6814 = vpack.c.b16 %v6481, %v6472
      %v6815 = vpack.c.b16 %v6491, %v6482
      %v6816 = vpack.c.b16 %v6492, %v6483
      %v6817 = vpack.c.b16 %v6493, %v6484
      %v6818 = vpack.c.b16 %v6494, %v6485
      %v6819 = vpack.c.b16 %v6495, %v6486
      %v6820 = vpack.c.b16 %v6496, %v6487
      %v6821 = vpack.c.b16 %v6497, %v6488
      %v6822 = vpack.c.b16 %v6498, %v6489
      %v6823 = vpack.c.b16 %v6499, %v6490
      %v6824 = vpack.c.b16 %v6509, %v6500
      %v6825 = vpack.c.b16 %v6510, %v6501
      %v6826 = vpack.c.b16 %v6511, %v6502
      %v6827 = vpack.c.b16 %v6512, %v6503
      %v6828 = vpack.c.b16 %v6513, %v6504
      %v6829 = vpack.c.b16 %v6514, %v6505
      %v6830 = vpack.c.b16 %v6515, %v6506
      %v6831 = vpack.c.b16 %v6516, %v6507
      %v6832 = vpack.c.b16 %v6517, %v6508
      %v6833 = vpack.c.b16 %v6527, %v6518
      %v6834 = vpack.c.b16 %v6528, %v6519
      %v6835 = vpack.c.b16 %v6529, %v6520
      %v6836 = vpack.c.b16 %v6530, %v6521
      %v6837 = vpack.c.b16 %v6531, %v6522
      %v6838 = vpack.c.b16 %v6532, %v6523
      %v6839 = vpack.c.b16 %v6533, %v6524
      %v6840 = vpack.c.b16 %v6534, %v6525
      %v6841 = vpack.c.b16 %v6535, %v6526
      %v6842 = vpack.c.b16 %v6545, %v6536
      %v6843 = vpack.c.b16 %v6546, %v6537
      %v6844 = vpack.c.b16 %v6547, %v6538
      %v6845 = vpack.c.b16 %v6548, %v6539
      %v6846 = vpack.c.b16 %v6549, %v6540
      %v6847 = vpack.c.b16 %v6550, %v6541
      %v6848 = vpack.c.b16 %v6551, %v6542
      %v6849 = vpack.c.b16 %v6552, %v6543
      %v6850 = vpack.c.b16 %v6553, %v6544
      %v6851 = vpack.c.b16 %v6563, %v6554
      %v6852 = vpack.c.b16 %v6564, %v6555
      %v6853 = vpack.c.b16 %v6565, %v6556
      %v6854 = vpack.c.b16 %v6566, %v6557
      %v6855 = vpack.c.b16 %v6567, %v6558
      %v6856 = vpack.c.b16 %v6568, %v6559
      %v6857 = vpack.c.b16 %v6569, %v6560
      %v6858 = vpack.c.b16 %v6570, %v6561
      %v6859 = vpack.c.b16 %v6571, %v6562
      %v6860 = vpack.c.b16 %v6581, %v6572
      %v6861 = vpack.c.b16 %v6582, %v6573
      %v6862 = vpack.c.b16 %v6583, %v6574
      %v6863 = vpack.c.b16 %v6584, %v6575
      %v6864 = vpack.c.b16 %v6585, %v6576
      %v6865 = vpack.c.b16 %v6586, %v6577
      %v6866 = vpack.c.b16 %v6587, %v6578
      %v6867 = vpack.c.b16 %v6588, %v6579
      %v6868 = vpack.c.b16 %v6589, %v6580
      %v6869 = vpack.c.b16 %v6599, %v6590
      %v6870 = vpack.c.b16 %v6600, %v6591
      %v6871 = vpack.c.b16 %v6601, %v6592
      %v6872 = vpack.c.b16 %v6602, %v6593
      %v6873 = vpack.c.b16 %v6603, %v6594
      %v6874 = vpack.c.b16 %v6604, %v6595
      %v6875 = vpack.c.b16 %v6605, %v6596
      %v6876 = vpack.c.b16 %v6606, %v6597
      %v6877 = vpack.c.b16 %v6607, %v6598
      %v6878 = vpack.c.b16 %v6617, %v6608
      %v6879 = vpack.c.b16 %v6618, %v6609
      %v6880 = vpack.c.b16 %v6619, %v6610
      %v6881 = vpack.c.b16 %v6620, %v6611
      %v6882 = vpack.c.b16 %v6621, %v6612
      %v6883 = vpack.c.b16 %v6622, %v6613
      %v6884 = vpack.c.b16 %v6623, %v6614
      %v6885 = vpack.c.b16 %v6624, %v6615
      %v6886 = vpack.c.b16 %v6625, %v6616
      %v6887 = vpack.c.b16 %v6635, %v6626
      %v6888 = vpack.c.b16 %v6636, %v6627
      %v6889 = vpack.c.b16 %v6637, %v6628
      %v6890 = vpack.c.b16 %v6638, %v6629
      %v6891 = vpack.c.b16 %v6639, %v6630
      %v6892 = vpack.c.b16 %v6640, %v6631
      %v6893 = vpack.c.b16 %v6641, %v6632
      %v6894 = vpack.c.b16 %v6642, %v6633
      %v6895 = vpack.c.b16 %v6643, %v6634
      %v6896 = vpack.c.b16 %v6653, %v6644
      %v6897 = vpack.c.b16 %v6654, %v6645
      %v6898 = vpack.c.b16 %v6655, %v6646
      %v6899 = vpack.c.b16 %v6656, %v6647
      %v6900 = vpack.c.b16 %v6657, %v6648
      %v6901 = vpack.c.b16 %v6658, %v6649
      %v6902 = vpack.c.b16 %v6659, %v6650
      %v6903 = vpack.c.b16 %v6660, %v6651
      %v6904 = vpack.c.b16 %v6661, %v6652
      %v6905 = vpack.c.b16 %v6671, %v6662
      %v6906 = vpack.c.b16 %v6672, %v6663
      %v6907 = vpack.c.b16 %v6673, %v6664
      %v6908 = vpack.c.b16 %v6674, %v6665
      %v6909 = vpack.c.b16 %v6675, %v6666
      %v6910 = vpack.c.b16 %v6676, %v6667
      %v6911 = vpack.c.b16 %v6677, %v6668
      %v6912 = vpack.c.b16 %v6678, %v6669
      %v6913 = vpack.c.b16 %v6679, %v6670
      %v6914 = vpack.c.b16 %v6689, %v6680
      %v6915 = vpack.c.b16 %v6690, %v6681
      %v6916 = vpack.c.b16 %v6691, %v6682
      %v6917 = vpack.c.b16 %v6692, %v6683
      %v6918 = vpack.c.b16 %v6693, %v6684
      %v6919 = vpack.c.b16 %v6694, %v6685
      %v6920 = vpack.c.b16 %v6695, %v6686
      %v6921 = vpack.c.b16 %v6696, %v6687
      %v6922 = vpack.c.b16 %v6697, %v6688
      %v6923 = vpack.c.b16 %v6707, %v6698
      %v6924 = vpack.c.b16 %v6708, %v6699
      %v6925 = vpack.c.b16 %v6709, %v6700
      %v6926 = vpack.c.b16 %v6710, %v6701
      %v6927 = vpack.c.b16 %v6711, %v6702
      %v6928 = vpack.c.b16 %v6712, %v6703
      %v6929 = vpack.c.b16 %v6713, %v6704
      %v6930 = vpack.c.b16 %v6714, %v6705
      %v6931 = vpack.c.b16 %v6715, %v6706
      %v6932 = vpack.c.b16 %v6725, %v6716
      %v6933 = vpack.c.b16 %v6726, %v6717
      %v6934 = vpack.c.b16 %v6727, %v6718
      %v6935 = vpack.c.b16 %v6728, %v6719
      %v6936 = vpack.c.b16 %v6729, %v6720
      %v6937 = vpack.c.b16 %v6730, %v6721
      %v6938 = vpack.c.b16 %v6731, %v6722
      %v6939 = vpack.c.b16 %v6732, %v6723
      %v6940 = vpack.c.b16 %v6733, %v6724
      %v6941 = vpack.c.b16 %v6743, %v6734
      %v6942 = vpack.c.b16 %v6744, %v6735
      %v6943 = vpack.c.b16 %v6745, %v6736
      %v6944 = vpack.c.b16 %v6746, %v6737
      %v6945 = vpack.c.b16 %v6747, %v6738
      %v6946 = vpack.c.b16 %v6748, %v6739
      %v6947 = vpack.c.b16 %v6749, %v6740
      %v6948 = vpack.c.b16 %v6750, %v6741
      %v6949 = vpack.c.b16 %v6751, %v6742
      %v6950 = vpack.c.b16 %v6761, %v6752
      %v6951 = vpack.c.b16 %v6762, %v6753
      %v6952 = vpack.c.b16 %v6763, %v6754
      %v6953 = vpack.c.b16 %v6764, %v6755
      %v6954 = vpack.c.b16 %v6765, %v6756
      %v6955 = vpack.c.b16 %v6766, %v6757
      %v6956 = vpack.c.b16 %v6767, %v6758
      %v6957 = vpack.c.b16 %v6768, %v6759
      %v6958 = vpack.c.b16 %v6769, %v6760
      %v7292 = vunpack.c.l.b16 %v6038
      %v7293 = vunpack.c.l.b16 %v6039
      %v7294 = vunpack.c.l.b16 %v6040
      %v7295 = vunpack.c.l.b16 %v6041
      %v7296 = vunpack.c.l.b16 %v6042
      %v7297 = vunpack.c.l.b16 %v6043
      %v7298 = vunpack.c.l.b16 %v6044
      %v7299 = vunpack.c.l.b16 %v6045
      %v7300 = vunpack.c.l.b16 %v6046
      %v7301 = vunpack.c.l.b16 %v6047
      %v7302 = vunpack.c.l.b16 %v6048
      %v7303 = vunpack.c.l.b16 %v6049
      %v7304 = vunpack.c.l.b16 %v6050
      %v7305 = vunpack.c.l.b16 %v6051
      %v7306 = vunpack.c.l.b16 %v6052
      %v7307 = vunpack.c.l.b16 %v6053
      %v7308 = vunpack.c.l.b16 %v6054
      %v7309 = vunpack.c.l.b16 %v6055
      %v7310 = vunpack.c.l.b16 %v6056
      %v7311 = vunpack.c.l.b16 %v6057
      %v7312 = vunpack.c.l.b16 %v6058
      %v7313 = vunpack.c.l.b16 %v6059
      %v7314 = vunpack.c.l.b16 %v6060
      %v7315 = vunpack.c.l.b16 %v6061
      %v7316 = vunpack.c.l.b16 %v6062
      %v7317 = vunpack.c.l.b16 %v6063
      %v7318 = vunpack.c.l.b16 %v6064
      %v7319 = vunpack.c.l.b16 %v6065
      %v7320 = vunpack.c.l.b16 %v6066
      %v7321 = vunpack.c.l.b16 %v6067
      %v7322 = vunpack.c.l.b16 %v6068
      %v7323 = vunpack.c.l.b16 %v6069
      %v7324 = vunpack.c.l.b16 %v6070
      %v7325 = vunpack.c.l.b16 %v6071
      %v7326 = vunpack.c.l.b16 %v6072
      %v7327 = vunpack.c.l.b16 %v6073
      %v7328 = vunpack.c.l.b16 %v6074
      %v7329 = vunpack.c.l.b16 %v6075
      %v7330 = vunpack.c.l.b16 %v6076
      %v7331 = vunpack.c.l.b16 %v6077
      %v7332 = vunpack.c.l.b16 %v6078
      %v7333 = vunpack.c.l.b16 %v6079
      %v7334 = vunpack.c.l.b16 %v6080
      %v7335 = vunpack.c.l.b16 %v6081
      %v7336 = vunpack.c.l.b16 %v6082
      %v7337 = vunpack.c.l.b16 %v6083
      %v7338 = vunpack.c.l.b16 %v6084
      %v7339 = vunpack.c.l.b16 %v6085
      %v7340 = vunpack.c.l.b16 %v6086
      %v7341 = vunpack.c.l.b16 %v6087
      %v7342 = vunpack.c.l.b16 %v6088
      %v7343 = vunpack.c.l.b16 %v6089
      %v7344 = vunpack.c.l.b16 %v6090
      %v7345 = vunpack.c.l.b16 %v6091
      %v7346 = vunpack.c.l.b16 %v6092
      %v7347 = vunpack.c.l.b16 %v6093
      %v7348 = vunpack.c.l.b16 %v6094
      %v7349 = vunpack.c.l.b16 %v6095
      %v7350 = vunpack.c.l.b16 %v6096
      %v7351 = vunpack.c.l.b16 %v6097
      %v7352 = vunpack.c.l.b16 %v6098
      %v7353 = vunpack.c.l.b16 %v6099
      %v7354 = vunpack.c.l.b16 %v6100
      %v7355 = vunpack.c.l.b16 %v6101
      %v7356 = vunpack.c.l.b16 %v6102
      %v7357 = vunpack.c.l.b16 %v6103
      %v7358 = vunpack.c.l.b16 %v6104
      %v7359 = vunpack.c.l.b16 %v6105
      %v7360 = vunpack.c.l.b16 %v6106
      %v7361 = vunpack.c.l.b16 %v6107
      %v7362 = vunpack.c.l.b16 %v6108
      %v7363 = vunpack.c.l.b16 %v6109
      %v7364 = vunpack.c.l.b16 %v6110
      %v7365 = vunpack.c.l.b16 %v6111
      %v7366 = vunpack.c.l.b16 %v6112
      %v7367 = vunpack.c.l.b16 %v6113
      %v7368 = vunpack.c.l.b16 %v6114
      %v7369 = vunpack.c.l.b16 %v6115
      %v7370 = vunpack.c.l.b16 %v6116
      %v7371 = vunpack.c.l.b16 %v6117
      %v7372 = vunpack.c.l.b16 %v6118
      %v7373 = vunpack.c.l.b16 %v6119
      %v7374 = vunpack.c.l.b16 %v6120
      %v7375 = vunpack.c.l.b16 %v6121
      %v7376 = vunpack.c.l.b16 %v6122
      %v7377 = vunpack.c.l.b16 %v6123
      %v7378 = vunpack.c.l.b16 %v6124
      %v7379 = vunpack.c.l.b16 %v6125
      %v7380 = vunpack.c.l.b16 %v6126
      %v7381 = vunpack.c.l.b16 %v6127
      %v7382 = vunpack.c.l.b16 %v6128
      %v7383 = vunpack.c.l.b16 %v6129
      %v7384 = vunpack.c.l.b16 %v6130
      %v7385 = vunpack.c.l.b16 %v6131
      %v7386 = vunpack.c.l.b16 %v6132
      %v7387 = vunpack.c.l.b16 %v6133
      %v7388 = vunpack.c.l.b16 %v6134
      %v7389 = vunpack.c.l.b16 %v6135
      %v7390 = vunpack.c.l.b16 %v6136
      %v7391 = vunpack.c.l.b16 %v6137
      %v7392 = vunpack.c.l.b16 %v6138
      %v7393 = vunpack.c.l.b16 %v6139
      %v7394 = vunpack.c.l.b16 %v6140
      %v7395 = vunpack.c.l.b16 %v6141
      %v7396 = vunpack.c.l.b16 %v6142
      %v7397 = vunpack.c.l.b16 %v6143
      %v7398 = vunpack.c.l.b16 %v6144
      %v7399 = vunpack.c.l.b16 %v6145
      %v7400 = vunpack.c.l.b16 %v6146
      %v7401 = vunpack.c.l.b16 %v6147
      %v7402 = vunpack.c.l.b16 %v6148
      %v7403 = vunpack.c.l.b16 %v6149
      %v7404 = vunpack.c.l.b16 %v6150
      %v7405 = vunpack.c.l.b16 %v6151
      %v7406 = vunpack.c.l.b16 %v6152
      %v7407 = vunpack.c.l.b16 %v6153
      %v7408 = vunpack.c.l.b16 %v6154
      %v7409 = vunpack.c.l.b16 %v6155
      %v7410 = vunpack.c.l.b16 %v6156
      %v7411 = vunpack.c.l.b16 %v6157
      %v7412 = vunpack.c.l.b16 %v6158
      %v7413 = vunpack.c.l.b16 %v6159
      %v7414 = vunpack.c.l.b16 %v6160
      %v7415 = vunpack.c.l.b16 %v6161
      %v7416 = vunpack.c.l.b16 %v6162
      %v7417 = vunpack.c.l.b16 %v6163
      %v7418 = vunpack.c.l.b16 %v6164
      %v7419 = vunpack.c.l.b16 %v6165
      %v7420 = vunpack.c.l.b16 %v6166
      %v7421 = vunpack.c.l.b16 %v6167
      %v7422 = vunpack.c.l.b16 %v6168
      %v7423 = vunpack.c.l.b16 %v6169
      %v7424 = vunpack.c.l.b16 %v6170
      %v7425 = vunpack.c.l.b16 %v6171
      %v7426 = vunpack.c.l.b16 %v6172
      %v7427 = vunpack.c.l.b16 %v6173
      %v7428 = vunpack.c.l.b16 %v6174
      %v7429 = vunpack.c.l.b16 %v6175
      %v7430 = vunpack.c.l.b16 %v6176
      %v7431 = vunpack.c.l.b16 %v6177
      %v7432 = vunpack.c.l.b16 %v6178
      %v7433 = vunpack.c.l.b16 %v6179
      %v7434 = vunpack.c.l.b16 %v6180
      %v7435 = vunpack.c.l.b16 %v6181
      %v7436 = vpack.c.b16 %v7293, %v7292
      %v7437 = vpack.c.b16 %v7295, %v7294
      %v7438 = vpack.c.b16 %v7297, %v7296
      %v7439 = vpack.c.b16 %v7299, %v7298
      %v7440 = vpack.c.b16 %v7301, %v7300
      %v7441 = vpack.c.b16 %v7303, %v7302
      %v7442 = vpack.c.b16 %v7305, %v7304
      %v7443 = vpack.c.b16 %v7307, %v7306
      %v7444 = vpack.c.b16 %v7309, %v7308
      %v7445 = vpack.c.b16 %v7311, %v7310
      %v7446 = vpack.c.b16 %v7313, %v7312
      %v7447 = vpack.c.b16 %v7315, %v7314
      %v7448 = vpack.c.b16 %v7317, %v7316
      %v7449 = vpack.c.b16 %v7319, %v7318
      %v7450 = vpack.c.b16 %v7321, %v7320
      %v7451 = vpack.c.b16 %v7323, %v7322
      %v7452 = vpack.c.b16 %v7325, %v7324
      %v7453 = vpack.c.b16 %v7327, %v7326
      %v7454 = vpack.c.b16 %v7329, %v7328
      %v7455 = vpack.c.b16 %v7331, %v7330
      %v7456 = vpack.c.b16 %v7333, %v7332
      %v7457 = vpack.c.b16 %v7335, %v7334
      %v7458 = vpack.c.b16 %v7337, %v7336
      %v7459 = vpack.c.b16 %v7339, %v7338
      %v7460 = vpack.c.b16 %v7341, %v7340
      %v7461 = vpack.c.b16 %v7343, %v7342
      %v7462 = vpack.c.b16 %v7345, %v7344
      %v7463 = vpack.c.b16 %v7347, %v7346
      %v7464 = vpack.c.b16 %v7349, %v7348
      %v7465 = vpack.c.b16 %v7351, %v7350
      %v7466 = vpack.c.b16 %v7353, %v7352
      %v7467 = vpack.c.b16 %v7355, %v7354
      %v7468 = vpack.c.b16 %v7357, %v7356
      %v7469 = vpack.c.b16 %v7359, %v7358
      %v7470 = vpack.c.b16 %v7361, %v7360
      %v7471 = vpack.c.b16 %v7363, %v7362
      %v7472 = vpack.c.b16 %v7365, %v7364
      %v7473 = vpack.c.b16 %v7367, %v7366
      %v7474 = vpack.c.b16 %v7369, %v7368
      %v7475 = vpack.c.b16 %v7371, %v7370
      %v7476 = vpack.c.b16 %v7373, %v7372
      %v7477 = vpack.c.b16 %v7375, %v7374
      %v7478 = vpack.c.b16 %v7377, %v7376
      %v7479 = vpack.c.b16 %v7379, %v7378
      %v7480 = vpack.c.b16 %v7381, %v7380
      %v7481 = vpack.c.b16 %v7383, %v7382
      %v7482 = vpack.c.b16 %v7385, %v7384
      %v7483 = vpack.c.b16 %v7387, %v7386
      %v7484 = vpack.c.b16 %v7389, %v7388
      %v7485 = vpack.c.b16 %v7391, %v7390
      %v7486 = vpack.c.b16 %v7393, %v7392
      %v7487 = vpack.c.b16 %v7395, %v7394
      %v7488 = vpack.c.b16 %v7397, %v7396
      %v7489 = vpack.c.b16 %v7399, %v7398
      %v7490 = vpack.c.b16 %v7401, %v7400
      %v7491 = vpack.c.b16 %v7403, %v7402
      %v7492 = vpack.c.b16 %v7405, %v7404
      %v7493 = vpack.c.b16 %v7407, %v7406
      %v7494 = vpack.c.b16 %v7409, %v7408
      %v7495 = vpack.c.b16 %v7411, %v7410
      %v7496 = vpack.c.b16 %v7413, %v7412
      %v7497 = vpack.c.b16 %v7415, %v7414
      %v7498 = vpack.c.b16 %v7417, %v7416
      %v7499 = vpack.c.b16 %v7419, %v7418
      %v7500 = vpack.c.b16 %v7421, %v7420
      %v7501 = vpack.c.b16 %v7423, %v7422
      %v7502 = vpack.c.b16 %v7425, %v7424
      %v7503 = vpack.c.b16 %v7427, %v7426
      %v7504 = vpack.c.b16 %v7429, %v7428
      %v7505 = vpack.c.b16 %v7431, %v7430
      %v7506 = vpack.c.b16 %v7433, %v7432
      %v7507 = vpack.c.b16 %v7435, %v7434
      %7580 = vmatpush.bf16.msra.mxu0 %v7443
      %7581 = vmatpush.bf16.msra.mxu0 %v7442
      %7582 = vmatpush.bf16.msra.mxu0 %v7441
      %7583 = vmatpush.bf16.msra.mxu0 %v7440
      %7584 = vmatpush.bf16.msra.mxu0 %v7439
      %7585 = vmatpush.bf16.msra.mxu0 %v7438
      %7586 = vmatpush.bf16.msra.mxu0 %v7437
      %7587 = vmatpush.bf16.msra.mxu0 %v7436
      %7588 = vmatmul.bf16.gmra.mxu0 %v6770
      %v7589 = vpop.f32.mrf.mxu0
      %v7590 = vadd.f32 0.0, %v7589
      %v7591 = vpop.f32.mrf.mxu0
      %v7592 = vadd.f32 0.0, %v7591
      %7593 = vmatmul.bf16.gmra.mxu0 %v6779
      %v7594 = vpop.f32.mrf.mxu0
      %v7595 = vadd.f32 0.0, %v7594
      %v7596 = vpop.f32.mrf.mxu0
      %v7597 = vadd.f32 0.0, %v7596
      %7598 = vmatmul.bf16.gmra.mxu0 %v6788
      %v7599 = vpop.f32.mrf.mxu0
      %v7600 = vadd.f32 0.0, %v7599
      %v7601 = vpop.f32.mrf.mxu0
      %v7602 = vadd.f32 0.0, %v7601
      %7603 = vmatmul.bf16.gmra.mxu0 %v6797
      %v7604 = vpop.f32.mrf.mxu0
      %v7605 = vadd.f32 0.0, %v7604
      %v7606 = vpop.f32.mrf.mxu0
      %v7607 = vadd.f32 0.0, %v7606
      %7608 = vmatmul.bf16.gmra.mxu0 %v6806
      %v7609 = vpop.f32.mrf.mxu0
      %v7610 = vadd.f32 0.0, %v7609
      %v7611 = vpop.f32.mrf.mxu0
      %v7612 = vadd.f32 0.0, %v7611
      %7613 = vmatmul.bf16.gmra.mxu0 %v6815
      %v7614 = vpop.f32.mrf.mxu0
      %v7615 = vadd.f32 0.0, %v7614
      %v7616 = vpop.f32.mrf.mxu0
      %v7617 = vadd.f32 0.0, %v7616
      %7618 = vmatmul.bf16.gmra.mxu0 %v6824
      %v7619 = vpop.f32.mrf.mxu0
      %v7620 = vadd.f32 0.0, %v7619
      %v7621 = vpop.f32.mrf.mxu0
      %v7622 = vadd.f32 0.0, %v7621
      %7623 = vmatmul.bf16.gmra.mxu0 %v6833
      %v7624 = vpop.f32.mrf.mxu0
      %v7625 = vadd.f32 0.0, %v7624
      %v7626 = vpop.f32.mrf.mxu0
      %v7627 = vadd.f32 0.0, %v7626
      %7628 = vmatmul.bf16.gmra.mxu0 %v6842
      %v7629 = vpop.f32.mrf.mxu0
      %v7630 = vadd.f32 0.0, %v7629
      %v7631 = vpop.f32.mrf.mxu0
      %v7632 = vadd.f32 0.0, %v7631
      %7633 = vmatmul.bf16.gmra.mxu0 %v6851
      %v7634 = vpop.f32.mrf.mxu0
      %v7635 = vadd.f32 0.0, %v7634
      %v7636 = vpop.f32.mrf.mxu0
      %v7637 = vadd.f32 0.0, %v7636
      %7638 = vmatmul.bf16.gmra.mxu0 %v6860
      %v7639 = vpop.f32.mrf.mxu0
      %v7640 = vadd.f32 0.0, %v7639
      %v7641 = vpop.f32.mrf.mxu0
      %v7642 = vadd.f32 0.0, %v7641
      %7643 = vmatmul.bf16.gmra.mxu0 %v6869
      %v7644 = vpop.f32.mrf.mxu0
      %v7645 = vadd.f32 0.0, %v7644
      %v7646 = vpop.f32.mrf.mxu0
      %v7647 = vadd.f32 0.0, %v7646
      %7648 = vmatmul.bf16.gmra.mxu0 %v6878
      %v7649 = vpop.f32.mrf.mxu0
      %v7650 = vadd.f32 0.0, %v7649
      %v7651 = vpop.f32.mrf.mxu0
      %v7652 = vadd.f32 0.0, %v7651
      %7653 = vmatmul.bf16.gmra.mxu0 %v6887
      %v7654 = vpop.f32.mrf.mxu0
      %v7655 = vadd.f32 0.0, %v7654
      %v7656 = vpop.f32.mrf.mxu0
      %v7657 = vadd.f32 0.0, %v7656
      %7658 = vmatmul.bf16.gmra.mxu0 %v6896
      %v7659 = vpop.f32.mrf.mxu0
      %v7660 = vadd.f32 0.0, %v7659
      %v7661 = vpop.f32.mrf.mxu0
      %v7662 = vadd.f32 0.0, %v7661
      %7663 = vmatmul.bf16.gmra.mxu0 %v6905
      %v7664 = vpop.f32.mrf.mxu0
      %v7665 = vadd.f32 0.0, %v7664
      %v7666 = vpop.f32.mrf.mxu0
      %v7667 = vadd.f32 0.0, %v7666
      %7668 = vmatmul.bf16.gmra.mxu0 %v6914
      %v7669 = vpop.f32.mrf.mxu0
      %v7670 = vadd.f32 0.0, %v7669
      %v7671 = vpop.f32.mrf.mxu0
      %v7672 = vadd.f32 0.0, %v7671
      %7673 = vmatmul.bf16.gmra.mxu0 %v6923
      %v7674 = vpop.f32.mrf.mxu0
      %v7675 = vadd.f32 0.0, %v7674
      %v7676 = vpop.f32.mrf.mxu0
      %v7677 = vadd.f32 0.0, %v7676
      %7678 = vmatmul.bf16.gmra.mxu0 %v6932
      %v7679 = vpop.f32.mrf.mxu0
      %v7680 = vadd.f32 0.0, %v7679
      %v7681 = vpop.f32.mrf.mxu0
      %v7682 = vadd.f32 0.0, %v7681
      %7683 = vmatmul.bf16.gmra.mxu0 %v6941
      %v7684 = vpop.f32.mrf.mxu0
      %v7685 = vadd.f32 0.0, %v7684
      %v7686 = vpop.f32.mrf.mxu0
      %v7687 = vadd.f32 0.0, %v7686
      %7688 = vmatmul.bf16.gmra.mxu0 %v6950
      %v7689 = vpop.f32.mrf.mxu0
      %v7690 = vadd.f32 0.0, %v7689
      %v7691 = vpop.f32.mrf.mxu0
      %v7692 = vadd.f32 0.0, %v7691
      %7693 = vdwg.mxu0
      %7694 = vmatpush.bf16.msra.mxu0 %v7451
      %7695 = vmatpush.bf16.msra.mxu0 %v7450
      %7696 = vmatpush.bf16.msra.mxu0 %v7449
      %7697 = vmatpush.bf16.msra.mxu0 %v7448
      %7698 = vmatpush.bf16.msra.mxu0 %v7447
      %7699 = vmatpush.bf16.msra.mxu0 %v7446
      %7700 = vmatpush.bf16.msra.mxu0 %v7445
      %7701 = vmatpush.bf16.msra.mxu0 %v7444
      %7702 = vmatmul.bf16.gmra.mxu0 %v6771
      %v7703 = vpop.f32.mrf.mxu0
      %v7704 = vadd.f32 %v7590, %v7703
      %v7705 = vpop.f32.mrf.mxu0
      %v7706 = vadd.f32 %v7592, %v7705
      %7707 = vmatmul.bf16.gmra.mxu0 %v6780
      %v7708 = vpop.f32.mrf.mxu0
      %v7709 = vadd.f32 %v7595, %v7708
      %v7710 = vpop.f32.mrf.mxu0
      %v7711 = vadd.f32 %v7597, %v7710
      %7712 = vmatmul.bf16.gmra.mxu0 %v6789
      %v7713 = vpop.f32.mrf.mxu0
      %v7714 = vadd.f32 %v7600, %v7713
      %v7715 = vpop.f32.mrf.mxu0
      %v7716 = vadd.f32 %v7602, %v7715
      %7717 = vmatmul.bf16.gmra.mxu0 %v6798
      %v7718 = vpop.f32.mrf.mxu0
      %v7719 = vadd.f32 %v7605, %v7718
      %v7720 = vpop.f32.mrf.mxu0
      %v7721 = vadd.f32 %v7607, %v7720
      %7722 = vmatmul.bf16.gmra.mxu0 %v6807
      %v7723 = vpop.f32.mrf.mxu0
      %v7724 = vadd.f32 %v7610, %v7723
      %v7725 = vpop.f32.mrf.mxu0
      %v7726 = vadd.f32 %v7612, %v7725
      %7727 = vmatmul.bf16.gmra.mxu0 %v6816
      %v7728 = vpop.f32.mrf.mxu0
      %v7729 = vadd.f32 %v7615, %v7728
      %v7730 = vpop.f32.mrf.mxu0
      %v7731 = vadd.f32 %v7617, %v7730
      %7732 = vmatmul.bf16.gmra.mxu0 %v6825
      %v7733 = vpop.f32.mrf.mxu0
      %v7734 = vadd.f32 %v7620, %v7733
      %v7735 = vpop.f32.mrf.mxu0
      %v7736 = vadd.f32 %v7622, %v7735
      %7737 = vmatmul.bf16.gmra.mxu0 %v6834
      %v7738 = vpop.f32.mrf.mxu0
      %v7739 = vadd.f32 %v7625, %v7738
      %v7740 = vpop.f32.mrf.mxu0
      %v7741 = vadd.f32 %v7627, %v7740
      %7742 = vmatmul.bf16.gmra.mxu0 %v6843
      %v7743 = vpop.f32.mrf.mxu0
      %v7744 = vadd.f32 %v7630, %v7743
      %v7745 = vpop.f32.mrf.mxu0
      %v7746 = vadd.f32 %v7632, %v7745
      %7747 = vmatmul.bf16.gmra.mxu0 %v6852
      %v7748 = vpop.f32.mrf.mxu0
      %v7749 = vadd.f32 %v7635, %v7748
      %v7750 = vpop.f32.mrf.mxu0
      %v7751 = vadd.f32 %v7637, %v7750
      %7752 = vmatmul.bf16.gmra.mxu0 %v6861
      %v7753 = vpop.f32.mrf.mxu0
      %v7754 = vadd.f32 %v7640, %v7753
      %v7755 = vpop.f32.mrf.mxu0
      %v7756 = vadd.f32 %v7642, %v7755
      %7757 = vmatmul.bf16.gmra.mxu0 %v6870
      %v7758 = vpop.f32.mrf.mxu0
      %v7759 = vadd.f32 %v7645, %v7758
      %v7760 = vpop.f32.mrf.mxu0
      %v7761 = vadd.f32 %v7647, %v7760
      %7762 = vmatmul.bf16.gmra.mxu0 %v6879
      %v7763 = vpop.f32.mrf.mxu0
      %v7764 = vadd.f32 %v7650, %v7763
      %v7765 = vpop.f32.mrf.mxu0
      %v7766 = vadd.f32 %v7652, %v7765
      %7767 = vmatmul.bf16.gmra.mxu0 %v6888
      %v7768 = vpop.f32.mrf.mxu0
      %v7769 = vadd.f32 %v7655, %v7768
      %v7770 = vpop.f32.mrf.mxu0
      %v7771 = vadd.f32 %v7657, %v7770
      %7772 = vmatmul.bf16.gmra.mxu0 %v6897
      %v7773 = vpop.f32.mrf.mxu0
      %v7774 = vadd.f32 %v7660, %v7773
      %v7775 = vpop.f32.mrf.mxu0
      %v7776 = vadd.f32 %v7662, %v7775
      %7777 = vmatmul.bf16.gmra.mxu0 %v6906
      %v7778 = vpop.f32.mrf.mxu0
      %v7779 = vadd.f32 %v7665, %v7778
      %v7780 = vpop.f32.mrf.mxu0
      %v7781 = vadd.f32 %v7667, %v7780
      %7782 = vmatmul.bf16.gmra.mxu0 %v6915
      %v7783 = vpop.f32.mrf.mxu0
      %v7784 = vadd.f32 %v7670, %v7783
      %v7785 = vpop.f32.mrf.mxu0
      %v7786 = vadd.f32 %v7672, %v7785
      %7787 = vmatmul.bf16.gmra.mxu0 %v6924
      %v7788 = vpop.f32.mrf.mxu0
      %v7789 = vadd.f32 %v7675, %v7788
      %v7790 = vpop.f32.mrf.mxu0
      %v7791 = vadd.f32 %v7677, %v7790
      %7792 = vmatmul.bf16.gmra.mxu0 %v6933
      %v7793 = vpop.f32.mrf.mxu0
      %v7794 = vadd.f32 %v7680, %v7793
      %v7795 = vpop.f32.mrf.mxu0
      %v7796 = vadd.f32 %v7682, %v7795
      %7797 = vmatmul.bf16.gmra.mxu0 %v6942
      %v7798 = vpop.f32.mrf.mxu0
      %v7799 = vadd.f32 %v7685, %v7798
      %v7800 = vpop.f32.mrf.mxu0
      %v7801 = vadd.f32 %v7687, %v7800
      %7802 = vmatmul.bf16.gmra.mxu0 %v6951
      %v7803 = vpop.f32.mrf.mxu0
      %v7804 = vadd.f32 %v7690, %v7803
      %v7805 = vpop.f32.mrf.mxu0
      %v7806 = vadd.f32 %v7692, %v7805
      %7807 = vdwg.mxu0
      %7808 = vmatpush.bf16.msra.mxu0 %v7459
      %7809 = vmatpush.bf16.msra.mxu0 %v7458
      %7810 = vmatpush.bf16.msra.mxu0 %v7457
      %7811 = vmatpush.bf16.msra.mxu0 %v7456
      %7812 = vmatpush.bf16.msra.mxu0 %v7455
      %7813 = vmatpush.bf16.msra.mxu0 %v7454
      %7814 = vmatpush.bf16.msra.mxu0 %v7453
      %7815 = vmatpush.bf16.msra.mxu0 %v7452
      %7816 = vmatmul.bf16.gmra.mxu0 %v6772
      %v7817 = vpop.f32.mrf.mxu0
      %v7818 = vadd.f32 %v7704, %v7817
      %v7819 = vpop.f32.mrf.mxu0
      %v7820 = vadd.f32 %v7706, %v7819
      %7821 = vmatmul.bf16.gmra.mxu0 %v6781
      %v7822 = vpop.f32.mrf.mxu0
      %v7823 = vadd.f32 %v7709, %v7822
      %v7824 = vpop.f32.mrf.mxu0
      %v7825 = vadd.f32 %v7711, %v7824
      %7826 = vmatmul.bf16.gmra.mxu0 %v6790
      %v7827 = vpop.f32.mrf.mxu0
      %v7828 = vadd.f32 %v7714, %v7827
      %v7829 = vpop.f32.mrf.mxu0
      %v7830 = vadd.f32 %v7716, %v7829
      %7831 = vmatmul.bf16.gmra.mxu0 %v6799
      %v7832 = vpop.f32.mrf.mxu0
      %v7833 = vadd.f32 %v7719, %v7832
      %v7834 = vpop.f32.mrf.mxu0
      %v7835 = vadd.f32 %v7721, %v7834
      %7836 = vmatmul.bf16.gmra.mxu0 %v6808
      %v7837 = vpop.f32.mrf.mxu0
      %v7838 = vadd.f32 %v7724, %v7837
      %v7839 = vpop.f32.mrf.mxu0
      %v7840 = vadd.f32 %v7726, %v7839
      %7841 = vmatmul.bf16.gmra.mxu0 %v6817
      %v7842 = vpop.f32.mrf.mxu0
      %v7843 = vadd.f32 %v7729, %v7842
      %v7844 = vpop.f32.mrf.mxu0
      %v7845 = vadd.f32 %v7731, %v7844
      %7846 = vmatmul.bf16.gmra.mxu0 %v6826
      %v7847 = vpop.f32.mrf.mxu0
      %v7848 = vadd.f32 %v7734, %v7847
      %v7849 = vpop.f32.mrf.mxu0
      %v7850 = vadd.f32 %v7736, %v7849
      %7851 = vmatmul.bf16.gmra.mxu0 %v6835
      %v7852 = vpop.f32.mrf.mxu0
      %v7853 = vadd.f32 %v7739, %v7852
      %v7854 = vpop.f32.mrf.mxu0
      %v7855 = vadd.f32 %v7741, %v7854
      %7856 = vmatmul.bf16.gmra.mxu0 %v6844
      %v7857 = vpop.f32.mrf.mxu0
      %v7858 = vadd.f32 %v7744, %v7857
      %v7859 = vpop.f32.mrf.mxu0
      %v7860 = vadd.f32 %v7746, %v7859
      %7861 = vmatmul.bf16.gmra.mxu0 %v6853
      %v7862 = vpop.f32.mrf.mxu0
      %v7863 = vadd.f32 %v7749, %v7862
      %v7864 = vpop.f32.mrf.mxu0
      %v7865 = vadd.f32 %v7751, %v7864
      %7866 = vmatmul.bf16.gmra.mxu0 %v6862
      %v7867 = vpop.f32.mrf.mxu0
      %v7868 = vadd.f32 %v7754, %v7867
      %v7869 = vpop.f32.mrf.mxu0
      %v7870 = vadd.f32 %v7756, %v7869
      %7871 = vmatmul.bf16.gmra.mxu0 %v6871
      %v7872 = vpop.f32.mrf.mxu0
      %v7873 = vadd.f32 %v7759, %v7872
      %v7874 = vpop.f32.mrf.mxu0
      %v7875 = vadd.f32 %v7761, %v7874
      %7876 = vmatmul.bf16.gmra.mxu0 %v6880
      %v7877 = vpop.f32.mrf.mxu0
      %v7878 = vadd.f32 %v7764, %v7877
      %v7879 = vpop.f32.mrf.mxu0
      %v7880 = vadd.f32 %v7766, %v7879
      %7881 = vmatmul.bf16.gmra.mxu0 %v6889
      %v7882 = vpop.f32.mrf.mxu0
      %v7883 = vadd.f32 %v7769, %v7882
      %v7884 = vpop.f32.mrf.mxu0
      %v7885 = vadd.f32 %v7771, %v7884
      %7886 = vmatmul.bf16.gmra.mxu0 %v6898
      %v7887 = vpop.f32.mrf.mxu0
      %v7888 = vadd.f32 %v7774, %v7887
      %v7889 = vpop.f32.mrf.mxu0
      %v7890 = vadd.f32 %v7776, %v7889
      %7891 = vmatmul.bf16.gmra.mxu0 %v6907
      %v7892 = vpop.f32.mrf.mxu0
      %v7893 = vadd.f32 %v7779, %v7892
      %v7894 = vpop.f32.mrf.mxu0
      %v7895 = vadd.f32 %v7781, %v7894
      %7896 = vmatmul.bf16.gmra.mxu0 %v6916
      %v7897 = vpop.f32.mrf.mxu0
      %v7898 = vadd.f32 %v7784, %v7897
      %v7899 = vpop.f32.mrf.mxu0
      %v7900 = vadd.f32 %v7786, %v7899
      %7901 = vmatmul.bf16.gmra.mxu0 %v6925
      %v7902 = vpop.f32.mrf.mxu0
      %v7903 = vadd.f32 %v7789, %v7902
      %v7904 = vpop.f32.mrf.mxu0
      %v7905 = vadd.f32 %v7791, %v7904
      %7906 = vmatmul.bf16.gmra.mxu0 %v6934
      %v7907 = vpop.f32.mrf.mxu0
      %v7908 = vadd.f32 %v7794, %v7907
      %v7909 = vpop.f32.mrf.mxu0
      %v7910 = vadd.f32 %v7796, %v7909
      %7911 = vmatmul.bf16.gmra.mxu0 %v6943
      %v7912 = vpop.f32.mrf.mxu0
      %v7913 = vadd.f32 %v7799, %v7912
      %v7914 = vpop.f32.mrf.mxu0
      %v7915 = vadd.f32 %v7801, %v7914
      %7916 = vmatmul.bf16.gmra.mxu0 %v6952
      %v7917 = vpop.f32.mrf.mxu0
      %v7918 = vadd.f32 %v7804, %v7917
      %v7919 = vpop.f32.mrf.mxu0
      %v7920 = vadd.f32 %v7806, %v7919
      %7921 = vdwg.mxu0
      %7922 = vmatpush.bf16.msra.mxu0 %v7467
      %7923 = vmatpush.bf16.msra.mxu0 %v7466
      %7924 = vmatpush.bf16.msra.mxu0 %v7465
      %7925 = vmatpush.bf16.msra.mxu0 %v7464
      %7926 = vmatpush.bf16.msra.mxu0 %v7463
      %7927 = vmatpush.bf16.msra.mxu0 %v7462
      %7928 = vmatpush.bf16.msra.mxu0 %v7461
      %7929 = vmatpush.bf16.msra.mxu0 %v7460
      %7930 = vmatmul.bf16.gmra.mxu0 %v6773
      %v7931 = vpop.f32.mrf.mxu0
      %v7932 = vadd.f32 %v7818, %v7931
      %v7933 = vpop.f32.mrf.mxu0
      %v7934 = vadd.f32 %v7820, %v7933
      %7935 = vmatmul.bf16.gmra.mxu0 %v6782
      %v7936 = vpop.f32.mrf.mxu0
      %v7937 = vadd.f32 %v7823, %v7936
      %v7938 = vpop.f32.mrf.mxu0
      %v7939 = vadd.f32 %v7825, %v7938
      %7940 = vmatmul.bf16.gmra.mxu0 %v6791
      %v7941 = vpop.f32.mrf.mxu0
      %v7942 = vadd.f32 %v7828, %v7941
      %v7943 = vpop.f32.mrf.mxu0
      %v7944 = vadd.f32 %v7830, %v7943
      %7945 = vmatmul.bf16.gmra.mxu0 %v6800
      %v7946 = vpop.f32.mrf.mxu0
      %v7947 = vadd.f32 %v7833, %v7946
      %v7948 = vpop.f32.mrf.mxu0
      %v7949 = vadd.f32 %v7835, %v7948
      %7950 = vmatmul.bf16.gmra.mxu0 %v6809
      %v7951 = vpop.f32.mrf.mxu0
      %v7952 = vadd.f32 %v7838, %v7951
      %v7953 = vpop.f32.mrf.mxu0
      %v7954 = vadd.f32 %v7840, %v7953
      %7955 = vmatmul.bf16.gmra.mxu0 %v6818
      %v7956 = vpop.f32.mrf.mxu0
      %v7957 = vadd.f32 %v7843, %v7956
      %v7958 = vpop.f32.mrf.mxu0
      %v7959 = vadd.f32 %v7845, %v7958
      %7960 = vmatmul.bf16.gmra.mxu0 %v6827
      %v7961 = vpop.f32.mrf.mxu0
      %v7962 = vadd.f32 %v7848, %v7961
      %v7963 = vpop.f32.mrf.mxu0
      %v7964 = vadd.f32 %v7850, %v7963
      %7965 = vmatmul.bf16.gmra.mxu0 %v6836
      %v7966 = vpop.f32.mrf.mxu0
      %v7967 = vadd.f32 %v7853, %v7966
      %v7968 = vpop.f32.mrf.mxu0
      %v7969 = vadd.f32 %v7855, %v7968
      %7970 = vmatmul.bf16.gmra.mxu0 %v6845
      %v7971 = vpop.f32.mrf.mxu0
      %v7972 = vadd.f32 %v7858, %v7971
      %v7973 = vpop.f32.mrf.mxu0
      %v7974 = vadd.f32 %v7860, %v7973
      %7975 = vmatmul.bf16.gmra.mxu0 %v6854
      %v7976 = vpop.f32.mrf.mxu0
      %v7977 = vadd.f32 %v7863, %v7976
      %v7978 = vpop.f32.mrf.mxu0
      %v7979 = vadd.f32 %v7865, %v7978
      %7980 = vmatmul.bf16.gmra.mxu0 %v6863
      %v7981 = vpop.f32.mrf.mxu0
      %v7982 = vadd.f32 %v7868, %v7981
      %v7983 = vpop.f32.mrf.mxu0
      %v7984 = vadd.f32 %v7870, %v7983
      %7985 = vmatmul.bf16.gmra.mxu0 %v6872
      %v7986 = vpop.f32.mrf.mxu0
      %v7987 = vadd.f32 %v7873, %v7986
      %v7988 = vpop.f32.mrf.mxu0
      %v7989 = vadd.f32 %v7875, %v7988
      %7990 = vmatmul.bf16.gmra.mxu0 %v6881
      %v7991 = vpop.f32.mrf.mxu0
      %v7992 = vadd.f32 %v7878, %v7991
      %v7993 = vpop.f32.mrf.mxu0
      %v7994 = vadd.f32 %v7880, %v7993
      %7995 = vmatmul.bf16.gmra.mxu0 %v6890
      %v7996 = vpop.f32.mrf.mxu0
      %v7997 = vadd.f32 %v7883, %v7996
      %v7998 = vpop.f32.mrf.mxu0
      %v7999 = vadd.f32 %v7885, %v7998
      %8000 = vmatmul.bf16.gmra.mxu0 %v6899
      %v8001 = vpop.f32.mrf.mxu0
      %v8002 = vadd.f32 %v7888, %v8001
      %v8003 = vpop.f32.mrf.mxu0
      %v8004 = vadd.f32 %v7890, %v8003
      %8005 = vmatmul.bf16.gmra.mxu0 %v6908
      %v8006 = vpop.f32.mrf.mxu0
      %v8007 = vadd.f32 %v7893, %v8006
      %v8008 = vpop.f32.mrf.mxu0
      %v8009 = vadd.f32 %v7895, %v8008
      %8010 = vmatmul.bf16.gmra.mxu0 %v6917
      %v8011 = vpop.f32.mrf.mxu0
      %v8012 = vadd.f32 %v7898, %v8011
      %v8013 = vpop.f32.mrf.mxu0
      %v8014 = vadd.f32 %v7900, %v8013
      %8015 = vmatmul.bf16.gmra.mxu0 %v6926
      %v8016 = vpop.f32.mrf.mxu0
      %v8017 = vadd.f32 %v7903, %v8016
      %v8018 = vpop.f32.mrf.mxu0
      %v8019 = vadd.f32 %v7905, %v8018
      %8020 = vmatmul.bf16.gmra.mxu0 %v6935
      %v8021 = vpop.f32.mrf.mxu0
      %v8022 = vadd.f32 %v7908, %v8021
      %v8023 = vpop.f32.mrf.mxu0
      %v8024 = vadd.f32 %v7910, %v8023
      %8025 = vmatmul.bf16.gmra.mxu0 %v6944
      %v8026 = vpop.f32.mrf.mxu0
      %v8027 = vadd.f32 %v7913, %v8026
      %v8028 = vpop.f32.mrf.mxu0
      %v8029 = vadd.f32 %v7915, %v8028
      %8030 = vmatmul.bf16.gmra.mxu0 %v6953
      %v8031 = vpop.f32.mrf.mxu0
      %v8032 = vadd.f32 %v7918, %v8031
      %v8033 = vpop.f32.mrf.mxu0
      %v8034 = vadd.f32 %v7920, %v8033
      %8035 = vdwg.mxu0
      %8036 = vmatpush.bf16.msra.mxu0 %v7475
      %8037 = vmatpush.bf16.msra.mxu0 %v7474
      %8038 = vmatpush.bf16.msra.mxu0 %v7473
      %8039 = vmatpush.bf16.msra.mxu0 %v7472
      %8040 = vmatpush.bf16.msra.mxu0 %v7471
      %8041 = vmatpush.bf16.msra.mxu0 %v7470
      %8042 = vmatpush.bf16.msra.mxu0 %v7469
      %8043 = vmatpush.bf16.msra.mxu0 %v7468
      %8044 = vmatmul.bf16.gmra.mxu0 %v6774
      %v8045 = vpop.f32.mrf.mxu0
      %v8046 = vadd.f32 %v7932, %v8045
      %v8047 = vpop.f32.mrf.mxu0
      %v8048 = vadd.f32 %v7934, %v8047
      %8049 = vmatmul.bf16.gmra.mxu0 %v6783
      %v8050 = vpop.f32.mrf.mxu0
      %v8051 = vadd.f32 %v7937, %v8050
      %v8052 = vpop.f32.mrf.mxu0
      %v8053 = vadd.f32 %v7939, %v8052
      %8054 = vmatmul.bf16.gmra.mxu0 %v6792
      %v8055 = vpop.f32.mrf.mxu0
      %v8056 = vadd.f32 %v7942, %v8055
      %v8057 = vpop.f32.mrf.mxu0
      %v8058 = vadd.f32 %v7944, %v8057
      %8059 = vmatmul.bf16.gmra.mxu0 %v6801
      %v8060 = vpop.f32.mrf.mxu0
      %v8061 = vadd.f32 %v7947, %v8060
      %v8062 = vpop.f32.mrf.mxu0
      %v8063 = vadd.f32 %v7949, %v8062
      %8064 = vmatmul.bf16.gmra.mxu0 %v6810
      %v8065 = vpop.f32.mrf.mxu0
      %v8066 = vadd.f32 %v7952, %v8065
      %v8067 = vpop.f32.mrf.mxu0
      %v8068 = vadd.f32 %v7954, %v8067
      %8069 = vmatmul.bf16.gmra.mxu0 %v6819
      %v8070 = vpop.f32.mrf.mxu0
      %v8071 = vadd.f32 %v7957, %v8070
      %v8072 = vpop.f32.mrf.mxu0
      %v8073 = vadd.f32 %v7959, %v8072
      %8074 = vmatmul.bf16.gmra.mxu0 %v6828
      %v8075 = vpop.f32.mrf.mxu0
      %v8076 = vadd.f32 %v7962, %v8075
      %v8077 = vpop.f32.mrf.mxu0
      %v8078 = vadd.f32 %v7964, %v8077
      %8079 = vmatmul.bf16.gmra.mxu0 %v6837
      %v8080 = vpop.f32.mrf.mxu0
      %v8081 = vadd.f32 %v7967, %v8080
      %v8082 = vpop.f32.mrf.mxu0
      %v8083 = vadd.f32 %v7969, %v8082
      %8084 = vmatmul.bf16.gmra.mxu0 %v6846
      %v8085 = vpop.f32.mrf.mxu0
      %v8086 = vadd.f32 %v7972, %v8085
      %v8087 = vpop.f32.mrf.mxu0
      %v8088 = vadd.f32 %v7974, %v8087
      %8089 = vmatmul.bf16.gmra.mxu0 %v6855
      %v8090 = vpop.f32.mrf.mxu0
      %v8091 = vadd.f32 %v7977, %v8090
      %v8092 = vpop.f32.mrf.mxu0
      %v8093 = vadd.f32 %v7979, %v8092
      %8094 = vmatmul.bf16.gmra.mxu0 %v6864
      %v8095 = vpop.f32.mrf.mxu0
      %v8096 = vadd.f32 %v7982, %v8095
      %v8097 = vpop.f32.mrf.mxu0
      %v8098 = vadd.f32 %v7984, %v8097
      %8099 = vmatmul.bf16.gmra.mxu0 %v6873
      %v8100 = vpop.f32.mrf.mxu0
      %v8101 = vadd.f32 %v7987, %v8100
      %v8102 = vpop.f32.mrf.mxu0
      %v8103 = vadd.f32 %v7989, %v8102
      %8104 = vmatmul.bf16.gmra.mxu0 %v6882
      %v8105 = vpop.f32.mrf.mxu0
      %v8106 = vadd.f32 %v7992, %v8105
      %v8107 = vpop.f32.mrf.mxu0
      %v8108 = vadd.f32 %v7994, %v8107
      %8109 = vmatmul.bf16.gmra.mxu0 %v6891
      %v8110 = vpop.f32.mrf.mxu0
      %v8111 = vadd.f32 %v7997, %v8110
      %v8112 = vpop.f32.mrf.mxu0
      %v8113 = vadd.f32 %v7999, %v8112
      %8114 = vmatmul.bf16.gmra.mxu0 %v6900
      %v8115 = vpop.f32.mrf.mxu0
      %v8116 = vadd.f32 %v8002, %v8115
      %v8117 = vpop.f32.mrf.mxu0
      %v8118 = vadd.f32 %v8004, %v8117
      %8119 = vmatmul.bf16.gmra.mxu0 %v6909
      %v8120 = vpop.f32.mrf.mxu0
      %v8121 = vadd.f32 %v8007, %v8120
      %v8122 = vpop.f32.mrf.mxu0
      %v8123 = vadd.f32 %v8009, %v8122
      %8124 = vmatmul.bf16.gmra.mxu0 %v6918
      %v8125 = vpop.f32.mrf.mxu0
      %v8126 = vadd.f32 %v8012, %v8125
      %v8127 = vpop.f32.mrf.mxu0
      %v8128 = vadd.f32 %v8014, %v8127
      %8129 = vmatmul.bf16.gmra.mxu0 %v6927
      %v8130 = vpop.f32.mrf.mxu0
      %v8131 = vadd.f32 %v8017, %v8130
      %v8132 = vpop.f32.mrf.mxu0
      %v8133 = vadd.f32 %v8019, %v8132
      %8134 = vmatmul.bf16.gmra.mxu0 %v6936
      %v8135 = vpop.f32.mrf.mxu0
      %v8136 = vadd.f32 %v8022, %v8135
      %v8137 = vpop.f32.mrf.mxu0
      %v8138 = vadd.f32 %v8024, %v8137
      %8139 = vmatmul.bf16.gmra.mxu0 %v6945
      %v8140 = vpop.f32.mrf.mxu0
      %v8141 = vadd.f32 %v8027, %v8140
      %v8142 = vpop.f32.mrf.mxu0
      %v8143 = vadd.f32 %v8029, %v8142
      %8144 = vmatmul.bf16.gmra.mxu0 %v6954
      %v8145 = vpop.f32.mrf.mxu0
      %v8146 = vadd.f32 %v8032, %v8145
      %v8147 = vpop.f32.mrf.mxu0
      %v8148 = vadd.f32 %v8034, %v8147
      %8149 = vdwg.mxu0
      %8150 = vmatpush.bf16.msra.mxu0 %v7483
      %8151 = vmatpush.bf16.msra.mxu0 %v7482
      %8152 = vmatpush.bf16.msra.mxu0 %v7481
      %8153 = vmatpush.bf16.msra.mxu0 %v7480
      %8154 = vmatpush.bf16.msra.mxu0 %v7479
      %8155 = vmatpush.bf16.msra.mxu0 %v7478
      %8156 = vmatpush.bf16.msra.mxu0 %v7477
      %8157 = vmatpush.bf16.msra.mxu0 %v7476
      %8158 = vmatmul.bf16.gmra.mxu0 %v6775
      %v8159 = vpop.f32.mrf.mxu0
      %v8160 = vadd.f32 %v8046, %v8159
      %v8161 = vpop.f32.mrf.mxu0
      %v8162 = vadd.f32 %v8048, %v8161
      %8163 = vmatmul.bf16.gmra.mxu0 %v6784
      %v8164 = vpop.f32.mrf.mxu0
      %v8165 = vadd.f32 %v8051, %v8164
      %v8166 = vpop.f32.mrf.mxu0
      %v8167 = vadd.f32 %v8053, %v8166
      %8168 = vmatmul.bf16.gmra.mxu0 %v6793
      %v8169 = vpop.f32.mrf.mxu0
      %v8170 = vadd.f32 %v8056, %v8169
      %v8171 = vpop.f32.mrf.mxu0
      %v8172 = vadd.f32 %v8058, %v8171
      %8173 = vmatmul.bf16.gmra.mxu0 %v6802
      %v8174 = vpop.f32.mrf.mxu0
      %v8175 = vadd.f32 %v8061, %v8174
      %v8176 = vpop.f32.mrf.mxu0
      %v8177 = vadd.f32 %v8063, %v8176
      %8178 = vmatmul.bf16.gmra.mxu0 %v6811
      %v8179 = vpop.f32.mrf.mxu0
      %v8180 = vadd.f32 %v8066, %v8179
      %v8181 = vpop.f32.mrf.mxu0
      %v8182 = vadd.f32 %v8068, %v8181
      %8183 = vmatmul.bf16.gmra.mxu0 %v6820
      %v8184 = vpop.f32.mrf.mxu0
      %v8185 = vadd.f32 %v8071, %v8184
      %v8186 = vpop.f32.mrf.mxu0
      %v8187 = vadd.f32 %v8073, %v8186
      %8188 = vmatmul.bf16.gmra.mxu0 %v6829
      %v8189 = vpop.f32.mrf.mxu0
      %v8190 = vadd.f32 %v8076, %v8189
      %v8191 = vpop.f32.mrf.mxu0
      %v8192 = vadd.f32 %v8078, %v8191
      %8193 = vmatmul.bf16.gmra.mxu0 %v6838
      %v8194 = vpop.f32.mrf.mxu0
      %v8195 = vadd.f32 %v8081, %v8194
      %v8196 = vpop.f32.mrf.mxu0
      %v8197 = vadd.f32 %v8083, %v8196
      %8198 = vmatmul.bf16.gmra.mxu0 %v6847
      %v8199 = vpop.f32.mrf.mxu0
      %v8200 = vadd.f32 %v8086, %v8199
      %v8201 = vpop.f32.mrf.mxu0
      %v8202 = vadd.f32 %v8088, %v8201
      %8203 = vmatmul.bf16.gmra.mxu0 %v6856
      %v8204 = vpop.f32.mrf.mxu0
      %v8205 = vadd.f32 %v8091, %v8204
      %v8206 = vpop.f32.mrf.mxu0
      %v8207 = vadd.f32 %v8093, %v8206
      %8208 = vmatmul.bf16.gmra.mxu0 %v6865
      %v8209 = vpop.f32.mrf.mxu0
      %v8210 = vadd.f32 %v8096, %v8209
      %v8211 = vpop.f32.mrf.mxu0
      %v8212 = vadd.f32 %v8098, %v8211
      %8213 = vmatmul.bf16.gmra.mxu0 %v6874
      %v8214 = vpop.f32.mrf.mxu0
      %v8215 = vadd.f32 %v8101, %v8214
      %v8216 = vpop.f32.mrf.mxu0
      %v8217 = vadd.f32 %v8103, %v8216
      %8218 = vmatmul.bf16.gmra.mxu0 %v6883
      %v8219 = vpop.f32.mrf.mxu0
      %v8220 = vadd.f32 %v8106, %v8219
      %v8221 = vpop.f32.mrf.mxu0
      %v8222 = vadd.f32 %v8108, %v8221
      %8223 = vmatmul.bf16.gmra.mxu0 %v6892
      %v8224 = vpop.f32.mrf.mxu0
      %v8225 = vadd.f32 %v8111, %v8224
      %v8226 = vpop.f32.mrf.mxu0
      %v8227 = vadd.f32 %v8113, %v8226
      %8228 = vmatmul.bf16.gmra.mxu0 %v6901
      %v8229 = vpop.f32.mrf.mxu0
      %v8230 = vadd.f32 %v8116, %v8229
      %v8231 = vpop.f32.mrf.mxu0
      %v8232 = vadd.f32 %v8118, %v8231
      %8233 = vmatmul.bf16.gmra.mxu0 %v6910
      %v8234 = vpop.f32.mrf.mxu0
      %v8235 = vadd.f32 %v8121, %v8234
      %v8236 = vpop.f32.mrf.mxu0
      %v8237 = vadd.f32 %v8123, %v8236
      %8238 = vmatmul.bf16.gmra.mxu0 %v6919
      %v8239 = vpop.f32.mrf.mxu0
      %v8240 = vadd.f32 %v8126, %v8239
      %v8241 = vpop.f32.mrf.mxu0
      %v8242 = vadd.f32 %v8128, %v8241
      %8243 = vmatmul.bf16.gmra.mxu0 %v6928
      %v8244 = vpop.f32.mrf.mxu0
      %v8245 = vadd.f32 %v8131, %v8244
      %v8246 = vpop.f32.mrf.mxu0
      %v8247 = vadd.f32 %v8133, %v8246
      %8248 = vmatmul.bf16.gmra.mxu0 %v6937
      %v8249 = vpop.f32.mrf.mxu0
      %v8250 = vadd.f32 %v8136, %v8249
      %v8251 = vpop.f32.mrf.mxu0
      %v8252 = vadd.f32 %v8138, %v8251
      %8253 = vmatmul.bf16.gmra.mxu0 %v6946
      %v8254 = vpop.f32.mrf.mxu0
      %v8255 = vadd.f32 %v8141, %v8254
      %v8256 = vpop.f32.mrf.mxu0
      %v8257 = vadd.f32 %v8143, %v8256
      %8258 = vmatmul.bf16.gmra.mxu0 %v6955
      %v8259 = vpop.f32.mrf.mxu0
      %v8260 = vadd.f32 %v8146, %v8259
      %v8261 = vpop.f32.mrf.mxu0
      %v8262 = vadd.f32 %v8148, %v8261
      %8263 = vdwg.mxu0
      %8264 = vmatpush.bf16.msra.mxu0 %v7491
      %8265 = vmatpush.bf16.msra.mxu0 %v7490
      %8266 = vmatpush.bf16.msra.mxu0 %v7489
      %8267 = vmatpush.bf16.msra.mxu0 %v7488
      %8268 = vmatpush.bf16.msra.mxu0 %v7487
      %8269 = vmatpush.bf16.msra.mxu0 %v7486
      %8270 = vmatpush.bf16.msra.mxu0 %v7485
      %8271 = vmatpush.bf16.msra.mxu0 %v7484
      %8272 = vmatmul.bf16.gmra.mxu0 %v6776
      %v8273 = vpop.f32.mrf.mxu0
      %v8274 = vadd.f32 %v8160, %v8273
      %v8275 = vpop.f32.mrf.mxu0
      %v8276 = vadd.f32 %v8162, %v8275
      %8277 = vmatmul.bf16.gmra.mxu0 %v6785
      %v8278 = vpop.f32.mrf.mxu0
      %v8279 = vadd.f32 %v8165, %v8278
      %v8280 = vpop.f32.mrf.mxu0
      %v8281 = vadd.f32 %v8167, %v8280
      %8282 = vmatmul.bf16.gmra.mxu0 %v6794
      %v8283 = vpop.f32.mrf.mxu0
      %v8284 = vadd.f32 %v8170, %v8283
      %v8285 = vpop.f32.mrf.mxu0
      %v8286 = vadd.f32 %v8172, %v8285
      %8287 = vmatmul.bf16.gmra.mxu0 %v6803
      %v8288 = vpop.f32.mrf.mxu0
      %v8289 = vadd.f32 %v8175, %v8288
      %v8290 = vpop.f32.mrf.mxu0
      %v8291 = vadd.f32 %v8177, %v8290
      %8292 = vmatmul.bf16.gmra.mxu0 %v6812
      %v8293 = vpop.f32.mrf.mxu0
      %v8294 = vadd.f32 %v8180, %v8293
      %v8295 = vpop.f32.mrf.mxu0
      %v8296 = vadd.f32 %v8182, %v8295
      %8297 = vmatmul.bf16.gmra.mxu0 %v6821
      %v8298 = vpop.f32.mrf.mxu0
      %v8299 = vadd.f32 %v8185, %v8298
      %v8300 = vpop.f32.mrf.mxu0
      %v8301 = vadd.f32 %v8187, %v8300
      %8302 = vmatmul.bf16.gmra.mxu0 %v6830
      %v8303 = vpop.f32.mrf.mxu0
      %v8304 = vadd.f32 %v8190, %v8303
      %v8305 = vpop.f32.mrf.mxu0
      %v8306 = vadd.f32 %v8192, %v8305
      %8307 = vmatmul.bf16.gmra.mxu0 %v6839
      %v8308 = vpop.f32.mrf.mxu0
      %v8309 = vadd.f32 %v8195, %v8308
      %v8310 = vpop.f32.mrf.mxu0
      %v8311 = vadd.f32 %v8197, %v8310
      %8312 = vmatmul.bf16.gmra.mxu0 %v6848
      %v8313 = vpop.f32.mrf.mxu0
      %v8314 = vadd.f32 %v8200, %v8313
      %v8315 = vpop.f32.mrf.mxu0
      %v8316 = vadd.f32 %v8202, %v8315
      %8317 = vmatmul.bf16.gmra.mxu0 %v6857
      %v8318 = vpop.f32.mrf.mxu0
      %v8319 = vadd.f32 %v8205, %v8318
      %v8320 = vpop.f32.mrf.mxu0
      %v8321 = vadd.f32 %v8207, %v8320
      %8322 = vmatmul.bf16.gmra.mxu0 %v6866
      %v8323 = vpop.f32.mrf.mxu0
      %v8324 = vadd.f32 %v8210, %v8323
      %v8325 = vpop.f32.mrf.mxu0
      %v8326 = vadd.f32 %v8212, %v8325
      %8327 = vmatmul.bf16.gmra.mxu0 %v6875
      %v8328 = vpop.f32.mrf.mxu0
      %v8329 = vadd.f32 %v8215, %v8328
      %v8330 = vpop.f32.mrf.mxu0
      %v8331 = vadd.f32 %v8217, %v8330
      %8332 = vmatmul.bf16.gmra.mxu0 %v6884
      %v8333 = vpop.f32.mrf.mxu0
      %v8334 = vadd.f32 %v8220, %v8333
      %v8335 = vpop.f32.mrf.mxu0
      %v8336 = vadd.f32 %v8222, %v8335
      %8337 = vmatmul.bf16.gmra.mxu0 %v6893
      %v8338 = vpop.f32.mrf.mxu0
      %v8339 = vadd.f32 %v8225, %v8338
      %v8340 = vpop.f32.mrf.mxu0
      %v8341 = vadd.f32 %v8227, %v8340
      %8342 = vmatmul.bf16.gmra.mxu0 %v6902
      %v8343 = vpop.f32.mrf.mxu0
      %v8344 = vadd.f32 %v8230, %v8343
      %v8345 = vpop.f32.mrf.mxu0
      %v8346 = vadd.f32 %v8232, %v8345
      %8347 = vmatmul.bf16.gmra.mxu0 %v6911
      %v8348 = vpop.f32.mrf.mxu0
      %v8349 = vadd.f32 %v8235, %v8348
      %v8350 = vpop.f32.mrf.mxu0
      %v8351 = vadd.f32 %v8237, %v8350
      %8352 = vmatmul.bf16.gmra.mxu0 %v6920
      %v8353 = vpop.f32.mrf.mxu0
      %v8354 = vadd.f32 %v8240, %v8353
      %v8355 = vpop.f32.mrf.mxu0
      %v8356 = vadd.f32 %v8242, %v8355
      %8357 = vmatmul.bf16.gmra.mxu0 %v6929
      %v8358 = vpop.f32.mrf.mxu0
      %v8359 = vadd.f32 %v8245, %v8358
      %v8360 = vpop.f32.mrf.mxu0
      %v8361 = vadd.f32 %v8247, %v8360
      %8362 = vmatmul.bf16.gmra.mxu0 %v6938
      %v8363 = vpop.f32.mrf.mxu0
      %v8364 = vadd.f32 %v8250, %v8363
      %v8365 = vpop.f32.mrf.mxu0
      %v8366 = vadd.f32 %v8252, %v8365
      %8367 = vmatmul.bf16.gmra.mxu0 %v6947
      %v8368 = vpop.f32.mrf.mxu0
      %v8369 = vadd.f32 %v8255, %v8368
      %v8370 = vpop.f32.mrf.mxu0
      %v8371 = vadd.f32 %v8257, %v8370
      %8372 = vmatmul.bf16.gmra.mxu0 %v6956
      %v8373 = vpop.f32.mrf.mxu0
      %v8374 = vadd.f32 %v8260, %v8373
      %v8375 = vpop.f32.mrf.mxu0
      %v8376 = vadd.f32 %v8262, %v8375
      %8377 = vdwg.mxu0
      %8378 = vmatpush.bf16.msra.mxu0 %v7499
      %8379 = vmatpush.bf16.msra.mxu0 %v7498
      %8380 = vmatpush.bf16.msra.mxu0 %v7497
      %8381 = vmatpush.bf16.msra.mxu0 %v7496
      %8382 = vmatpush.bf16.msra.mxu0 %v7495
      %8383 = vmatpush.bf16.msra.mxu0 %v7494
      %8384 = vmatpush.bf16.msra.mxu0 %v7493
      %8385 = vmatpush.bf16.msra.mxu0 %v7492
      %8386 = vmatmul.bf16.gmra.mxu0 %v6777
      %v8387 = vpop.f32.mrf.mxu0
      %v8388 = vadd.f32 %v8274, %v8387
      %v8389 = vpop.f32.mrf.mxu0
      %v8390 = vadd.f32 %v8276, %v8389
      %8391 = vmatmul.bf16.gmra.mxu0 %v6786
      %v8392 = vpop.f32.mrf.mxu0
      %v8393 = vadd.f32 %v8279, %v8392
      %v8394 = vpop.f32.mrf.mxu0
      %v8395 = vadd.f32 %v8281, %v8394
      %8396 = vmatmul.bf16.gmra.mxu0 %v6795
      %v8397 = vpop.f32.mrf.mxu0
      %v8398 = vadd.f32 %v8284, %v8397
      %v8399 = vpop.f32.mrf.mxu0
      %v8400 = vadd.f32 %v8286, %v8399
      %8401 = vmatmul.bf16.gmra.mxu0 %v6804
      %v8402 = vpop.f32.mrf.mxu0
      %v8403 = vadd.f32 %v8289, %v8402
      %v8404 = vpop.f32.mrf.mxu0
      %v8405 = vadd.f32 %v8291, %v8404
      %8406 = vmatmul.bf16.gmra.mxu0 %v6813
      %v8407 = vpop.f32.mrf.mxu0
      %v8408 = vadd.f32 %v8294, %v8407
      %v8409 = vpop.f32.mrf.mxu0
      %v8410 = vadd.f32 %v8296, %v8409
      %8411 = vmatmul.bf16.gmra.mxu0 %v6822
      %v8412 = vpop.f32.mrf.mxu0
      %v8413 = vadd.f32 %v8299, %v8412
      %v8414 = vpop.f32.mrf.mxu0
      %v8415 = vadd.f32 %v8301, %v8414
      %8416 = vmatmul.bf16.gmra.mxu0 %v6831
      %v8417 = vpop.f32.mrf.mxu0
      %v8418 = vadd.f32 %v8304, %v8417
      %v8419 = vpop.f32.mrf.mxu0
      %v8420 = vadd.f32 %v8306, %v8419
      %8421 = vmatmul.bf16.gmra.mxu0 %v6840
      %v8422 = vpop.f32.mrf.mxu0
      %v8423 = vadd.f32 %v8309, %v8422
      %v8424 = vpop.f32.mrf.mxu0
      %v8425 = vadd.f32 %v8311, %v8424
      %8426 = vmatmul.bf16.gmra.mxu0 %v6849
      %v8427 = vpop.f32.mrf.mxu0
      %v8428 = vadd.f32 %v8314, %v8427
      %v8429 = vpop.f32.mrf.mxu0
      %v8430 = vadd.f32 %v8316, %v8429
      %8431 = vmatmul.bf16.gmra.mxu0 %v6858
      %v8432 = vpop.f32.mrf.mxu0
      %v8433 = vadd.f32 %v8319, %v8432
      %v8434 = vpop.f32.mrf.mxu0
      %v8435 = vadd.f32 %v8321, %v8434
      %8436 = vmatmul.bf16.gmra.mxu0 %v6867
      %v8437 = vpop.f32.mrf.mxu0
      %v8438 = vadd.f32 %v8324, %v8437
      %v8439 = vpop.f32.mrf.mxu0
      %v8440 = vadd.f32 %v8326, %v8439
      %8441 = vmatmul.bf16.gmra.mxu0 %v6876
      %v8442 = vpop.f32.mrf.mxu0
      %v8443 = vadd.f32 %v8329, %v8442
      %v8444 = vpop.f32.mrf.mxu0
      %v8445 = vadd.f32 %v8331, %v8444
      %8446 = vmatmul.bf16.gmra.mxu0 %v6885
      %v8447 = vpop.f32.mrf.mxu0
      %v8448 = vadd.f32 %v8334, %v8447
      %v8449 = vpop.f32.mrf.mxu0
      %v8450 = vadd.f32 %v8336, %v8449
      %8451 = vmatmul.bf16.gmra.mxu0 %v6894
      %v8452 = vpop.f32.mrf.mxu0
      %v8453 = vadd.f32 %v8339, %v8452
      %v8454 = vpop.f32.mrf.mxu0
      %v8455 = vadd.f32 %v8341, %v8454
      %8456 = vmatmul.bf16.gmra.mxu0 %v6903
      %v8457 = vpop.f32.mrf.mxu0
      %v8458 = vadd.f32 %v8344, %v8457
      %v8459 = vpop.f32.mrf.mxu0
      %v8460 = vadd.f32 %v8346, %v8459
      %8461 = vmatmul.bf16.gmra.mxu0 %v6912
      %v8462 = vpop.f32.mrf.mxu0
      %v8463 = vadd.f32 %v8349, %v8462
      %v8464 = vpop.f32.mrf.mxu0
      %v8465 = vadd.f32 %v8351, %v8464
      %8466 = vmatmul.bf16.gmra.mxu0 %v6921
      %v8467 = vpop.f32.mrf.mxu0
      %v8468 = vadd.f32 %v8354, %v8467
      %v8469 = vpop.f32.mrf.mxu0
      %v8470 = vadd.f32 %v8356, %v8469
      %8471 = vmatmul.bf16.gmra.mxu0 %v6930
      %v8472 = vpop.f32.mrf.mxu0
      %v8473 = vadd.f32 %v8359, %v8472
      %v8474 = vpop.f32.mrf.mxu0
      %v8475 = vadd.f32 %v8361, %v8474
      %8476 = vmatmul.bf16.gmra.mxu0 %v6939
      %v8477 = vpop.f32.mrf.mxu0
      %v8478 = vadd.f32 %v8364, %v8477
      %v8479 = vpop.f32.mrf.mxu0
      %v8480 = vadd.f32 %v8366, %v8479
      %8481 = vmatmul.bf16.gmra.mxu0 %v6948
      %v8482 = vpop.f32.mrf.mxu0
      %v8483 = vadd.f32 %v8369, %v8482
      %v8484 = vpop.f32.mrf.mxu0
      %v8485 = vadd.f32 %v8371, %v8484
      %8486 = vmatmul.bf16.gmra.mxu0 %v6957
      %v8487 = vpop.f32.mrf.mxu0
      %v8488 = vadd.f32 %v8374, %v8487
      %v8489 = vpop.f32.mrf.mxu0
      %v8490 = vadd.f32 %v8376, %v8489
      %8491 = vdwg.mxu0
      %8492 = vmatpush.bf16.msra.mxu0 %v7507
      %8493 = vmatpush.bf16.msra.mxu0 %v7506
      %8494 = vmatpush.bf16.msra.mxu0 %v7505
      %8495 = vmatpush.bf16.msra.mxu0 %v7504
      %8496 = vmatpush.bf16.msra.mxu0 %v7503
      %8497 = vmatpush.bf16.msra.mxu0 %v7502
      %8498 = vmatpush.bf16.msra.mxu0 %v7501
      %8499 = vmatpush.bf16.msra.mxu0 %v7500
      %8500 = vmatmul.bf16.gmra.mxu0 %v6778
      %v8501 = vpop.f32.mrf.mxu0
      %v8502 = vadd.f32 %v8388, %v8501
      %v8503 = vpop.f32.mrf.mxu0
      %v8504 = vadd.f32 %v8390, %v8503
      %8505 = vmatmul.bf16.gmra.mxu0 %v6787
      %v8506 = vpop.f32.mrf.mxu0
      %v8507 = vadd.f32 %v8393, %v8506
      %v8508 = vpop.f32.mrf.mxu0
      %v8509 = vadd.f32 %v8395, %v8508
      %8510 = vmatmul.bf16.gmra.mxu0 %v6796
      %v8511 = vpop.f32.mrf.mxu0
      %v8512 = vadd.f32 %v8398, %v8511
      %v8513 = vpop.f32.mrf.mxu0
      %v8514 = vadd.f32 %v8400, %v8513
      %8515 = vmatmul.bf16.gmra.mxu0 %v6805
      %v8516 = vpop.f32.mrf.mxu0
      %v8517 = vadd.f32 %v8403, %v8516
      %v8518 = vpop.f32.mrf.mxu0
      %v8519 = vadd.f32 %v8405, %v8518
      %8520 = vmatmul.bf16.gmra.mxu0 %v6814
      %v8521 = vpop.f32.mrf.mxu0
      %v8522 = vadd.f32 %v8408, %v8521
      %v8523 = vpop.f32.mrf.mxu0
      %v8524 = vadd.f32 %v8410, %v8523
      %8525 = vmatmul.bf16.gmra.mxu0 %v6823
      %v8526 = vpop.f32.mrf.mxu0
      %v8527 = vadd.f32 %v8413, %v8526
      %v8528 = vpop.f32.mrf.mxu0
      %v8529 = vadd.f32 %v8415, %v8528
      %8530 = vmatmul.bf16.gmra.mxu0 %v6832
      %v8531 = vpop.f32.mrf.mxu0
      %v8532 = vadd.f32 %v8418, %v8531
      %v8533 = vpop.f32.mrf.mxu0
      %v8534 = vadd.f32 %v8420, %v8533
      %8535 = vmatmul.bf16.gmra.mxu0 %v6841
      %v8536 = vpop.f32.mrf.mxu0
      %v8537 = vadd.f32 %v8423, %v8536
      %v8538 = vpop.f32.mrf.mxu0
      %v8539 = vadd.f32 %v8425, %v8538
      %8540 = vmatmul.bf16.gmra.mxu0 %v6850
      %v8541 = vpop.f32.mrf.mxu0
      %v8542 = vadd.f32 %v8428, %v8541
      %v8543 = vpop.f32.mrf.mxu0
      %v8544 = vadd.f32 %v8430, %v8543
      %8545 = vmatmul.bf16.gmra.mxu0 %v6859
      %v8546 = vpop.f32.mrf.mxu0
      %v8547 = vadd.f32 %v8433, %v8546
      %v8548 = vpop.f32.mrf.mxu0
      %v8549 = vadd.f32 %v8435, %v8548
      %8550 = vmatmul.bf16.gmra.mxu0 %v6868
      %v8551 = vpop.f32.mrf.mxu0
      %v8552 = vadd.f32 %v8438, %v8551
      %v8553 = vpop.f32.mrf.mxu0
      %v8554 = vadd.f32 %v8440, %v8553
      %8555 = vmatmul.bf16.gmra.mxu0 %v6877
      %v8556 = vpop.f32.mrf.mxu0
      %v8557 = vadd.f32 %v8443, %v8556
      %v8558 = vpop.f32.mrf.mxu0
      %v8559 = vadd.f32 %v8445, %v8558
      %8560 = vmatmul.bf16.gmra.mxu0 %v6886
      %v8561 = vpop.f32.mrf.mxu0
      %v8562 = vadd.f32 %v8448, %v8561
      %v8563 = vpop.f32.mrf.mxu0
      %v8564 = vadd.f32 %v8450, %v8563
      %8565 = vmatmul.bf16.gmra.mxu0 %v6895
      %v8566 = vpop.f32.mrf.mxu0
      %v8567 = vadd.f32 %v8453, %v8566
      %v8568 = vpop.f32.mrf.mxu0
      %v8569 = vadd.f32 %v8455, %v8568
      %8570 = vmatmul.bf16.gmra.mxu0 %v6904
      %v8571 = vpop.f32.mrf.mxu0
      %v8572 = vadd.f32 %v8458, %v8571
      %v8573 = vpop.f32.mrf.mxu0
      %v8574 = vadd.f32 %v8460, %v8573
      %8575 = vmatmul.bf16.gmra.mxu0 %v6913
      %v8576 = vpop.f32.mrf.mxu0
      %v8577 = vadd.f32 %v8463, %v8576
      %v8578 = vpop.f32.mrf.mxu0
      %v8579 = vadd.f32 %v8465, %v8578
      %8580 = vmatmul.bf16.gmra.mxu0 %v6922
      %v8581 = vpop.f32.mrf.mxu0
      %v8582 = vadd.f32 %v8468, %v8581
      %v8583 = vpop.f32.mrf.mxu0
      %v8584 = vadd.f32 %v8470, %v8583
      %8585 = vmatmul.bf16.gmra.mxu0 %v6931
      %v8586 = vpop.f32.mrf.mxu0
      %v8587 = vadd.f32 %v8473, %v8586
      %v8588 = vpop.f32.mrf.mxu0
      %v8589 = vadd.f32 %v8475, %v8588
      %8590 = vmatmul.bf16.gmra.mxu0 %v6940
      %v8591 = vpop.f32.mrf.mxu0
      %v8592 = vadd.f32 %v8478, %v8591
      %v8593 = vpop.f32.mrf.mxu0
      %v8594 = vadd.f32 %v8480, %v8593
      %8595 = vmatmul.bf16.gmra.mxu0 %v6949
      %v8596 = vpop.f32.mrf.mxu0
      %v8597 = vadd.f32 %v8483, %v8596
      %v8598 = vpop.f32.mrf.mxu0
      %v8599 = vadd.f32 %v8485, %v8598
      %8600 = vmatmul.bf16.gmra.mxu0 %v6958
      %v8601 = vpop.f32.mrf.mxu0
      %v8602 = vadd.f32 %v8488, %v8601
      %v8603 = vpop.f32.mrf.mxu0
      %v8604 = vadd.f32 %v8490, %v8603
      %8605 = vdwg.mxu0
      %v8606 = vld [vmem:[%s5] sm:$0x1]
      %v8608 = vperm.slane %v8606, 0
      %v8610 = vmul.f32 %v8502, %v8608
      %v8611 = vmul.f32 %v8504, %v8608
      %v8612 = vmul.f32 %v8507, %v8608
      %v8613 = vmul.f32 %v8509, %v8608
      %v8614 = vmul.f32 %v8512, %v8608
      %v8615 = vmul.f32 %v8514, %v8608
      %v8616 = vmul.f32 %v8517, %v8608
      %v8617 = vmul.f32 %v8519, %v8608
      %v8618 = vmul.f32 %v8522, %v8608
      %v8619 = vmul.f32 %v8524, %v8608
      %v8620 = vmul.f32 %v8527, %v8608
      %v8621 = vmul.f32 %v8529, %v8608
      %v8622 = vmul.f32 %v8532, %v8608
      %v8623 = vmul.f32 %v8534, %v8608
      %v8624 = vmul.f32 %v8537, %v8608
      %v8625 = vmul.f32 %v8539, %v8608
      %v8626 = vmul.f32 %v8542, %v8608
      %v8627 = vmul.f32 %v8544, %v8608
      %v8628 = vmul.f32 %v8547, %v8608
      %v8629 = vmul.f32 %v8549, %v8608
      %v8630 = vmul.f32 %v8552, %v8608
      %v8631 = vmul.f32 %v8554, %v8608
      %v8632 = vmul.f32 %v8557, %v8608
      %v8633 = vmul.f32 %v8559, %v8608
      %v8634 = vmul.f32 %v8562, %v8608
      %v8635 = vmul.f32 %v8564, %v8608
      %v8636 = vmul.f32 %v8567, %v8608
      %v8637 = vmul.f32 %v8569, %v8608
      %v8638 = vmul.f32 %v8572, %v8608
      %v8639 = vmul.f32 %v8574, %v8608
      %v8640 = vmul.f32 %v8577, %v8608
      %v8641 = vmul.f32 %v8579, %v8608
      %v8642 = vmul.f32 %v8582, %v8608
      %v8643 = vmul.f32 %v8584, %v8608
      %v8644 = vmul.f32 %v8587, %v8608
      %v8645 = vmul.f32 %v8589, %v8608
      %v8646 = vmul.f32 %v8592, %v8608
      %v8647 = vmul.f32 %v8594, %v8608
      %v8648 = vmul.f32 %v8597, %v8608
      %v8649 = vmul.f32 %v8599, %v8608
      %v8650 = vmul.f32 %v8602, %v8608
      %v8651 = vmul.f32 %v8604, %v8608
      %v8652 = vld [vmem:[%s6] sm:$0x1]
      %v8654 = vperm.slane %v8652, 0
      %v8656 = vadd.f32 %v8610, %v8654
      %v8657 = vadd.f32 %v8611, %v8654
      %v8658 = vadd.f32 %v8612, %v8654
      %v8659 = vadd.f32 %v8613, %v8654
      %v8660 = vadd.f32 %v8614, %v8654
      %v8661 = vadd.f32 %v8615, %v8654
      %v8662 = vadd.f32 %v8616, %v8654
      %v8663 = vadd.f32 %v8617, %v8654
      %v8664 = vadd.f32 %v8618, %v8654
      %v8665 = vadd.f32 %v8619, %v8654
      %v8666 = vadd.f32 %v8620, %v8654
      %v8667 = vadd.f32 %v8621, %v8654
      %v8668 = vadd.f32 %v8622, %v8654
      %v8669 = vadd.f32 %v8623, %v8654
      %v8670 = vadd.f32 %v8624, %v8654
      %v8671 = vadd.f32 %v8625, %v8654
      %v8672 = vadd.f32 %v8626, %v8654
      %v8673 = vadd.f32 %v8627, %v8654
      %v8674 = vadd.f32 %v8628, %v8654
      %v8675 = vadd.f32 %v8629, %v8654
      %v8676 = vadd.f32 %v8630, %v8654
      %v8677 = vadd.f32 %v8631, %v8654
      %v8678 = vadd.f32 %v8632, %v8654
      %v8679 = vadd.f32 %v8633, %v8654
      %v8680 = vadd.f32 %v8634, %v8654
      %v8681 = vadd.f32 %v8635, %v8654
      %v8682 = vadd.f32 %v8636, %v8654
      %v8683 = vadd.f32 %v8637, %v8654
      %v8684 = vadd.f32 %v8638, %v8654
      %v8685 = vadd.f32 %v8639, %v8654
      %v8686 = vadd.f32 %v8640, %v8654
      %v8687 = vadd.f32 %v8641, %v8654
      %v8688 = vadd.f32 %v8642, %v8654
      %v8689 = vadd.f32 %v8643, %v8654
      %v8690 = vadd.f32 %v8644, %v8654
      %v8691 = vadd.f32 %v8645, %v8654
      %v8692 = vadd.f32 %v8646, %v8654
      %v8693 = vadd.f32 %v8647, %v8654
      %v8694 = vadd.f32 %v8648, %v8654
      %v8695 = vadd.f32 %v8649, %v8654
      %v8696 = vadd.f32 %v8650, %v8654
      %v8697 = vadd.f32 %v8651, %v8654
      %v8698 = vld [vmem:[%s300 + $0x18] sm:$0xff]
      %v8699 = vld [vmem:[%s300 + $0x20] sm:$0xff]
      %v8700 = vld [vmem:[%s300 + $0x28] sm:$0xff]
      %v8701 = vld [vmem:[%s300 + $0x30] sm:$0xff]
      %v8702 = vld [vmem:[%s300 + $0x38] sm:$0xff]
      %v8703 = vld [vmem:[%s300 + $0x40] sm:$0xff]
      %v8704 = vld [vmem:[%s300 + $0x48] sm:$0xff]
      %v8705 = vld [vmem:[%s300 + $0x50] sm:$0xff]
      %v8706 = vld [vmem:[%s300 + $0x58] sm:$0xff]
      %v8707 = vld [vmem:[%s300 + $0x60] sm:$0xff]
      %v8708 = vld [vmem:[%s300 + $0x68] sm:$0xff]
      %v8709 = vld [vmem:[%s300 + $0x70] sm:$0xff]
      %v8710 = vld [vmem:[%s300 + $0x78] sm:$0xff]
      %v8711 = vld [vmem:[%s300 + $0x80] sm:$0xff]
      %v8712 = vld [vmem:[%s300 + $0x88] sm:$0xff]
      %v8713 = vld [vmem:[%s300 + $0x90] sm:$0xff]
      %v8714 = vld [vmem:[%s300 + $0x98] sm:$0xff]
      %v8715 = vld [vmem:[%s300 + $0xa0] sm:$0xff]
      %v8716 = vld [vmem:[%s300 + $0xa8] sm:$0xff]
      %v8717 = vld [vmem:[%s300 + $0xb0] sm:$0xff]
      %v8718 = vld [vmem:[%s300 + $0xb8] sm:$0xff]
      %v8719 = vld [vmem:[%s300 + $0xc0] sm:$0xff]
      %v8720 = vld [vmem:[%s300 + $0xc8] sm:$0xff]
      %v8721 = vld [vmem:[%s300 + $0xd0] sm:$0xff]
      %v8722 = vld [vmem:[%s300 + $0xd8] sm:$0xff]
      %v8723 = vld [vmem:[%s300 + $0xe0] sm:$0xff]
      %v8724 = vld [vmem:[%s300 + $0xe8] sm:$0xff]
      %v8725 = vld [vmem:[%s300 + $0xf0] sm:$0xff]
      %v8726 = vld [vmem:[%s300 + $0xf8] sm:$0xff]
      %v8727 = vld [vmem:[%s300 + $0x100] sm:$0xff]
      %v8728 = vld [vmem:[%s300 + $0x108] sm:$0xff]
      %v8729 = vld [vmem:[%s300 + $0x110] sm:$0xff]
      %v8730 = vld [vmem:[%s300 + $0x118] sm:$0xff]
      %v8731 = vld [vmem:[%s300 + $0x120] sm:$0xff]
      %v8732 = vld [vmem:[%s300 + $0x128] sm:$0xff]
      %v8733 = vld [vmem:[%s300 + $0x130] sm:$0xff]
      %v8734 = vld [vmem:[%s300 + $0x138] sm:$0xff]
      %v8735 = vld [vmem:[%s300 + $0x140] sm:$0xff]
      %v8736 = vld [vmem:[%s300 + $0x148] sm:$0xff]
      %v8737 = vld [vmem:[%s300 + $0x150] sm:$0xff]
      %v8738 = vld [vmem:[%s300 + $0x158] sm:$0xff]
      %v8739 = vld [vmem:[%s300 + $0x160] sm:$0xff]
      %v8740 = vadd.f32 %v8656, %v8698
      %v8741 = vadd.f32 %v8657, %v8699
      %v8742 = vadd.f32 %v8658, %v8700
      %v8743 = vadd.f32 %v8659, %v8701
      %v8744 = vadd.f32 %v8660, %v8702
      %v8745 = vadd.f32 %v8661, %v8703
      %v8746 = vadd.f32 %v8662, %v8704
      %v8747 = vadd.f32 %v8663, %v8705
      %v8748 = vadd.f32 %v8664, %v8706
      %v8749 = vadd.f32 %v8665, %v8707
      %v8750 = vadd.f32 %v8666, %v8708
      %v8751 = vadd.f32 %v8667, %v8709
      %v8752 = vadd.f32 %v8668, %v8710
      %v8753 = vadd.f32 %v8669, %v8711
      %v8754 = vadd.f32 %v8670, %v8712
      %v8755 = vadd.f32 %v8671, %v8713
      %v8756 = vadd.f32 %v8672, %v8714
      %v8757 = vadd.f32 %v8673, %v8715
      %v8758 = vadd.f32 %v8674, %v8716
      %v8759 = vadd.f32 %v8675, %v8717
      %v8760 = vadd.f32 %v8676, %v8718
      %v8761 = vadd.f32 %v8677, %v8719
      %v8762 = vadd.f32 %v8678, %v8720
      %v8763 = vadd.f32 %v8679, %v8721
      %v8764 = vadd.f32 %v8680, %v8722
      %v8765 = vadd.f32 %v8681, %v8723
      %v8766 = vadd.f32 %v8682, %v8724
      %v8767 = vadd.f32 %v8683, %v8725
      %v8768 = vadd.f32 %v8684, %v8726
      %v8769 = vadd.f32 %v8685, %v8727
      %v8770 = vadd.f32 %v8686, %v8728
      %v8771 = vadd.f32 %v8687, %v8729
      %v8772 = vadd.f32 %v8688, %v8730
      %v8773 = vadd.f32 %v8689, %v8731
      %v8774 = vadd.f32 %v8690, %v8732
      %v8775 = vadd.f32 %v8691, %v8733
      %v8776 = vadd.f32 %v8692, %v8734
      %v8777 = vadd.f32 %v8693, %v8735
      %v8778 = vadd.f32 %v8694, %v8736
      %v8779 = vadd.f32 %v8695, %v8737
      %v8780 = vadd.f32 %v8696, %v8738
      %v8781 = vadd.f32 %v8697, %v8739
      %v8782 = vmax.f32 %v8740, 0.0
      %v8783 = vmax.f32 %v8741, 0.0
      %v8784 = vmax.f32 %v8742, 0.0
      %v8785 = vmax.f32 %v8743, 0.0
      %v8786 = vmax.f32 %v8744, 0.0
      %v8787 = vmax.f32 %v8745, 0.0
      %v8788 = vmax.f32 %v8746, 0.0
      %v8789 = vmax.f32 %v8747, 0.0
      %v8790 = vmax.f32 %v8748, 0.0
      %v8791 = vmax.f32 %v8749, 0.0
      %v8792 = vmax.f32 %v8750, 0.0
      %v8793 = vmax.f32 %v8751, 0.0
      %v8794 = vmax.f32 %v8752, 0.0
      %v8795 = vmax.f32 %v8753, 0.0
      %v8796 = vmax.f32 %v8754, 0.0
      %v8797 = vmax.f32 %v8755, 0.0
      %v8798 = vmax.f32 %v8756, 0.0
      %v8799 = vmax.f32 %v8757, 0.0
      %v8800 = vmax.f32 %v8758, 0.0
      %v8801 = vmax.f32 %v8759, 0.0
      %v8802 = vmax.f32 %v8760, 0.0
      %v8803 = vmax.f32 %v8761, 0.0
      %v8804 = vmax.f32 %v8762, 0.0
      %v8805 = vmax.f32 %v8763, 0.0
      %v8806 = vmax.f32 %v8764, 0.0
      %v8807 = vmax.f32 %v8765, 0.0
      %v8808 = vmax.f32 %v8766, 0.0
      %v8809 = vmax.f32 %v8767, 0.0
      %v8810 = vmax.f32 %v8768, 0.0
      %v8811 = vmax.f32 %v8769, 0.0
      %v8812 = vmax.f32 %v8770, 0.0
      %v8813 = vmax.f32 %v8771, 0.0
      %v8814 = vmax.f32 %v8772, 0.0
      %v8815 = vmax.f32 %v8773, 0.0
      %v8816 = vmax.f32 %v8774, 0.0
      %v8817 = vmax.f32 %v8775, 0.0
      %v8818 = vmax.f32 %v8776, 0.0
      %v8819 = vmax.f32 %v8777, 0.0
      %v8820 = vmax.f32 %v8778, 0.0
      %v8821 = vmax.f32 %v8779, 0.0
      %v8822 = vmax.f32 %v8780, 0.0
      %v8823 = vmax.f32 %v8781, 0.0
      %8824 = vst [vmem:[%s305] sm:$0xff] %v8782
      %8825 = vst [vmem:[%s305 + $0x8] sm:$0xff] %v8783
      %8826 = vst [vmem:[%s305 + $0x10] sm:$0xff] %v8784
      %8827 = vst [vmem:[%s305 + $0x18] sm:$0xff] %v8785
      %8828 = vst [vmem:[%s305 + $0x20] sm:$0xff] %v8786
      %8829 = vst [vmem:[%s305 + $0x28] sm:$0xff] %v8787
      %8830 = vst [vmem:[%s305 + $0x30] sm:$0xff] %v8788
      %8831 = vst [vmem:[%s305 + $0x38] sm:$0xff] %v8789
      %8832 = vst [vmem:[%s305 + $0x40] sm:$0xff] %v8790
      %8833 = vst [vmem:[%s305 + $0x48] sm:$0xff] %v8791
      %8834 = vst [vmem:[%s305 + $0x50] sm:$0xff] %v8792
      %8835 = vst [vmem:[%s305 + $0x58] sm:$0xff] %v8793
      %8836 = vst [vmem:[%s305 + $0x60] sm:$0xff] %v8794
      %8837 = vst [vmem:[%s305 + $0x68] sm:$0xff] %v8795
      %8838 = vst [vmem:[%s305 + $0x70] sm:$0xff] %v8796
      %8839 = vst [vmem:[%s305 + $0x78] sm:$0xff] %v8797
      %8840 = vst [vmem:[%s305 + $0x80] sm:$0xff] %v8798
      %8841 = vst [vmem:[%s305 + $0x88] sm:$0xff] %v8799
      %8842 = vst [vmem:[%s305 + $0x90] sm:$0xff] %v8800
      %8843 = vst [vmem:[%s305 + $0x98] sm:$0xff] %v8801
      %8844 = vst [vmem:[%s305 + $0xa0] sm:$0xff] %v8802
      %8845 = vst [vmem:[%s305 + $0xa8] sm:$0xff] %v8803
      %8846 = vst [vmem:[%s305 + $0xb0] sm:$0xff] %v8804
      %8847 = vst [vmem:[%s305 + $0xb8] sm:$0xff] %v8805
      %8848 = vst [vmem:[%s305 + $0xc0] sm:$0xff] %v8806
      %8849 = vst [vmem:[%s305 + $0xc8] sm:$0xff] %v8807
      %8850 = vst [vmem:[%s305 + $0xd0] sm:$0xff] %v8808
      %8851 = vst [vmem:[%s305 + $0xd8] sm:$0xff] %v8809
      %8852 = vst [vmem:[%s305 + $0xe0] sm:$0xff] %v8810
      %8853 = vst [vmem:[%s305 + $0xe8] sm:$0xff] %v8811
      %8854 = vst [vmem:[%s305 + $0xf0] sm:$0xff] %v8812
      %8855 = vst [vmem:[%s305 + $0xf8] sm:$0xff] %v8813
      %8856 = vst [vmem:[%s305 + $0x100] sm:$0xff] %v8814
      %8857 = vst [vmem:[%s305 + $0x108] sm:$0xff] %v8815
      %8858 = vst [vmem:[%s305 + $0x110] sm:$0xff] %v8816
      %8859 = vst [vmem:[%s305 + $0x118] sm:$0xff] %v8817
      %8860 = vst [vmem:[%s305 + $0x120] sm:$0xff] %v8818
      %8861 = vst [vmem:[%s305 + $0x128] sm:$0xff] %v8819
      %8862 = vst [vmem:[%s305 + $0x130] sm:$0xff] %v8820
      %8863 = vst [vmem:[%s305 + $0x138] sm:$0xff] %v8821
      %8864 = vst [vmem:[%s305 + $0x140] sm:$0xff] %v8822
      %8865 = vst [vmem:[%s305 + $0x148] sm:$0xff] %v8823
      %p8866 = scmp.lt.s32.totalorder %s19, 1
      %s8867 = scalar_select %p8866, %s19, 1
      %s8868 = smul.addr %s8867, 42
      %s8869 = smul.addr %s8868, 8
      %s8870 = scalar_lea.vmem %s8, %s8869
      // Predicated region
      $region53: #{basic_block_forward.1} parent=51 // pred_check
        %p8871 = pneg %p210
      $region54: #{basic_block_forward.1} parent=51 // pred_check_branch
        %8873 = sbr.rel (%p8871) target = $region56
      $region55: #{basic_block_forward.1} parent=51 // pred_region
        _
      $region56: #{basic_block_forward.1} parent=51 // pred_fallthru
        _
    $region52: #{basic_block_forward.1} parent=5 // pred_fallthru
      _
    %p8874 = scmp.le.s32.totalorder 2, %s14
    // Predicated region
    $region57: #{basic_block_forward.1} parent=5 // pred_check
      %p8875 = pneg %p8874
    $region58: #{basic_block_forward.1} parent=5 // pred_check_branch
      %8877 = sbr.rel (%p8875) target = $region60
    $region59: #{basic_block_forward.1} parent=5 // pred_region
      %s8878 = ssub.s32 %s14, 2
      // Predicated region
      $region61: #{basic_block_forward.1} parent=59 // pred_check
        %p8879 = pneg %p216
      $region62: #{basic_block_forward.1} parent=59 // pred_check_branch
        %8881 = sbr.rel (%p8879) target = $region64
      $region63: #{basic_block_forward.1} parent=59 // pred_region
        %p8882 = scmp.lt.s32.totalorder %s20, 1
        %s8883 = scalar_select %p8882, %s20, 1
        %s8884 = smul.addr %s8883, 42
        %s8885 = smul.addr %s8884, 8
        %s8886 = scalar_lea.vmem %s8, %s8885
      $region64: #{basic_block_forward.1} parent=59 // pred_fallthru
        _
    $region60: #{basic_block_forward.1} parent=5 // pred_fallthru
      _
  $region6: #{basic_block_forward.1} parent=0 // loop_footer
    %s18 = sadd.s32 1, %s14
  $region7: #{basic_block_forward.1} parent=0 // loop_footer_branch
    %13 = sbr.rel target = $region3
  $region8: #{basic_block_forward.1} parent=0 // loop_exit
    _

</llo_original>
